<compile_context>
chip_gen: v7x
topology: tpu7x:2x2x1
jax: 0.10.0
libtpu: 0.0.40
codegen_flags: <defaults>
</compile_context>

<pallas_src>
import math
from functools import partial

import jax
import jax.numpy as jnp
from jax.experimental import pallas as pl
from jax.experimental.pallas import tpu as pltpu

_BN_EPS = 1e-5
_LANE = 128                       # lane grain (last dim) for dense, unmasked stores
_TM = 512                         # M-tile: ~85% of HBM roofline, fits v7x VMEM w/ 2x buffering
_VMEM_LIMIT = 48 * 1024 * 1024    # <= v7x physical VMEM (64 MiB) with compiler headroom


def _round_up(x, m):
    return (x + m - 1) // m * m


# ---------------------------- Pallas kernels (hot path) ----------------------------

def _matmul_bias_kernel(x_ref, w_ref, b_ref, o_ref, *, relu):
    # (TM, Kp) bf16 @ (Kp, Cp) bf16 on the MXU, f32 accumulation; fused bias (+ ReLU) epilogue.
    acc = jnp.dot(x_ref[...], w_ref[...], preferred_element_type=jnp.float32)
    y = acc + b_ref[...]
    if relu:
        y = jnp.maximum(y, 0.0)
    o_ref[...] = y.astype(o_ref.dtype)


def _matmul_bias_res_kernel(x_ref, w_ref, b_ref, r_ref, o_ref, *, relu):
    # Same as above with fused residual add (BasicBlock second conv).
    acc = jnp.dot(x_ref[...], w_ref[...], preferred_element_type=jnp.float32)
    y = acc + b_ref[...] + r_ref[...]
    if relu:
        y = jnp.maximum(y, 0.0)
    o_ref[...] = y.astype(o_ref.dtype)


# ---------------------------- JAX glue (layout plumbing) ----------------------------

def _im2col_cl(x, ksize, stride, padding):
    """x: channels-last (N, D, H, W, C) -> patches (N*Do*Ho*Wo, kd*kh*kw*C), tap-major."""
    N, D, H, W, C = x.shape
    kd, kh, kw = ksize
    sd, sh, sw = stride
    pd, ph, pw = padding
    xp = jnp.pad(x, ((0, 0), (pd, pd), (ph, ph), (pw, pw), (0, 0)))
    Do = (D + 2 * pd - kd) // sd + 1
    Ho = (H + 2 * ph - kh) // sh + 1
    Wo = (W + 2 * pw - kw) // sw + 1
    cols = []
    for dz in range(kd):
        for dy in range(kh):
            for dx in range(kw):
                cols.append(xp[:,
                               dz:dz + (Do - 1) * sd + 1:sd,
                               dy:dy + (Ho - 1) * sh + 1:sh,
                               dx:dx + (Wo - 1) * sw + 1:sw,
                               :])                    # (N, Do, Ho, Wo, C)
    patches = jnp.concatenate(cols, axis=-1)          # (N, Do, Ho, Wo, kd*kh*kw*C)
    return patches.reshape(N * Do * Ho * Wo, kd * kh * kw * C), (Do, Ho, Wo)


def conv3d_bn_act(x, w, bn, *, stride, padding, relu=True, residual=None):
    """Conv3d (no bias) + folded BatchNorm3d (eval) + optional residual + optional ReLU.

    x, residual: channels-last (N, D, H, W, C).  Returns channels-last float32.
    """
    N = x.shape[0]
    Cout, Cin, kd, kh, kw = w.shape
    patches, (Do, Ho, Wo) = _im2col_cl(x, (kd, kh, kw), (stride,) * 3, (padding,) * 3)
    M, K = patches.shape
    Kp = _round_up(K, _LANE)
    Cp = _round_up(Cout, _LANE)

    # Fold BN scale into the weight matrix (wrapper-side); only the bias stays in the epilogue.
    scale = bn['gamma'] * jax.lax.rsqrt(bn['var'] + _BN_EPS)
    bias = bn['beta'] - bn['mean'] * scale
    wmat = w.transpose(2, 3, 4, 1, 0).reshape(kd * kh * kw * Cin, Cout)     # (K, Cout) tap-major
    wmat = (wmat * scale[None, :]).astype(jnp.bfloat16)
    wmat = jnp.pad(wmat, ((0, Kp - K), (0, Cp - Cout)))                     # lane/sublane aligned
    biasp = jnp.pad(bias, (0, Cp - Cout)).reshape(1, Cp).astype(jnp.float32)

    patches = jnp.pad(patches.astype(jnp.bfloat16), ((0, 0), (0, Kp - K)))  # bf16 MXU operands

    # M tiling: real grid over rows (parallel => both TCs on v7x, pipelined DMA everywhere).
    if M > _TM:
        tm = _TM
        Mp = _round_up(M, tm)
        if Mp != M:
            patches = jnp.pad(patches, ((0, Mp - M), (0, 0)))
    else:
        tm = M            # single full block (full dims satisfy the (8,128) constraint)
        Mp = M
    grid = (Mp // tm,)

    x_spec = pl.BlockSpec((tm, Kp), lambda i: (i, 0))
    w_spec = pl.BlockSpec((Kp, Cp), lambda i: (0, 0))     # tiny, stays resident across steps
    b_spec = pl.BlockSpec((1, Cp), lambda i: (0, 0))
    o_spec = pl.BlockSpec((tm, Cp), lambda i: (i, 0))
    cparams = pltpu.CompilerParams(
        dimension_semantics=("parallel",),
        vmem_limit_bytes=_VMEM_LIMIT,
    )
    out_sds = jax.ShapeDtypeStruct((Mp, Cp), jnp.float32)

    if residual is None:
        out = pl.pallas_call(
            partial(_matmul_bias_kernel, relu=relu),
            out_shape=out_sds,
            grid=grid,
            in_specs=[x_spec, w_spec, b_spec],
            out_specs=o_spec,
            compiler_params=cparams,
        )(patches, wmat, biasp)
    else:
        r = residual.reshape(M, Cout).astype(jnp.float32)
        r = jnp.pad(r, ((0, Mp - M), (0, Cp - Cout)))
        r_spec = pl.BlockSpec((tm, Cp), lambda i: (i, 0))
        out = pl.pallas_call(
            partial(_matmul_bias_res_kernel, relu=relu),
            out_shape=out_sds,
            grid=grid,
            in_specs=[x_spec, w_spec, b_spec, r_spec],
            out_specs=o_spec,
            compiler_params=cparams,
        )(patches, wmat, biasp, r)

    return out[:M, :Cout].reshape(N, Do, Ho, Wo, Cout)


def maxpool3d_cl(x, *, k=3, s=2, p=1):
    """MaxPool3d in plain JAX (per perf review: the Pallas stack/launch was pure overhead)."""
    N, D, H, W, C = x.shape
    xp = jnp.pad(x, ((0, 0), (p, p), (p, p), (p, p), (0, 0)), constant_values=-jnp.inf)
    Do = (D + 2 * p - k) // s + 1
    Ho = (H + 2 * p - k) // s + 1
    Wo = (W + 2 * p - k) // s + 1
    out = None
    for dz in range(k):
        for dy in range(k):
            for dx in range(k):
                sl = xp[:,
                        dz:dz + (Do - 1) * s + 1:s,
                        dy:dy + (Ho - 1) * s + 1:s,
                        dx:dx + (Wo - 1) * s + 1:s,
                        :]
                out = sl if out is None else jnp.maximum(out, sl)
    return out


def basic_block(x, p, stride):
    """3D ResNet BasicBlock (expansion=1), shortcut_type='B'.  Channels-last in/out."""
    residual = x
    y = conv3d_bn_act(x, p['conv1_w'], p['bn1'], stride=stride, padding=1, relu=True)
    if 'down_w' in p:
        residual = conv3d_bn_act(x, p['down_w'], p['down_bn'],
                                 stride=stride, padding=0, relu=False)
    y = conv3d_bn_act(y, p['conv2_w'], p['bn2'], stride=1, padding=1, relu=True,
                      residual=residual)
    return y


def resnet_forward(x, params):
    outs = [x]                                            # PyTorch out-list item 0: raw input
    h = jnp.transpose(x, (0, 2, 3, 4, 1))                 # NCDHW -> channels-last, once
    h = conv3d_bn_act(h, params['conv1_w'], params['bn1'], stride=1, padding=3, relu=True)
    h = maxpool3d_cl(h, k=3, s=2, p=1)                    # no_max_pool=False
    strides = (1, 2, 2, 2)
    for lp, s in zip(params['layers'], strides):
        h = basic_block(h, lp, s)
        outs.append(jnp.transpose(h, (0, 4, 1, 2, 3)))    # back to NCDHW for the out list
    # Head in plain JAX per perf review: AdaptiveAvgPool3d((1,1,1)) + flatten + Linear(64 -> 1).
    feat = jnp.mean(h, axis=(1, 2, 3))                    # (N, C)
    logits = feat @ params['fc_w'].T + params['fc_b']     # (N, 1)
    outs.append(logits)
    return outs


# ---------------------------- deterministic parameter init ----------------------------

def _bn_init(c):
    return dict(gamma=jnp.ones((c,), jnp.float32),
                beta=jnp.zeros((c,), jnp.float32),
                mean=jnp.zeros((c,), jnp.float32),
                var=jnp.ones((c,), jnp.float32))


def _kaiming_conv(key, cout, cin, k):
    fan_out = cout * k * k * k            # mode='fan_out', nonlinearity='relu'
    std = math.sqrt(2.0 / fan_out)
    return std * jax.random.normal(key, (cout, cin, k, k, k), jnp.float32)


def _block_params(key, in_planes, planes, stride):
    k1, k2, k3 = jax.random.split(key, 3)
    p = {
        'conv1_w': _kaiming_conv(k1, planes, in_planes, 3),
        'bn1': _bn_init(planes),
        'conv2_w': _kaiming_conv(k2, planes, planes, 3),
        'bn2': _bn_init(planes),
    }
    if stride != 1 or in_planes != planes:
        p['down_w'] = _kaiming_conv(k3, planes, in_planes, 1)
        p['down_bn'] = _bn_init(planes)
    return p


def init_params(key, block_inplanes, n_input_channels=1):
    keys = jax.random.split(key, 8)
    in_planes = block_inplanes[0]
    params = {
        'conv1_w': _kaiming_conv(keys[0], in_planes, n_input_channels, 7),
        'bn1': _bn_init(in_planes),
    }
    strides = (1, 2, 2, 2)
    layers = []
    for i, (planes, s) in enumerate(zip(block_inplanes, strides)):
        layers.append(_block_params(keys[1 + i], in_planes, planes, s))
        in_planes = planes
    params['layers'] = layers
    fan_in = block_inplanes[-1]
    bound = 1.0 / math.sqrt(fan_in)
    params['fc_w'] = jax.random.uniform(keys[5], (1, fan_in), jnp.float32, -bound, bound)
    params['fc_b'] = jax.random.uniform(keys[6], (1,), jnp.float32, -bound, bound)
    return params


if __name__ == "__main__":
    key = jax.random.PRNGKey(0)
    pkey, xkey = jax.random.split(key)

    block_inplanes = [8, 16, 32, 64]      # widen_factor=1.0, small synthetic widths
    params = init_params(pkey, block_inplanes, n_input_channels=1)

    x = jax.random.normal(xkey, (2, 1, 16, 16, 16), jnp.float32)   # (N, C, D, H, W)

    outs = jax.jit(resnet_forward)(x, params)
    outs = jax.block_until_ready(outs)

    # sanity on the output list: [input, layer1, layer2, layer3, layer4, logits]
    assert len(outs) == 6
    assert outs[1].shape == (2, 8, 8, 8, 8)
    assert outs[2].shape == (2, 16, 4, 4, 4)
    assert outs[3].shape == (2, 32, 2, 2, 2)
    assert outs[4].shape == (2, 64, 1, 1, 1)
    assert outs[5].shape == (2, 1)
    assert all(bool(jnp.all(jnp.isfinite(o))) for o in outs)
    print("KERNEL_OK")
</pallas_src>

<mosaic_0001>
module attributes {stable_mosaic.version = 11 : i64} {
  func.func @_matmul_bias_kernel(%arg0: i32, %arg1: memref<512x384xbf16, #tpu.memory_space<vmem>>, %arg2: memref<384x128xbf16, #tpu.memory_space<vmem>>, %arg3: memref<1x128xf32, #tpu.memory_space<vmem>>, %arg4: memref<512x128xf32, #tpu.memory_space<vmem>>) attributes {dimension_semantics = [#tpu.dimension_semantics<parallel>], iteration_bounds = array<i64: 16>, scalar_prefetch = 0 : i64, scratch_operands = 0 : i64, tpu.core_type = #tpu.core_type<tc>, window_params = [{transform_indices = @transform_0, window_bounds = array<i64: 512, 384>}, {pipeline_mode = #tpu.pipeline_mode<synchronous>, transform_indices = @transform_1, window_bounds = array<i64: 384, 128>}, {pipeline_mode = #tpu.pipeline_mode<synchronous>, transform_indices = @transform_2, window_bounds = array<i64: 1, 128>}, {transform_indices = @transform_3, window_bounds = array<i64: 512, 128>}]} {
    %c0 = arith.constant 0 : index
    %c0_0 = arith.constant 0 : index
    %0 = vector.load %arg1[%c0, %c0_0] : memref<512x384xbf16, #tpu.memory_space<vmem>>, vector<512x384xbf16>
    %c0_1 = arith.constant 0 : index
    %c0_2 = arith.constant 0 : index
    %1 = vector.load %arg2[%c0_1, %c0_2] : memref<384x128xbf16, #tpu.memory_space<vmem>>, vector<384x128xbf16>
    %cst = arith.constant dense<0.000000e+00> : vector<512x128xf32>
    %2 = tpu.matmul %0, %1, %cst {dimension_numbers = #tpu.dot_dimension_numbers<[1], [0], [0], [1], [0, 0, 1, 1], [], []>} : vector<512x384xbf16>, vector<384x128xbf16>, vector<512x128xf32> -> vector<512x128xf32>
    %c0_3 = arith.constant 0 : index
    %c0_4 = arith.constant 0 : index
    %3 = vector.load %arg3[%c0_3, %c0_4] : memref<1x128xf32, #tpu.memory_space<vmem>>, vector<1x128xf32>
    %4 = vector.broadcast %3 : vector<1x128xf32> to vector<512x128xf32>
    %5 = arith.addf %2, %4 : vector<512x128xf32>
    %cst_5 = arith.constant 0.000000e+00 : f32
    %6 = vector.broadcast %cst_5 : f32 to vector<512x128xf32>
    %7 = arith.maximumf %5, %6 : vector<512x128xf32>
    %c0_6 = arith.constant 0 : index
    %c0_7 = arith.constant 0 : index
    %8 = vector.load %arg4[%c0_6, %c0_7] : memref<512x128xf32, #tpu.memory_space<vmem>>, vector<512x128xf32>
    tpu.vector_store %arg4[%c0_6, %c0_7], %7 {strides = array<i32>} : memref<512x128xf32, #tpu.memory_space<vmem>>, vector<512x128xf32>,
    return
  }
  func.func @transform_0(%arg0: i32) -> (i32, i32) {
    %c0_i32 = arith.constant 0 : i32
    %c0_i32_0 = arith.constant 0 : i32
    return %arg0, %c0_i32 : i32, i32
  }
  func.func @transform_1(%arg0: i32) -> (i32, i32) {
    %c0_i32 = arith.constant 0 : i32
    %c0_i32_0 = arith.constant 0 : i32
    %c0_i32_1 = arith.constant 0 : i32
    return %c0_i32, %c0_i32_0 : i32, i32
  }
  func.func @transform_2(%arg0: i32) -> (i32, i32) {
    %c0_i32 = arith.constant 0 : i32
    %c0_i32_0 = arith.constant 0 : i32
    %c0_i32_1 = arith.constant 0 : i32
    return %c0_i32, %c0_i32_0 : i32, i32
  }
  func.func @transform_3(%arg0: i32) -> (i32, i32) {
    %c0_i32 = arith.constant 0 : i32
    %c0_i32_0 = arith.constant 0 : i32
    return %arg0, %c0_i32 : i32, i32
  }
}

module attributes {stable_mosaic.version = 11 : i64} {
  func.func @_matmul_bias_kernel(%arg0: i32, %arg1: memref<512x256xbf16, #tpu.memory_space<vmem>>, %arg2: memref<256x128xbf16, #tpu.memory_space<vmem>>, %arg3: memref<1x128xf32, #tpu.memory_space<vmem>>, %arg4: memref<512x128xf32, #tpu.memory_space<vmem>>) attributes {dimension_semantics = [#tpu.dimension_semantics<parallel>], iteration_bounds = array<i64: 2>, scalar_prefetch = 0 : i64, scratch_operands = 0 : i64, tpu.core_type = #tpu.core_type<tc>, window_params = [{transform_indices = @transform_0, window_bounds = array<i64: 512, 256>}, {pipeline_mode = #tpu.pipeline_mode<synchronous>, transform_indices = @transform_1, window_bounds = array<i64: 256, 128>}, {pipeline_mode = #tpu.pipeline_mode<synchronous>, transform_indices = @transform_2, window_bounds = array<i64: 1, 128>}, {transform_indices = @transform_3, window_bounds = array<i64: 512, 128>}]} {
    %c0 = arith.constant 0 : index
    %c0_0 = arith.constant 0 : index
    %0 = vector.load %arg1[%c0, %c0_0] : memref<512x256xbf16, #tpu.memory_space<vmem>>, vector<512x256xbf16>
    %c0_1 = arith.constant 0 : index
    %c0_2 = arith.constant 0 : index
    %1 = vector.load %arg2[%c0_1, %c0_2] : memref<256x128xbf16, #tpu.memory_space<vmem>>, vector<256x128xbf16>
    %cst = arith.constant dense<0.000000e+00> : vector<512x128xf32>
    %2 = tpu.matmul %0, %1, %cst {dimension_numbers = #tpu.dot_dimension_numbers<[1], [0], [0], [1], [0, 0, 1, 1], [], []>} : vector<512x256xbf16>, vector<256x128xbf16>, vector<512x128xf32> -> vector<512x128xf32>
    %c0_3 = arith.constant 0 : index
    %c0_4 = arith.constant 0 : index
    %3 = vector.load %arg3[%c0_3, %c0_4] : memref<1x128xf32, #tpu.memory_space<vmem>>, vector<1x128xf32>
    %4 = vector.broadcast %3 : vector<1x128xf32> to vector<512x128xf32>
    %5 = arith.addf %2, %4 : vector<512x128xf32>
    %cst_5 = arith.constant 0.000000e+00 : f32
    %6 = vector.broadcast %cst_5 : f32 to vector<512x128xf32>
    %7 = arith.maximumf %5, %6 : vector<512x128xf32>
    %c0_6 = arith.constant 0 : index
    %c0_7 = arith.constant 0 : index
    %8 = vector.load %arg4[%c0_6, %c0_7] : memref<512x128xf32, #tpu.memory_space<vmem>>, vector<512x128xf32>
    tpu.vector_store %arg4[%c0_6, %c0_7], %7 {strides = array<i32>} : memref<512x128xf32, #tpu.memory_space<vmem>>, vector<512x128xf32>,
    return
  }
  func.func @transform_0(%arg0: i32) -> (i32, i32) {
    %c0_i32 = arith.constant 0 : i32
    %c0_i32_0 = arith.constant 0 : i32
    return %arg0, %c0_i32 : i32, i32
  }
  func.func @transform_1(%arg0: i32) -> (i32, i32) {
    %c0_i32 = arith.constant 0 : i32
    %c0_i32_0 = arith.constant 0 : i32
    %c0_i32_1 = arith.constant 0 : i32
    return %c0_i32, %c0_i32_0 : i32, i32
  }
  func.func @transform_2(%arg0: i32) -> (i32, i32) {
    %c0_i32 = arith.constant 0 : i32
    %c0_i32_0 = arith.constant 0 : i32
    %c0_i32_1 = arith.constant 0 : i32
    return %c0_i32, %c0_i32_0 : i32, i32
  }
  func.func @transform_3(%arg0: i32) -> (i32, i32) {
    %c0_i32 = arith.constant 0 : i32
    %c0_i32_0 = arith.constant 0 : i32
    return %arg0, %c0_i32 : i32, i32
  }
}

module attributes {stable_mosaic.version = 11 : i64} {
  func.func @_matmul_bias_res_kernel(%arg0: i32, %arg1: memref<512x256xbf16, #tpu.memory_space<vmem>>, %arg2: memref<256x128xbf16, #tpu.memory_space<vmem>>, %arg3: memref<1x128xf32, #tpu.memory_space<vmem>>, %arg4: memref<512x128xf32, #tpu.memory_space<vmem>>, %arg5: memref<512x128xf32, #tpu.memory_space<vmem>>) attributes {dimension_semantics = [#tpu.dimension_semantics<parallel>], iteration_bounds = array<i64: 2>, scalar_prefetch = 0 : i64, scratch_operands = 0 : i64, tpu.core_type = #tpu.core_type<tc>, window_params = [{transform_indices = @transform_0, window_bounds = array<i64: 512, 256>}, {pipeline_mode = #tpu.pipeline_mode<synchronous>, transform_indices = @transform_1, window_bounds = array<i64: 256, 128>}, {pipeline_mode = #tpu.pipeline_mode<synchronous>, transform_indices = @transform_2, window_bounds = array<i64: 1, 128>}, {transform_indices = @transform_3, window_bounds = array<i64: 512, 128>}, {transform_indices = @transform_4, window_bounds = array<i64: 512, 128>}]} {
    %c0 = arith.constant 0 : index
    %c0_0 = arith.constant 0 : index
    %0 = vector.load %arg1[%c0, %c0_0] : memref<512x256xbf16, #tpu.memory_space<vmem>>, vector<512x256xbf16>
    %c0_1 = arith.constant 0 : index
    %c0_2 = arith.constant 0 : index
    %1 = vector.load %arg2[%c0_1, %c0_2] : memref<256x128xbf16, #tpu.memory_space<vmem>>, vector<256x128xbf16>
    %cst = arith.constant dense<0.000000e+00> : vector<512x128xf32>
    %2 = tpu.matmul %0, %1, %cst {dimension_numbers = #tpu.dot_dimension_numbers<[1], [0], [0], [1], [0, 0, 1, 1], [], []>} : vector<512x256xbf16>, vector<256x128xbf16>, vector<512x128xf32> -> vector<512x128xf32>
    %c0_3 = arith.constant 0 : index
    %c0_4 = arith.constant 0 : index
    %3 = vector.load %arg3[%c0_3, %c0_4] : memref<1x128xf32, #tpu.memory_space<vmem>>, vector<1x128xf32>
    %4 = vector.broadcast %3 : vector<1x128xf32> to vector<512x128xf32>
    %5 = arith.addf %2, %4 : vector<512x128xf32>
    %c0_5 = arith.constant 0 : index
    %c0_6 = arith.constant 0 : index
    %6 = vector.load %arg4[%c0_5, %c0_6] : memref<512x128xf32, #tpu.memory_space<vmem>>, vector<512x128xf32>
    %7 = arith.addf %5, %6 : vector<512x128xf32>
    %cst_7 = arith.constant 0.000000e+00 : f32
    %8 = vector.broadcast %cst_7 : f32 to vector<512x128xf32>
    %9 = arith.maximumf %7, %8 : vector<512x128xf32>
    %c0_8 = arith.constant 0 : index
    %c0_9 = arith.constant 0 : index
    %10 = vector.load %arg5[%c0_8, %c0_9] : memref<512x128xf32, #tpu.memory_space<vmem>>, vector<512x128xf32>
    tpu.vector_store %arg5[%c0_8, %c0_9], %9 {strides = array<i32>} : memref<512x128xf32, #tpu.memory_space<vmem>>, vector<512x128xf32>,
    return
  }
  func.func @transform_0(%arg0: i32) -> (i32, i32) {
    %c0_i32 = arith.constant 0 : i32
    %c0_i32_0 = arith.constant 0 : i32
    return %arg0, %c0_i32 : i32, i32
  }
  func.func @transform_1(%arg0: i32) -> (i32, i32) {
    %c0_i32 = arith.constant 0 : i32
    %c0_i32_0 = arith.constant 0 : i32
    %c0_i32_1 = arith.constant 0 : i32
    return %c0_i32, %c0_i32_0 : i32, i32
  }
  func.func @transform_2(%arg0: i32) -> (i32, i32) {
    %c0_i32 = arith.constant 0 : i32
    %c0_i32_0 = arith.constant 0 : i32
    %c0_i32_1 = arith.constant 0 : i32
    return %c0_i32, %c0_i32_0 : i32, i32
  }
  func.func @transform_3(%arg0: i32) -> (i32, i32) {
    %c0_i32 = arith.constant 0 : i32
    %c0_i32_0 = arith.constant 0 : i32
    return %arg0, %c0_i32 : i32, i32
  }
  func.func @transform_4(%arg0: i32) -> (i32, i32) {
    %c0_i32 = arith.constant 0 : i32
    %c0_i32_0 = arith.constant 0 : i32
    return %arg0, %c0_i32 : i32, i32
  }
}

module attributes {stable_mosaic.version = 11 : i64} {
  func.func @_matmul_bias_kernel(%arg0: i32, %arg1: memref<128x256xbf16, #tpu.memory_space<vmem>>, %arg2: memref<256x128xbf16, #tpu.memory_space<vmem>>, %arg3: memref<1x128xf32, #tpu.memory_space<vmem>>, %arg4: memref<128x128xf32, #tpu.memory_space<vmem>>) attributes {dimension_semantics = [#tpu.dimension_semantics<parallel>], iteration_bounds = array<i64: 1>, scalar_prefetch = 0 : i64, scratch_operands = 0 : i64, tpu.core_type = #tpu.core_type<tc>, window_params = [{transform_indices = @transform_0, window_bounds = array<i64: 128, 256>}, {pipeline_mode = #tpu.pipeline_mode<synchronous>, transform_indices = @transform_1, window_bounds = array<i64: 256, 128>}, {pipeline_mode = #tpu.pipeline_mode<synchronous>, transform_indices = @transform_2, window_bounds = array<i64: 1, 128>}, {transform_indices = @transform_3, window_bounds = array<i64: 128, 128>}]} {
    %c0 = arith.constant 0 : index
    %c0_0 = arith.constant 0 : index
    %0 = vector.load %arg1[%c0, %c0_0] : memref<128x256xbf16, #tpu.memory_space<vmem>>, vector<128x256xbf16>
    %c0_1 = arith.constant 0 : index
    %c0_2 = arith.constant 0 : index
    %1 = vector.load %arg2[%c0_1, %c0_2] : memref<256x128xbf16, #tpu.memory_space<vmem>>, vector<256x128xbf16>
    %cst = arith.constant dense<0.000000e+00> : vector<128x128xf32>
    %2 = tpu.matmul %0, %1, %cst {dimension_numbers = #tpu.dot_dimension_numbers<[1], [0], [0], [1], [0, 0, 1, 1], [], []>} : vector<128x256xbf16>, vector<256x128xbf16>, vector<128x128xf32> -> vector<128x128xf32>
    %c0_3 = arith.constant 0 : index
    %c0_4 = arith.constant 0 : index
    %3 = vector.load %arg3[%c0_3, %c0_4] : memref<1x128xf32, #tpu.memory_space<vmem>>, vector<1x128xf32>
    %4 = vector.broadcast %3 : vector<1x128xf32> to vector<128x128xf32>
    %5 = arith.addf %2, %4 : vector<128x128xf32>
    %cst_5 = arith.constant 0.000000e+00 : f32
    %6 = vector.broadcast %cst_5 : f32 to vector<128x128xf32>
    %7 = arith.maximumf %5, %6 : vector<128x128xf32>
    %c0_6 = arith.constant 0 : index
    %c0_7 = arith.constant 0 : index
    %8 = vector.load %arg4[%c0_6, %c0_7] : memref<128x128xf32, #tpu.memory_space<vmem>>, vector<128x128xf32>
    tpu.vector_store %arg4[%c0_6, %c0_7], %7 {strides = array<i32>} : memref<128x128xf32, #tpu.memory_space<vmem>>, vector<128x128xf32>,
    return
  }
  func.func @transform_0(%arg0: i32) -> (i32, i32) {
    %c0_i32 = arith.constant 0 : i32
    %c0_i32_0 = arith.constant 0 : i32
    return %arg0, %c0_i32 : i32, i32
  }
  func.func @transform_1(%arg0: i32) -> (i32, i32) {
    %c0_i32 = arith.constant 0 : i32
    %c0_i32_0 = arith.constant 0 : i32
    %c0_i32_1 = arith.constant 0 : i32
    return %c0_i32, %c0_i32_0 : i32, i32
  }
  func.func @transform_2(%arg0: i32) -> (i32, i32) {
    %c0_i32 = arith.constant 0 : i32
    %c0_i32_0 = arith.constant 0 : i32
    %c0_i32_1 = arith.constant 0 : i32
    return %c0_i32, %c0_i32_0 : i32, i32
  }
  func.func @transform_3(%arg0: i32) -> (i32, i32) {
    %c0_i32 = arith.constant 0 : i32
    %c0_i32_0 = arith.constant 0 : i32
    return %arg0, %c0_i32 : i32, i32
  }
}

module attributes {stable_mosaic.version = 11 : i64} {
  func.func @_matmul_bias_kernel(%arg0: i32, %arg1: memref<128x128xbf16, #tpu.memory_space<vmem>>, %arg2: memref<128x128xbf16, #tpu.memory_space<vmem>>, %arg3: memref<1x128xf32, #tpu.memory_space<vmem>>, %arg4: memref<128x128xf32, #tpu.memory_space<vmem>>) attributes {dimension_semantics = [#tpu.dimension_semantics<parallel>], iteration_bounds = array<i64: 1>, scalar_prefetch = 0 : i64, scratch_operands = 0 : i64, tpu.core_type = #tpu.core_type<tc>, window_params = [{transform_indices = @transform_0, window_bounds = array<i64: 128, 128>}, {pipeline_mode = #tpu.pipeline_mode<synchronous>, transform_indices = @transform_1, window_bounds = array<i64: 128, 128>}, {pipeline_mode = #tpu.pipeline_mode<synchronous>, transform_indices = @transform_2, window_bounds = array<i64: 1, 128>}, {transform_indices = @transform_3, window_bounds = array<i64: 128, 128>}]} {
    %c0 = arith.constant 0 : index
    %c0_0 = arith.constant 0 : index
    %0 = vector.load %arg1[%c0, %c0_0] : memref<128x128xbf16, #tpu.memory_space<vmem>>, vector<128x128xbf16>
    %c0_1 = arith.constant 0 : index
    %c0_2 = arith.constant 0 : index
    %1 = vector.load %arg2[%c0_1, %c0_2] : memref<128x128xbf16, #tpu.memory_space<vmem>>, vector<128x128xbf16>
    %cst = arith.constant dense<0.000000e+00> : vector<128x128xf32>
    %2 = tpu.matmul %0, %1, %cst {dimension_numbers = #tpu.dot_dimension_numbers<[1], [0], [0], [1], [0, 0, 1, 1], [], []>} : vector<128x128xbf16>, vector<128x128xbf16>, vector<128x128xf32> -> vector<128x128xf32>
    %c0_3 = arith.constant 0 : index
    %c0_4 = arith.constant 0 : index
    %3 = vector.load %arg3[%c0_3, %c0_4] : memref<1x128xf32, #tpu.memory_space<vmem>>, vector<1x128xf32>
    %4 = vector.broadcast %3 : vector<1x128xf32> to vector<128x128xf32>
    %5 = arith.addf %2, %4 : vector<128x128xf32>
    %c0_5 = arith.constant 0 : index
    %c0_6 = arith.constant 0 : index
    %6 = vector.load %arg4[%c0_5, %c0_6] : memref<128x128xf32, #tpu.memory_space<vmem>>, vector<128x128xf32>
    tpu.vector_store %arg4[%c0_5, %c0_6], %5 {strides = array<i32>} : memref<128x128xf32, #tpu.memory_space<vmem>>, vector<128x128xf32>,
    return
  }
  func.func @transform_0(%arg0: i32) -> (i32, i32) {
    %c0_i32 = arith.constant 0 : i32
    %c0_i32_0 = arith.constant 0 : i32
    return %arg0, %c0_i32 : i32, i32
  }
  func.func @transform_1(%arg0: i32) -> (i32, i32) {
    %c0_i32 = arith.constant 0 : i32
    %c0_i32_0 = arith.constant 0 : i32
    %c0_i32_1 = arith.constant 0 : i32
    return %c0_i32, %c0_i32_0 : i32, i32
  }
  func.func @transform_2(%arg0: i32) -> (i32, i32) {
    %c0_i32 = arith.constant 0 : i32
    %c0_i32_0 = arith.constant 0 : i32
    %c0_i32_1 = arith.constant 0 : i32
    return %c0_i32, %c0_i32_0 : i32, i32
  }
  func.func @transform_3(%arg0: i32) -> (i32, i32) {
    %c0_i32 = arith.constant 0 : i32
    %c0_i32_0 = arith.constant 0 : i32
    return %arg0, %c0_i32 : i32, i32
  }
}

module attributes {stable_mosaic.version = 11 : i64} {
  func.func @_matmul_bias_res_kernel(%arg0: i32, %arg1: memref<128x512xbf16, #tpu.memory_space<vmem>>, %arg2: memref<512x128xbf16, #tpu.memory_space<vmem>>, %arg3: memref<1x128xf32, #tpu.memory_space<vmem>>, %arg4: memref<128x128xf32, #tpu.memory_space<vmem>>, %arg5: memref<128x128xf32, #tpu.memory_space<vmem>>) attributes {dimension_semantics = [#tpu.dimension_semantics<parallel>], iteration_bounds = array<i64: 1>, scalar_prefetch = 0 : i64, scratch_operands = 0 : i64, tpu.core_type = #tpu.core_type<tc>, window_params = [{transform_indices = @transform_0, window_bounds = array<i64: 128, 512>}, {pipeline_mode = #tpu.pipeline_mode<synchronous>, transform_indices = @transform_1, window_bounds = array<i64: 512, 128>}, {pipeline_mode = #tpu.pipeline_mode<synchronous>, transform_indices = @transform_2, window_bounds = array<i64: 1, 128>}, {transform_indices = @transform_3, window_bounds = array<i64: 128, 128>}, {transform_indices = @transform_4, window_bounds = array<i64: 128, 128>}]} {
    %c0 = arith.constant 0 : index
    %c0_0 = arith.constant 0 : index
    %0 = vector.load %arg1[%c0, %c0_0] : memref<128x512xbf16, #tpu.memory_space<vmem>>, vector<128x512xbf16>
    %c0_1 = arith.constant 0 : index
    %c0_2 = arith.constant 0 : index
    %1 = vector.load %arg2[%c0_1, %c0_2] : memref<512x128xbf16, #tpu.memory_space<vmem>>, vector<512x128xbf16>
    %cst = arith.constant dense<0.000000e+00> : vector<128x128xf32>
    %2 = tpu.matmul %0, %1, %cst {dimension_numbers = #tpu.dot_dimension_numbers<[1], [0], [0], [1], [0, 0, 1, 1], [], []>} : vector<128x512xbf16>, vector<512x128xbf16>, vector<128x128xf32> -> vector<128x128xf32>
    %c0_3 = arith.constant 0 : index
    %c0_4 = arith.constant 0 : index
    %3 = vector.load %arg3[%c0_3, %c0_4] : memref<1x128xf32, #tpu.memory_space<vmem>>, vector<1x128xf32>
    %4 = vector.broadcast %3 : vector<1x128xf32> to vector<128x128xf32>
    %5 = arith.addf %2, %4 : vector<128x128xf32>
    %c0_5 = arith.constant 0 : index
    %c0_6 = arith.constant 0 : index
    %6 = vector.load %arg4[%c0_5, %c0_6] : memref<128x128xf32, #tpu.memory_space<vmem>>, vector<128x128xf32>
    %7 = arith.addf %5, %6 : vector<128x128xf32>
    %cst_7 = arith.constant 0.000000e+00 : f32
    %8 = vector.broadcast %cst_7 : f32 to vector<128x128xf32>
    %9 = arith.maximumf %7, %8 : vector<128x128xf32>
    %c0_8 = arith.constant 0 : index
    %c0_9 = arith.constant 0 : index
    %10 = vector.load %arg5[%c0_8, %c0_9] : memref<128x128xf32, #tpu.memory_space<vmem>>, vector<128x128xf32>
    tpu.vector_store %arg5[%c0_8, %c0_9], %9 {strides = array<i32>} : memref<128x128xf32, #tpu.memory_space<vmem>>, vector<128x128xf32>,
    return
  }
  func.func @transform_0(%arg0: i32) -> (i32, i32) {
    %c0_i32 = arith.constant 0 : i32
    %c0_i32_0 = arith.constant 0 : i32
    return %arg0, %c0_i32 : i32, i32
  }
  func.func @transform_1(%arg0: i32) -> (i32, i32) {
    %c0_i32 = arith.constant 0 : i32
    %c0_i32_0 = arith.constant 0 : i32
    %c0_i32_1 = arith.constant 0 : i32
    return %c0_i32, %c0_i32_0 : i32, i32
  }
  func.func @transform_2(%arg0: i32) -> (i32, i32) {
    %c0_i32 = arith.constant 0 : i32
    %c0_i32_0 = arith.constant 0 : i32
    %c0_i32_1 = arith.constant 0 : i32
    return %c0_i32, %c0_i32_0 : i32, i32
  }
  func.func @transform_3(%arg0: i32) -> (i32, i32) {
    %c0_i32 = arith.constant 0 : i32
    %c0_i32_0 = arith.constant 0 : i32
    return %arg0, %c0_i32 : i32, i32
  }
  func.func @transform_4(%arg0: i32) -> (i32, i32) {
    %c0_i32 = arith.constant 0 : i32
    %c0_i32_0 = arith.constant 0 : i32
    return %arg0, %c0_i32 : i32, i32
  }
}

module attributes {stable_mosaic.version = 11 : i64} {
  func.func @_matmul_bias_kernel(%arg0: i32, %arg1: memref<16x512xbf16, #tpu.memory_space<vmem>>, %arg2: memref<512x128xbf16, #tpu.memory_space<vmem>>, %arg3: memref<1x128xf32, #tpu.memory_space<vmem>>, %arg4: memref<16x128xf32, #tpu.memory_space<vmem>>) attributes {dimension_semantics = [#tpu.dimension_semantics<parallel>], iteration_bounds = array<i64: 1>, scalar_prefetch = 0 : i64, scratch_operands = 0 : i64, tpu.core_type = #tpu.core_type<tc>, window_params = [{transform_indices = @transform_0, window_bounds = array<i64: 16, 512>}, {pipeline_mode = #tpu.pipeline_mode<synchronous>, transform_indices = @transform_1, window_bounds = array<i64: 512, 128>}, {pipeline_mode = #tpu.pipeline_mode<synchronous>, transform_indices = @transform_2, window_bounds = array<i64: 1, 128>}, {transform_indices = @transform_3, window_bounds = array<i64: 16, 128>}]} {
    %c0 = arith.constant 0 : index
    %c0_0 = arith.constant 0 : index
    %0 = vector.load %arg1[%c0, %c0_0] : memref<16x512xbf16, #tpu.memory_space<vmem>>, vector<16x512xbf16>
    %c0_1 = arith.constant 0 : index
    %c0_2 = arith.constant 0 : index
    %1 = vector.load %arg2[%c0_1, %c0_2] : memref<512x128xbf16, #tpu.memory_space<vmem>>, vector<512x128xbf16>
    %cst = arith.constant dense<0.000000e+00> : vector<16x128xf32>
    %2 = tpu.matmul %0, %1, %cst {dimension_numbers = #tpu.dot_dimension_numbers<[1], [0], [0], [1], [0, 0, 1, 1], [], []>} : vector<16x512xbf16>, vector<512x128xbf16>, vector<16x128xf32> -> vector<16x128xf32>
    %c0_3 = arith.constant 0 : index
    %c0_4 = arith.constant 0 : index
    %3 = vector.load %arg3[%c0_3, %c0_4] : memref<1x128xf32, #tpu.memory_space<vmem>>, vector<1x128xf32>
    %4 = vector.broadcast %3 : vector<1x128xf32> to vector<16x128xf32>
    %5 = arith.addf %2, %4 : vector<16x128xf32>
    %cst_5 = arith.constant 0.000000e+00 : f32
    %6 = vector.broadcast %cst_5 : f32 to vector<16x128xf32>
    %7 = arith.maximumf %5, %6 : vector<16x128xf32>
    %c0_6 = arith.constant 0 : index
    %c0_7 = arith.constant 0 : index
    %8 = vector.load %arg4[%c0_6, %c0_7] : memref<16x128xf32, #tpu.memory_space<vmem>>, vector<16x128xf32>
    tpu.vector_store %arg4[%c0_6, %c0_7], %7 {strides = array<i32>} : memref<16x128xf32, #tpu.memory_space<vmem>>, vector<16x128xf32>,
    return
  }
  func.func @transform_0(%arg0: i32) -> (i32, i32) {
    %c0_i32 = arith.constant 0 : i32
    %c0_i32_0 = arith.constant 0 : i32
    return %arg0, %c0_i32 : i32, i32
  }
  func.func @transform_1(%arg0: i32) -> (i32, i32) {
    %c0_i32 = arith.constant 0 : i32
    %c0_i32_0 = arith.constant 0 : i32
    %c0_i32_1 = arith.constant 0 : i32
    return %c0_i32, %c0_i32_0 : i32, i32
  }
  func.func @transform_2(%arg0: i32) -> (i32, i32) {
    %c0_i32 = arith.constant 0 : i32
    %c0_i32_0 = arith.constant 0 : i32
    %c0_i32_1 = arith.constant 0 : i32
    return %c0_i32, %c0_i32_0 : i32, i32
  }
  func.func @transform_3(%arg0: i32) -> (i32, i32) {
    %c0_i32 = arith.constant 0 : i32
    %c0_i32_0 = arith.constant 0 : i32
    return %arg0, %c0_i32 : i32, i32
  }
}

module attributes {stable_mosaic.version = 11 : i64} {
  func.func @_matmul_bias_kernel(%arg0: i32, %arg1: memref<16x128xbf16, #tpu.memory_space<vmem>>, %arg2: memref<128x128xbf16, #tpu.memory_space<vmem>>, %arg3: memref<1x128xf32, #tpu.memory_space<vmem>>, %arg4: memref<16x128xf32, #tpu.memory_space<vmem>>) attributes {dimension_semantics = [#tpu.dimension_semantics<parallel>], iteration_bounds = array<i64: 1>, scalar_prefetch = 0 : i64, scratch_operands = 0 : i64, tpu.core_type = #tpu.core_type<tc>, window_params = [{transform_indices = @transform_0, window_bounds = array<i64: 16, 128>}, {pipeline_mode = #tpu.pipeline_mode<synchronous>, transform_indices = @transform_1, window_bounds = array<i64: 128, 128>}, {pipeline_mode = #tpu.pipeline_mode<synchronous>, transform_indices = @transform_2, window_bounds = array<i64: 1, 128>}, {transform_indices = @transform_3, window_bounds = array<i64: 16, 128>}]} {
    %c0 = arith.constant 0 : index
    %c0_0 = arith.constant 0 : index
    %0 = vector.load %arg1[%c0, %c0_0] : memref<16x128xbf16, #tpu.memory_space<vmem>>, vector<16x128xbf16>
    %c0_1 = arith.constant 0 : index
    %c0_2 = arith.constant 0 : index
    %1 = vector.load %arg2[%c0_1, %c0_2] : memref<128x128xbf16, #tpu.memory_space<vmem>>, vector<128x128xbf16>
    %cst = arith.constant dense<0.000000e+00> : vector<16x128xf32>
    %2 = tpu.matmul %0, %1, %cst {dimension_numbers = #tpu.dot_dimension_numbers<[1], [0], [0], [1], [0, 0, 1, 1], [], []>} : vector<16x128xbf16>, vector<128x128xbf16>, vector<16x128xf32> -> vector<16x128xf32>
    %c0_3 = arith.constant 0 : index
    %c0_4 = arith.constant 0 : index
    %3 = vector.load %arg3[%c0_3, %c0_4] : memref<1x128xf32, #tpu.memory_space<vmem>>, vector<1x128xf32>
    %4 = vector.broadcast %3 : vector<1x128xf32> to vector<16x128xf32>
    %5 = arith.addf %2, %4 : vector<16x128xf32>
    %c0_5 = arith.constant 0 : index
    %c0_6 = arith.constant 0 : index
    %6 = vector.load %arg4[%c0_5, %c0_6] : memref<16x128xf32, #tpu.memory_space<vmem>>, vector<16x128xf32>
    tpu.vector_store %arg4[%c0_5, %c0_6], %5 {strides = array<i32>} : memref<16x128xf32, #tpu.memory_space<vmem>>, vector<16x128xf32>,
    return
  }
  func.func @transform_0(%arg0: i32) -> (i32, i32) {
    %c0_i32 = arith.constant 0 : i32
    %c0_i32_0 = arith.constant 0 : i32
    return %arg0, %c0_i32 : i32, i32
  }
  func.func @transform_1(%arg0: i32) -> (i32, i32) {
    %c0_i32 = arith.constant 0 : i32
    %c0_i32_0 = arith.constant 0 : i32
    %c0_i32_1 = arith.constant 0 : i32
    return %c0_i32, %c0_i32_0 : i32, i32
  }
  func.func @transform_2(%arg0: i32) -> (i32, i32) {
    %c0_i32 = arith.constant 0 : i32
    %c0_i32_0 = arith.constant 0 : i32
    %c0_i32_1 = arith.constant 0 : i32
    return %c0_i32, %c0_i32_0 : i32, i32
  }
  func.func @transform_3(%arg0: i32) -> (i32, i32) {
    %c0_i32 = arith.constant 0 : i32
    %c0_i32_0 = arith.constant 0 : i32
    return %arg0, %c0_i32 : i32, i32
  }
}

module attributes {stable_mosaic.version = 11 : i64} {
  func.func @_matmul_bias_res_kernel(%arg0: i32, %arg1: memref<16x896xbf16, #tpu.memory_space<vmem>>, %arg2: memref<896x128xbf16, #tpu.memory_space<vmem>>, %arg3: memref<1x128xf32, #tpu.memory_space<vmem>>, %arg4: memref<16x128xf32, #tpu.memory_space<vmem>>, %arg5: memref<16x128xf32, #tpu.memory_space<vmem>>) attributes {dimension_semantics = [#tpu.dimension_semantics<parallel>], iteration_bounds = array<i64: 1>, scalar_prefetch = 0 : i64, scratch_operands = 0 : i64, tpu.core_type = #tpu.core_type<tc>, window_params = [{transform_indices = @transform_0, window_bounds = array<i64: 16, 896>}, {pipeline_mode = #tpu.pipeline_mode<synchronous>, transform_indices = @transform_1, window_bounds = array<i64: 896, 128>}, {pipeline_mode = #tpu.pipeline_mode<synchronous>, transform_indices = @transform_2, window_bounds = array<i64: 1, 128>}, {transform_indices = @transform_3, window_bounds = array<i64: 16, 128>}, {transform_indices = @transform_4, window_bounds = array<i64: 16, 128>}]} {
    %c0 = arith.constant 0 : index
    %c0_0 = arith.constant 0 : index
    %0 = vector.load %arg1[%c0, %c0_0] : memref<16x896xbf16, #tpu.memory_space<vmem>>, vector<16x896xbf16>
    %c0_1 = arith.constant 0 : index
    %c0_2 = arith.constant 0 : index
    %1 = vector.load %arg2[%c0_1, %c0_2] : memref<896x128xbf16, #tpu.memory_space<vmem>>, vector<896x128xbf16>
    %cst = arith.constant dense<0.000000e+00> : vector<16x128xf32>
    %2 = tpu.matmul %0, %1, %cst {dimension_numbers = #tpu.dot_dimension_numbers<[1], [0], [0], [1], [0, 0, 1, 1], [], []>} : vector<16x896xbf16>, vector<896x128xbf16>, vector<16x128xf32> -> vector<16x128xf32>
    %c0_3 = arith.constant 0 : index
    %c0_4 = arith.constant 0 : index
    %3 = vector.load %arg3[%c0_3, %c0_4] : memref<1x128xf32, #tpu.memory_space<vmem>>, vector<1x128xf32>
    %4 = vector.broadcast %3 : vector<1x128xf32> to vector<16x128xf32>
    %5 = arith.addf %2, %4 : vector<16x128xf32>
    %c0_5 = arith.constant 0 : index
    %c0_6 = arith.constant 0 : index
    %6 = vector.load %arg4[%c0_5, %c0_6] : memref<16x128xf32, #tpu.memory_space<vmem>>, vector<16x128xf32>
    %7 = arith.addf %5, %6 : vector<16x128xf32>
    %cst_7 = arith.constant 0.000000e+00 : f32
    %8 = vector.broadcast %cst_7 : f32 to vector<16x128xf32>
    %9 = arith.maximumf %7, %8 : vector<16x128xf32>
    %c0_8 = arith.constant 0 : index
    %c0_9 = arith.constant 0 : index
    %10 = vector.load %arg5[%c0_8, %c0_9] : memref<16x128xf32, #tpu.memory_space<vmem>>, vector<16x128xf32>
    tpu.vector_store %arg5[%c0_8, %c0_9], %9 {strides = array<i32>} : memref<16x128xf32, #tpu.memory_space<vmem>>, vector<16x128xf32>,
    return
  }
  func.func @transform_0(%arg0: i32) -> (i32, i32) {
    %c0_i32 = arith.constant 0 : i32
    %c0_i32_0 = arith.constant 0 : i32
    return %arg0, %c0_i32 : i32, i32
  }
  func.func @transform_1(%arg0: i32) -> (i32, i32) {
    %c0_i32 = arith.constant 0 : i32
    %c0_i32_0 = arith.constant 0 : i32
    %c0_i32_1 = arith.constant 0 : i32
    return %c0_i32, %c0_i32_0 : i32, i32
  }
  func.func @transform_2(%arg0: i32) -> (i32, i32) {
    %c0_i32 = arith.constant 0 : i32
    %c0_i32_0 = arith.constant 0 : i32
    %c0_i32_1 = arith.constant 0 : i32
    return %c0_i32, %c0_i32_0 : i32, i32
  }
  func.func @transform_3(%arg0: i32) -> (i32, i32) {
    %c0_i32 = arith.constant 0 : i32
    %c0_i32_0 = arith.constant 0 : i32
    return %arg0, %c0_i32 : i32, i32
  }
  func.func @transform_4(%arg0: i32) -> (i32, i32) {
    %c0_i32 = arith.constant 0 : i32
    %c0_i32_0 = arith.constant 0 : i32
    return %arg0, %c0_i32 : i32, i32
  }
}

module attributes {stable_mosaic.version = 11 : i64} {
  func.func @_matmul_bias_kernel(%arg0: i32, %arg1: memref<2x896xbf16, #tpu.memory_space<vmem>>, %arg2: memref<896x128xbf16, #tpu.memory_space<vmem>>, %arg3: memref<1x128xf32, #tpu.memory_space<vmem>>, %arg4: memref<2x128xf32, #tpu.memory_space<vmem>>) attributes {dimension_semantics = [#tpu.dimension_semantics<parallel>], iteration_bounds = array<i64: 1>, scalar_prefetch = 0 : i64, scratch_operands = 0 : i64, tpu.core_type = #tpu.core_type<tc>, window_params = [{transform_indices = @transform_0, window_bounds = array<i64: 2, 896>}, {pipeline_mode = #tpu.pipeline_mode<synchronous>, transform_indices = @transform_1, window_bounds = array<i64: 896, 128>}, {pipeline_mode = #tpu.pipeline_mode<synchronous>, transform_indices = @transform_2, window_bounds = array<i64: 1, 128>}, {transform_indices = @transform_3, window_bounds = array<i64: 2, 128>}]} {
    %c0 = arith.constant 0 : index
    %c0_0 = arith.constant 0 : index
    %0 = vector.load %arg1[%c0, %c0_0] : memref<2x896xbf16, #tpu.memory_space<vmem>>, vector<2x896xbf16>
    %c0_1 = arith.constant 0 : index
    %c0_2 = arith.constant 0 : index
    %1 = vector.load %arg2[%c0_1, %c0_2] : memref<896x128xbf16, #tpu.memory_space<vmem>>, vector<896x128xbf16>
    %cst = arith.constant dense<0.000000e+00> : vector<2x128xf32>
    %2 = tpu.matmul %0, %1, %cst {dimension_numbers = #tpu.dot_dimension_numbers<[1], [0], [0], [1], [0, 0, 1, 1], [], []>} : vector<2x896xbf16>, vector<896x128xbf16>, vector<2x128xf32> -> vector<2x128xf32>
    %c0_3 = arith.constant 0 : index
    %c0_4 = arith.constant 0 : index
    %3 = vector.load %arg3[%c0_3, %c0_4] : memref<1x128xf32, #tpu.memory_space<vmem>>, vector<1x128xf32>
    %4 = vector.broadcast %3 : vector<1x128xf32> to vector<2x128xf32>
    %5 = arith.addf %2, %4 : vector<2x128xf32>
    %cst_5 = arith.constant 0.000000e+00 : f32
    %6 = vector.broadcast %cst_5 : f32 to vector<2x128xf32>
    %7 = arith.maximumf %5, %6 : vector<2x128xf32>
    %c0_6 = arith.constant 0 : index
    %c0_7 = arith.constant 0 : index
    %8 = vector.load %arg4[%c0_6, %c0_7] : memref<2x128xf32, #tpu.memory_space<vmem>>, vector<2x128xf32>
    tpu.vector_store %arg4[%c0_6, %c0_7], %7 {strides = array<i32>} : memref<2x128xf32, #tpu.memory_space<vmem>>, vector<2x128xf32>,
    return
  }
  func.func @transform_0(%arg0: i32) -> (i32, i32) {
    %c0_i32 = arith.constant 0 : i32
    %c0_i32_0 = arith.constant 0 : i32
    return %arg0, %c0_i32 : i32, i32
  }
  func.func @transform_1(%arg0: i32) -> (i32, i32) {
    %c0_i32 = arith.constant 0 : i32
    %c0_i32_0 = arith.constant 0 : i32
    %c0_i32_1 = arith.constant 0 : i32
    return %c0_i32, %c0_i32_0 : i32, i32
  }
  func.func @transform_2(%arg0: i32) -> (i32, i32) {
    %c0_i32 = arith.constant 0 : i32
    %c0_i32_0 = arith.constant 0 : i32
    %c0_i32_1 = arith.constant 0 : i32
    return %c0_i32, %c0_i32_0 : i32, i32
  }
  func.func @transform_3(%arg0: i32) -> (i32, i32) {
    %c0_i32 = arith.constant 0 : i32
    %c0_i32_0 = arith.constant 0 : i32
    return %arg0, %c0_i32 : i32, i32
  }
}

module attributes {stable_mosaic.version = 11 : i64} {
  func.func @_matmul_bias_kernel(%arg0: i32, %arg1: memref<2x128xbf16, #tpu.memory_space<vmem>>, %arg2: memref<128x128xbf16, #tpu.memory_space<vmem>>, %arg3: memref<1x128xf32, #tpu.memory_space<vmem>>, %arg4: memref<2x128xf32, #tpu.memory_space<vmem>>) attributes {dimension_semantics = [#tpu.dimension_semantics<parallel>], iteration_bounds = array<i64: 1>, scalar_prefetch = 0 : i64, scratch_operands = 0 : i64, tpu.core_type = #tpu.core_type<tc>, window_params = [{transform_indices = @transform_0, window_bounds = array<i64: 2, 128>}, {pipeline_mode = #tpu.pipeline_mode<synchronous>, transform_indices = @transform_1, window_bounds = array<i64: 128, 128>}, {pipeline_mode = #tpu.pipeline_mode<synchronous>, transform_indices = @transform_2, window_bounds = array<i64: 1, 128>}, {transform_indices = @transform_3, window_bounds = array<i64: 2, 128>}]} {
    %c0 = arith.constant 0 : index
    %c0_0 = arith.constant 0 : index
    %0 = vector.load %arg1[%c0, %c0_0] : memref<2x128xbf16, #tpu.memory_space<vmem>>, vector<2x128xbf16>
    %c0_1 = arith.constant 0 : index
    %c0_2 = arith.constant 0 : index
    %1 = vector.load %arg2[%c0_1, %c0_2] : memref<128x128xbf16, #tpu.memory_space<vmem>>, vector<128x128xbf16>
    %cst = arith.constant dense<0.000000e+00> : vector<2x128xf32>
    %2 = tpu.matmul %0, %1, %cst {dimension_numbers = #tpu.dot_dimension_numbers<[1], [0], [0], [1], [0, 0, 1, 1], [], []>} : vector<2x128xbf16>, vector<128x128xbf16>, vector<2x128xf32> -> vector<2x128xf32>
    %c0_3 = arith.constant 0 : index
    %c0_4 = arith.constant 0 : index
    %3 = vector.load %arg3[%c0_3, %c0_4] : memref<1x128xf32, #tpu.memory_space<vmem>>, vector<1x128xf32>
    %4 = vector.broadcast %3 : vector<1x128xf32> to vector<2x128xf32>
    %5 = arith.addf %2, %4 : vector<2x128xf32>
    %c0_5 = arith.constant 0 : index
    %c0_6 = arith.constant 0 : index
    %6 = vector.load %arg4[%c0_5, %c0_6] : memref<2x128xf32, #tpu.memory_space<vmem>>, vector<2x128xf32>
    tpu.vector_store %arg4[%c0_5, %c0_6], %5 {strides = array<i32>} : memref<2x128xf32, #tpu.memory_space<vmem>>, vector<2x128xf32>,
    return
  }
  func.func @transform_0(%arg0: i32) -> (i32, i32) {
    %c0_i32 = arith.constant 0 : i32
    %c0_i32_0 = arith.constant 0 : i32
    return %arg0, %c0_i32 : i32, i32
  }
  func.func @transform_1(%arg0: i32) -> (i32, i32) {
    %c0_i32 = arith.constant 0 : i32
    %c0_i32_0 = arith.constant 0 : i32
    %c0_i32_1 = arith.constant 0 : i32
    return %c0_i32, %c0_i32_0 : i32, i32
  }
  func.func @transform_2(%arg0: i32) -> (i32, i32) {
    %c0_i32 = arith.constant 0 : i32
    %c0_i32_0 = arith.constant 0 : i32
    %c0_i32_1 = arith.constant 0 : i32
    return %c0_i32, %c0_i32_0 : i32, i32
  }
  func.func @transform_3(%arg0: i32) -> (i32, i32) {
    %c0_i32 = arith.constant 0 : i32
    %c0_i32_0 = arith.constant 0 : i32
    return %arg0, %c0_i32 : i32, i32
  }
}

module attributes {stable_mosaic.version = 11 : i64} {
  func.func @_matmul_bias_res_kernel(%arg0: i32, %arg1: memref<2x1792xbf16, #tpu.memory_space<vmem>>, %arg2: memref<1792x128xbf16, #tpu.memory_space<vmem>>, %arg3: memref<1x128xf32, #tpu.memory_space<vmem>>, %arg4: memref<2x128xf32, #tpu.memory_space<vmem>>, %arg5: memref<2x128xf32, #tpu.memory_space<vmem>>) attributes {dimension_semantics = [#tpu.dimension_semantics<parallel>], iteration_bounds = array<i64: 1>, scalar_prefetch = 0 : i64, scratch_operands = 0 : i64, tpu.core_type = #tpu.core_type<tc>, window_params = [{transform_indices = @transform_0, window_bounds = array<i64: 2, 1792>}, {pipeline_mode = #tpu.pipeline_mode<synchronous>, transform_indices = @transform_1, window_bounds = array<i64: 1792, 128>}, {pipeline_mode = #tpu.pipeline_mode<synchronous>, transform_indices = @transform_2, window_bounds = array<i64: 1, 128>}, {transform_indices = @transform_3, window_bounds = array<i64: 2, 128>}, {transform_indices = @transform_4, window_bounds = array<i64: 2, 128>}]} {
    %c0 = arith.constant 0 : index
    %c0_0 = arith.constant 0 : index
    %0 = vector.load %arg1[%c0, %c0_0] : memref<2x1792xbf16, #tpu.memory_space<vmem>>, vector<2x1792xbf16>
    %c0_1 = arith.constant 0 : index
    %c0_2 = arith.constant 0 : index
    %1 = vector.load %arg2[%c0_1, %c0_2] : memref<1792x128xbf16, #tpu.memory_space<vmem>>, vector<1792x128xbf16>
    %cst = arith.constant dense<0.000000e+00> : vector<2x128xf32>
    %2 = tpu.matmul %0, %1, %cst {dimension_numbers = #tpu.dot_dimension_numbers<[1], [0], [0], [1], [0, 0, 1, 1], [], []>} : vector<2x1792xbf16>, vector<1792x128xbf16>, vector<2x128xf32> -> vector<2x128xf32>
    %c0_3 = arith.constant 0 : index
    %c0_4 = arith.constant 0 : index
    %3 = vector.load %arg3[%c0_3, %c0_4] : memref<1x128xf32, #tpu.memory_space<vmem>>, vector<1x128xf32>
    %4 = vector.broadcast %3 : vector<1x128xf32> to vector<2x128xf32>
    %5 = arith.addf %2, %4 : vector<2x128xf32>
    %c0_5 = arith.constant 0 : index
    %c0_6 = arith.constant 0 : index
    %6 = vector.load %arg4[%c0_5, %c0_6] : memref<2x128xf32, #tpu.memory_space<vmem>>, vector<2x128xf32>
    %7 = arith.addf %5, %6 : vector<2x128xf32>
    %cst_7 = arith.constant 0.000000e+00 : f32
    %8 = vector.broadcast %cst_7 : f32 to vector<2x128xf32>
    %9 = arith.maximumf %7, %8 : vector<2x128xf32>
    %c0_8 = arith.constant 0 : index
    %c0_9 = arith.constant 0 : index
    %10 = vector.load %arg5[%c0_8, %c0_9] : memref<2x128xf32, #tpu.memory_space<vmem>>, vector<2x128xf32>
    tpu.vector_store %arg5[%c0_8, %c0_9], %9 {strides = array<i32>} : memref<2x128xf32, #tpu.memory_space<vmem>>, vector<2x128xf32>,
    return
  }
  func.func @transform_0(%arg0: i32) -> (i32, i32) {
    %c0_i32 = arith.constant 0 : i32
    %c0_i32_0 = arith.constant 0 : i32
    return %arg0, %c0_i32 : i32, i32
  }
  func.func @transform_1(%arg0: i32) -> (i32, i32) {
    %c0_i32 = arith.constant 0 : i32
    %c0_i32_0 = arith.constant 0 : i32
    %c0_i32_1 = arith.constant 0 : i32
    return %c0_i32, %c0_i32_0 : i32, i32
  }
  func.func @transform_2(%arg0: i32) -> (i32, i32) {
    %c0_i32 = arith.constant 0 : i32
    %c0_i32_0 = arith.constant 0 : i32
    %c0_i32_1 = arith.constant 0 : i32
    return %c0_i32, %c0_i32_0 : i32, i32
  }
  func.func @transform_3(%arg0: i32) -> (i32, i32) {
    %c0_i32 = arith.constant 0 : i32
    %c0_i32_0 = arith.constant 0 : i32
    return %arg0, %c0_i32 : i32, i32
  }
  func.func @transform_4(%arg0: i32) -> (i32, i32) {
    %c0_i32 = arith.constant 0 : i32
    %c0_i32_0 = arith.constant 0 : i32
    return %arg0, %c0_i32 : i32, i32
  }
}

</mosaic_0001>

<llo_original>
// kernel: resnet_forward.12
$region0: #{resnet_forward.12}
  #allocation0 [shape = 'u32[]', space=smem, size = 0x4, offset = 0x4, fixed_abs, tag = 'smem constant byte address 0x4 - core index']
  #allocation1 [shape = 'u32[144,128]{1,0:T(1,128)}', space=vmem, size = 0x12000, scoped, tag = 'internal scratch']
  %s0 = inlined_call_operand.vmem [shape: bf16[8192,384], index: 0, kind: input, shape index: {}]
  %s1 = inlined_call_operand.vmem [shape: bf16[384,128], index: 1, kind: input, shape index: {}]
  %s2 = inlined_call_operand.vmem [shape: f32[1,128], index: 2, kind: input, shape index: {}]
  %s3 = inlined_call_operand.vmem [shape: f32[8192,128], index: 3, kind: output, shape index: {}]
  %s4 = sld [smem:[#allocation0]]
  $region45: #{resnet_forward.12} parent=0
    _
  %s6 = ssub.s32 1, %s4
  %s7 = scalar_select 0, %s6, %s4
  loop: start=0, step=1, limit=18
  $region2: #{resnet_forward.12} parent=0 // loop_pre_header
    _
  $region3: #{resnet_forward.12} parent=0 // loop_header
    %s9 = sphi 0, %s13
    %p10 = scmp.ge.s32.totalorder %s9, 18
    %s19 = sphi 0, %s21
    %s22 = sphi 0, %s19
    %s23 = sphi 0, %s22
    %s39 = sphi 0, %s23
    %s43 = sphi 0, %s43
    %s45 = sphi 0, %s43
    %s46 = sphi 0, %s45
    %s60 = sphi 0, %s46
    %s64 = sphi 0, %s64
    %s66 = sphi 0, %s64
    %s67 = sphi 0, %s66
    %s81 = sphi 0, %s67
    %s87 = sphi 0, %s89
    %s90 = sphi 0, %s87
    %s91 = sphi 0, %s90
    %s107 = sphi 0, %s91
  $region4: #{resnet_forward.12} parent=0 // loop_header_branch
    %12 = sbr.rel (%p10) target = $region8
  $region5: #{resnet_forward.12} parent=0 // loop_body
    %s14 = ssub.s32 %s9, 1
    %s15 = ssub.s32 %s9, 2
    %s16 = sadd.s32 %s9, 1
    %s17 = ssub.s32 %s9, %s16
    %p18 = scmp.eq.s32.totalorder %s17, 0
    %s20 = sadd.s32 %s19, 1
    %s21 = scalar_select %p18, %s19, %s20
    %p24 = pneg %p18
    %p25 = scmp.eq.s32.totalorder %s9, 15
    %p26 = por %p24, %p25
    %p27 = scmp.ne.s32.totalorder %s19, %s22
    %p28 = scmp.eq.s32.totalorder %s9, 0
    %p29 = por %p27, %p28
    %p30 = scmp.ne.s32.totalorder %s19, %s22
    %p31 = scmp.eq.s32.totalorder %s14, 15
    %p32 = por %p30, %p31
    %p33 = scmp.ne.s32.totalorder %s22, %s23
    %p34 = scmp.eq.s32.totalorder %s14, 0
    %p35 = por %p33, %p34
    %p36 = scmp.ne.s32.totalorder %s22, %s23
    %p37 = scmp.eq.s32.totalorder %s15, 15
    %p38 = por %p36, %p37
    %p40 = scmp.ne.s32.totalorder %s23, %s39
    %p41 = scmp.eq.s32.totalorder %s15, 0
    %p42 = por %p40, %p41
    %s44 = sadd.s32 %s43, 1
    %p47 = scmp.eq.s32.totalorder %s9, 15
    %p48 = scmp.ne.s32.totalorder %s43, %s45
    %p49 = scmp.eq.s32.totalorder %s9, 0
    %p50 = por %p48, %p49
    %p51 = scmp.ne.s32.totalorder %s43, %s45
    %p52 = scmp.eq.s32.totalorder %s14, 15
    %p53 = por %p51, %p52
    %p54 = scmp.ne.s32.totalorder %s45, %s46
    %p55 = scmp.eq.s32.totalorder %s14, 0
    %p56 = por %p54, %p55
    %p57 = scmp.ne.s32.totalorder %s45, %s46
    %p58 = scmp.eq.s32.totalorder %s15, 15
    %p59 = por %p57, %p58
    %p61 = scmp.ne.s32.totalorder %s46, %s60
    %p62 = scmp.eq.s32.totalorder %s15, 0
    %p63 = por %p61, %p62
    %s65 = sadd.s32 %s64, 1
    %p68 = scmp.eq.s32.totalorder %s9, 15
    %p69 = scmp.ne.s32.totalorder %s64, %s66
    %p70 = scmp.eq.s32.totalorder %s9, 0
    %p71 = por %p69, %p70
    %p72 = scmp.ne.s32.totalorder %s64, %s66
    %p73 = scmp.eq.s32.totalorder %s14, 15
    %p74 = por %p72, %p73
    %p75 = scmp.ne.s32.totalorder %s66, %s67
    %p76 = scmp.eq.s32.totalorder %s14, 0
    %p77 = por %p75, %p76
    %p78 = scmp.ne.s32.totalorder %s66, %s67
    %p79 = scmp.eq.s32.totalorder %s15, 15
    %p80 = por %p78, %p79
    %p82 = scmp.ne.s32.totalorder %s67, %s81
    %p83 = scmp.eq.s32.totalorder %s15, 0
    %p84 = por %p82, %p83
    %s85 = ssub.s32 %s9, %s16
    %p86 = scmp.eq.s32.totalorder %s85, 0
    %s88 = sadd.s32 %s87, 1
    %s89 = scalar_select %p86, %s87, %s88
    %p92 = pneg %p86
    %p93 = scmp.eq.s32.totalorder %s9, 15
    %p94 = por %p92, %p93
    %p95 = scmp.ne.s32.totalorder %s87, %s90
    %p96 = scmp.eq.s32.totalorder %s9, 0
    %p97 = por %p95, %p96
    %p98 = scmp.ne.s32.totalorder %s87, %s90
    %p99 = scmp.eq.s32.totalorder %s14, 15
    %p100 = por %p98, %p99
    %p101 = scmp.ne.s32.totalorder %s90, %s91
    %p102 = scmp.eq.s32.totalorder %s14, 0
    %p103 = por %p101, %p102
    %p104 = scmp.ne.s32.totalorder %s90, %s91
    %p105 = scmp.eq.s32.totalorder %s15, 15
    %p106 = por %p104, %p105
    %p108 = scmp.ne.s32.totalorder %s91, %s107
    %p109 = scmp.eq.s32.totalorder %s15, 0
    %p110 = por %p108, %p109
    %p111 = scmp.le.s32.totalorder 1, %s9
    %p112 = scmp.lt.s32.totalorder %s9, 17
    %p113 = pnand %p111, %p112
    %p114 = pneg %p113
    // Predicated region
    $region9: #{resnet_forward.12} parent=5 // pred_check
      _
    $region10: #{resnet_forward.12} parent=5 // pred_check_branch
      %116 = sbr.rel (%p113) target = $region12
    $region11: #{resnet_forward.12} parent=5 // pred_region
      %s117 = ssub.s32 %s9, 1
      // Predicated region
      $region13: #{resnet_forward.12} parent=11 // pred_check
        %p118 = pneg %p56
      $region14: #{resnet_forward.12} parent=11 // pred_check_branch
        %120 = sbr.rel (%p118) target = $region16
      $region15: #{resnet_forward.12} parent=11 // pred_region
        _
      $region16: #{resnet_forward.12} parent=11 // pred_fallthru
        _
      // Predicated region
      $region17: #{resnet_forward.12} parent=11 // pred_check
        %p121 = pneg %p77
      $region18: #{resnet_forward.12} parent=11 // pred_check_branch
        %123 = sbr.rel (%p121) target = $region20
      $region19: #{resnet_forward.12} parent=11 // pred_region
        _
      $region20: #{resnet_forward.12} parent=11 // pred_fallthru
        _
    $region12: #{resnet_forward.12} parent=5 // pred_fallthru
      _
    %p124 = scmp.lt.s32.totalorder %s9, 16
    // Predicated region
    $region21: #{resnet_forward.12} parent=5 // pred_check
      %p125 = pneg %p124
    $region22: #{resnet_forward.12} parent=5 // pred_check_branch
      %127 = sbr.rel (%p125) target = $region24
    $region23: #{resnet_forward.12} parent=5 // pred_region
      // Predicated region
      $region25: #{resnet_forward.12} parent=23 // pred_check
        %p128 = pneg %p29
      $region26: #{resnet_forward.12} parent=23 // pred_check_branch
        %130 = sbr.rel (%p128) target = $region28
      $region27: #{resnet_forward.12} parent=23 // pred_region
        %s131 = smul.u32 64, %s9
        %p132 = scmp.lt.s32.totalorder %s131, 1023
        %s133 = scalar_select %p132, %s131, 1023
        %s134 = smul.addr %s133, 3
        %s135 = smul.addr %s134, 4
        %s136 = scalar_lea.vmem %s0, %s135
        %s137 = smul.u32 64, %s9
      $region28: #{resnet_forward.12} parent=23 // pred_fallthru
        _
    $region24: #{resnet_forward.12} parent=5 // pred_fallthru
      _
    %p138 = scmp.le.s32.totalorder 1, %s9
    %p139 = scmp.lt.s32.totalorder %s9, 17
    %p140 = pnand %p138, %p139
    %p141 = pneg %p140
    // Predicated region
    $region29: #{resnet_forward.12} parent=5 // pred_check
      _
    $region30: #{resnet_forward.12} parent=5 // pred_check_branch
      %143 = sbr.rel (%p140) target = $region32
    $region31: #{resnet_forward.12} parent=5 // pred_region
      %s144 = ssub.s32 %s9, 1
      %s145 = smul.u32 64, %s14
      %p146 = scmp.lt.s32.totalorder %s145, 1023
      %s147 = scalar_select %p146, %s145, 1023
      %s148 = smul.addr %s147, 3
      %s149 = smul.addr %s148, 4
      %s150 = scalar_lea.vmem %s0, %s149
      %p151 = pneg %p35
      %p152 = pneg %p32
      %p153 = pneg %p56
      %p154 = pneg %p53
      %p155 = pneg %p77
      %p156 = pneg %p74
      %p157 = pneg %p103
      %p158 = pneg %p100
      %s159 = smul.u32 64, %s14
      %p160 = scmp.lt.s32.totalorder %s159, 1023
      %s161 = scalar_select %p160, %s159, 1023
      %s162 = smul.addr %s161, 8
      %s163 = scalar_lea.vmem %s3, %s162
      %s164 = smul.u32 64, %s14
      %p165 = scmp.lt.s32.totalorder %s164, 1023
      %s166 = scalar_select %p165, %s164, 1023
      %s167 = smul.addr %s166, 3
      %s168 = smul.addr %s167, 4
      %s169 = scalar_lea.vmem %s0, %s168
      %s170 = smul.u32 64, %s14
      %s171 = smul.u32 64, %s14
      %p172 = scmp.lt.s32.totalorder %s171, 1023
      %s173 = scalar_select %p172, %s171, 1023
      %s174 = smul.addr %s173, 8
      %s175 = scalar_lea.vmem %s3, %s174
      %s176 = smul.u32 64, %s14
      %v178 = vld [vmem:[%s169] sm:$0xff]
      %v179 = vld [vmem:[%s169 + $0x8] sm:$0xf]
      %v180 = vld [vmem:[%s169 + $0xc] sm:$0xff]
      %v181 = vld [vmem:[%s169 + $0x14] sm:$0xf]
      %v182 = vld [vmem:[%s169 + $0x18] sm:$0xff]
      %v183 = vld [vmem:[%s169 + $0x20] sm:$0xf]
      %v184 = vld [vmem:[%s169 + $0x24] sm:$0xff]
      %v185 = vld [vmem:[%s169 + $0x2c] sm:$0xf]
      %v186 = vld [vmem:[%s169 + $0x30] sm:$0xff]
      %v187 = vld [vmem:[%s169 + $0x38] sm:$0xf]
      %v188 = vld [vmem:[%s169 + $0x3c] sm:$0xff]
      %v189 = vld [vmem:[%s169 + $0x44] sm:$0xf]
      %v190 = vld [vmem:[%s169 + $0x48] sm:$0xff]
      %v191 = vld [vmem:[%s169 + $0x50] sm:$0xf]
      %v192 = vld [vmem:[%s169 + $0x54] sm:$0xff]
      %v193 = vld [vmem:[%s169 + $0x5c] sm:$0xf]
      %v194 = vld [vmem:[%s169 + $0x60] sm:$0xff]
      %v195 = vld [vmem:[%s169 + $0x68] sm:$0xf]
      %v196 = vld [vmem:[%s169 + $0x6c] sm:$0xff]
      %v197 = vld [vmem:[%s169 + $0x74] sm:$0xf]
      %v198 = vld [vmem:[%s169 + $0x78] sm:$0xff]
      %v199 = vld [vmem:[%s169 + $0x80] sm:$0xf]
      %v200 = vld [vmem:[%s169 + $0x84] sm:$0xff]
      %v201 = vld [vmem:[%s169 + $0x8c] sm:$0xf]
      %v202 = vld [vmem:[%s169 + $0x90] sm:$0xff]
      %v203 = vld [vmem:[%s169 + $0x98] sm:$0xf]
      %v204 = vld [vmem:[%s169 + $0x9c] sm:$0xff]
      %v205 = vld [vmem:[%s169 + $0xa4] sm:$0xf]
      %v206 = vld [vmem:[%s169 + $0xa8] sm:$0xff]
      %v207 = vld [vmem:[%s169 + $0xb0] sm:$0xf]
      %v208 = vld [vmem:[%s169 + $0xb4] sm:$0xff]
      %v209 = vld [vmem:[%s169 + $0xbc] sm:$0xf]
      %v210 = vld [vmem:[%s169 + $0xc0] sm:$0xff]
      %v211 = vld [vmem:[%s169 + $0xc8] sm:$0xf]
      %v212 = vld [vmem:[%s169 + $0xcc] sm:$0xff]
      %v213 = vld [vmem:[%s169 + $0xd4] sm:$0xf]
      %v214 = vld [vmem:[%s169 + $0xd8] sm:$0xff]
      %v215 = vld [vmem:[%s169 + $0xe0] sm:$0xf]
      %v216 = vld [vmem:[%s169 + $0xe4] sm:$0xff]
      %v217 = vld [vmem:[%s169 + $0xec] sm:$0xf]
      %v218 = vld [vmem:[%s169 + $0xf0] sm:$0xff]
      %v219 = vld [vmem:[%s169 + $0xf8] sm:$0xf]
      %v220 = vld [vmem:[%s169 + $0xfc] sm:$0xff]
      %v221 = vld [vmem:[%s169 + $0x104] sm:$0xf]
      %v222 = vld [vmem:[%s169 + $0x108] sm:$0xff]
      %v223 = vld [vmem:[%s169 + $0x110] sm:$0xf]
      %v224 = vld [vmem:[%s169 + $0x114] sm:$0xff]
      %v225 = vld [vmem:[%s169 + $0x11c] sm:$0xf]
      %v226 = vld [vmem:[%s169 + $0x120] sm:$0xff]
      %v227 = vld [vmem:[%s169 + $0x128] sm:$0xf]
      %v228 = vld [vmem:[%s169 + $0x12c] sm:$0xff]
      %v229 = vld [vmem:[%s169 + $0x134] sm:$0xf]
      %v230 = vld [vmem:[%s169 + $0x138] sm:$0xff]
      %v231 = vld [vmem:[%s169 + $0x140] sm:$0xf]
      %v232 = vld [vmem:[%s169 + $0x144] sm:$0xff]
      %v233 = vld [vmem:[%s169 + $0x14c] sm:$0xf]
      %v234 = vld [vmem:[%s169 + $0x150] sm:$0xff]
      %v235 = vld [vmem:[%s169 + $0x158] sm:$0xf]
      %v236 = vld [vmem:[%s169 + $0x15c] sm:$0xff]
      %v237 = vld [vmem:[%s169 + $0x164] sm:$0xf]
      %v238 = vld [vmem:[%s169 + $0x168] sm:$0xff]
      %v239 = vld [vmem:[%s169 + $0x170] sm:$0xf]
      %v240 = vld [vmem:[%s169 + $0x174] sm:$0xff]
      %v241 = vld [vmem:[%s169 + $0x17c] sm:$0xf]
      %v242 = vld [vmem:[%s169 + $0x180] sm:$0xff]
      %v243 = vld [vmem:[%s169 + $0x188] sm:$0xf]
      %v244 = vld [vmem:[%s169 + $0x18c] sm:$0xff]
      %v245 = vld [vmem:[%s169 + $0x194] sm:$0xf]
      %v246 = vld [vmem:[%s169 + $0x198] sm:$0xff]
      %v247 = vld [vmem:[%s169 + $0x1a0] sm:$0xf]
      %v248 = vld [vmem:[%s169 + $0x1a4] sm:$0xff]
      %v249 = vld [vmem:[%s169 + $0x1ac] sm:$0xf]
      %v250 = vld [vmem:[%s169 + $0x1b0] sm:$0xff]
      %v251 = vld [vmem:[%s169 + $0x1b8] sm:$0xf]
      %v252 = vld [vmem:[%s169 + $0x1bc] sm:$0xff]
      %v253 = vld [vmem:[%s169 + $0x1c4] sm:$0xf]
      %v254 = vld [vmem:[%s169 + $0x1c8] sm:$0xff]
      %v255 = vld [vmem:[%s169 + $0x1d0] sm:$0xf]
      %v256 = vld [vmem:[%s169 + $0x1d4] sm:$0xff]
      %v257 = vld [vmem:[%s169 + $0x1dc] sm:$0xf]
      %v258 = vld [vmem:[%s169 + $0x1e0] sm:$0xff]
      %v259 = vld [vmem:[%s169 + $0x1e8] sm:$0xf]
      %v260 = vld [vmem:[%s169 + $0x1ec] sm:$0xff]
      %v261 = vld [vmem:[%s169 + $0x1f4] sm:$0xf]
      %v262 = vld [vmem:[%s169 + $0x1f8] sm:$0xff]
      %v263 = vld [vmem:[%s169 + $0x200] sm:$0xf]
      %v264 = vld [vmem:[%s169 + $0x204] sm:$0xff]
      %v265 = vld [vmem:[%s169 + $0x20c] sm:$0xf]
      %v266 = vld [vmem:[%s169 + $0x210] sm:$0xff]
      %v267 = vld [vmem:[%s169 + $0x218] sm:$0xf]
      %v268 = vld [vmem:[%s169 + $0x21c] sm:$0xff]
      %v269 = vld [vmem:[%s169 + $0x224] sm:$0xf]
      %v270 = vld [vmem:[%s169 + $0x228] sm:$0xff]
      %v271 = vld [vmem:[%s169 + $0x230] sm:$0xf]
      %v272 = vld [vmem:[%s169 + $0x234] sm:$0xff]
      %v273 = vld [vmem:[%s169 + $0x23c] sm:$0xf]
      %v274 = vld [vmem:[%s169 + $0x240] sm:$0xff]
      %v275 = vld [vmem:[%s169 + $0x248] sm:$0xf]
      %v276 = vld [vmem:[%s169 + $0x24c] sm:$0xff]
      %v277 = vld [vmem:[%s169 + $0x254] sm:$0xf]
      %v278 = vld [vmem:[%s169 + $0x258] sm:$0xff]
      %v279 = vld [vmem:[%s169 + $0x260] sm:$0xf]
      %v280 = vld [vmem:[%s169 + $0x264] sm:$0xff]
      %v281 = vld [vmem:[%s169 + $0x26c] sm:$0xf]
      %v282 = vld [vmem:[%s169 + $0x270] sm:$0xff]
      %v283 = vld [vmem:[%s169 + $0x278] sm:$0xf]
      %v284 = vld [vmem:[%s169 + $0x27c] sm:$0xff]
      %v285 = vld [vmem:[%s169 + $0x284] sm:$0xf]
      %v286 = vld [vmem:[%s169 + $0x288] sm:$0xff]
      %v287 = vld [vmem:[%s169 + $0x290] sm:$0xf]
      %v288 = vld [vmem:[%s169 + $0x294] sm:$0xff]
      %v289 = vld [vmem:[%s169 + $0x29c] sm:$0xf]
      %v290 = vld [vmem:[%s169 + $0x2a0] sm:$0xff]
      %v291 = vld [vmem:[%s169 + $0x2a8] sm:$0xf]
      %v292 = vld [vmem:[%s169 + $0x2ac] sm:$0xff]
      %v293 = vld [vmem:[%s169 + $0x2b4] sm:$0xf]
      %v294 = vld [vmem:[%s169 + $0x2b8] sm:$0xff]
      %v295 = vld [vmem:[%s169 + $0x2c0] sm:$0xf]
      %v296 = vld [vmem:[%s169 + $0x2c4] sm:$0xff]
      %v297 = vld [vmem:[%s169 + $0x2cc] sm:$0xf]
      %v298 = vld [vmem:[%s169 + $0x2d0] sm:$0xff]
      %v299 = vld [vmem:[%s169 + $0x2d8] sm:$0xf]
      %v300 = vld [vmem:[%s169 + $0x2dc] sm:$0xff]
      %v301 = vld [vmem:[%s169 + $0x2e4] sm:$0xf]
      %v302 = vld [vmem:[%s169 + $0x2e8] sm:$0xff]
      %v303 = vld [vmem:[%s169 + $0x2f0] sm:$0xf]
      %v304 = vld [vmem:[%s169 + $0x2f4] sm:$0xff]
      %v305 = vld [vmem:[%s169 + $0x2fc] sm:$0xf]
      %v306 = vld [vmem:[%s1] sm:$0xf]
      %v307 = vld [vmem:[%s1 + $0x4] sm:$0xf]
      %v308 = vld [vmem:[%s1 + $0x8] sm:$0xf]
      %v309 = vld [vmem:[%s1 + $0xc] sm:$0xf]
      %v310 = vld [vmem:[%s1 + $0x10] sm:$0xf]
      %v311 = vld [vmem:[%s1 + $0x14] sm:$0xf]
      %v312 = vld [vmem:[%s1 + $0x18] sm:$0xf]
      %v313 = vld [vmem:[%s1 + $0x1c] sm:$0xf]
      %v314 = vld [vmem:[%s1 + $0x20] sm:$0xf]
      %v315 = vld [vmem:[%s1 + $0x24] sm:$0xf]
      %v316 = vld [vmem:[%s1 + $0x28] sm:$0xf]
      %v317 = vld [vmem:[%s1 + $0x2c] sm:$0xf]
      %v318 = vld [vmem:[%s1 + $0x30] sm:$0xf]
      %v319 = vld [vmem:[%s1 + $0x34] sm:$0xf]
      %v320 = vld [vmem:[%s1 + $0x38] sm:$0xf]
      %v321 = vld [vmem:[%s1 + $0x3c] sm:$0xf]
      %v322 = vld [vmem:[%s1 + $0x40] sm:$0xf]
      %v323 = vld [vmem:[%s1 + $0x44] sm:$0xf]
      %v324 = vld [vmem:[%s1 + $0x48] sm:$0xf]
      %v325 = vld [vmem:[%s1 + $0x4c] sm:$0xf]
      %v326 = vld [vmem:[%s1 + $0x50] sm:$0xf]
      %v327 = vld [vmem:[%s1 + $0x54] sm:$0xf]
      %v328 = vld [vmem:[%s1 + $0x58] sm:$0xf]
      %v329 = vld [vmem:[%s1 + $0x5c] sm:$0xf]
      %v330 = vld [vmem:[%s1 + $0x60] sm:$0xf]
      %v331 = vld [vmem:[%s1 + $0x64] sm:$0xf]
      %v332 = vld [vmem:[%s1 + $0x68] sm:$0xf]
      %v333 = vld [vmem:[%s1 + $0x6c] sm:$0xf]
      %v334 = vld [vmem:[%s1 + $0x70] sm:$0xf]
      %v335 = vld [vmem:[%s1 + $0x74] sm:$0xf]
      %v336 = vld [vmem:[%s1 + $0x78] sm:$0xf]
      %v337 = vld [vmem:[%s1 + $0x7c] sm:$0xf]
      %v338 = vld [vmem:[%s1 + $0x80] sm:$0xf]
      %v339 = vld [vmem:[%s1 + $0x84] sm:$0xf]
      %v340 = vld [vmem:[%s1 + $0x88] sm:$0xf]
      %v341 = vld [vmem:[%s1 + $0x8c] sm:$0xf]
      %v342 = vld [vmem:[%s1 + $0x90] sm:$0xf]
      %v343 = vld [vmem:[%s1 + $0x94] sm:$0xf]
      %v344 = vld [vmem:[%s1 + $0x98] sm:$0xf]
      %v345 = vld [vmem:[%s1 + $0x9c] sm:$0xf]
      %v346 = vld [vmem:[%s1 + $0xa0] sm:$0xf]
      %v347 = vld [vmem:[%s1 + $0xa4] sm:$0xf]
      %v348 = vld [vmem:[%s1 + $0xa8] sm:$0xf]
      %v349 = vld [vmem:[%s1 + $0xac] sm:$0xf]
      %v350 = vld [vmem:[%s1 + $0xb0] sm:$0xf]
      %v351 = vld [vmem:[%s1 + $0xb4] sm:$0xf]
      %v352 = vld [vmem:[%s1 + $0xb8] sm:$0xf]
      %v353 = vld [vmem:[%s1 + $0xbc] sm:$0xf]
      %v354 = vld [vmem:[%s2] sm:$0x1]
      %v356 = vlaneseq
      %v357 = vshrl.u32 %v356, 7
      %v358 = vsub.s32 0, %v357
      %v359 = vrot.slane %v354, %v358
      %v489 = vunpack.c.l.b16 %v178
      %v490 = vunpack.c.h.b16 %v178
      %v491 = vunpack.c.l.b16 %v179
      %v492 = vunpack.c.l.b16 %v180
      %v493 = vunpack.c.h.b16 %v180
      %v494 = vunpack.c.l.b16 %v181
      %v495 = vunpack.c.l.b16 %v182
      %v496 = vunpack.c.h.b16 %v182
      %v497 = vunpack.c.l.b16 %v183
      %v498 = vunpack.c.l.b16 %v184
      %v499 = vunpack.c.h.b16 %v184
      %v500 = vunpack.c.l.b16 %v185
      %v501 = vunpack.c.l.b16 %v186
      %v502 = vunpack.c.h.b16 %v186
      %v503 = vunpack.c.l.b16 %v187
      %v504 = vunpack.c.l.b16 %v188
      %v505 = vunpack.c.h.b16 %v188
      %v506 = vunpack.c.l.b16 %v189
      %v507 = vunpack.c.l.b16 %v190
      %v508 = vunpack.c.h.b16 %v190
      %v509 = vunpack.c.l.b16 %v191
      %v510 = vunpack.c.l.b16 %v192
      %v511 = vunpack.c.h.b16 %v192
      %v512 = vunpack.c.l.b16 %v193
      %v513 = vunpack.c.l.b16 %v194
      %v514 = vunpack.c.h.b16 %v194
      %v515 = vunpack.c.l.b16 %v195
      %v516 = vunpack.c.l.b16 %v196
      %v517 = vunpack.c.h.b16 %v196
      %v518 = vunpack.c.l.b16 %v197
      %v519 = vunpack.c.l.b16 %v198
      %v520 = vunpack.c.h.b16 %v198
      %v521 = vunpack.c.l.b16 %v199
      %v522 = vunpack.c.l.b16 %v200
      %v523 = vunpack.c.h.b16 %v200
      %v524 = vunpack.c.l.b16 %v201
      %v525 = vunpack.c.l.b16 %v202
      %v526 = vunpack.c.h.b16 %v202
      %v527 = vunpack.c.l.b16 %v203
      %v528 = vunpack.c.l.b16 %v204
      %v529 = vunpack.c.h.b16 %v204
      %v530 = vunpack.c.l.b16 %v205
      %v531 = vunpack.c.l.b16 %v206
      %v532 = vunpack.c.h.b16 %v206
      %v533 = vunpack.c.l.b16 %v207
      %v534 = vunpack.c.l.b16 %v208
      %v535 = vunpack.c.h.b16 %v208
      %v536 = vunpack.c.l.b16 %v209
      %v537 = vunpack.c.l.b16 %v210
      %v538 = vunpack.c.h.b16 %v210
      %v539 = vunpack.c.l.b16 %v211
      %v540 = vunpack.c.l.b16 %v212
      %v541 = vunpack.c.h.b16 %v212
      %v542 = vunpack.c.l.b16 %v213
      %v543 = vunpack.c.l.b16 %v214
      %v544 = vunpack.c.h.b16 %v214
      %v545 = vunpack.c.l.b16 %v215
      %v546 = vunpack.c.l.b16 %v216
      %v547 = vunpack.c.h.b16 %v216
      %v548 = vunpack.c.l.b16 %v217
      %v549 = vunpack.c.l.b16 %v218
      %v550 = vunpack.c.h.b16 %v218
      %v551 = vunpack.c.l.b16 %v219
      %v552 = vunpack.c.l.b16 %v220
      %v553 = vunpack.c.h.b16 %v220
      %v554 = vunpack.c.l.b16 %v221
      %v555 = vunpack.c.l.b16 %v222
      %v556 = vunpack.c.h.b16 %v222
      %v557 = vunpack.c.l.b16 %v223
      %v558 = vunpack.c.l.b16 %v224
      %v559 = vunpack.c.h.b16 %v224
      %v560 = vunpack.c.l.b16 %v225
      %v561 = vunpack.c.l.b16 %v226
      %v562 = vunpack.c.h.b16 %v226
      %v563 = vunpack.c.l.b16 %v227
      %v564 = vunpack.c.l.b16 %v228
      %v565 = vunpack.c.h.b16 %v228
      %v566 = vunpack.c.l.b16 %v229
      %v567 = vunpack.c.l.b16 %v230
      %v568 = vunpack.c.h.b16 %v230
      %v569 = vunpack.c.l.b16 %v231
      %v570 = vunpack.c.l.b16 %v232
      %v571 = vunpack.c.h.b16 %v232
      %v572 = vunpack.c.l.b16 %v233
      %v573 = vunpack.c.l.b16 %v234
      %v574 = vunpack.c.h.b16 %v234
      %v575 = vunpack.c.l.b16 %v235
      %v576 = vunpack.c.l.b16 %v236
      %v577 = vunpack.c.h.b16 %v236
      %v578 = vunpack.c.l.b16 %v237
      %v579 = vunpack.c.l.b16 %v238
      %v580 = vunpack.c.h.b16 %v238
      %v581 = vunpack.c.l.b16 %v239
      %v582 = vunpack.c.l.b16 %v240
      %v583 = vunpack.c.h.b16 %v240
      %v584 = vunpack.c.l.b16 %v241
      %v585 = vunpack.c.l.b16 %v242
      %v586 = vunpack.c.h.b16 %v242
      %v587 = vunpack.c.l.b16 %v243
      %v588 = vunpack.c.l.b16 %v244
      %v589 = vunpack.c.h.b16 %v244
      %v590 = vunpack.c.l.b16 %v245
      %v591 = vunpack.c.l.b16 %v246
      %v592 = vunpack.c.h.b16 %v246
      %v593 = vunpack.c.l.b16 %v247
      %v594 = vunpack.c.l.b16 %v248
      %v595 = vunpack.c.h.b16 %v248
      %v596 = vunpack.c.l.b16 %v249
      %v597 = vunpack.c.l.b16 %v250
      %v598 = vunpack.c.h.b16 %v250
      %v599 = vunpack.c.l.b16 %v251
      %v600 = vunpack.c.l.b16 %v252
      %v601 = vunpack.c.h.b16 %v252
      %v602 = vunpack.c.l.b16 %v253
      %v603 = vunpack.c.l.b16 %v254
      %v604 = vunpack.c.h.b16 %v254
      %v605 = vunpack.c.l.b16 %v255
      %v606 = vunpack.c.l.b16 %v256
      %v607 = vunpack.c.h.b16 %v256
      %v608 = vunpack.c.l.b16 %v257
      %v609 = vunpack.c.l.b16 %v258
      %v610 = vunpack.c.h.b16 %v258
      %v611 = vunpack.c.l.b16 %v259
      %v612 = vunpack.c.l.b16 %v260
      %v613 = vunpack.c.h.b16 %v260
      %v614 = vunpack.c.l.b16 %v261
      %v615 = vunpack.c.l.b16 %v262
      %v616 = vunpack.c.h.b16 %v262
      %v617 = vunpack.c.l.b16 %v263
      %v618 = vunpack.c.l.b16 %v264
      %v619 = vunpack.c.h.b16 %v264
      %v620 = vunpack.c.l.b16 %v265
      %v621 = vunpack.c.l.b16 %v266
      %v622 = vunpack.c.h.b16 %v266
      %v623 = vunpack.c.l.b16 %v267
      %v624 = vunpack.c.l.b16 %v268
      %v625 = vunpack.c.h.b16 %v268
      %v626 = vunpack.c.l.b16 %v269
      %v627 = vunpack.c.l.b16 %v270
      %v628 = vunpack.c.h.b16 %v270
      %v629 = vunpack.c.l.b16 %v271
      %v630 = vunpack.c.l.b16 %v272
      %v631 = vunpack.c.h.b16 %v272
      %v632 = vunpack.c.l.b16 %v273
      %v633 = vunpack.c.l.b16 %v274
      %v634 = vunpack.c.h.b16 %v274
      %v635 = vunpack.c.l.b16 %v275
      %v636 = vunpack.c.l.b16 %v276
      %v637 = vunpack.c.h.b16 %v276
      %v638 = vunpack.c.l.b16 %v277
      %v639 = vunpack.c.l.b16 %v278
      %v640 = vunpack.c.h.b16 %v278
      %v641 = vunpack.c.l.b16 %v279
      %v642 = vunpack.c.l.b16 %v280
      %v643 = vunpack.c.h.b16 %v280
      %v644 = vunpack.c.l.b16 %v281
      %v645 = vunpack.c.l.b16 %v282
      %v646 = vunpack.c.h.b16 %v282
      %v647 = vunpack.c.l.b16 %v283
      %v648 = vunpack.c.l.b16 %v284
      %v649 = vunpack.c.h.b16 %v284
      %v650 = vunpack.c.l.b16 %v285
      %v651 = vunpack.c.l.b16 %v286
      %v652 = vunpack.c.h.b16 %v286
      %v653 = vunpack.c.l.b16 %v287
      %v654 = vunpack.c.l.b16 %v288
      %v655 = vunpack.c.h.b16 %v288
      %v656 = vunpack.c.l.b16 %v289
      %v657 = vunpack.c.l.b16 %v290
      %v658 = vunpack.c.h.b16 %v290
      %v659 = vunpack.c.l.b16 %v291
      %v660 = vunpack.c.l.b16 %v292
      %v661 = vunpack.c.h.b16 %v292
      %v662 = vunpack.c.l.b16 %v293
      %v663 = vunpack.c.l.b16 %v294
      %v664 = vunpack.c.h.b16 %v294
      %v665 = vunpack.c.l.b16 %v295
      %v666 = vunpack.c.l.b16 %v296
      %v667 = vunpack.c.h.b16 %v296
      %v668 = vunpack.c.l.b16 %v297
      %v669 = vunpack.c.l.b16 %v298
      %v670 = vunpack.c.h.b16 %v298
      %v671 = vunpack.c.l.b16 %v299
      %v672 = vunpack.c.l.b16 %v300
      %v673 = vunpack.c.h.b16 %v300
      %v674 = vunpack.c.l.b16 %v301
      %v675 = vunpack.c.l.b16 %v302
      %v676 = vunpack.c.h.b16 %v302
      %v677 = vunpack.c.l.b16 %v303
      %v678 = vunpack.c.l.b16 %v304
      %v679 = vunpack.c.h.b16 %v304
      %v680 = vunpack.c.l.b16 %v305
      %v681 = vpack.c.b16 %v492, %v489
      %v682 = vpack.c.b16 %v493, %v490
      %v683 = vpack.c.b16 %v494, %v491
      %v684 = vpack.c.b16 %v498, %v495
      %v685 = vpack.c.b16 %v499, %v496
      %v686 = vpack.c.b16 %v500, %v497
      %v687 = vpack.c.b16 %v504, %v501
      %v688 = vpack.c.b16 %v505, %v502
      %v689 = vpack.c.b16 %v506, %v503
      %v690 = vpack.c.b16 %v510, %v507
      %v691 = vpack.c.b16 %v511, %v508
      %v692 = vpack.c.b16 %v512, %v509
      %v693 = vpack.c.b16 %v516, %v513
      %v694 = vpack.c.b16 %v517, %v514
      %v695 = vpack.c.b16 %v518, %v515
      %v696 = vpack.c.b16 %v522, %v519
      %v697 = vpack.c.b16 %v523, %v520
      %v698 = vpack.c.b16 %v524, %v521
      %v699 = vpack.c.b16 %v528, %v525
      %v700 = vpack.c.b16 %v529, %v526
      %v701 = vpack.c.b16 %v530, %v527
      %v702 = vpack.c.b16 %v534, %v531
      %v703 = vpack.c.b16 %v535, %v532
      %v704 = vpack.c.b16 %v536, %v533
      %v705 = vpack.c.b16 %v540, %v537
      %v706 = vpack.c.b16 %v541, %v538
      %v707 = vpack.c.b16 %v542, %v539
      %v708 = vpack.c.b16 %v546, %v543
      %v709 = vpack.c.b16 %v547, %v544
      %v710 = vpack.c.b16 %v548, %v545
      %v711 = vpack.c.b16 %v552, %v549
      %v712 = vpack.c.b16 %v553, %v550
      %v713 = vpack.c.b16 %v554, %v551
      %v714 = vpack.c.b16 %v558, %v555
      %v715 = vpack.c.b16 %v559, %v556
      %v716 = vpack.c.b16 %v560, %v557
      %v717 = vpack.c.b16 %v564, %v561
      %v718 = vpack.c.b16 %v565, %v562
      %v719 = vpack.c.b16 %v566, %v563
      %v720 = vpack.c.b16 %v570, %v567
      %v721 = vpack.c.b16 %v571, %v568
      %v722 = vpack.c.b16 %v572, %v569
      %v723 = vpack.c.b16 %v576, %v573
      %v724 = vpack.c.b16 %v577, %v574
      %v725 = vpack.c.b16 %v578, %v575
      %v726 = vpack.c.b16 %v582, %v579
      %v727 = vpack.c.b16 %v583, %v580
      %v728 = vpack.c.b16 %v584, %v581
      %v729 = vpack.c.b16 %v588, %v585
      %v730 = vpack.c.b16 %v589, %v586
      %v731 = vpack.c.b16 %v590, %v587
      %v732 = vpack.c.b16 %v594, %v591
      %v733 = vpack.c.b16 %v595, %v592
      %v734 = vpack.c.b16 %v596, %v593
      %v735 = vpack.c.b16 %v600, %v597
      %v736 = vpack.c.b16 %v601, %v598
      %v737 = vpack.c.b16 %v602, %v599
      %v738 = vpack.c.b16 %v606, %v603
      %v739 = vpack.c.b16 %v607, %v604
      %v740 = vpack.c.b16 %v608, %v605
      %v741 = vpack.c.b16 %v612, %v609
      %v742 = vpack.c.b16 %v613, %v610
      %v743 = vpack.c.b16 %v614, %v611
      %v744 = vpack.c.b16 %v618, %v615
      %v745 = vpack.c.b16 %v619, %v616
      %v746 = vpack.c.b16 %v620, %v617
      %v747 = vpack.c.b16 %v624, %v621
      %v748 = vpack.c.b16 %v625, %v622
      %v749 = vpack.c.b16 %v626, %v623
      %v750 = vpack.c.b16 %v630, %v627
      %v751 = vpack.c.b16 %v631, %v628
      %v752 = vpack.c.b16 %v632, %v629
      %v753 = vpack.c.b16 %v636, %v633
      %v754 = vpack.c.b16 %v637, %v634
      %v755 = vpack.c.b16 %v638, %v635
      %v756 = vpack.c.b16 %v642, %v639
      %v757 = vpack.c.b16 %v643, %v640
      %v758 = vpack.c.b16 %v644, %v641
      %v759 = vpack.c.b16 %v648, %v645
      %v760 = vpack.c.b16 %v649, %v646
      %v761 = vpack.c.b16 %v650, %v647
      %v762 = vpack.c.b16 %v654, %v651
      %v763 = vpack.c.b16 %v655, %v652
      %v764 = vpack.c.b16 %v656, %v653
      %v765 = vpack.c.b16 %v660, %v657
      %v766 = vpack.c.b16 %v661, %v658
      %v767 = vpack.c.b16 %v662, %v659
      %v768 = vpack.c.b16 %v666, %v663
      %v769 = vpack.c.b16 %v667, %v664
      %v770 = vpack.c.b16 %v668, %v665
      %v771 = vpack.c.b16 %v672, %v669
      %v772 = vpack.c.b16 %v673, %v670
      %v773 = vpack.c.b16 %v674, %v671
      %v774 = vpack.c.b16 %v678, %v675
      %v775 = vpack.c.b16 %v679, %v676
      %v776 = vpack.c.b16 %v680, %v677
      %v921 = vunpack.c.l.b16 %v306
      %v922 = vunpack.c.l.b16 %v307
      %v923 = vunpack.c.l.b16 %v308
      %v924 = vunpack.c.l.b16 %v309
      %v925 = vunpack.c.l.b16 %v310
      %v926 = vunpack.c.l.b16 %v311
      %v927 = vunpack.c.l.b16 %v312
      %v928 = vunpack.c.l.b16 %v313
      %v929 = vunpack.c.l.b16 %v314
      %v930 = vunpack.c.l.b16 %v315
      %v931 = vunpack.c.l.b16 %v316
      %v932 = vunpack.c.l.b16 %v317
      %v933 = vunpack.c.l.b16 %v318
      %v934 = vunpack.c.l.b16 %v319
      %v935 = vunpack.c.l.b16 %v320
      %v936 = vunpack.c.l.b16 %v321
      %v937 = vunpack.c.l.b16 %v322
      %v938 = vunpack.c.l.b16 %v323
      %v939 = vunpack.c.l.b16 %v324
      %v940 = vunpack.c.l.b16 %v325
      %v941 = vunpack.c.l.b16 %v326
      %v942 = vunpack.c.l.b16 %v327
      %v943 = vunpack.c.l.b16 %v328
      %v944 = vunpack.c.l.b16 %v329
      %v945 = vunpack.c.l.b16 %v330
      %v946 = vunpack.c.l.b16 %v331
      %v947 = vunpack.c.l.b16 %v332
      %v948 = vunpack.c.l.b16 %v333
      %v949 = vunpack.c.l.b16 %v334
      %v950 = vunpack.c.l.b16 %v335
      %v951 = vunpack.c.l.b16 %v336
      %v952 = vunpack.c.l.b16 %v337
      %v953 = vunpack.c.l.b16 %v338
      %v954 = vunpack.c.l.b16 %v339
      %v955 = vunpack.c.l.b16 %v340
      %v956 = vunpack.c.l.b16 %v341
      %v957 = vunpack.c.l.b16 %v342
      %v958 = vunpack.c.l.b16 %v343
      %v959 = vunpack.c.l.b16 %v344
      %v960 = vunpack.c.l.b16 %v345
      %v961 = vunpack.c.l.b16 %v346
      %v962 = vunpack.c.l.b16 %v347
      %v963 = vunpack.c.l.b16 %v348
      %v964 = vunpack.c.l.b16 %v349
      %v965 = vunpack.c.l.b16 %v350
      %v966 = vunpack.c.l.b16 %v351
      %v967 = vunpack.c.l.b16 %v352
      %v968 = vunpack.c.l.b16 %v353
      %v969 = vpack.c.b16 %v922, %v921
      %v970 = vpack.c.b16 %v924, %v923
      %v971 = vpack.c.b16 %v926, %v925
      %v972 = vpack.c.b16 %v928, %v927
      %v973 = vpack.c.b16 %v930, %v929
      %v974 = vpack.c.b16 %v932, %v931
      %v975 = vpack.c.b16 %v934, %v933
      %v976 = vpack.c.b16 %v936, %v935
      %v977 = vpack.c.b16 %v938, %v937
      %v978 = vpack.c.b16 %v940, %v939
      %v979 = vpack.c.b16 %v942, %v941
      %v980 = vpack.c.b16 %v944, %v943
      %v981 = vpack.c.b16 %v946, %v945
      %v982 = vpack.c.b16 %v948, %v947
      %v983 = vpack.c.b16 %v950, %v949
      %v984 = vpack.c.b16 %v952, %v951
      %v985 = vpack.c.b16 %v954, %v953
      %v986 = vpack.c.b16 %v956, %v955
      %v987 = vpack.c.b16 %v958, %v957
      %v988 = vpack.c.b16 %v960, %v959
      %v989 = vpack.c.b16 %v962, %v961
      %v990 = vpack.c.b16 %v964, %v963
      %v991 = vpack.c.b16 %v966, %v965
      %v992 = vpack.c.b16 %v968, %v967
      %1017 = vmatprep.subr.bf16.mxu0 0
      %1018 = vmatpush1.bf16.msra.mxu0 %v969
      %1019 = vmatprep.subr.bf16.mxu0 0
      %1020 = vmatpush1.bf16.msra.mxu0 %v970
      %1021 = vmatprep.subr.bf16.mxu0 0
      %1022 = vmatpush1.bf16.msra.mxu0 %v971
      %1023 = vmatprep.subr.bf16.mxu0 0
      %1024 = vmatpush1.bf16.msra.mxu0 %v972
      %1025 = vmatprep.subr.bf16.mxu0 0
      %1026 = vmatpush1.bf16.msra.mxu0 %v973
      %1027 = vmatprep.subr.bf16.mxu0 0
      %1028 = vmatpush1.bf16.msra.mxu0 %v974
      %1029 = vmatprep.subr.bf16.mxu0 0
      %1030 = vmatpush1.bf16.msra.mxu0 %v975
      %1031 = vmatprep.subr.bf16.mxu0 0
      %1032 = vmatpush1.bf16.msra.mxu0 %v976
      %1033 = vmatprep.subr.bf16.mxu0 0
      %1034 = vmatpush1.bf16.msra.mxu0 %v977
      %1035 = vmatprep.subr.bf16.mxu0 0
      %1036 = vmatpush1.bf16.msra.mxu0 %v978
      %1037 = vmatprep.subr.bf16.mxu0 0
      %1038 = vmatpush1.bf16.msra.mxu0 %v979
      %1039 = vmatprep.subr.bf16.mxu0 0
      %1040 = vmatpush1.bf16.msra.mxu0 %v980
      %1041 = vmatprep.subr.bf16.mxu0 0
      %1042 = vmatpush1.bf16.msra.mxu0 %v981
      %1043 = vmatprep.subr.bf16.mxu0 0
      %1044 = vmatpush1.bf16.msra.mxu0 %v982
      %1045 = vmatprep.subr.bf16.mxu0 0
      %1046 = vmatpush1.bf16.msra.mxu0 %v983
      %1047 = vmatprep.subr.bf16.mxu0 0
      %1048 = vmatpush1.bf16.msra.mxu0 %v984
      %1049 = vmatprep.mubr.bf16.mxu0 %v682
      %1050 = vmatmul.mubr.bf16.gmra.mrb[0].mxu0 %v681
      %v1051 = vpop.f32.mrb[0].mxu0
      %v1052 = vadd.f32 %v359, %v1051
      %v1053 = vpop.f32.mrb[0].mxu0
      %v1054 = vpop.f32.mrb[0].mxu0
      %v1055 = vadd.f32 %v359, %v1054
      %v1056 = vpop.f32.mrb[0].mxu0
      %1057 = vmatprep.mubr.bf16.mxu0 %v685
      %1058 = vmatmul.mubr.bf16.gmra.mrb[0].mxu0 %v684
      %v1059 = vpop.f32.mrb[0].mxu0
      %v1060 = vadd.f32 %v359, %v1059
      %v1061 = vpop.f32.mrb[0].mxu0
      %v1062 = vpop.f32.mrb[0].mxu0
      %v1063 = vadd.f32 %v359, %v1062
      %v1064 = vpop.f32.mrb[0].mxu0
      %1065 = vmatprep.mubr.bf16.mxu0 %v688
      %1066 = vmatmul.mubr.bf16.gmra.mrb[0].mxu0 %v687
      %v1067 = vpop.f32.mrb[0].mxu0
      %v1068 = vadd.f32 %v359, %v1067
      %v1069 = vpop.f32.mrb[0].mxu0
      %v1070 = vpop.f32.mrb[0].mxu0
      %v1071 = vadd.f32 %v359, %v1070
      %v1072 = vpop.f32.mrb[0].mxu0
      %1073 = vmatprep.mubr.bf16.mxu0 %v691
      %1074 = vmatmul.mubr.bf16.gmra.mrb[0].mxu0 %v690
      %v1075 = vpop.f32.mrb[0].mxu0
      %v1076 = vadd.f32 %v359, %v1075
      %v1077 = vpop.f32.mrb[0].mxu0
      %v1078 = vpop.f32.mrb[0].mxu0
      %v1079 = vadd.f32 %v359, %v1078
      %v1080 = vpop.f32.mrb[0].mxu0
      %1081 = vmatprep.mubr.bf16.mxu0 %v694
      %1082 = vmatmul.mubr.bf16.gmra.mrb[0].mxu0 %v693
      %v1083 = vpop.f32.mrb[0].mxu0
      %v1084 = vadd.f32 %v359, %v1083
      %v1085 = vpop.f32.mrb[0].mxu0
      %v1086 = vpop.f32.mrb[0].mxu0
      %v1087 = vadd.f32 %v359, %v1086
      %v1088 = vpop.f32.mrb[0].mxu0
      %1089 = vmatprep.mubr.bf16.mxu0 %v697
      %1090 = vmatmul.mubr.bf16.gmra.mrb[0].mxu0 %v696
      %v1091 = vpop.f32.mrb[0].mxu0
      %v1092 = vadd.f32 %v359, %v1091
      %v1093 = vpop.f32.mrb[0].mxu0
      %v1094 = vpop.f32.mrb[0].mxu0
      %v1095 = vadd.f32 %v359, %v1094
      %v1096 = vpop.f32.mrb[0].mxu0
      %1097 = vmatprep.mubr.bf16.mxu0 %v700
      %1098 = vmatmul.mubr.bf16.gmra.mrb[0].mxu0 %v699
      %v1099 = vpop.f32.mrb[0].mxu0
      %v1100 = vadd.f32 %v359, %v1099
      %v1101 = vpop.f32.mrb[0].mxu0
      %v1102 = vpop.f32.mrb[0].mxu0
      %v1103 = vadd.f32 %v359, %v1102
      %v1104 = vpop.f32.mrb[0].mxu0
      %1105 = vmatprep.mubr.bf16.mxu0 %v703
      %1106 = vmatmul.mubr.bf16.gmra.mrb[0].mxu0 %v702
      %v1107 = vpop.f32.mrb[0].mxu0
      %v1108 = vadd.f32 %v359, %v1107
      %v1109 = vpop.f32.mrb[0].mxu0
      %v1110 = vpop.f32.mrb[0].mxu0
      %v1111 = vadd.f32 %v359, %v1110
      %v1112 = vpop.f32.mrb[0].mxu0
      %1113 = vmatprep.mubr.bf16.mxu0 %v706
      %1114 = vmatmul.mubr.bf16.gmra.mrb[0].mxu0 %v705
      %v1115 = vpop.f32.mrb[0].mxu0
      %v1116 = vadd.f32 %v359, %v1115
      %v1117 = vpop.f32.mrb[0].mxu0
      %v1118 = vpop.f32.mrb[0].mxu0
      %v1119 = vadd.f32 %v359, %v1118
      %v1120 = vpop.f32.mrb[0].mxu0
      %1121 = vmatprep.mubr.bf16.mxu0 %v709
      %1122 = vmatmul.mubr.bf16.gmra.mrb[0].mxu0 %v708
      %v1123 = vpop.f32.mrb[0].mxu0
      %v1124 = vadd.f32 %v359, %v1123
      %v1125 = vpop.f32.mrb[0].mxu0
      %v1126 = vpop.f32.mrb[0].mxu0
      %v1127 = vadd.f32 %v359, %v1126
      %v1128 = vpop.f32.mrb[0].mxu0
      %1129 = vmatprep.mubr.bf16.mxu0 %v712
      %1130 = vmatmul.mubr.bf16.gmra.mrb[0].mxu0 %v711
      %v1131 = vpop.f32.mrb[0].mxu0
      %v1132 = vadd.f32 %v359, %v1131
      %v1133 = vpop.f32.mrb[0].mxu0
      %v1134 = vpop.f32.mrb[0].mxu0
      %v1135 = vadd.f32 %v359, %v1134
      %v1136 = vpop.f32.mrb[0].mxu0
      %1137 = vmatprep.mubr.bf16.mxu0 %v715
      %1138 = vmatmul.mubr.bf16.gmra.mrb[0].mxu0 %v714
      %v1139 = vpop.f32.mrb[0].mxu0
      %v1140 = vadd.f32 %v359, %v1139
      %v1141 = vpop.f32.mrb[0].mxu0
      %v1142 = vpop.f32.mrb[0].mxu0
      %v1143 = vadd.f32 %v359, %v1142
      %v1144 = vpop.f32.mrb[0].mxu0
      %1145 = vmatprep.mubr.bf16.mxu0 %v718
      %1146 = vmatmul.mubr.bf16.gmra.mrb[0].mxu0 %v717
      %v1147 = vpop.f32.mrb[0].mxu0
      %v1148 = vadd.f32 %v359, %v1147
      %v1149 = vpop.f32.mrb[0].mxu0
      %v1150 = vpop.f32.mrb[0].mxu0
      %v1151 = vadd.f32 %v359, %v1150
      %v1152 = vpop.f32.mrb[0].mxu0
      %1153 = vmatprep.mubr.bf16.mxu0 %v721
      %1154 = vmatmul.mubr.bf16.gmra.mrb[0].mxu0 %v720
      %v1155 = vpop.f32.mrb[0].mxu0
      %v1156 = vadd.f32 %v359, %v1155
      %v1157 = vpop.f32.mrb[0].mxu0
      %v1158 = vpop.f32.mrb[0].mxu0
      %v1159 = vadd.f32 %v359, %v1158
      %v1160 = vpop.f32.mrb[0].mxu0
      %1161 = vmatprep.mubr.bf16.mxu0 %v724
      %1162 = vmatmul.mubr.bf16.gmra.mrb[0].mxu0 %v723
      %v1163 = vpop.f32.mrb[0].mxu0
      %v1164 = vadd.f32 %v359, %v1163
      %v1165 = vpop.f32.mrb[0].mxu0
      %v1166 = vpop.f32.mrb[0].mxu0
      %v1167 = vadd.f32 %v359, %v1166
      %v1168 = vpop.f32.mrb[0].mxu0
      %1169 = vmatprep.mubr.bf16.mxu0 %v727
      %1170 = vmatmul.mubr.bf16.gmra.mrb[0].mxu0 %v726
      %v1171 = vpop.f32.mrb[0].mxu0
      %v1172 = vadd.f32 %v359, %v1171
      %v1173 = vpop.f32.mrb[0].mxu0
      %v1174 = vpop.f32.mrb[0].mxu0
      %v1175 = vadd.f32 %v359, %v1174
      %v1176 = vpop.f32.mrb[0].mxu0
      %1177 = vmatprep.mubr.bf16.mxu0 %v730
      %1178 = vmatmul.mubr.bf16.gmra.mrb[0].mxu0 %v729
      %v1179 = vpop.f32.mrb[0].mxu0
      %v1180 = vadd.f32 %v359, %v1179
      %v1181 = vpop.f32.mrb[0].mxu0
      %v1182 = vpop.f32.mrb[0].mxu0
      %v1183 = vadd.f32 %v359, %v1182
      %v1184 = vpop.f32.mrb[0].mxu0
      %1185 = vmatprep.mubr.bf16.mxu0 %v733
      %1186 = vmatmul.mubr.bf16.gmra.mrb[0].mxu0 %v732
      %v1187 = vpop.f32.mrb[0].mxu0
      %v1188 = vadd.f32 %v359, %v1187
      %v1189 = vpop.f32.mrb[0].mxu0
      %v1190 = vpop.f32.mrb[0].mxu0
      %v1191 = vadd.f32 %v359, %v1190
      %v1192 = vpop.f32.mrb[0].mxu0
      %1193 = vmatprep.mubr.bf16.mxu0 %v736
      %1194 = vmatmul.mubr.bf16.gmra.mrb[0].mxu0 %v735
      %v1195 = vpop.f32.mrb[0].mxu0
      %v1196 = vadd.f32 %v359, %v1195
      %v1197 = vpop.f32.mrb[0].mxu0
      %v1198 = vpop.f32.mrb[0].mxu0
      %v1199 = vadd.f32 %v359, %v1198
      %v1200 = vpop.f32.mrb[0].mxu0
      %1201 = vmatprep.mubr.bf16.mxu0 %v739
      %1202 = vmatmul.mubr.bf16.gmra.mrb[0].mxu0 %v738
      %v1203 = vpop.f32.mrb[0].mxu0
      %v1204 = vadd.f32 %v359, %v1203
      %v1205 = vpop.f32.mrb[0].mxu0
      %v1206 = vpop.f32.mrb[0].mxu0
      %v1207 = vadd.f32 %v359, %v1206
      %v1208 = vpop.f32.mrb[0].mxu0
      %1209 = vmatprep.mubr.bf16.mxu0 %v742
      %1210 = vmatmul.mubr.bf16.gmra.mrb[0].mxu0 %v741
      %v1211 = vpop.f32.mrb[0].mxu0
      %v1212 = vadd.f32 %v359, %v1211
      %v1213 = vpop.f32.mrb[0].mxu0
      %v1214 = vpop.f32.mrb[0].mxu0
      %v1215 = vadd.f32 %v359, %v1214
      %v1216 = vpop.f32.mrb[0].mxu0
      %1217 = vmatprep.mubr.bf16.mxu0 %v745
      %1218 = vmatmul.mubr.bf16.gmra.mrb[0].mxu0 %v744
      %v1219 = vpop.f32.mrb[0].mxu0
      %v1220 = vadd.f32 %v359, %v1219
      %v1221 = vpop.f32.mrb[0].mxu0
      %v1222 = vpop.f32.mrb[0].mxu0
      %v1223 = vadd.f32 %v359, %v1222
      %v1224 = vpop.f32.mrb[0].mxu0
      %1225 = vmatprep.mubr.bf16.mxu0 %v748
      %1226 = vmatmul.mubr.bf16.gmra.mrb[0].mxu0 %v747
      %v1227 = vpop.f32.mrb[0].mxu0
      %v1228 = vadd.f32 %v359, %v1227
      %v1229 = vpop.f32.mrb[0].mxu0
      %v1230 = vpop.f32.mrb[0].mxu0
      %v1231 = vadd.f32 %v359, %v1230
      %v1232 = vpop.f32.mrb[0].mxu0
      %1233 = vmatprep.mubr.bf16.mxu0 %v751
      %1234 = vmatmul.mubr.bf16.gmra.mrb[0].mxu0 %v750
      %v1235 = vpop.f32.mrb[0].mxu0
      %v1236 = vadd.f32 %v359, %v1235
      %v1237 = vpop.f32.mrb[0].mxu0
      %v1238 = vpop.f32.mrb[0].mxu0
      %v1239 = vadd.f32 %v359, %v1238
      %v1240 = vpop.f32.mrb[0].mxu0
      %1241 = vmatprep.mubr.bf16.mxu0 %v754
      %1242 = vmatmul.mubr.bf16.gmra.mrb[0].mxu0 %v753
      %v1243 = vpop.f32.mrb[0].mxu0
      %v1244 = vadd.f32 %v359, %v1243
      %v1245 = vpop.f32.mrb[0].mxu0
      %v1246 = vpop.f32.mrb[0].mxu0
      %v1247 = vadd.f32 %v359, %v1246
      %v1248 = vpop.f32.mrb[0].mxu0
      %1249 = vmatprep.mubr.bf16.mxu0 %v757
      %1250 = vmatmul.mubr.bf16.gmra.mrb[0].mxu0 %v756
      %v1251 = vpop.f32.mrb[0].mxu0
      %v1252 = vadd.f32 %v359, %v1251
      %v1253 = vpop.f32.mrb[0].mxu0
      %v1254 = vpop.f32.mrb[0].mxu0
      %v1255 = vadd.f32 %v359, %v1254
      %v1256 = vpop.f32.mrb[0].mxu0
      %1257 = vmatprep.mubr.bf16.mxu0 %v760
      %1258 = vmatmul.mubr.bf16.gmra.mrb[0].mxu0 %v759
      %v1259 = vpop.f32.mrb[0].mxu0
      %v1260 = vadd.f32 %v359, %v1259
      %v1261 = vpop.f32.mrb[0].mxu0
      %v1262 = vpop.f32.mrb[0].mxu0
      %v1263 = vadd.f32 %v359, %v1262
      %v1264 = vpop.f32.mrb[0].mxu0
      %1265 = vmatprep.mubr.bf16.mxu0 %v763
      %1266 = vmatmul.mubr.bf16.gmra.mrb[0].mxu0 %v762
      %v1267 = vpop.f32.mrb[0].mxu0
      %v1268 = vadd.f32 %v359, %v1267
      %v1269 = vpop.f32.mrb[0].mxu0
      %v1270 = vpop.f32.mrb[0].mxu0
      %v1271 = vadd.f32 %v359, %v1270
      %v1272 = vpop.f32.mrb[0].mxu0
      %1273 = vmatprep.mubr.bf16.mxu0 %v766
      %1274 = vmatmul.mubr.bf16.gmra.mrb[0].mxu0 %v765
      %v1275 = vpop.f32.mrb[0].mxu0
      %v1276 = vadd.f32 %v359, %v1275
      %v1277 = vpop.f32.mrb[0].mxu0
      %v1278 = vpop.f32.mrb[0].mxu0
      %v1279 = vadd.f32 %v359, %v1278
      %v1280 = vpop.f32.mrb[0].mxu0
      %1281 = vmatprep.mubr.bf16.mxu0 %v769
      %1282 = vmatmul.mubr.bf16.gmra.mrb[0].mxu0 %v768
      %v1283 = vpop.f32.mrb[0].mxu0
      %v1284 = vadd.f32 %v359, %v1283
      %v1285 = vpop.f32.mrb[0].mxu0
      %v1286 = vpop.f32.mrb[0].mxu0
      %v1287 = vadd.f32 %v359, %v1286
      %v1288 = vpop.f32.mrb[0].mxu0
      %1289 = vmatprep.mubr.bf16.mxu0 %v772
      %1290 = vmatmul.mubr.bf16.gmra.mrb[0].mxu0 %v771
      %v1291 = vpop.f32.mrb[0].mxu0
      %v1292 = vadd.f32 %v359, %v1291
      %v1293 = vpop.f32.mrb[0].mxu0
      %v1294 = vpop.f32.mrb[0].mxu0
      %v1295 = vadd.f32 %v359, %v1294
      %v1296 = vpop.f32.mrb[0].mxu0
      %1297 = vmatprep.mubr.bf16.mxu0 %v775
      %1298 = vmatmul.mubr.bf16.gmra.mrb[0].mxu0 %v774
      %v1299 = vpop.f32.mrb[0].mxu0
      %v1300 = vadd.f32 %v359, %v1299
      %v1301 = vpop.f32.mrb[0].mxu0
      %v1302 = vpop.f32.mrb[0].mxu0
      %v1303 = vadd.f32 %v359, %v1302
      %v1304 = vpop.f32.mrb[0].mxu0
      %1305 = vdwg.mxu0
      %1306 = vmatprep.subr.bf16.mxu0 0
      %1307 = vmatpush1.bf16.msra.mxu0 %v985
      %1308 = vmatprep.subr.bf16.mxu0 0
      %1309 = vmatpush1.bf16.msra.mxu0 %v986
      %1310 = vmatprep.subr.bf16.mxu0 0
      %1311 = vmatpush1.bf16.msra.mxu0 %v987
      %1312 = vmatprep.subr.bf16.mxu0 0
      %1313 = vmatpush1.bf16.msra.mxu0 %v988
      %1314 = vmatprep.subr.bf16.mxu0 0
      %1315 = vmatpush1.bf16.msra.mxu0 %v989
      %1316 = vmatprep.subr.bf16.mxu0 0
      %1317 = vmatpush1.bf16.msra.mxu0 %v990
      %1318 = vmatprep.subr.bf16.mxu0 0
      %1319 = vmatpush1.bf16.msra.mxu0 %v991
      %1320 = vmatprep.subr.bf16.mxu0 0
      %1321 = vmatpush1.bf16.msra.mxu0 %v992
      %1322 = vmatprep.subr.bf16.mxu0 0
      %1323 = vmatpush1.bf16.msra.mxu0 0
      %1324 = vmatprep.subr.bf16.mxu0 0
      %1325 = vmatpush1.bf16.msra.mxu0 0
      %1326 = vmatprep.subr.bf16.mxu0 0
      %1327 = vmatpush1.bf16.msra.mxu0 0
      %1328 = vmatprep.subr.bf16.mxu0 0
      %1329 = vmatpush1.bf16.msra.mxu0 0
      %1330 = vmatprep.subr.bf16.mxu0 0
      %1331 = vmatpush1.bf16.msra.mxu0 0
      %1332 = vmatprep.subr.bf16.mxu0 0
      %1333 = vmatpush1.bf16.msra.mxu0 0
      %1334 = vmatprep.subr.bf16.mxu0 0
      %1335 = vmatpush1.bf16.msra.mxu0 0
      %1336 = vmatprep.subr.bf16.mxu0 0
      %1337 = vmatpush1.bf16.msra.mxu0 0
      %1338 = vmatprep.mubr.bf16.mxu0 0
      %1339 = vmatmul.mubr.bf16.gmra.mrb[0].mxu0 %v683
      %v1340 = vpop.f32.mrb[0].mxu0
      %v1341 = vadd.f32 %v1052, %v1340
      %v1342 = vpop.f32.mrb[0].mxu0
      %v1343 = vpop.f32.mrb[0].mxu0
      %v1344 = vadd.f32 %v1055, %v1343
      %v1345 = vpop.f32.mrb[0].mxu0
      %1346 = vmatprep.mubr.bf16.mxu0 0
      %1347 = vmatmul.mubr.bf16.gmra.mrb[0].mxu0 %v686
      %v1348 = vpop.f32.mrb[0].mxu0
      %v1349 = vadd.f32 %v1060, %v1348
      %v1350 = vpop.f32.mrb[0].mxu0
      %v1351 = vpop.f32.mrb[0].mxu0
      %v1352 = vadd.f32 %v1063, %v1351
      %v1353 = vpop.f32.mrb[0].mxu0
      %1354 = vmatprep.mubr.bf16.mxu0 0
      %1355 = vmatmul.mubr.bf16.gmra.mrb[0].mxu0 %v689
      %v1356 = vpop.f32.mrb[0].mxu0
      %v1357 = vadd.f32 %v1068, %v1356
      %v1358 = vpop.f32.mrb[0].mxu0
      %v1359 = vpop.f32.mrb[0].mxu0
      %v1360 = vadd.f32 %v1071, %v1359
      %v1361 = vpop.f32.mrb[0].mxu0
      %1362 = vmatprep.mubr.bf16.mxu0 0
      %1363 = vmatmul.mubr.bf16.gmra.mrb[0].mxu0 %v692
      %v1364 = vpop.f32.mrb[0].mxu0
      %v1365 = vadd.f32 %v1076, %v1364
      %v1366 = vpop.f32.mrb[0].mxu0
      %v1367 = vpop.f32.mrb[0].mxu0
      %v1368 = vadd.f32 %v1079, %v1367
      %v1369 = vpop.f32.mrb[0].mxu0
      %1370 = vmatprep.mubr.bf16.mxu0 0
      %1371 = vmatmul.mubr.bf16.gmra.mrb[0].mxu0 %v695
      %v1372 = vpop.f32.mrb[0].mxu0
      %v1373 = vadd.f32 %v1084, %v1372
      %v1374 = vpop.f32.mrb[0].mxu0
      %v1375 = vpop.f32.mrb[0].mxu0
      %v1376 = vadd.f32 %v1087, %v1375
      %v1377 = vpop.f32.mrb[0].mxu0
      %1378 = vmatprep.mubr.bf16.mxu0 0
      %1379 = vmatmul.mubr.bf16.gmra.mrb[0].mxu0 %v698
      %v1380 = vpop.f32.mrb[0].mxu0
      %v1381 = vadd.f32 %v1092, %v1380
      %v1382 = vpop.f32.mrb[0].mxu0
      %v1383 = vpop.f32.mrb[0].mxu0
      %v1384 = vadd.f32 %v1095, %v1383
      %v1385 = vpop.f32.mrb[0].mxu0
      %1386 = vmatprep.mubr.bf16.mxu0 0
      %1387 = vmatmul.mubr.bf16.gmra.mrb[0].mxu0 %v701
      %v1388 = vpop.f32.mrb[0].mxu0
      %v1389 = vadd.f32 %v1100, %v1388
      %v1390 = vpop.f32.mrb[0].mxu0
      %v1391 = vpop.f32.mrb[0].mxu0
      %v1392 = vadd.f32 %v1103, %v1391
      %v1393 = vpop.f32.mrb[0].mxu0
      %1394 = vmatprep.mubr.bf16.mxu0 0
      %1395 = vmatmul.mubr.bf16.gmra.mrb[0].mxu0 %v704
      %v1396 = vpop.f32.mrb[0].mxu0
      %v1397 = vadd.f32 %v1108, %v1396
      %v1398 = vpop.f32.mrb[0].mxu0
      %v1399 = vpop.f32.mrb[0].mxu0
      %v1400 = vadd.f32 %v1111, %v1399
      %v1401 = vpop.f32.mrb[0].mxu0
      %1402 = vmatprep.mubr.bf16.mxu0 0
      %1403 = vmatmul.mubr.bf16.gmra.mrb[0].mxu0 %v707
      %v1404 = vpop.f32.mrb[0].mxu0
      %v1405 = vadd.f32 %v1116, %v1404
      %v1406 = vpop.f32.mrb[0].mxu0
      %v1407 = vpop.f32.mrb[0].mxu0
      %v1408 = vadd.f32 %v1119, %v1407
      %v1409 = vpop.f32.mrb[0].mxu0
      %1410 = vmatprep.mubr.bf16.mxu0 0
      %1411 = vmatmul.mubr.bf16.gmra.mrb[0].mxu0 %v710
      %v1412 = vpop.f32.mrb[0].mxu0
      %v1413 = vadd.f32 %v1124, %v1412
      %v1414 = vpop.f32.mrb[0].mxu0
      %v1415 = vpop.f32.mrb[0].mxu0
      %v1416 = vadd.f32 %v1127, %v1415
      %v1417 = vpop.f32.mrb[0].mxu0
      %1418 = vmatprep.mubr.bf16.mxu0 0
      %1419 = vmatmul.mubr.bf16.gmra.mrb[0].mxu0 %v713
      %v1420 = vpop.f32.mrb[0].mxu0
      %v1421 = vadd.f32 %v1132, %v1420
      %v1422 = vpop.f32.mrb[0].mxu0
      %v1423 = vpop.f32.mrb[0].mxu0
      %v1424 = vadd.f32 %v1135, %v1423
      %v1425 = vpop.f32.mrb[0].mxu0
      %1426 = vmatprep.mubr.bf16.mxu0 0
      %1427 = vmatmul.mubr.bf16.gmra.mrb[0].mxu0 %v716
      %v1428 = vpop.f32.mrb[0].mxu0
      %v1429 = vadd.f32 %v1140, %v1428
      %v1430 = vpop.f32.mrb[0].mxu0
      %v1431 = vpop.f32.mrb[0].mxu0
      %v1432 = vadd.f32 %v1143, %v1431
      %v1433 = vpop.f32.mrb[0].mxu0
      %1434 = vmatprep.mubr.bf16.mxu0 0
      %1435 = vmatmul.mubr.bf16.gmra.mrb[0].mxu0 %v719
      %v1436 = vpop.f32.mrb[0].mxu0
      %v1437 = vadd.f32 %v1148, %v1436
      %v1438 = vpop.f32.mrb[0].mxu0
      %v1439 = vpop.f32.mrb[0].mxu0
      %v1440 = vadd.f32 %v1151, %v1439
      %v1441 = vpop.f32.mrb[0].mxu0
      %1442 = vmatprep.mubr.bf16.mxu0 0
      %1443 = vmatmul.mubr.bf16.gmra.mrb[0].mxu0 %v722
      %v1444 = vpop.f32.mrb[0].mxu0
      %v1445 = vadd.f32 %v1156, %v1444
      %v1446 = vpop.f32.mrb[0].mxu0
      %v1447 = vpop.f32.mrb[0].mxu0
      %v1448 = vadd.f32 %v1159, %v1447
      %v1449 = vpop.f32.mrb[0].mxu0
      %1450 = vmatprep.mubr.bf16.mxu0 0
      %1451 = vmatmul.mubr.bf16.gmra.mrb[0].mxu0 %v725
      %v1452 = vpop.f32.mrb[0].mxu0
      %v1453 = vadd.f32 %v1164, %v1452
      %v1454 = vpop.f32.mrb[0].mxu0
      %v1455 = vpop.f32.mrb[0].mxu0
      %v1456 = vadd.f32 %v1167, %v1455
      %v1457 = vpop.f32.mrb[0].mxu0
      %1458 = vmatprep.mubr.bf16.mxu0 0
      %1459 = vmatmul.mubr.bf16.gmra.mrb[0].mxu0 %v728
      %v1460 = vpop.f32.mrb[0].mxu0
      %v1461 = vadd.f32 %v1172, %v1460
      %v1462 = vpop.f32.mrb[0].mxu0
      %v1463 = vpop.f32.mrb[0].mxu0
      %v1464 = vadd.f32 %v1175, %v1463
      %v1465 = vpop.f32.mrb[0].mxu0
      %1466 = vmatprep.mubr.bf16.mxu0 0
      %1467 = vmatmul.mubr.bf16.gmra.mrb[0].mxu0 %v731
      %v1468 = vpop.f32.mrb[0].mxu0
      %v1469 = vadd.f32 %v1180, %v1468
      %v1470 = vpop.f32.mrb[0].mxu0
      %v1471 = vpop.f32.mrb[0].mxu0
      %v1472 = vadd.f32 %v1183, %v1471
      %v1473 = vpop.f32.mrb[0].mxu0
      %1474 = vmatprep.mubr.bf16.mxu0 0
      %1475 = vmatmul.mubr.bf16.gmra.mrb[0].mxu0 %v734
      %v1476 = vpop.f32.mrb[0].mxu0
      %v1477 = vadd.f32 %v1188, %v1476
      %v1478 = vpop.f32.mrb[0].mxu0
      %v1479 = vpop.f32.mrb[0].mxu0
      %v1480 = vadd.f32 %v1191, %v1479
      %v1481 = vpop.f32.mrb[0].mxu0
      %1482 = vmatprep.mubr.bf16.mxu0 0
      %1483 = vmatmul.mubr.bf16.gmra.mrb[0].mxu0 %v737
      %v1484 = vpop.f32.mrb[0].mxu0
      %v1485 = vadd.f32 %v1196, %v1484
      %v1486 = vpop.f32.mrb[0].mxu0
      %v1487 = vpop.f32.mrb[0].mxu0
      %v1488 = vadd.f32 %v1199, %v1487
      %v1489 = vpop.f32.mrb[0].mxu0
      %1490 = vmatprep.mubr.bf16.mxu0 0
      %1491 = vmatmul.mubr.bf16.gmra.mrb[0].mxu0 %v740
      %v1492 = vpop.f32.mrb[0].mxu0
      %v1493 = vadd.f32 %v1204, %v1492
      %v1494 = vpop.f32.mrb[0].mxu0
      %v1495 = vpop.f32.mrb[0].mxu0
      %v1496 = vadd.f32 %v1207, %v1495
      %v1497 = vpop.f32.mrb[0].mxu0
      %1498 = vmatprep.mubr.bf16.mxu0 0
      %1499 = vmatmul.mubr.bf16.gmra.mrb[0].mxu0 %v743
      %v1500 = vpop.f32.mrb[0].mxu0
      %v1501 = vadd.f32 %v1212, %v1500
      %v1502 = vpop.f32.mrb[0].mxu0
      %v1503 = vpop.f32.mrb[0].mxu0
      %v1504 = vadd.f32 %v1215, %v1503
      %v1505 = vpop.f32.mrb[0].mxu0
      %1506 = vmatprep.mubr.bf16.mxu0 0
      %1507 = vmatmul.mubr.bf16.gmra.mrb[0].mxu0 %v746
      %v1508 = vpop.f32.mrb[0].mxu0
      %v1509 = vadd.f32 %v1220, %v1508
      %v1510 = vpop.f32.mrb[0].mxu0
      %v1511 = vpop.f32.mrb[0].mxu0
      %v1512 = vadd.f32 %v1223, %v1511
      %v1513 = vpop.f32.mrb[0].mxu0
      %1514 = vmatprep.mubr.bf16.mxu0 0
      %1515 = vmatmul.mubr.bf16.gmra.mrb[0].mxu0 %v749
      %v1516 = vpop.f32.mrb[0].mxu0
      %v1517 = vadd.f32 %v1228, %v1516
      %v1518 = vpop.f32.mrb[0].mxu0
      %v1519 = vpop.f32.mrb[0].mxu0
      %v1520 = vadd.f32 %v1231, %v1519
      %v1521 = vpop.f32.mrb[0].mxu0
      %1522 = vmatprep.mubr.bf16.mxu0 0
      %1523 = vmatmul.mubr.bf16.gmra.mrb[0].mxu0 %v752
      %v1524 = vpop.f32.mrb[0].mxu0
      %v1525 = vadd.f32 %v1236, %v1524
      %v1526 = vpop.f32.mrb[0].mxu0
      %v1527 = vpop.f32.mrb[0].mxu0
      %v1528 = vadd.f32 %v1239, %v1527
      %v1529 = vpop.f32.mrb[0].mxu0
      %1530 = vmatprep.mubr.bf16.mxu0 0
      %1531 = vmatmul.mubr.bf16.gmra.mrb[0].mxu0 %v755
      %v1532 = vpop.f32.mrb[0].mxu0
      %v1533 = vadd.f32 %v1244, %v1532
      %v1534 = vpop.f32.mrb[0].mxu0
      %v1535 = vpop.f32.mrb[0].mxu0
      %v1536 = vadd.f32 %v1247, %v1535
      %v1537 = vpop.f32.mrb[0].mxu0
      %1538 = vmatprep.mubr.bf16.mxu0 0
      %1539 = vmatmul.mubr.bf16.gmra.mrb[0].mxu0 %v758
      %v1540 = vpop.f32.mrb[0].mxu0
      %v1541 = vadd.f32 %v1252, %v1540
      %v1542 = vpop.f32.mrb[0].mxu0
      %v1543 = vpop.f32.mrb[0].mxu0
      %v1544 = vadd.f32 %v1255, %v1543
      %v1545 = vpop.f32.mrb[0].mxu0
      %1546 = vmatprep.mubr.bf16.mxu0 0
      %1547 = vmatmul.mubr.bf16.gmra.mrb[0].mxu0 %v761
      %v1548 = vpop.f32.mrb[0].mxu0
      %v1549 = vadd.f32 %v1260, %v1548
      %v1550 = vpop.f32.mrb[0].mxu0
      %v1551 = vpop.f32.mrb[0].mxu0
      %v1552 = vadd.f32 %v1263, %v1551
      %v1553 = vpop.f32.mrb[0].mxu0
      %1554 = vmatprep.mubr.bf16.mxu0 0
      %1555 = vmatmul.mubr.bf16.gmra.mrb[0].mxu0 %v764
      %v1556 = vpop.f32.mrb[0].mxu0
      %v1557 = vadd.f32 %v1268, %v1556
      %v1558 = vpop.f32.mrb[0].mxu0
      %v1559 = vpop.f32.mrb[0].mxu0
      %v1560 = vadd.f32 %v1271, %v1559
      %v1561 = vpop.f32.mrb[0].mxu0
      %1562 = vmatprep.mubr.bf16.mxu0 0
      %1563 = vmatmul.mubr.bf16.gmra.mrb[0].mxu0 %v767
      %v1564 = vpop.f32.mrb[0].mxu0
      %v1565 = vadd.f32 %v1276, %v1564
      %v1566 = vpop.f32.mrb[0].mxu0
      %v1567 = vpop.f32.mrb[0].mxu0
      %v1568 = vadd.f32 %v1279, %v1567
      %v1569 = vpop.f32.mrb[0].mxu0
      %1570 = vmatprep.mubr.bf16.mxu0 0
      %1571 = vmatmul.mubr.bf16.gmra.mrb[0].mxu0 %v770
      %v1572 = vpop.f32.mrb[0].mxu0
      %v1573 = vadd.f32 %v1284, %v1572
      %v1574 = vpop.f32.mrb[0].mxu0
      %v1575 = vpop.f32.mrb[0].mxu0
      %v1576 = vadd.f32 %v1287, %v1575
      %v1577 = vpop.f32.mrb[0].mxu0
      %1578 = vmatprep.mubr.bf16.mxu0 0
      %1579 = vmatmul.mubr.bf16.gmra.mrb[0].mxu0 %v773
      %v1580 = vpop.f32.mrb[0].mxu0
      %v1581 = vadd.f32 %v1292, %v1580
      %v1582 = vpop.f32.mrb[0].mxu0
      %v1583 = vpop.f32.mrb[0].mxu0
      %v1584 = vadd.f32 %v1295, %v1583
      %v1585 = vpop.f32.mrb[0].mxu0
      %1586 = vmatprep.mubr.bf16.mxu0 0
      %1587 = vmatmul.mubr.bf16.gmra.mrb[0].mxu0 %v776
      %v1588 = vpop.f32.mrb[0].mxu0
      %v1589 = vadd.f32 %v1300, %v1588
      %v1590 = vpop.f32.mrb[0].mxu0
      %v1591 = vpop.f32.mrb[0].mxu0
      %v1592 = vadd.f32 %v1303, %v1591
      %v1593 = vpop.f32.mrb[0].mxu0
      %1594 = vdwg.mxu0
      %v1595 = vmax.f32 %v1341, 0.0
      %v1596 = vmax.f32 %v1344, 0.0
      %v1597 = vmax.f32 %v1349, 0.0
      %v1598 = vmax.f32 %v1352, 0.0
      %v1599 = vmax.f32 %v1357, 0.0
      %v1600 = vmax.f32 %v1360, 0.0
      %v1601 = vmax.f32 %v1365, 0.0
      %v1602 = vmax.f32 %v1368, 0.0
      %v1603 = vmax.f32 %v1373, 0.0
      %v1604 = vmax.f32 %v1376, 0.0
      %v1605 = vmax.f32 %v1381, 0.0
      %v1606 = vmax.f32 %v1384, 0.0
      %v1607 = vmax.f32 %v1389, 0.0
      %v1608 = vmax.f32 %v1392, 0.0
      %v1609 = vmax.f32 %v1397, 0.0
      %v1610 = vmax.f32 %v1400, 0.0
      %v1611 = vmax.f32 %v1405, 0.0
      %v1612 = vmax.f32 %v1408, 0.0
      %v1613 = vmax.f32 %v1413, 0.0
      %v1614 = vmax.f32 %v1416, 0.0
      %v1615 = vmax.f32 %v1421, 0.0
      %v1616 = vmax.f32 %v1424, 0.0
      %v1617 = vmax.f32 %v1429, 0.0
      %v1618 = vmax.f32 %v1432, 0.0
      %v1619 = vmax.f32 %v1437, 0.0
      %v1620 = vmax.f32 %v1440, 0.0
      %v1621 = vmax.f32 %v1445, 0.0
      %v1622 = vmax.f32 %v1448, 0.0
      %v1623 = vmax.f32 %v1453, 0.0
      %v1624 = vmax.f32 %v1456, 0.0
      %v1625 = vmax.f32 %v1461, 0.0
      %v1626 = vmax.f32 %v1464, 0.0
      %v1627 = vmax.f32 %v1469, 0.0
      %v1628 = vmax.f32 %v1472, 0.0
      %v1629 = vmax.f32 %v1477, 0.0
      %v1630 = vmax.f32 %v1480, 0.0
      %v1631 = vmax.f32 %v1485, 0.0
      %v1632 = vmax.f32 %v1488, 0.0
      %v1633 = vmax.f32 %v1493, 0.0
      %v1634 = vmax.f32 %v1496, 0.0
      %v1635 = vmax.f32 %v1501, 0.0
      %v1636 = vmax.f32 %v1504, 0.0
      %v1637 = vmax.f32 %v1509, 0.0
      %v1638 = vmax.f32 %v1512, 0.0
      %v1639 = vmax.f32 %v1517, 0.0
      %v1640 = vmax.f32 %v1520, 0.0
      %v1641 = vmax.f32 %v1525, 0.0
      %v1642 = vmax.f32 %v1528, 0.0
      %v1643 = vmax.f32 %v1533, 0.0
      %v1644 = vmax.f32 %v1536, 0.0
      %v1645 = vmax.f32 %v1541, 0.0
      %v1646 = vmax.f32 %v1544, 0.0
      %v1647 = vmax.f32 %v1549, 0.0
      %v1648 = vmax.f32 %v1552, 0.0
      %v1649 = vmax.f32 %v1557, 0.0
      %v1650 = vmax.f32 %v1560, 0.0
      %v1651 = vmax.f32 %v1565, 0.0
      %v1652 = vmax.f32 %v1568, 0.0
      %v1653 = vmax.f32 %v1573, 0.0
      %v1654 = vmax.f32 %v1576, 0.0
      %v1655 = vmax.f32 %v1581, 0.0
      %v1656 = vmax.f32 %v1584, 0.0
      %v1657 = vmax.f32 %v1589, 0.0
      %v1658 = vmax.f32 %v1592, 0.0
      %1659 = vst [vmem:[%s175] sm:$0xff] %v1595
      %1660 = vst [vmem:[%s175 + $0x8] sm:$0xff] %v1596
      %1661 = vst [vmem:[%s175 + $0x10] sm:$0xff] %v1597
      %1662 = vst [vmem:[%s175 + $0x18] sm:$0xff] %v1598
      %1663 = vst [vmem:[%s175 + $0x20] sm:$0xff] %v1599
      %1664 = vst [vmem:[%s175 + $0x28] sm:$0xff] %v1600
      %1665 = vst [vmem:[%s175 + $0x30] sm:$0xff] %v1601
      %1666 = vst [vmem:[%s175 + $0x38] sm:$0xff] %v1602
      %1667 = vst [vmem:[%s175 + $0x40] sm:$0xff] %v1603
      %1668 = vst [vmem:[%s175 + $0x48] sm:$0xff] %v1604
      %1669 = vst [vmem:[%s175 + $0x50] sm:$0xff] %v1605
      %1670 = vst [vmem:[%s175 + $0x58] sm:$0xff] %v1606
      %1671 = vst [vmem:[%s175 + $0x60] sm:$0xff] %v1607
      %1672 = vst [vmem:[%s175 + $0x68] sm:$0xff] %v1608
      %1673 = vst [vmem:[%s175 + $0x70] sm:$0xff] %v1609
      %1674 = vst [vmem:[%s175 + $0x78] sm:$0xff] %v1610
      %1675 = vst [vmem:[%s175 + $0x80] sm:$0xff] %v1611
      %1676 = vst [vmem:[%s175 + $0x88] sm:$0xff] %v1612
      %1677 = vst [vmem:[%s175 + $0x90] sm:$0xff] %v1613
      %1678 = vst [vmem:[%s175 + $0x98] sm:$0xff] %v1614
      %1679 = vst [vmem:[%s175 + $0xa0] sm:$0xff] %v1615
      %1680 = vst [vmem:[%s175 + $0xa8] sm:$0xff] %v1616
      %1681 = vst [vmem:[%s175 + $0xb0] sm:$0xff] %v1617
      %1682 = vst [vmem:[%s175 + $0xb8] sm:$0xff] %v1618
      %1683 = vst [vmem:[%s175 + $0xc0] sm:$0xff] %v1619
      %1684 = vst [vmem:[%s175 + $0xc8] sm:$0xff] %v1620
      %1685 = vst [vmem:[%s175 + $0xd0] sm:$0xff] %v1621
      %1686 = vst [vmem:[%s175 + $0xd8] sm:$0xff] %v1622
      %1687 = vst [vmem:[%s175 + $0xe0] sm:$0xff] %v1623
      %1688 = vst [vmem:[%s175 + $0xe8] sm:$0xff] %v1624
      %1689 = vst [vmem:[%s175 + $0xf0] sm:$0xff] %v1625
      %1690 = vst [vmem:[%s175 + $0xf8] sm:$0xff] %v1626
      %1691 = vst [vmem:[%s175 + $0x100] sm:$0xff] %v1627
      %1692 = vst [vmem:[%s175 + $0x108] sm:$0xff] %v1628
      %1693 = vst [vmem:[%s175 + $0x110] sm:$0xff] %v1629
      %1694 = vst [vmem:[%s175 + $0x118] sm:$0xff] %v1630
      %1695 = vst [vmem:[%s175 + $0x120] sm:$0xff] %v1631
      %1696 = vst [vmem:[%s175 + $0x128] sm:$0xff] %v1632
      %1697 = vst [vmem:[%s175 + $0x130] sm:$0xff] %v1633
      %1698 = vst [vmem:[%s175 + $0x138] sm:$0xff] %v1634
      %1699 = vst [vmem:[%s175 + $0x140] sm:$0xff] %v1635
      %1700 = vst [vmem:[%s175 + $0x148] sm:$0xff] %v1636
      %1701 = vst [vmem:[%s175 + $0x150] sm:$0xff] %v1637
      %1702 = vst [vmem:[%s175 + $0x158] sm:$0xff] %v1638
      %1703 = vst [vmem:[%s175 + $0x160] sm:$0xff] %v1639
      %1704 = vst [vmem:[%s175 + $0x168] sm:$0xff] %v1640
      %1705 = vst [vmem:[%s175 + $0x170] sm:$0xff] %v1641
      %1706 = vst [vmem:[%s175 + $0x178] sm:$0xff] %v1642
      %1707 = vst [vmem:[%s175 + $0x180] sm:$0xff] %v1643
      %1708 = vst [vmem:[%s175 + $0x188] sm:$0xff] %v1644
      %1709 = vst [vmem:[%s175 + $0x190] sm:$0xff] %v1645
      %1710 = vst [vmem:[%s175 + $0x198] sm:$0xff] %v1646
      %1711 = vst [vmem:[%s175 + $0x1a0] sm:$0xff] %v1647
      %1712 = vst [vmem:[%s175 + $0x1a8] sm:$0xff] %v1648
      %1713 = vst [vmem:[%s175 + $0x1b0] sm:$0xff] %v1649
      %1714 = vst [vmem:[%s175 + $0x1b8] sm:$0xff] %v1650
      %1715 = vst [vmem:[%s175 + $0x1c0] sm:$0xff] %v1651
      %1716 = vst [vmem:[%s175 + $0x1c8] sm:$0xff] %v1652
      %1717 = vst [vmem:[%s175 + $0x1d0] sm:$0xff] %v1653
      %1718 = vst [vmem:[%s175 + $0x1d8] sm:$0xff] %v1654
      %1719 = vst [vmem:[%s175 + $0x1e0] sm:$0xff] %v1655
      %1720 = vst [vmem:[%s175 + $0x1e8] sm:$0xff] %v1656
      %1721 = vst [vmem:[%s175 + $0x1f0] sm:$0xff] %v1657
      %1722 = vst [vmem:[%s175 + $0x1f8] sm:$0xff] %v1658
      %s1723 = smul.u32 64, %s14
      %p1724 = scmp.lt.s32.totalorder %s1723, 1023
      %s1725 = scalar_select %p1724, %s1723, 1023
      %s1726 = smul.addr %s1725, 8
      %s1727 = scalar_lea.vmem %s3, %s1726
      // Predicated region
      $region33: #{resnet_forward.12} parent=31 // pred_check
        %p1728 = pneg %p100
      $region34: #{resnet_forward.12} parent=31 // pred_check_branch
        %1730 = sbr.rel (%p1728) target = $region36
      $region35: #{resnet_forward.12} parent=31 // pred_region
        %s1731 = smul.u32 64, %s14
      $region36: #{resnet_forward.12} parent=31 // pred_fallthru
        _
    $region32: #{resnet_forward.12} parent=5 // pred_fallthru
      _
    %p1732 = scmp.le.s32.totalorder 2, %s9
    // Predicated region
    $region37: #{resnet_forward.12} parent=5 // pred_check
      %p1733 = pneg %p1732
    $region38: #{resnet_forward.12} parent=5 // pred_check_branch
      %1735 = sbr.rel (%p1733) target = $region40
    $region39: #{resnet_forward.12} parent=5 // pred_region
      %s1736 = ssub.s32 %s9, 2
      // Predicated region
      $region41: #{resnet_forward.12} parent=39 // pred_check
        %p1737 = pneg %p106
      $region42: #{resnet_forward.12} parent=39 // pred_check_branch
        %1739 = sbr.rel (%p1737) target = $region44
      $region43: #{resnet_forward.12} parent=39 // pred_region
        %s1740 = smul.u32 64, %s15
        %p1741 = scmp.lt.s32.totalorder %s1740, 1023
        %s1742 = scalar_select %p1741, %s1740, 1023
        %s1743 = smul.addr %s1742, 8
        %s1744 = scalar_lea.vmem %s3, %s1743
      $region44: #{resnet_forward.12} parent=39 // pred_fallthru
        _
    $region40: #{resnet_forward.12} parent=5 // pred_fallthru
      _
  $region6: #{resnet_forward.12} parent=0 // loop_footer
    %s13 = sadd.s32 1, %s9
  $region7: #{resnet_forward.12} parent=0 // loop_footer_branch
    %8 = sbr.rel target = $region3
  $region8: #{resnet_forward.12} parent=0 // loop_exit
    _

// kernel: resnet_forward.13
$region0: #{resnet_forward.13}
  #allocation0 [shape = 'u32[]', space=smem, size = 0x4, offset = 0x4, fixed_abs, tag = 'smem constant byte address 0x4 - core index']
  #allocation1 [shape = 'u32[144,128]{1,0:T(1,128)}', space=vmem, size = 0x12000, scoped, tag = 'internal scratch']
  %s0 = inlined_call_operand.vmem [shape: bf16[1024,256], index: 0, kind: input, shape index: {}]
  %s1 = inlined_call_operand.vmem [shape: bf16[256,128], index: 1, kind: input, shape index: {}]
  %s2 = inlined_call_operand.vmem [shape: f32[1,128], index: 2, kind: input, shape index: {}]
  %s3 = inlined_call_operand.vmem [shape: f32[1024,128], index: 3, kind: output, shape index: {}]
  %s4 = sld [smem:[#allocation0]]
  $region45: #{resnet_forward.13} parent=0
    _
  %s6 = ssub.s32 1, %s4
  %s7 = scalar_select 0, %s6, %s4
  loop: start=0, step=1, limit=4
  $region2: #{resnet_forward.13} parent=0 // loop_pre_header
    _
  $region3: #{resnet_forward.13} parent=0 // loop_header
    %s9 = sphi 0, %s13
    %p10 = scmp.ge.s32.totalorder %s9, 4
    %s19 = sphi 0, %s21
    %s22 = sphi 0, %s19
    %s23 = sphi 0, %s22
    %s39 = sphi 0, %s23
    %s43 = sphi 0, %s43
    %s45 = sphi 0, %s43
    %s46 = sphi 0, %s45
    %s60 = sphi 0, %s46
    %s64 = sphi 0, %s64
    %s66 = sphi 0, %s64
    %s67 = sphi 0, %s66
    %s81 = sphi 0, %s67
    %s87 = sphi 0, %s89
    %s90 = sphi 0, %s87
    %s91 = sphi 0, %s90
    %s107 = sphi 0, %s91
  $region4: #{resnet_forward.13} parent=0 // loop_header_branch
    %12 = sbr.rel (%p10) target = $region8
  $region5: #{resnet_forward.13} parent=0 // loop_body
    %s14 = ssub.s32 %s9, 1
    %s15 = ssub.s32 %s9, 2
    %s16 = sadd.s32 %s9, 1
    %s17 = ssub.s32 %s9, %s16
    %p18 = scmp.eq.s32.totalorder %s17, 0
    %s20 = sadd.s32 %s19, 1
    %s21 = scalar_select %p18, %s19, %s20
    %p24 = pneg %p18
    %p25 = scmp.eq.s32.totalorder %s9, 1
    %p26 = por %p24, %p25
    %p27 = scmp.ne.s32.totalorder %s19, %s22
    %p28 = scmp.eq.s32.totalorder %s9, 0
    %p29 = por %p27, %p28
    %p30 = scmp.ne.s32.totalorder %s19, %s22
    %p31 = scmp.eq.s32.totalorder %s14, 1
    %p32 = por %p30, %p31
    %p33 = scmp.ne.s32.totalorder %s22, %s23
    %p34 = scmp.eq.s32.totalorder %s14, 0
    %p35 = por %p33, %p34
    %p36 = scmp.ne.s32.totalorder %s22, %s23
    %p37 = scmp.eq.s32.totalorder %s15, 1
    %p38 = por %p36, %p37
    %p40 = scmp.ne.s32.totalorder %s23, %s39
    %p41 = scmp.eq.s32.totalorder %s15, 0
    %p42 = por %p40, %p41
    %s44 = sadd.s32 %s43, 1
    %p47 = scmp.eq.s32.totalorder %s9, 1
    %p48 = scmp.ne.s32.totalorder %s43, %s45
    %p49 = scmp.eq.s32.totalorder %s9, 0
    %p50 = por %p48, %p49
    %p51 = scmp.ne.s32.totalorder %s43, %s45
    %p52 = scmp.eq.s32.totalorder %s14, 1
    %p53 = por %p51, %p52
    %p54 = scmp.ne.s32.totalorder %s45, %s46
    %p55 = scmp.eq.s32.totalorder %s14, 0
    %p56 = por %p54, %p55
    %p57 = scmp.ne.s32.totalorder %s45, %s46
    %p58 = scmp.eq.s32.totalorder %s15, 1
    %p59 = por %p57, %p58
    %p61 = scmp.ne.s32.totalorder %s46, %s60
    %p62 = scmp.eq.s32.totalorder %s15, 0
    %p63 = por %p61, %p62
    %s65 = sadd.s32 %s64, 1
    %p68 = scmp.eq.s32.totalorder %s9, 1
    %p69 = scmp.ne.s32.totalorder %s64, %s66
    %p70 = scmp.eq.s32.totalorder %s9, 0
    %p71 = por %p69, %p70
    %p72 = scmp.ne.s32.totalorder %s64, %s66
    %p73 = scmp.eq.s32.totalorder %s14, 1
    %p74 = por %p72, %p73
    %p75 = scmp.ne.s32.totalorder %s66, %s67
    %p76 = scmp.eq.s32.totalorder %s14, 0
    %p77 = por %p75, %p76
    %p78 = scmp.ne.s32.totalorder %s66, %s67
    %p79 = scmp.eq.s32.totalorder %s15, 1
    %p80 = por %p78, %p79
    %p82 = scmp.ne.s32.totalorder %s67, %s81
    %p83 = scmp.eq.s32.totalorder %s15, 0
    %p84 = por %p82, %p83
    %s85 = ssub.s32 %s9, %s16
    %p86 = scmp.eq.s32.totalorder %s85, 0
    %s88 = sadd.s32 %s87, 1
    %s89 = scalar_select %p86, %s87, %s88
    %p92 = pneg %p86
    %p93 = scmp.eq.s32.totalorder %s9, 1
    %p94 = por %p92, %p93
    %p95 = scmp.ne.s32.totalorder %s87, %s90
    %p96 = scmp.eq.s32.totalorder %s9, 0
    %p97 = por %p95, %p96
    %p98 = scmp.ne.s32.totalorder %s87, %s90
    %p99 = scmp.eq.s32.totalorder %s14, 1
    %p100 = por %p98, %p99
    %p101 = scmp.ne.s32.totalorder %s90, %s91
    %p102 = scmp.eq.s32.totalorder %s14, 0
    %p103 = por %p101, %p102
    %p104 = scmp.ne.s32.totalorder %s90, %s91
    %p105 = scmp.eq.s32.totalorder %s15, 1
    %p106 = por %p104, %p105
    %p108 = scmp.ne.s32.totalorder %s91, %s107
    %p109 = scmp.eq.s32.totalorder %s15, 0
    %p110 = por %p108, %p109
    %p111 = scmp.le.s32.totalorder 1, %s9
    %p112 = scmp.lt.s32.totalorder %s9, 3
    %p113 = pnand %p111, %p112
    %p114 = pneg %p113
    // Predicated region
    $region9: #{resnet_forward.13} parent=5 // pred_check
      _
    $region10: #{resnet_forward.13} parent=5 // pred_check_branch
      %116 = sbr.rel (%p113) target = $region12
    $region11: #{resnet_forward.13} parent=5 // pred_region
      %s117 = ssub.s32 %s9, 1
      // Predicated region
      $region13: #{resnet_forward.13} parent=11 // pred_check
        %p118 = pneg %p56
      $region14: #{resnet_forward.13} parent=11 // pred_check_branch
        %120 = sbr.rel (%p118) target = $region16
      $region15: #{resnet_forward.13} parent=11 // pred_region
        _
      $region16: #{resnet_forward.13} parent=11 // pred_fallthru
        _
      // Predicated region
      $region17: #{resnet_forward.13} parent=11 // pred_check
        %p121 = pneg %p77
      $region18: #{resnet_forward.13} parent=11 // pred_check_branch
        %123 = sbr.rel (%p121) target = $region20
      $region19: #{resnet_forward.13} parent=11 // pred_region
        _
      $region20: #{resnet_forward.13} parent=11 // pred_fallthru
        _
    $region12: #{resnet_forward.13} parent=5 // pred_fallthru
      _
    %p124 = scmp.lt.s32.totalorder %s9, 2
    // Predicated region
    $region21: #{resnet_forward.13} parent=5 // pred_check
      %p125 = pneg %p124
    $region22: #{resnet_forward.13} parent=5 // pred_check_branch
      %127 = sbr.rel (%p125) target = $region24
    $region23: #{resnet_forward.13} parent=5 // pred_region
      // Predicated region
      $region25: #{resnet_forward.13} parent=23 // pred_check
        %p128 = pneg %p29
      $region26: #{resnet_forward.13} parent=23 // pred_check_branch
        %130 = sbr.rel (%p128) target = $region28
      $region27: #{resnet_forward.13} parent=23 // pred_region
        %s131 = smul.u32 64, %s9
        %p132 = scmp.lt.s32.totalorder %s131, 127
        %s133 = scalar_select %p132, %s131, 127
        %s134 = smul.addr %s133, 2
        %s135 = smul.addr %s134, 4
        %s136 = scalar_lea.vmem %s0, %s135
        %s137 = smul.u32 64, %s9
      $region28: #{resnet_forward.13} parent=23 // pred_fallthru
        _
    $region24: #{resnet_forward.13} parent=5 // pred_fallthru
      _
    %p138 = scmp.le.s32.totalorder 1, %s9
    %p139 = scmp.lt.s32.totalorder %s9, 3
    %p140 = pnand %p138, %p139
    %p141 = pneg %p140
    // Predicated region
    $region29: #{resnet_forward.13} parent=5 // pred_check
      _
    $region30: #{resnet_forward.13} parent=5 // pred_check_branch
      %143 = sbr.rel (%p140) target = $region32
    $region31: #{resnet_forward.13} parent=5 // pred_region
      %s144 = ssub.s32 %s9, 1
      %s145 = smul.u32 64, %s14
      %p146 = scmp.lt.s32.totalorder %s145, 127
      %s147 = scalar_select %p146, %s145, 127
      %s148 = smul.addr %s147, 2
      %s149 = smul.addr %s148, 4
      %s150 = scalar_lea.vmem %s0, %s149
      %p151 = pneg %p35
      %p152 = pneg %p32
      %p153 = pneg %p56
      %p154 = pneg %p53
      %p155 = pneg %p77
      %p156 = pneg %p74
      %p157 = pneg %p103
      %p158 = pneg %p100
      %s159 = smul.u32 64, %s14
      %p160 = scmp.lt.s32.totalorder %s159, 127
      %s161 = scalar_select %p160, %s159, 127
      %s162 = smul.addr %s161, 8
      %s163 = scalar_lea.vmem %s3, %s162
      %s164 = smul.u32 64, %s14
      %p165 = scmp.lt.s32.totalorder %s164, 127
      %s166 = scalar_select %p165, %s164, 127
      %s167 = smul.addr %s166, 2
      %s168 = smul.addr %s167, 4
      %s169 = scalar_lea.vmem %s0, %s168
      %s170 = smul.u32 64, %s14
      %s171 = smul.u32 64, %s14
      %p172 = scmp.lt.s32.totalorder %s171, 127
      %s173 = scalar_select %p172, %s171, 127
      %s174 = smul.addr %s173, 8
      %s175 = scalar_lea.vmem %s3, %s174
      %s176 = smul.u32 64, %s14
      %v178 = vld [vmem:[%s169] sm:$0xff]
      %v179 = vld [vmem:[%s169 + $0x8] sm:$0xff]
      %v180 = vld [vmem:[%s169 + $0x10] sm:$0xff]
      %v181 = vld [vmem:[%s169 + $0x18] sm:$0xff]
      %v182 = vld [vmem:[%s169 + $0x20] sm:$0xff]
      %v183 = vld [vmem:[%s169 + $0x28] sm:$0xff]
      %v184 = vld [vmem:[%s169 + $0x30] sm:$0xff]
      %v185 = vld [vmem:[%s169 + $0x38] sm:$0xff]
      %v186 = vld [vmem:[%s169 + $0x40] sm:$0xff]
      %v187 = vld [vmem:[%s169 + $0x48] sm:$0xff]
      %v188 = vld [vmem:[%s169 + $0x50] sm:$0xff]
      %v189 = vld [vmem:[%s169 + $0x58] sm:$0xff]
      %v190 = vld [vmem:[%s169 + $0x60] sm:$0xff]
      %v191 = vld [vmem:[%s169 + $0x68] sm:$0xff]
      %v192 = vld [vmem:[%s169 + $0x70] sm:$0xff]
      %v193 = vld [vmem:[%s169 + $0x78] sm:$0xff]
      %v194 = vld [vmem:[%s169 + $0x80] sm:$0xff]
      %v195 = vld [vmem:[%s169 + $0x88] sm:$0xff]
      %v196 = vld [vmem:[%s169 + $0x90] sm:$0xff]
      %v197 = vld [vmem:[%s169 + $0x98] sm:$0xff]
      %v198 = vld [vmem:[%s169 + $0xa0] sm:$0xff]
      %v199 = vld [vmem:[%s169 + $0xa8] sm:$0xff]
      %v200 = vld [vmem:[%s169 + $0xb0] sm:$0xff]
      %v201 = vld [vmem:[%s169 + $0xb8] sm:$0xff]
      %v202 = vld [vmem:[%s169 + $0xc0] sm:$0xff]
      %v203 = vld [vmem:[%s169 + $0xc8] sm:$0xff]
      %v204 = vld [vmem:[%s169 + $0xd0] sm:$0xff]
      %v205 = vld [vmem:[%s169 + $0xd8] sm:$0xff]
      %v206 = vld [vmem:[%s169 + $0xe0] sm:$0xff]
      %v207 = vld [vmem:[%s169 + $0xe8] sm:$0xff]
      %v208 = vld [vmem:[%s169 + $0xf0] sm:$0xff]
      %v209 = vld [vmem:[%s169 + $0xf8] sm:$0xff]
      %v210 = vld [vmem:[%s169 + $0x100] sm:$0xff]
      %v211 = vld [vmem:[%s169 + $0x108] sm:$0xff]
      %v212 = vld [vmem:[%s169 + $0x110] sm:$0xff]
      %v213 = vld [vmem:[%s169 + $0x118] sm:$0xff]
      %v214 = vld [vmem:[%s169 + $0x120] sm:$0xff]
      %v215 = vld [vmem:[%s169 + $0x128] sm:$0xff]
      %v216 = vld [vmem:[%s169 + $0x130] sm:$0xff]
      %v217 = vld [vmem:[%s169 + $0x138] sm:$0xff]
      %v218 = vld [vmem:[%s169 + $0x140] sm:$0xff]
      %v219 = vld [vmem:[%s169 + $0x148] sm:$0xff]
      %v220 = vld [vmem:[%s169 + $0x150] sm:$0xff]
      %v221 = vld [vmem:[%s169 + $0x158] sm:$0xff]
      %v222 = vld [vmem:[%s169 + $0x160] sm:$0xff]
      %v223 = vld [vmem:[%s169 + $0x168] sm:$0xff]
      %v224 = vld [vmem:[%s169 + $0x170] sm:$0xff]
      %v225 = vld [vmem:[%s169 + $0x178] sm:$0xff]
      %v226 = vld [vmem:[%s169 + $0x180] sm:$0xff]
      %v227 = vld [vmem:[%s169 + $0x188] sm:$0xff]
      %v228 = vld [vmem:[%s169 + $0x190] sm:$0xff]
      %v229 = vld [vmem:[%s169 + $0x198] sm:$0xff]
      %v230 = vld [vmem:[%s169 + $0x1a0] sm:$0xff]
      %v231 = vld [vmem:[%s169 + $0x1a8] sm:$0xff]
      %v232 = vld [vmem:[%s169 + $0x1b0] sm:$0xff]
      %v233 = vld [vmem:[%s169 + $0x1b8] sm:$0xff]
      %v234 = vld [vmem:[%s169 + $0x1c0] sm:$0xff]
      %v235 = vld [vmem:[%s169 + $0x1c8] sm:$0xff]
      %v236 = vld [vmem:[%s169 + $0x1d0] sm:$0xff]
      %v237 = vld [vmem:[%s169 + $0x1d8] sm:$0xff]
      %v238 = vld [vmem:[%s169 + $0x1e0] sm:$0xff]
      %v239 = vld [vmem:[%s169 + $0x1e8] sm:$0xff]
      %v240 = vld [vmem:[%s169 + $0x1f0] sm:$0xff]
      %v241 = vld [vmem:[%s169 + $0x1f8] sm:$0xff]
      %v242 = vld [vmem:[%s1] sm:$0xf]
      %v243 = vld [vmem:[%s1 + $0x4] sm:$0xf]
      %v244 = vld [vmem:[%s1 + $0x8] sm:$0xf]
      %v245 = vld [vmem:[%s1 + $0xc] sm:$0xf]
      %v246 = vld [vmem:[%s1 + $0x10] sm:$0xf]
      %v247 = vld [vmem:[%s1 + $0x14] sm:$0xf]
      %v248 = vld [vmem:[%s1 + $0x18] sm:$0xf]
      %v249 = vld [vmem:[%s1 + $0x1c] sm:$0xf]
      %v250 = vld [vmem:[%s1 + $0x20] sm:$0xf]
      %v251 = vld [vmem:[%s1 + $0x24] sm:$0xf]
      %v252 = vld [vmem:[%s1 + $0x28] sm:$0xf]
      %v253 = vld [vmem:[%s1 + $0x2c] sm:$0xf]
      %v254 = vld [vmem:[%s1 + $0x30] sm:$0xf]
      %v255 = vld [vmem:[%s1 + $0x34] sm:$0xf]
      %v256 = vld [vmem:[%s1 + $0x38] sm:$0xf]
      %v257 = vld [vmem:[%s1 + $0x3c] sm:$0xf]
      %v258 = vld [vmem:[%s1 + $0x40] sm:$0xf]
      %v259 = vld [vmem:[%s1 + $0x44] sm:$0xf]
      %v260 = vld [vmem:[%s1 + $0x48] sm:$0xf]
      %v261 = vld [vmem:[%s1 + $0x4c] sm:$0xf]
      %v262 = vld [vmem:[%s1 + $0x50] sm:$0xf]
      %v263 = vld [vmem:[%s1 + $0x54] sm:$0xf]
      %v264 = vld [vmem:[%s1 + $0x58] sm:$0xf]
      %v265 = vld [vmem:[%s1 + $0x5c] sm:$0xf]
      %v266 = vld [vmem:[%s1 + $0x60] sm:$0xf]
      %v267 = vld [vmem:[%s1 + $0x64] sm:$0xf]
      %v268 = vld [vmem:[%s1 + $0x68] sm:$0xf]
      %v269 = vld [vmem:[%s1 + $0x6c] sm:$0xf]
      %v270 = vld [vmem:[%s1 + $0x70] sm:$0xf]
      %v271 = vld [vmem:[%s1 + $0x74] sm:$0xf]
      %v272 = vld [vmem:[%s1 + $0x78] sm:$0xf]
      %v273 = vld [vmem:[%s1 + $0x7c] sm:$0xf]
      %v274 = vld [vmem:[%s2] sm:$0x1]
      %v276 = vlaneseq
      %v277 = vshrl.u32 %v276, 7
      %v278 = vsub.s32 0, %v277
      %v279 = vrot.slane %v274, %v278
      %v345 = vunpack.c.l.b16 %v178
      %v346 = vunpack.c.h.b16 %v178
      %v347 = vunpack.c.l.b16 %v179
      %v348 = vunpack.c.h.b16 %v179
      %v349 = vunpack.c.l.b16 %v180
      %v350 = vunpack.c.h.b16 %v180
      %v351 = vunpack.c.l.b16 %v181
      %v352 = vunpack.c.h.b16 %v181
      %v353 = vunpack.c.l.b16 %v182
      %v354 = vunpack.c.h.b16 %v182
      %v355 = vunpack.c.l.b16 %v183
      %v356 = vunpack.c.h.b16 %v183
      %v357 = vunpack.c.l.b16 %v184
      %v358 = vunpack.c.h.b16 %v184
      %v359 = vunpack.c.l.b16 %v185
      %v360 = vunpack.c.h.b16 %v185
      %v361 = vunpack.c.l.b16 %v186
      %v362 = vunpack.c.h.b16 %v186
      %v363 = vunpack.c.l.b16 %v187
      %v364 = vunpack.c.h.b16 %v187
      %v365 = vunpack.c.l.b16 %v188
      %v366 = vunpack.c.h.b16 %v188
      %v367 = vunpack.c.l.b16 %v189
      %v368 = vunpack.c.h.b16 %v189
      %v369 = vunpack.c.l.b16 %v190
      %v370 = vunpack.c.h.b16 %v190
      %v371 = vunpack.c.l.b16 %v191
      %v372 = vunpack.c.h.b16 %v191
      %v373 = vunpack.c.l.b16 %v192
      %v374 = vunpack.c.h.b16 %v192
      %v375 = vunpack.c.l.b16 %v193
      %v376 = vunpack.c.h.b16 %v193
      %v377 = vunpack.c.l.b16 %v194
      %v378 = vunpack.c.h.b16 %v194
      %v379 = vunpack.c.l.b16 %v195
      %v380 = vunpack.c.h.b16 %v195
      %v381 = vunpack.c.l.b16 %v196
      %v382 = vunpack.c.h.b16 %v196
      %v383 = vunpack.c.l.b16 %v197
      %v384 = vunpack.c.h.b16 %v197
      %v385 = vunpack.c.l.b16 %v198
      %v386 = vunpack.c.h.b16 %v198
      %v387 = vunpack.c.l.b16 %v199
      %v388 = vunpack.c.h.b16 %v199
      %v389 = vunpack.c.l.b16 %v200
      %v390 = vunpack.c.h.b16 %v200
      %v391 = vunpack.c.l.b16 %v201
      %v392 = vunpack.c.h.b16 %v201
      %v393 = vunpack.c.l.b16 %v202
      %v394 = vunpack.c.h.b16 %v202
      %v395 = vunpack.c.l.b16 %v203
      %v396 = vunpack.c.h.b16 %v203
      %v397 = vunpack.c.l.b16 %v204
      %v398 = vunpack.c.h.b16 %v204
      %v399 = vunpack.c.l.b16 %v205
      %v400 = vunpack.c.h.b16 %v205
      %v401 = vunpack.c.l.b16 %v206
      %v402 = vunpack.c.h.b16 %v206
      %v403 = vunpack.c.l.b16 %v207
      %v404 = vunpack.c.h.b16 %v207
      %v405 = vunpack.c.l.b16 %v208
      %v406 = vunpack.c.h.b16 %v208
      %v407 = vunpack.c.l.b16 %v209
      %v408 = vunpack.c.h.b16 %v209
      %v409 = vunpack.c.l.b16 %v210
      %v410 = vunpack.c.h.b16 %v210
      %v411 = vunpack.c.l.b16 %v211
      %v412 = vunpack.c.h.b16 %v211
      %v413 = vunpack.c.l.b16 %v212
      %v414 = vunpack.c.h.b16 %v212
      %v415 = vunpack.c.l.b16 %v213
      %v416 = vunpack.c.h.b16 %v213
      %v417 = vunpack.c.l.b16 %v214
      %v418 = vunpack.c.h.b16 %v214
      %v419 = vunpack.c.l.b16 %v215
      %v420 = vunpack.c.h.b16 %v215
      %v421 = vunpack.c.l.b16 %v216
      %v422 = vunpack.c.h.b16 %v216
      %v423 = vunpack.c.l.b16 %v217
      %v424 = vunpack.c.h.b16 %v217
      %v425 = vunpack.c.l.b16 %v218
      %v426 = vunpack.c.h.b16 %v218
      %v427 = vunpack.c.l.b16 %v219
      %v428 = vunpack.c.h.b16 %v219
      %v429 = vunpack.c.l.b16 %v220
      %v430 = vunpack.c.h.b16 %v220
      %v431 = vunpack.c.l.b16 %v221
      %v432 = vunpack.c.h.b16 %v221
      %v433 = vunpack.c.l.b16 %v222
      %v434 = vunpack.c.h.b16 %v222
      %v435 = vunpack.c.l.b16 %v223
      %v436 = vunpack.c.h.b16 %v223
      %v437 = vunpack.c.l.b16 %v224
      %v438 = vunpack.c.h.b16 %v224
      %v439 = vunpack.c.l.b16 %v225
      %v440 = vunpack.c.h.b16 %v225
      %v441 = vunpack.c.l.b16 %v226
      %v442 = vunpack.c.h.b16 %v226
      %v443 = vunpack.c.l.b16 %v227
      %v444 = vunpack.c.h.b16 %v227
      %v445 = vunpack.c.l.b16 %v228
      %v446 = vunpack.c.h.b16 %v228
      %v447 = vunpack.c.l.b16 %v229
      %v448 = vunpack.c.h.b16 %v229
      %v449 = vunpack.c.l.b16 %v230
      %v450 = vunpack.c.h.b16 %v230
      %v451 = vunpack.c.l.b16 %v231
      %v452 = vunpack.c.h.b16 %v231
      %v453 = vunpack.c.l.b16 %v232
      %v454 = vunpack.c.h.b16 %v232
      %v455 = vunpack.c.l.b16 %v233
      %v456 = vunpack.c.h.b16 %v233
      %v457 = vunpack.c.l.b16 %v234
      %v458 = vunpack.c.h.b16 %v234
      %v459 = vunpack.c.l.b16 %v235
      %v460 = vunpack.c.h.b16 %v235
      %v461 = vunpack.c.l.b16 %v236
      %v462 = vunpack.c.h.b16 %v236
      %v463 = vunpack.c.l.b16 %v237
      %v464 = vunpack.c.h.b16 %v237
      %v465 = vunpack.c.l.b16 %v238
      %v466 = vunpack.c.h.b16 %v238
      %v467 = vunpack.c.l.b16 %v239
      %v468 = vunpack.c.h.b16 %v239
      %v469 = vunpack.c.l.b16 %v240
      %v470 = vunpack.c.h.b16 %v240
      %v471 = vunpack.c.l.b16 %v241
      %v472 = vunpack.c.h.b16 %v241
      %v473 = vpack.c.b16 %v347, %v345
      %v474 = vpack.c.b16 %v348, %v346
      %v475 = vpack.c.b16 %v351, %v349
      %v476 = vpack.c.b16 %v352, %v350
      %v477 = vpack.c.b16 %v355, %v353
      %v478 = vpack.c.b16 %v356, %v354
      %v479 = vpack.c.b16 %v359, %v357
      %v480 = vpack.c.b16 %v360, %v358
      %v481 = vpack.c.b16 %v363, %v361
      %v482 = vpack.c.b16 %v364, %v362
      %v483 = vpack.c.b16 %v367, %v365
      %v484 = vpack.c.b16 %v368, %v366
      %v485 = vpack.c.b16 %v371, %v369
      %v486 = vpack.c.b16 %v372, %v370
      %v487 = vpack.c.b16 %v375, %v373
      %v488 = vpack.c.b16 %v376, %v374
      %v489 = vpack.c.b16 %v379, %v377
      %v490 = vpack.c.b16 %v380, %v378
      %v491 = vpack.c.b16 %v383, %v381
      %v492 = vpack.c.b16 %v384, %v382
      %v493 = vpack.c.b16 %v387, %v385
      %v494 = vpack.c.b16 %v388, %v386
      %v495 = vpack.c.b16 %v391, %v389
      %v496 = vpack.c.b16 %v392, %v390
      %v497 = vpack.c.b16 %v395, %v393
      %v498 = vpack.c.b16 %v396, %v394
      %v499 = vpack.c.b16 %v399, %v397
      %v500 = vpack.c.b16 %v400, %v398
      %v501 = vpack.c.b16 %v403, %v401
      %v502 = vpack.c.b16 %v404, %v402
      %v503 = vpack.c.b16 %v407, %v405
      %v504 = vpack.c.b16 %v408, %v406
      %v505 = vpack.c.b16 %v411, %v409
      %v506 = vpack.c.b16 %v412, %v410
      %v507 = vpack.c.b16 %v415, %v413
      %v508 = vpack.c.b16 %v416, %v414
      %v509 = vpack.c.b16 %v419, %v417
      %v510 = vpack.c.b16 %v420, %v418
      %v511 = vpack.c.b16 %v423, %v421
      %v512 = vpack.c.b16 %v424, %v422
      %v513 = vpack.c.b16 %v427, %v425
      %v514 = vpack.c.b16 %v428, %v426
      %v515 = vpack.c.b16 %v431, %v429
      %v516 = vpack.c.b16 %v432, %v430
      %v517 = vpack.c.b16 %v435, %v433
      %v518 = vpack.c.b16 %v436, %v434
      %v519 = vpack.c.b16 %v439, %v437
      %v520 = vpack.c.b16 %v440, %v438
      %v521 = vpack.c.b16 %v443, %v441
      %v522 = vpack.c.b16 %v444, %v442
      %v523 = vpack.c.b16 %v447, %v445
      %v524 = vpack.c.b16 %v448, %v446
      %v525 = vpack.c.b16 %v451, %v449
      %v526 = vpack.c.b16 %v452, %v450
      %v527 = vpack.c.b16 %v455, %v453
      %v528 = vpack.c.b16 %v456, %v454
      %v529 = vpack.c.b16 %v459, %v457
      %v530 = vpack.c.b16 %v460, %v458
      %v531 = vpack.c.b16 %v463, %v461
      %v532 = vpack.c.b16 %v464, %v462
      %v533 = vpack.c.b16 %v467, %v465
      %v534 = vpack.c.b16 %v468, %v466
      %v535 = vpack.c.b16 %v471, %v469
      %v536 = vpack.c.b16 %v472, %v470
      %v633 = vunpack.c.l.b16 %v242
      %v634 = vunpack.c.l.b16 %v243
      %v635 = vunpack.c.l.b16 %v244
      %v636 = vunpack.c.l.b16 %v245
      %v637 = vunpack.c.l.b16 %v246
      %v638 = vunpack.c.l.b16 %v247
      %v639 = vunpack.c.l.b16 %v248
      %v640 = vunpack.c.l.b16 %v249
      %v641 = vunpack.c.l.b16 %v250
      %v642 = vunpack.c.l.b16 %v251
      %v643 = vunpack.c.l.b16 %v252
      %v644 = vunpack.c.l.b16 %v253
      %v645 = vunpack.c.l.b16 %v254
      %v646 = vunpack.c.l.b16 %v255
      %v647 = vunpack.c.l.b16 %v256
      %v648 = vunpack.c.l.b16 %v257
      %v649 = vunpack.c.l.b16 %v258
      %v650 = vunpack.c.l.b16 %v259
      %v651 = vunpack.c.l.b16 %v260
      %v652 = vunpack.c.l.b16 %v261
      %v653 = vunpack.c.l.b16 %v262
      %v654 = vunpack.c.l.b16 %v263
      %v655 = vunpack.c.l.b16 %v264
      %v656 = vunpack.c.l.b16 %v265
      %v657 = vunpack.c.l.b16 %v266
      %v658 = vunpack.c.l.b16 %v267
      %v659 = vunpack.c.l.b16 %v268
      %v660 = vunpack.c.l.b16 %v269
      %v661 = vunpack.c.l.b16 %v270
      %v662 = vunpack.c.l.b16 %v271
      %v663 = vunpack.c.l.b16 %v272
      %v664 = vunpack.c.l.b16 %v273
      %v665 = vpack.c.b16 %v634, %v633
      %v666 = vpack.c.b16 %v636, %v635
      %v667 = vpack.c.b16 %v638, %v637
      %v668 = vpack.c.b16 %v640, %v639
      %v669 = vpack.c.b16 %v642, %v641
      %v670 = vpack.c.b16 %v644, %v643
      %v671 = vpack.c.b16 %v646, %v645
      %v672 = vpack.c.b16 %v648, %v647
      %v673 = vpack.c.b16 %v650, %v649
      %v674 = vpack.c.b16 %v652, %v651
      %v675 = vpack.c.b16 %v654, %v653
      %v676 = vpack.c.b16 %v656, %v655
      %v677 = vpack.c.b16 %v658, %v657
      %v678 = vpack.c.b16 %v660, %v659
      %v679 = vpack.c.b16 %v662, %v661
      %v680 = vpack.c.b16 %v664, %v663
      %697 = vmatprep.subr.bf16.mxu0 0
      %698 = vmatpush1.bf16.msra.mxu0 %v665
      %699 = vmatprep.subr.bf16.mxu0 0
      %700 = vmatpush1.bf16.msra.mxu0 %v666
      %701 = vmatprep.subr.bf16.mxu0 0
      %702 = vmatpush1.bf16.msra.mxu0 %v667
      %703 = vmatprep.subr.bf16.mxu0 0
      %704 = vmatpush1.bf16.msra.mxu0 %v668
      %705 = vmatprep.subr.bf16.mxu0 0
      %706 = vmatpush1.bf16.msra.mxu0 %v669
      %707 = vmatprep.subr.bf16.mxu0 0
      %708 = vmatpush1.bf16.msra.mxu0 %v670
      %709 = vmatprep.subr.bf16.mxu0 0
      %710 = vmatpush1.bf16.msra.mxu0 %v671
      %711 = vmatprep.subr.bf16.mxu0 0
      %712 = vmatpush1.bf16.msra.mxu0 %v672
      %713 = vmatprep.subr.bf16.mxu0 0
      %714 = vmatpush1.bf16.msra.mxu0 %v673
      %715 = vmatprep.subr.bf16.mxu0 0
      %716 = vmatpush1.bf16.msra.mxu0 %v674
      %717 = vmatprep.subr.bf16.mxu0 0
      %718 = vmatpush1.bf16.msra.mxu0 %v675
      %719 = vmatprep.subr.bf16.mxu0 0
      %720 = vmatpush1.bf16.msra.mxu0 %v676
      %721 = vmatprep.subr.bf16.mxu0 0
      %722 = vmatpush1.bf16.msra.mxu0 %v677
      %723 = vmatprep.subr.bf16.mxu0 0
      %724 = vmatpush1.bf16.msra.mxu0 %v678
      %725 = vmatprep.subr.bf16.mxu0 0
      %726 = vmatpush1.bf16.msra.mxu0 %v679
      %727 = vmatprep.subr.bf16.mxu0 0
      %728 = vmatpush1.bf16.msra.mxu0 %v680
      %729 = vmatprep.mubr.bf16.mxu0 %v474
      %730 = vmatmul.mubr.bf16.gmra.mrb[0].mxu0 %v473
      %v731 = vpop.f32.mrb[0].mxu0
      %v732 = vadd.f32 %v279, %v731
      %v733 = vpop.f32.mrb[0].mxu0
      %v734 = vpop.f32.mrb[0].mxu0
      %v735 = vadd.f32 %v279, %v734
      %v736 = vpop.f32.mrb[0].mxu0
      %737 = vmatprep.mubr.bf16.mxu0 %v476
      %738 = vmatmul.mubr.bf16.gmra.mrb[0].mxu0 %v475
      %v739 = vpop.f32.mrb[0].mxu0
      %v740 = vadd.f32 %v279, %v739
      %v741 = vpop.f32.mrb[0].mxu0
      %v742 = vpop.f32.mrb[0].mxu0
      %v743 = vadd.f32 %v279, %v742
      %v744 = vpop.f32.mrb[0].mxu0
      %745 = vmatprep.mubr.bf16.mxu0 %v478
      %746 = vmatmul.mubr.bf16.gmra.mrb[0].mxu0 %v477
      %v747 = vpop.f32.mrb[0].mxu0
      %v748 = vadd.f32 %v279, %v747
      %v749 = vpop.f32.mrb[0].mxu0
      %v750 = vpop.f32.mrb[0].mxu0
      %v751 = vadd.f32 %v279, %v750
      %v752 = vpop.f32.mrb[0].mxu0
      %753 = vmatprep.mubr.bf16.mxu0 %v480
      %754 = vmatmul.mubr.bf16.gmra.mrb[0].mxu0 %v479
      %v755 = vpop.f32.mrb[0].mxu0
      %v756 = vadd.f32 %v279, %v755
      %v757 = vpop.f32.mrb[0].mxu0
      %v758 = vpop.f32.mrb[0].mxu0
      %v759 = vadd.f32 %v279, %v758
      %v760 = vpop.f32.mrb[0].mxu0
      %761 = vmatprep.mubr.bf16.mxu0 %v482
      %762 = vmatmul.mubr.bf16.gmra.mrb[0].mxu0 %v481
      %v763 = vpop.f32.mrb[0].mxu0
      %v764 = vadd.f32 %v279, %v763
      %v765 = vpop.f32.mrb[0].mxu0
      %v766 = vpop.f32.mrb[0].mxu0
      %v767 = vadd.f32 %v279, %v766
      %v768 = vpop.f32.mrb[0].mxu0
      %769 = vmatprep.mubr.bf16.mxu0 %v484
      %770 = vmatmul.mubr.bf16.gmra.mrb[0].mxu0 %v483
      %v771 = vpop.f32.mrb[0].mxu0
      %v772 = vadd.f32 %v279, %v771
      %v773 = vpop.f32.mrb[0].mxu0
      %v774 = vpop.f32.mrb[0].mxu0
      %v775 = vadd.f32 %v279, %v774
      %v776 = vpop.f32.mrb[0].mxu0
      %777 = vmatprep.mubr.bf16.mxu0 %v486
      %778 = vmatmul.mubr.bf16.gmra.mrb[0].mxu0 %v485
      %v779 = vpop.f32.mrb[0].mxu0
      %v780 = vadd.f32 %v279, %v779
      %v781 = vpop.f32.mrb[0].mxu0
      %v782 = vpop.f32.mrb[0].mxu0
      %v783 = vadd.f32 %v279, %v782
      %v784 = vpop.f32.mrb[0].mxu0
      %785 = vmatprep.mubr.bf16.mxu0 %v488
      %786 = vmatmul.mubr.bf16.gmra.mrb[0].mxu0 %v487
      %v787 = vpop.f32.mrb[0].mxu0
      %v788 = vadd.f32 %v279, %v787
      %v789 = vpop.f32.mrb[0].mxu0
      %v790 = vpop.f32.mrb[0].mxu0
      %v791 = vadd.f32 %v279, %v790
      %v792 = vpop.f32.mrb[0].mxu0
      %793 = vmatprep.mubr.bf16.mxu0 %v490
      %794 = vmatmul.mubr.bf16.gmra.mrb[0].mxu0 %v489
      %v795 = vpop.f32.mrb[0].mxu0
      %v796 = vadd.f32 %v279, %v795
      %v797 = vpop.f32.mrb[0].mxu0
      %v798 = vpop.f32.mrb[0].mxu0
      %v799 = vadd.f32 %v279, %v798
      %v800 = vpop.f32.mrb[0].mxu0
      %801 = vmatprep.mubr.bf16.mxu0 %v492
      %802 = vmatmul.mubr.bf16.gmra.mrb[0].mxu0 %v491
      %v803 = vpop.f32.mrb[0].mxu0
      %v804 = vadd.f32 %v279, %v803
      %v805 = vpop.f32.mrb[0].mxu0
      %v806 = vpop.f32.mrb[0].mxu0
      %v807 = vadd.f32 %v279, %v806
      %v808 = vpop.f32.mrb[0].mxu0
      %809 = vmatprep.mubr.bf16.mxu0 %v494
      %810 = vmatmul.mubr.bf16.gmra.mrb[0].mxu0 %v493
      %v811 = vpop.f32.mrb[0].mxu0
      %v812 = vadd.f32 %v279, %v811
      %v813 = vpop.f32.mrb[0].mxu0
      %v814 = vpop.f32.mrb[0].mxu0
      %v815 = vadd.f32 %v279, %v814
      %v816 = vpop.f32.mrb[0].mxu0
      %817 = vmatprep.mubr.bf16.mxu0 %v496
      %818 = vmatmul.mubr.bf16.gmra.mrb[0].mxu0 %v495
      %v819 = vpop.f32.mrb[0].mxu0
      %v820 = vadd.f32 %v279, %v819
      %v821 = vpop.f32.mrb[0].mxu0
      %v822 = vpop.f32.mrb[0].mxu0
      %v823 = vadd.f32 %v279, %v822
      %v824 = vpop.f32.mrb[0].mxu0
      %825 = vmatprep.mubr.bf16.mxu0 %v498
      %826 = vmatmul.mubr.bf16.gmra.mrb[0].mxu0 %v497
      %v827 = vpop.f32.mrb[0].mxu0
      %v828 = vadd.f32 %v279, %v827
      %v829 = vpop.f32.mrb[0].mxu0
      %v830 = vpop.f32.mrb[0].mxu0
      %v831 = vadd.f32 %v279, %v830
      %v832 = vpop.f32.mrb[0].mxu0
      %833 = vmatprep.mubr.bf16.mxu0 %v500
      %834 = vmatmul.mubr.bf16.gmra.mrb[0].mxu0 %v499
      %v835 = vpop.f32.mrb[0].mxu0
      %v836 = vadd.f32 %v279, %v835
      %v837 = vpop.f32.mrb[0].mxu0
      %v838 = vpop.f32.mrb[0].mxu0
      %v839 = vadd.f32 %v279, %v838
      %v840 = vpop.f32.mrb[0].mxu0
      %841 = vmatprep.mubr.bf16.mxu0 %v502
      %842 = vmatmul.mubr.bf16.gmra.mrb[0].mxu0 %v501
      %v843 = vpop.f32.mrb[0].mxu0
      %v844 = vadd.f32 %v279, %v843
      %v845 = vpop.f32.mrb[0].mxu0
      %v846 = vpop.f32.mrb[0].mxu0
      %v847 = vadd.f32 %v279, %v846
      %v848 = vpop.f32.mrb[0].mxu0
      %849 = vmatprep.mubr.bf16.mxu0 %v504
      %850 = vmatmul.mubr.bf16.gmra.mrb[0].mxu0 %v503
      %v851 = vpop.f32.mrb[0].mxu0
      %v852 = vadd.f32 %v279, %v851
      %v853 = vpop.f32.mrb[0].mxu0
      %v854 = vpop.f32.mrb[0].mxu0
      %v855 = vadd.f32 %v279, %v854
      %v856 = vpop.f32.mrb[0].mxu0
      %857 = vmatprep.mubr.bf16.mxu0 %v506
      %858 = vmatmul.mubr.bf16.gmra.mrb[0].mxu0 %v505
      %v859 = vpop.f32.mrb[0].mxu0
      %v860 = vadd.f32 %v279, %v859
      %v861 = vpop.f32.mrb[0].mxu0
      %v862 = vpop.f32.mrb[0].mxu0
      %v863 = vadd.f32 %v279, %v862
      %v864 = vpop.f32.mrb[0].mxu0
      %865 = vmatprep.mubr.bf16.mxu0 %v508
      %866 = vmatmul.mubr.bf16.gmra.mrb[0].mxu0 %v507
      %v867 = vpop.f32.mrb[0].mxu0
      %v868 = vadd.f32 %v279, %v867
      %v869 = vpop.f32.mrb[0].mxu0
      %v870 = vpop.f32.mrb[0].mxu0
      %v871 = vadd.f32 %v279, %v870
      %v872 = vpop.f32.mrb[0].mxu0
      %873 = vmatprep.mubr.bf16.mxu0 %v510
      %874 = vmatmul.mubr.bf16.gmra.mrb[0].mxu0 %v509
      %v875 = vpop.f32.mrb[0].mxu0
      %v876 = vadd.f32 %v279, %v875
      %v877 = vpop.f32.mrb[0].mxu0
      %v878 = vpop.f32.mrb[0].mxu0
      %v879 = vadd.f32 %v279, %v878
      %v880 = vpop.f32.mrb[0].mxu0
      %881 = vmatprep.mubr.bf16.mxu0 %v512
      %882 = vmatmul.mubr.bf16.gmra.mrb[0].mxu0 %v511
      %v883 = vpop.f32.mrb[0].mxu0
      %v884 = vadd.f32 %v279, %v883
      %v885 = vpop.f32.mrb[0].mxu0
      %v886 = vpop.f32.mrb[0].mxu0
      %v887 = vadd.f32 %v279, %v886
      %v888 = vpop.f32.mrb[0].mxu0
      %889 = vmatprep.mubr.bf16.mxu0 %v514
      %890 = vmatmul.mubr.bf16.gmra.mrb[0].mxu0 %v513
      %v891 = vpop.f32.mrb[0].mxu0
      %v892 = vadd.f32 %v279, %v891
      %v893 = vpop.f32.mrb[0].mxu0
      %v894 = vpop.f32.mrb[0].mxu0
      %v895 = vadd.f32 %v279, %v894
      %v896 = vpop.f32.mrb[0].mxu0
      %897 = vmatprep.mubr.bf16.mxu0 %v516
      %898 = vmatmul.mubr.bf16.gmra.mrb[0].mxu0 %v515
      %v899 = vpop.f32.mrb[0].mxu0
      %v900 = vadd.f32 %v279, %v899
      %v901 = vpop.f32.mrb[0].mxu0
      %v902 = vpop.f32.mrb[0].mxu0
      %v903 = vadd.f32 %v279, %v902
      %v904 = vpop.f32.mrb[0].mxu0
      %905 = vmatprep.mubr.bf16.mxu0 %v518
      %906 = vmatmul.mubr.bf16.gmra.mrb[0].mxu0 %v517
      %v907 = vpop.f32.mrb[0].mxu0
      %v908 = vadd.f32 %v279, %v907
      %v909 = vpop.f32.mrb[0].mxu0
      %v910 = vpop.f32.mrb[0].mxu0
      %v911 = vadd.f32 %v279, %v910
      %v912 = vpop.f32.mrb[0].mxu0
      %913 = vmatprep.mubr.bf16.mxu0 %v520
      %914 = vmatmul.mubr.bf16.gmra.mrb[0].mxu0 %v519
      %v915 = vpop.f32.mrb[0].mxu0
      %v916 = vadd.f32 %v279, %v915
      %v917 = vpop.f32.mrb[0].mxu0
      %v918 = vpop.f32.mrb[0].mxu0
      %v919 = vadd.f32 %v279, %v918
      %v920 = vpop.f32.mrb[0].mxu0
      %921 = vmatprep.mubr.bf16.mxu0 %v522
      %922 = vmatmul.mubr.bf16.gmra.mrb[0].mxu0 %v521
      %v923 = vpop.f32.mrb[0].mxu0
      %v924 = vadd.f32 %v279, %v923
      %v925 = vpop.f32.mrb[0].mxu0
      %v926 = vpop.f32.mrb[0].mxu0
      %v927 = vadd.f32 %v279, %v926
      %v928 = vpop.f32.mrb[0].mxu0
      %929 = vmatprep.mubr.bf16.mxu0 %v524
      %930 = vmatmul.mubr.bf16.gmra.mrb[0].mxu0 %v523
      %v931 = vpop.f32.mrb[0].mxu0
      %v932 = vadd.f32 %v279, %v931
      %v933 = vpop.f32.mrb[0].mxu0
      %v934 = vpop.f32.mrb[0].mxu0
      %v935 = vadd.f32 %v279, %v934
      %v936 = vpop.f32.mrb[0].mxu0
      %937 = vmatprep.mubr.bf16.mxu0 %v526
      %938 = vmatmul.mubr.bf16.gmra.mrb[0].mxu0 %v525
      %v939 = vpop.f32.mrb[0].mxu0
      %v940 = vadd.f32 %v279, %v939
      %v941 = vpop.f32.mrb[0].mxu0
      %v942 = vpop.f32.mrb[0].mxu0
      %v943 = vadd.f32 %v279, %v942
      %v944 = vpop.f32.mrb[0].mxu0
      %945 = vmatprep.mubr.bf16.mxu0 %v528
      %946 = vmatmul.mubr.bf16.gmra.mrb[0].mxu0 %v527
      %v947 = vpop.f32.mrb[0].mxu0
      %v948 = vadd.f32 %v279, %v947
      %v949 = vpop.f32.mrb[0].mxu0
      %v950 = vpop.f32.mrb[0].mxu0
      %v951 = vadd.f32 %v279, %v950
      %v952 = vpop.f32.mrb[0].mxu0
      %953 = vmatprep.mubr.bf16.mxu0 %v530
      %954 = vmatmul.mubr.bf16.gmra.mrb[0].mxu0 %v529
      %v955 = vpop.f32.mrb[0].mxu0
      %v956 = vadd.f32 %v279, %v955
      %v957 = vpop.f32.mrb[0].mxu0
      %v958 = vpop.f32.mrb[0].mxu0
      %v959 = vadd.f32 %v279, %v958
      %v960 = vpop.f32.mrb[0].mxu0
      %961 = vmatprep.mubr.bf16.mxu0 %v532
      %962 = vmatmul.mubr.bf16.gmra.mrb[0].mxu0 %v531
      %v963 = vpop.f32.mrb[0].mxu0
      %v964 = vadd.f32 %v279, %v963
      %v965 = vpop.f32.mrb[0].mxu0
      %v966 = vpop.f32.mrb[0].mxu0
      %v967 = vadd.f32 %v279, %v966
      %v968 = vpop.f32.mrb[0].mxu0
      %969 = vmatprep.mubr.bf16.mxu0 %v534
      %970 = vmatmul.mubr.bf16.gmra.mrb[0].mxu0 %v533
      %v971 = vpop.f32.mrb[0].mxu0
      %v972 = vadd.f32 %v279, %v971
      %v973 = vpop.f32.mrb[0].mxu0
      %v974 = vpop.f32.mrb[0].mxu0
      %v975 = vadd.f32 %v279, %v974
      %v976 = vpop.f32.mrb[0].mxu0
      %977 = vmatprep.mubr.bf16.mxu0 %v536
      %978 = vmatmul.mubr.bf16.gmra.mrb[0].mxu0 %v535
      %v979 = vpop.f32.mrb[0].mxu0
      %v980 = vadd.f32 %v279, %v979
      %v981 = vpop.f32.mrb[0].mxu0
      %v982 = vpop.f32.mrb[0].mxu0
      %v983 = vadd.f32 %v279, %v982
      %v984 = vpop.f32.mrb[0].mxu0
      %985 = vdwg.mxu0
      %v986 = vmax.f32 %v732, 0.0
      %v987 = vmax.f32 %v735, 0.0
      %v988 = vmax.f32 %v740, 0.0
      %v989 = vmax.f32 %v743, 0.0
      %v990 = vmax.f32 %v748, 0.0
      %v991 = vmax.f32 %v751, 0.0
      %v992 = vmax.f32 %v756, 0.0
      %v993 = vmax.f32 %v759, 0.0
      %v994 = vmax.f32 %v764, 0.0
      %v995 = vmax.f32 %v767, 0.0
      %v996 = vmax.f32 %v772, 0.0
      %v997 = vmax.f32 %v775, 0.0
      %v998 = vmax.f32 %v780, 0.0
      %v999 = vmax.f32 %v783, 0.0
      %v1000 = vmax.f32 %v788, 0.0
      %v1001 = vmax.f32 %v791, 0.0
      %v1002 = vmax.f32 %v796, 0.0
      %v1003 = vmax.f32 %v799, 0.0
      %v1004 = vmax.f32 %v804, 0.0
      %v1005 = vmax.f32 %v807, 0.0
      %v1006 = vmax.f32 %v812, 0.0
      %v1007 = vmax.f32 %v815, 0.0
      %v1008 = vmax.f32 %v820, 0.0
      %v1009 = vmax.f32 %v823, 0.0
      %v1010 = vmax.f32 %v828, 0.0
      %v1011 = vmax.f32 %v831, 0.0
      %v1012 = vmax.f32 %v836, 0.0
      %v1013 = vmax.f32 %v839, 0.0
      %v1014 = vmax.f32 %v844, 0.0
      %v1015 = vmax.f32 %v847, 0.0
      %v1016 = vmax.f32 %v852, 0.0
      %v1017 = vmax.f32 %v855, 0.0
      %v1018 = vmax.f32 %v860, 0.0
      %v1019 = vmax.f32 %v863, 0.0
      %v1020 = vmax.f32 %v868, 0.0
      %v1021 = vmax.f32 %v871, 0.0
      %v1022 = vmax.f32 %v876, 0.0
      %v1023 = vmax.f32 %v879, 0.0
      %v1024 = vmax.f32 %v884, 0.0
      %v1025 = vmax.f32 %v887, 0.0
      %v1026 = vmax.f32 %v892, 0.0
      %v1027 = vmax.f32 %v895, 0.0
      %v1028 = vmax.f32 %v900, 0.0
      %v1029 = vmax.f32 %v903, 0.0
      %v1030 = vmax.f32 %v908, 0.0
      %v1031 = vmax.f32 %v911, 0.0
      %v1032 = vmax.f32 %v916, 0.0
      %v1033 = vmax.f32 %v919, 0.0
      %v1034 = vmax.f32 %v924, 0.0
      %v1035 = vmax.f32 %v927, 0.0
      %v1036 = vmax.f32 %v932, 0.0
      %v1037 = vmax.f32 %v935, 0.0
      %v1038 = vmax.f32 %v940, 0.0
      %v1039 = vmax.f32 %v943, 0.0
      %v1040 = vmax.f32 %v948, 0.0
      %v1041 = vmax.f32 %v951, 0.0
      %v1042 = vmax.f32 %v956, 0.0
      %v1043 = vmax.f32 %v959, 0.0
      %v1044 = vmax.f32 %v964, 0.0
      %v1045 = vmax.f32 %v967, 0.0
      %v1046 = vmax.f32 %v972, 0.0
      %v1047 = vmax.f32 %v975, 0.0
      %v1048 = vmax.f32 %v980, 0.0
      %v1049 = vmax.f32 %v983, 0.0
      %1050 = vst [vmem:[%s175] sm:$0xff] %v986
      %1051 = vst [vmem:[%s175 + $0x8] sm:$0xff] %v987
      %1052 = vst [vmem:[%s175 + $0x10] sm:$0xff] %v988
      %1053 = vst [vmem:[%s175 + $0x18] sm:$0xff] %v989
      %1054 = vst [vmem:[%s175 + $0x20] sm:$0xff] %v990
      %1055 = vst [vmem:[%s175 + $0x28] sm:$0xff] %v991
      %1056 = vst [vmem:[%s175 + $0x30] sm:$0xff] %v992
      %1057 = vst [vmem:[%s175 + $0x38] sm:$0xff] %v993
      %1058 = vst [vmem:[%s175 + $0x40] sm:$0xff] %v994
      %1059 = vst [vmem:[%s175 + $0x48] sm:$0xff] %v995
      %1060 = vst [vmem:[%s175 + $0x50] sm:$0xff] %v996
      %1061 = vst [vmem:[%s175 + $0x58] sm:$0xff] %v997
      %1062 = vst [vmem:[%s175 + $0x60] sm:$0xff] %v998
      %1063 = vst [vmem:[%s175 + $0x68] sm:$0xff] %v999
      %1064 = vst [vmem:[%s175 + $0x70] sm:$0xff] %v1000
      %1065 = vst [vmem:[%s175 + $0x78] sm:$0xff] %v1001
      %1066 = vst [vmem:[%s175 + $0x80] sm:$0xff] %v1002
      %1067 = vst [vmem:[%s175 + $0x88] sm:$0xff] %v1003
      %1068 = vst [vmem:[%s175 + $0x90] sm:$0xff] %v1004
      %1069 = vst [vmem:[%s175 + $0x98] sm:$0xff] %v1005
      %1070 = vst [vmem:[%s175 + $0xa0] sm:$0xff] %v1006
      %1071 = vst [vmem:[%s175 + $0xa8] sm:$0xff] %v1007
      %1072 = vst [vmem:[%s175 + $0xb0] sm:$0xff] %v1008
      %1073 = vst [vmem:[%s175 + $0xb8] sm:$0xff] %v1009
      %1074 = vst [vmem:[%s175 + $0xc0] sm:$0xff] %v1010
      %1075 = vst [vmem:[%s175 + $0xc8] sm:$0xff] %v1011
      %1076 = vst [vmem:[%s175 + $0xd0] sm:$0xff] %v1012
      %1077 = vst [vmem:[%s175 + $0xd8] sm:$0xff] %v1013
      %1078 = vst [vmem:[%s175 + $0xe0] sm:$0xff] %v1014
      %1079 = vst [vmem:[%s175 + $0xe8] sm:$0xff] %v1015
      %1080 = vst [vmem:[%s175 + $0xf0] sm:$0xff] %v1016
      %1081 = vst [vmem:[%s175 + $0xf8] sm:$0xff] %v1017
      %1082 = vst [vmem:[%s175 + $0x100] sm:$0xff] %v1018
      %1083 = vst [vmem:[%s175 + $0x108] sm:$0xff] %v1019
      %1084 = vst [vmem:[%s175 + $0x110] sm:$0xff] %v1020
      %1085 = vst [vmem:[%s175 + $0x118] sm:$0xff] %v1021
      %1086 = vst [vmem:[%s175 + $0x120] sm:$0xff] %v1022
      %1087 = vst [vmem:[%s175 + $0x128] sm:$0xff] %v1023
      %1088 = vst [vmem:[%s175 + $0x130] sm:$0xff] %v1024
      %1089 = vst [vmem:[%s175 + $0x138] sm:$0xff] %v1025
      %1090 = vst [vmem:[%s175 + $0x140] sm:$0xff] %v1026
      %1091 = vst [vmem:[%s175 + $0x148] sm:$0xff] %v1027
      %1092 = vst [vmem:[%s175 + $0x150] sm:$0xff] %v1028
      %1093 = vst [vmem:[%s175 + $0x158] sm:$0xff] %v1029
      %1094 = vst [vmem:[%s175 + $0x160] sm:$0xff] %v1030
      %1095 = vst [vmem:[%s175 + $0x168] sm:$0xff] %v1031
      %1096 = vst [vmem:[%s175 + $0x170] sm:$0xff] %v1032
      %1097 = vst [vmem:[%s175 + $0x178] sm:$0xff] %v1033
      %1098 = vst [vmem:[%s175 + $0x180] sm:$0xff] %v1034
      %1099 = vst [vmem:[%s175 + $0x188] sm:$0xff] %v1035
      %1100 = vst [vmem:[%s175 + $0x190] sm:$0xff] %v1036
      %1101 = vst [vmem:[%s175 + $0x198] sm:$0xff] %v1037
      %1102 = vst [vmem:[%s175 + $0x1a0] sm:$0xff] %v1038
      %1103 = vst [vmem:[%s175 + $0x1a8] sm:$0xff] %v1039
      %1104 = vst [vmem:[%s175 + $0x1b0] sm:$0xff] %v1040
      %1105 = vst [vmem:[%s175 + $0x1b8] sm:$0xff] %v1041
      %1106 = vst [vmem:[%s175 + $0x1c0] sm:$0xff] %v1042
      %1107 = vst [vmem:[%s175 + $0x1c8] sm:$0xff] %v1043
      %1108 = vst [vmem:[%s175 + $0x1d0] sm:$0xff] %v1044
      %1109 = vst [vmem:[%s175 + $0x1d8] sm:$0xff] %v1045
      %1110 = vst [vmem:[%s175 + $0x1e0] sm:$0xff] %v1046
      %1111 = vst [vmem:[%s175 + $0x1e8] sm:$0xff] %v1047
      %1112 = vst [vmem:[%s175 + $0x1f0] sm:$0xff] %v1048
      %1113 = vst [vmem:[%s175 + $0x1f8] sm:$0xff] %v1049
      %s1114 = smul.u32 64, %s14
      %p1115 = scmp.lt.s32.totalorder %s1114, 127
      %s1116 = scalar_select %p1115, %s1114, 127
      %s1117 = smul.addr %s1116, 8
      %s1118 = scalar_lea.vmem %s3, %s1117
      // Predicated region
      $region33: #{resnet_forward.13} parent=31 // pred_check
        %p1119 = pneg %p100
      $region34: #{resnet_forward.13} parent=31 // pred_check_branch
        %1121 = sbr.rel (%p1119) target = $region36
      $region35: #{resnet_forward.13} parent=31 // pred_region
        %s1122 = smul.u32 64, %s14
      $region36: #{resnet_forward.13} parent=31 // pred_fallthru
        _
    $region32: #{resnet_forward.13} parent=5 // pred_fallthru
      _
    %p1123 = scmp.le.s32.totalorder 2, %s9
    // Predicated region
    $region37: #{resnet_forward.13} parent=5 // pred_check
      %p1124 = pneg %p1123
    $region38: #{resnet_forward.13} parent=5 // pred_check_branch
      %1126 = sbr.rel (%p1124) target = $region40
    $region39: #{resnet_forward.13} parent=5 // pred_region
      %s1127 = ssub.s32 %s9, 2
      // Predicated region
      $region41: #{resnet_forward.13} parent=39 // pred_check
        %p1128 = pneg %p106
      $region42: #{resnet_forward.13} parent=39 // pred_check_branch
        %1130 = sbr.rel (%p1128) target = $region44
      $region43: #{resnet_forward.13} parent=39 // pred_region
        %s1131 = smul.u32 64, %s15
        %p1132 = scmp.lt.s32.totalorder %s1131, 127
        %s1133 = scalar_select %p1132, %s1131, 127
        %s1134 = smul.addr %s1133, 8
        %s1135 = scalar_lea.vmem %s3, %s1134
      $region44: #{resnet_forward.13} parent=39 // pred_fallthru
        _
    $region40: #{resnet_forward.13} parent=5 // pred_fallthru
      _
  $region6: #{resnet_forward.13} parent=0 // loop_footer
    %s13 = sadd.s32 1, %s9
  $region7: #{resnet_forward.13} parent=0 // loop_footer_branch
    %8 = sbr.rel target = $region3
  $region8: #{resnet_forward.13} parent=0 // loop_exit
    _

// kernel: resnet_forward.14
$region0: #{resnet_forward.14}
  #allocation0 [shape = 'u32[]', space=smem, size = 0x4, offset = 0x4, fixed_abs, tag = 'smem constant byte address 0x4 - core index']
  #allocation1 [shape = 'u32[144,128]{1,0:T(1,128)}', space=vmem, size = 0x12000, scoped, tag = 'internal scratch']
  %s0 = inlined_call_operand.vmem [shape: bf16[1024,256], index: 0, kind: input, shape index: {}]
  %s1 = inlined_call_operand.vmem [shape: bf16[256,128], index: 1, kind: input, shape index: {}]
  %s2 = inlined_call_operand.vmem [shape: f32[1,128], index: 2, kind: input, shape index: {}]
  %s3 = inlined_call_operand.vmem [shape: f32[1024,128], index: 3, kind: input, shape index: {}]
  %s4 = inlined_call_operand.vmem [shape: f32[1024,128], index: 4, kind: output, shape index: {}]
  %s5 = sld [smem:[#allocation0]]
  $region49: #{resnet_forward.14} parent=0
    _
  %s7 = ssub.s32 1, %s5
  %s8 = scalar_select 0, %s7, %s5
  loop: start=0, step=1, limit=4
  $region2: #{resnet_forward.14} parent=0 // loop_pre_header
    _
  $region3: #{resnet_forward.14} parent=0 // loop_header
    %s10 = sphi 0, %s14
    %p11 = scmp.ge.s32.totalorder %s10, 4
    %s20 = sphi 0, %s22
    %s23 = sphi 0, %s20
    %s24 = sphi 0, %s23
    %s40 = sphi 0, %s24
    %s44 = sphi 0, %s44
    %s46 = sphi 0, %s44
    %s47 = sphi 0, %s46
    %s61 = sphi 0, %s47
    %s65 = sphi 0, %s65
    %s67 = sphi 0, %s65
    %s68 = sphi 0, %s67
    %s82 = sphi 0, %s68
    %s88 = sphi 0, %s90
    %s91 = sphi 0, %s88
    %s92 = sphi 0, %s91
    %s108 = sphi 0, %s92
    %s114 = sphi 0, %s116
    %s117 = sphi 0, %s114
    %s118 = sphi 0, %s117
    %s134 = sphi 0, %s118
  $region4: #{resnet_forward.14} parent=0 // loop_header_branch
    %13 = sbr.rel (%p11) target = $region8
  $region5: #{resnet_forward.14} parent=0 // loop_body
    %s15 = ssub.s32 %s10, 1
    %s16 = ssub.s32 %s10, 2
    %s17 = sadd.s32 %s10, 1
    %s18 = ssub.s32 %s10, %s17
    %p19 = scmp.eq.s32.totalorder %s18, 0
    %s21 = sadd.s32 %s20, 1
    %s22 = scalar_select %p19, %s20, %s21
    %p25 = pneg %p19
    %p26 = scmp.eq.s32.totalorder %s10, 1
    %p27 = por %p25, %p26
    %p28 = scmp.ne.s32.totalorder %s20, %s23
    %p29 = scmp.eq.s32.totalorder %s10, 0
    %p30 = por %p28, %p29
    %p31 = scmp.ne.s32.totalorder %s20, %s23
    %p32 = scmp.eq.s32.totalorder %s15, 1
    %p33 = por %p31, %p32
    %p34 = scmp.ne.s32.totalorder %s23, %s24
    %p35 = scmp.eq.s32.totalorder %s15, 0
    %p36 = por %p34, %p35
    %p37 = scmp.ne.s32.totalorder %s23, %s24
    %p38 = scmp.eq.s32.totalorder %s16, 1
    %p39 = por %p37, %p38
    %p41 = scmp.ne.s32.totalorder %s24, %s40
    %p42 = scmp.eq.s32.totalorder %s16, 0
    %p43 = por %p41, %p42
    %s45 = sadd.s32 %s44, 1
    %p48 = scmp.eq.s32.totalorder %s10, 1
    %p49 = scmp.ne.s32.totalorder %s44, %s46
    %p50 = scmp.eq.s32.totalorder %s10, 0
    %p51 = por %p49, %p50
    %p52 = scmp.ne.s32.totalorder %s44, %s46
    %p53 = scmp.eq.s32.totalorder %s15, 1
    %p54 = por %p52, %p53
    %p55 = scmp.ne.s32.totalorder %s46, %s47
    %p56 = scmp.eq.s32.totalorder %s15, 0
    %p57 = por %p55, %p56
    %p58 = scmp.ne.s32.totalorder %s46, %s47
    %p59 = scmp.eq.s32.totalorder %s16, 1
    %p60 = por %p58, %p59
    %p62 = scmp.ne.s32.totalorder %s47, %s61
    %p63 = scmp.eq.s32.totalorder %s16, 0
    %p64 = por %p62, %p63
    %s66 = sadd.s32 %s65, 1
    %p69 = scmp.eq.s32.totalorder %s10, 1
    %p70 = scmp.ne.s32.totalorder %s65, %s67
    %p71 = scmp.eq.s32.totalorder %s10, 0
    %p72 = por %p70, %p71
    %p73 = scmp.ne.s32.totalorder %s65, %s67
    %p74 = scmp.eq.s32.totalorder %s15, 1
    %p75 = por %p73, %p74
    %p76 = scmp.ne.s32.totalorder %s67, %s68
    %p77 = scmp.eq.s32.totalorder %s15, 0
    %p78 = por %p76, %p77
    %p79 = scmp.ne.s32.totalorder %s67, %s68
    %p80 = scmp.eq.s32.totalorder %s16, 1
    %p81 = por %p79, %p80
    %p83 = scmp.ne.s32.totalorder %s68, %s82
    %p84 = scmp.eq.s32.totalorder %s16, 0
    %p85 = por %p83, %p84
    %s86 = ssub.s32 %s10, %s17
    %p87 = scmp.eq.s32.totalorder %s86, 0
    %s89 = sadd.s32 %s88, 1
    %s90 = scalar_select %p87, %s88, %s89
    %p93 = pneg %p87
    %p94 = scmp.eq.s32.totalorder %s10, 1
    %p95 = por %p93, %p94
    %p96 = scmp.ne.s32.totalorder %s88, %s91
    %p97 = scmp.eq.s32.totalorder %s10, 0
    %p98 = por %p96, %p97
    %p99 = scmp.ne.s32.totalorder %s88, %s91
    %p100 = scmp.eq.s32.totalorder %s15, 1
    %p101 = por %p99, %p100
    %p102 = scmp.ne.s32.totalorder %s91, %s92
    %p103 = scmp.eq.s32.totalorder %s15, 0
    %p104 = por %p102, %p103
    %p105 = scmp.ne.s32.totalorder %s91, %s92
    %p106 = scmp.eq.s32.totalorder %s16, 1
    %p107 = por %p105, %p106
    %p109 = scmp.ne.s32.totalorder %s92, %s108
    %p110 = scmp.eq.s32.totalorder %s16, 0
    %p111 = por %p109, %p110
    %s112 = ssub.s32 %s10, %s17
    %p113 = scmp.eq.s32.totalorder %s112, 0
    %s115 = sadd.s32 %s114, 1
    %s116 = scalar_select %p113, %s114, %s115
    %p119 = pneg %p113
    %p120 = scmp.eq.s32.totalorder %s10, 1
    %p121 = por %p119, %p120
    %p122 = scmp.ne.s32.totalorder %s114, %s117
    %p123 = scmp.eq.s32.totalorder %s10, 0
    %p124 = por %p122, %p123
    %p125 = scmp.ne.s32.totalorder %s114, %s117
    %p126 = scmp.eq.s32.totalorder %s15, 1
    %p127 = por %p125, %p126
    %p128 = scmp.ne.s32.totalorder %s117, %s118
    %p129 = scmp.eq.s32.totalorder %s15, 0
    %p130 = por %p128, %p129
    %p131 = scmp.ne.s32.totalorder %s117, %s118
    %p132 = scmp.eq.s32.totalorder %s16, 1
    %p133 = por %p131, %p132
    %p135 = scmp.ne.s32.totalorder %s118, %s134
    %p136 = scmp.eq.s32.totalorder %s16, 0
    %p137 = por %p135, %p136
    %p138 = scmp.le.s32.totalorder 1, %s10
    %p139 = scmp.lt.s32.totalorder %s10, 3
    %p140 = pnand %p138, %p139
    %p141 = pneg %p140
    // Predicated region
    $region9: #{resnet_forward.14} parent=5 // pred_check
      _
    $region10: #{resnet_forward.14} parent=5 // pred_check_branch
      %143 = sbr.rel (%p140) target = $region12
    $region11: #{resnet_forward.14} parent=5 // pred_region
      %s144 = ssub.s32 %s10, 1
      // Predicated region
      $region13: #{resnet_forward.14} parent=11 // pred_check
        %p145 = pneg %p57
      $region14: #{resnet_forward.14} parent=11 // pred_check_branch
        %147 = sbr.rel (%p145) target = $region16
      $region15: #{resnet_forward.14} parent=11 // pred_region
        _
      $region16: #{resnet_forward.14} parent=11 // pred_fallthru
        _
      // Predicated region
      $region17: #{resnet_forward.14} parent=11 // pred_check
        %p148 = pneg %p78
      $region18: #{resnet_forward.14} parent=11 // pred_check_branch
        %150 = sbr.rel (%p148) target = $region20
      $region19: #{resnet_forward.14} parent=11 // pred_region
        _
      $region20: #{resnet_forward.14} parent=11 // pred_fallthru
        _
    $region12: #{resnet_forward.14} parent=5 // pred_fallthru
      _
    %p151 = scmp.lt.s32.totalorder %s10, 2
    // Predicated region
    $region21: #{resnet_forward.14} parent=5 // pred_check
      %p152 = pneg %p151
    $region22: #{resnet_forward.14} parent=5 // pred_check_branch
      %154 = sbr.rel (%p152) target = $region24
    $region23: #{resnet_forward.14} parent=5 // pred_region
      // Predicated region
      $region25: #{resnet_forward.14} parent=23 // pred_check
        %p155 = pneg %p30
      $region26: #{resnet_forward.14} parent=23 // pred_check_branch
        %157 = sbr.rel (%p155) target = $region28
      $region27: #{resnet_forward.14} parent=23 // pred_region
        %s158 = smul.u32 64, %s10
        %p159 = scmp.lt.s32.totalorder %s158, 127
        %s160 = scalar_select %p159, %s158, 127
        %s161 = smul.addr %s160, 2
        %s162 = smul.addr %s161, 4
        %s163 = scalar_lea.vmem %s0, %s162
        %s164 = smul.u32 64, %s10
      $region28: #{resnet_forward.14} parent=23 // pred_fallthru
        _
      // Predicated region
      $region29: #{resnet_forward.14} parent=23 // pred_check
        %p165 = pneg %p98
      $region30: #{resnet_forward.14} parent=23 // pred_check_branch
        %167 = sbr.rel (%p165) target = $region32
      $region31: #{resnet_forward.14} parent=23 // pred_region
        %s168 = smul.u32 64, %s10
        %p169 = scmp.lt.s32.totalorder %s168, 127
        %s170 = scalar_select %p169, %s168, 127
        %s171 = smul.addr %s170, 8
        %s172 = scalar_lea.vmem %s3, %s171
        %s173 = smul.u32 64, %s10
      $region32: #{resnet_forward.14} parent=23 // pred_fallthru
        _
    $region24: #{resnet_forward.14} parent=5 // pred_fallthru
      _
    %p174 = scmp.le.s32.totalorder 1, %s10
    %p175 = scmp.lt.s32.totalorder %s10, 3
    %p176 = pnand %p174, %p175
    %p177 = pneg %p176
    // Predicated region
    $region33: #{resnet_forward.14} parent=5 // pred_check
      _
    $region34: #{resnet_forward.14} parent=5 // pred_check_branch
      %179 = sbr.rel (%p176) target = $region36
    $region35: #{resnet_forward.14} parent=5 // pred_region
      %s180 = ssub.s32 %s10, 1
      %s181 = smul.u32 64, %s15
      %p182 = scmp.lt.s32.totalorder %s181, 127
      %s183 = scalar_select %p182, %s181, 127
      %s184 = smul.addr %s183, 2
      %s185 = smul.addr %s184, 4
      %s186 = scalar_lea.vmem %s0, %s185
      %p187 = pneg %p36
      %p188 = pneg %p33
      %p189 = pneg %p57
      %p190 = pneg %p54
      %p191 = pneg %p78
      %p192 = pneg %p75
      %s193 = smul.u32 64, %s15
      %p194 = scmp.lt.s32.totalorder %s193, 127
      %s195 = scalar_select %p194, %s193, 127
      %s196 = smul.addr %s195, 8
      %s197 = scalar_lea.vmem %s3, %s196
      %p198 = pneg %p104
      %p199 = pneg %p101
      %p200 = pneg %p130
      %p201 = pneg %p127
      %s202 = smul.u32 64, %s15
      %p203 = scmp.lt.s32.totalorder %s202, 127
      %s204 = scalar_select %p203, %s202, 127
      %s205 = smul.addr %s204, 8
      %s206 = scalar_lea.vmem %s4, %s205
      %s207 = smul.u32 64, %s15
      %p208 = scmp.lt.s32.totalorder %s207, 127
      %s209 = scalar_select %p208, %s207, 127
      %s210 = smul.addr %s209, 2
      %s211 = smul.addr %s210, 4
      %s212 = scalar_lea.vmem %s0, %s211
      %s213 = smul.u32 64, %s15
      %s214 = smul.u32 64, %s15
      %p215 = scmp.lt.s32.totalorder %s214, 127
      %s216 = scalar_select %p215, %s214, 127
      %s217 = smul.addr %s216, 8
      %s218 = scalar_lea.vmem %s3, %s217
      %s219 = smul.u32 64, %s15
      %s220 = smul.u32 64, %s15
      %p221 = scmp.lt.s32.totalorder %s220, 127
      %s222 = scalar_select %p221, %s220, 127
      %s223 = smul.addr %s222, 8
      %s224 = scalar_lea.vmem %s4, %s223
      %s225 = smul.u32 64, %s15
      %v227 = vld [vmem:[%s212] sm:$0xff]
      %v228 = vld [vmem:[%s212 + $0x8] sm:$0xff]
      %v229 = vld [vmem:[%s212 + $0x10] sm:$0xff]
      %v230 = vld [vmem:[%s212 + $0x18] sm:$0xff]
      %v231 = vld [vmem:[%s212 + $0x20] sm:$0xff]
      %v232 = vld [vmem:[%s212 + $0x28] sm:$0xff]
      %v233 = vld [vmem:[%s212 + $0x30] sm:$0xff]
      %v234 = vld [vmem:[%s212 + $0x38] sm:$0xff]
      %v235 = vld [vmem:[%s212 + $0x40] sm:$0xff]
      %v236 = vld [vmem:[%s212 + $0x48] sm:$0xff]
      %v237 = vld [vmem:[%s212 + $0x50] sm:$0xff]
      %v238 = vld [vmem:[%s212 + $0x58] sm:$0xff]
      %v239 = vld [vmem:[%s212 + $0x60] sm:$0xff]
      %v240 = vld [vmem:[%s212 + $0x68] sm:$0xff]
      %v241 = vld [vmem:[%s212 + $0x70] sm:$0xff]
      %v242 = vld [vmem:[%s212 + $0x78] sm:$0xff]
      %v243 = vld [vmem:[%s212 + $0x80] sm:$0xff]
      %v244 = vld [vmem:[%s212 + $0x88] sm:$0xff]
      %v245 = vld [vmem:[%s212 + $0x90] sm:$0xff]
      %v246 = vld [vmem:[%s212 + $0x98] sm:$0xff]
      %v247 = vld [vmem:[%s212 + $0xa0] sm:$0xff]
      %v248 = vld [vmem:[%s212 + $0xa8] sm:$0xff]
      %v249 = vld [vmem:[%s212 + $0xb0] sm:$0xff]
      %v250 = vld [vmem:[%s212 + $0xb8] sm:$0xff]
      %v251 = vld [vmem:[%s212 + $0xc0] sm:$0xff]
      %v252 = vld [vmem:[%s212 + $0xc8] sm:$0xff]
      %v253 = vld [vmem:[%s212 + $0xd0] sm:$0xff]
      %v254 = vld [vmem:[%s212 + $0xd8] sm:$0xff]
      %v255 = vld [vmem:[%s212 + $0xe0] sm:$0xff]
      %v256 = vld [vmem:[%s212 + $0xe8] sm:$0xff]
      %v257 = vld [vmem:[%s212 + $0xf0] sm:$0xff]
      %v258 = vld [vmem:[%s212 + $0xf8] sm:$0xff]
      %v259 = vld [vmem:[%s212 + $0x100] sm:$0xff]
      %v260 = vld [vmem:[%s212 + $0x108] sm:$0xff]
      %v261 = vld [vmem:[%s212 + $0x110] sm:$0xff]
      %v262 = vld [vmem:[%s212 + $0x118] sm:$0xff]
      %v263 = vld [vmem:[%s212 + $0x120] sm:$0xff]
      %v264 = vld [vmem:[%s212 + $0x128] sm:$0xff]
      %v265 = vld [vmem:[%s212 + $0x130] sm:$0xff]
      %v266 = vld [vmem:[%s212 + $0x138] sm:$0xff]
      %v267 = vld [vmem:[%s212 + $0x140] sm:$0xff]
      %v268 = vld [vmem:[%s212 + $0x148] sm:$0xff]
      %v269 = vld [vmem:[%s212 + $0x150] sm:$0xff]
      %v270 = vld [vmem:[%s212 + $0x158] sm:$0xff]
      %v271 = vld [vmem:[%s212 + $0x160] sm:$0xff]
      %v272 = vld [vmem:[%s212 + $0x168] sm:$0xff]
      %v273 = vld [vmem:[%s212 + $0x170] sm:$0xff]
      %v274 = vld [vmem:[%s212 + $0x178] sm:$0xff]
      %v275 = vld [vmem:[%s212 + $0x180] sm:$0xff]
      %v276 = vld [vmem:[%s212 + $0x188] sm:$0xff]
      %v277 = vld [vmem:[%s212 + $0x190] sm:$0xff]
      %v278 = vld [vmem:[%s212 + $0x198] sm:$0xff]
      %v279 = vld [vmem:[%s212 + $0x1a0] sm:$0xff]
      %v280 = vld [vmem:[%s212 + $0x1a8] sm:$0xff]
      %v281 = vld [vmem:[%s212 + $0x1b0] sm:$0xff]
      %v282 = vld [vmem:[%s212 + $0x1b8] sm:$0xff]
      %v283 = vld [vmem:[%s212 + $0x1c0] sm:$0xff]
      %v284 = vld [vmem:[%s212 + $0x1c8] sm:$0xff]
      %v285 = vld [vmem:[%s212 + $0x1d0] sm:$0xff]
      %v286 = vld [vmem:[%s212 + $0x1d8] sm:$0xff]
      %v287 = vld [vmem:[%s212 + $0x1e0] sm:$0xff]
      %v288 = vld [vmem:[%s212 + $0x1e8] sm:$0xff]
      %v289 = vld [vmem:[%s212 + $0x1f0] sm:$0xff]
      %v290 = vld [vmem:[%s212 + $0x1f8] sm:$0xff]
      %v291 = vld [vmem:[%s1] sm:$0xf]
      %v292 = vld [vmem:[%s1 + $0x4] sm:$0xf]
      %v293 = vld [vmem:[%s1 + $0x8] sm:$0xf]
      %v294 = vld [vmem:[%s1 + $0xc] sm:$0xf]
      %v295 = vld [vmem:[%s1 + $0x10] sm:$0xf]
      %v296 = vld [vmem:[%s1 + $0x14] sm:$0xf]
      %v297 = vld [vmem:[%s1 + $0x18] sm:$0xf]
      %v298 = vld [vmem:[%s1 + $0x1c] sm:$0xf]
      %v299 = vld [vmem:[%s1 + $0x20] sm:$0xf]
      %v300 = vld [vmem:[%s1 + $0x24] sm:$0xf]
      %v301 = vld [vmem:[%s1 + $0x28] sm:$0xf]
      %v302 = vld [vmem:[%s1 + $0x2c] sm:$0xf]
      %v303 = vld [vmem:[%s1 + $0x30] sm:$0xf]
      %v304 = vld [vmem:[%s1 + $0x34] sm:$0xf]
      %v305 = vld [vmem:[%s1 + $0x38] sm:$0xf]
      %v306 = vld [vmem:[%s1 + $0x3c] sm:$0xf]
      %v307 = vld [vmem:[%s1 + $0x40] sm:$0xf]
      %v308 = vld [vmem:[%s1 + $0x44] sm:$0xf]
      %v309 = vld [vmem:[%s1 + $0x48] sm:$0xf]
      %v310 = vld [vmem:[%s1 + $0x4c] sm:$0xf]
      %v311 = vld [vmem:[%s1 + $0x50] sm:$0xf]
      %v312 = vld [vmem:[%s1 + $0x54] sm:$0xf]
      %v313 = vld [vmem:[%s1 + $0x58] sm:$0xf]
      %v314 = vld [vmem:[%s1 + $0x5c] sm:$0xf]
      %v315 = vld [vmem:[%s1 + $0x60] sm:$0xf]
      %v316 = vld [vmem:[%s1 + $0x64] sm:$0xf]
      %v317 = vld [vmem:[%s1 + $0x68] sm:$0xf]
      %v318 = vld [vmem:[%s1 + $0x6c] sm:$0xf]
      %v319 = vld [vmem:[%s1 + $0x70] sm:$0xf]
      %v320 = vld [vmem:[%s1 + $0x74] sm:$0xf]
      %v321 = vld [vmem:[%s1 + $0x78] sm:$0xf]
      %v322 = vld [vmem:[%s1 + $0x7c] sm:$0xf]
      %v323 = vld [vmem:[%s2] sm:$0x1]
      %v325 = vlaneseq
      %v326 = vshrl.u32 %v325, 7
      %v327 = vsub.s32 0, %v326
      %v328 = vrot.slane %v323, %v327
      %v394 = vunpack.c.l.b16 %v227
      %v395 = vunpack.c.h.b16 %v227
      %v396 = vunpack.c.l.b16 %v228
      %v397 = vunpack.c.h.b16 %v228
      %v398 = vunpack.c.l.b16 %v229
      %v399 = vunpack.c.h.b16 %v229
      %v400 = vunpack.c.l.b16 %v230
      %v401 = vunpack.c.h.b16 %v230
      %v402 = vunpack.c.l.b16 %v231
      %v403 = vunpack.c.h.b16 %v231
      %v404 = vunpack.c.l.b16 %v232
      %v405 = vunpack.c.h.b16 %v232
      %v406 = vunpack.c.l.b16 %v233
      %v407 = vunpack.c.h.b16 %v233
      %v408 = vunpack.c.l.b16 %v234
      %v409 = vunpack.c.h.b16 %v234
      %v410 = vunpack.c.l.b16 %v235
      %v411 = vunpack.c.h.b16 %v235
      %v412 = vunpack.c.l.b16 %v236
      %v413 = vunpack.c.h.b16 %v236
      %v414 = vunpack.c.l.b16 %v237
      %v415 = vunpack.c.h.b16 %v237
      %v416 = vunpack.c.l.b16 %v238
      %v417 = vunpack.c.h.b16 %v238
      %v418 = vunpack.c.l.b16 %v239
      %v419 = vunpack.c.h.b16 %v239
      %v420 = vunpack.c.l.b16 %v240
      %v421 = vunpack.c.h.b16 %v240
      %v422 = vunpack.c.l.b16 %v241
      %v423 = vunpack.c.h.b16 %v241
      %v424 = vunpack.c.l.b16 %v242
      %v425 = vunpack.c.h.b16 %v242
      %v426 = vunpack.c.l.b16 %v243
      %v427 = vunpack.c.h.b16 %v243
      %v428 = vunpack.c.l.b16 %v244
      %v429 = vunpack.c.h.b16 %v244
      %v430 = vunpack.c.l.b16 %v245
      %v431 = vunpack.c.h.b16 %v245
      %v432 = vunpack.c.l.b16 %v246
      %v433 = vunpack.c.h.b16 %v246
      %v434 = vunpack.c.l.b16 %v247
      %v435 = vunpack.c.h.b16 %v247
      %v436 = vunpack.c.l.b16 %v248
      %v437 = vunpack.c.h.b16 %v248
      %v438 = vunpack.c.l.b16 %v249
      %v439 = vunpack.c.h.b16 %v249
      %v440 = vunpack.c.l.b16 %v250
      %v441 = vunpack.c.h.b16 %v250
      %v442 = vunpack.c.l.b16 %v251
      %v443 = vunpack.c.h.b16 %v251
      %v444 = vunpack.c.l.b16 %v252
      %v445 = vunpack.c.h.b16 %v252
      %v446 = vunpack.c.l.b16 %v253
      %v447 = vunpack.c.h.b16 %v253
      %v448 = vunpack.c.l.b16 %v254
      %v449 = vunpack.c.h.b16 %v254
      %v450 = vunpack.c.l.b16 %v255
      %v451 = vunpack.c.h.b16 %v255
      %v452 = vunpack.c.l.b16 %v256
      %v453 = vunpack.c.h.b16 %v256
      %v454 = vunpack.c.l.b16 %v257
      %v455 = vunpack.c.h.b16 %v257
      %v456 = vunpack.c.l.b16 %v258
      %v457 = vunpack.c.h.b16 %v258
      %v458 = vunpack.c.l.b16 %v259
      %v459 = vunpack.c.h.b16 %v259
      %v460 = vunpack.c.l.b16 %v260
      %v461 = vunpack.c.h.b16 %v260
      %v462 = vunpack.c.l.b16 %v261
      %v463 = vunpack.c.h.b16 %v261
      %v464 = vunpack.c.l.b16 %v262
      %v465 = vunpack.c.h.b16 %v262
      %v466 = vunpack.c.l.b16 %v263
      %v467 = vunpack.c.h.b16 %v263
      %v468 = vunpack.c.l.b16 %v264
      %v469 = vunpack.c.h.b16 %v264
      %v470 = vunpack.c.l.b16 %v265
      %v471 = vunpack.c.h.b16 %v265
      %v472 = vunpack.c.l.b16 %v266
      %v473 = vunpack.c.h.b16 %v266
      %v474 = vunpack.c.l.b16 %v267
      %v475 = vunpack.c.h.b16 %v267
      %v476 = vunpack.c.l.b16 %v268
      %v477 = vunpack.c.h.b16 %v268
      %v478 = vunpack.c.l.b16 %v269
      %v479 = vunpack.c.h.b16 %v269
      %v480 = vunpack.c.l.b16 %v270
      %v481 = vunpack.c.h.b16 %v270
      %v482 = vunpack.c.l.b16 %v271
      %v483 = vunpack.c.h.b16 %v271
      %v484 = vunpack.c.l.b16 %v272
      %v485 = vunpack.c.h.b16 %v272
      %v486 = vunpack.c.l.b16 %v273
      %v487 = vunpack.c.h.b16 %v273
      %v488 = vunpack.c.l.b16 %v274
      %v489 = vunpack.c.h.b16 %v274
      %v490 = vunpack.c.l.b16 %v275
      %v491 = vunpack.c.h.b16 %v275
      %v492 = vunpack.c.l.b16 %v276
      %v493 = vunpack.c.h.b16 %v276
      %v494 = vunpack.c.l.b16 %v277
      %v495 = vunpack.c.h.b16 %v277
      %v496 = vunpack.c.l.b16 %v278
      %v497 = vunpack.c.h.b16 %v278
      %v498 = vunpack.c.l.b16 %v279
      %v499 = vunpack.c.h.b16 %v279
      %v500 = vunpack.c.l.b16 %v280
      %v501 = vunpack.c.h.b16 %v280
      %v502 = vunpack.c.l.b16 %v281
      %v503 = vunpack.c.h.b16 %v281
      %v504 = vunpack.c.l.b16 %v282
      %v505 = vunpack.c.h.b16 %v282
      %v506 = vunpack.c.l.b16 %v283
      %v507 = vunpack.c.h.b16 %v283
      %v508 = vunpack.c.l.b16 %v284
      %v509 = vunpack.c.h.b16 %v284
      %v510 = vunpack.c.l.b16 %v285
      %v511 = vunpack.c.h.b16 %v285
      %v512 = vunpack.c.l.b16 %v286
      %v513 = vunpack.c.h.b16 %v286
      %v514 = vunpack.c.l.b16 %v287
      %v515 = vunpack.c.h.b16 %v287
      %v516 = vunpack.c.l.b16 %v288
      %v517 = vunpack.c.h.b16 %v288
      %v518 = vunpack.c.l.b16 %v289
      %v519 = vunpack.c.h.b16 %v289
      %v520 = vunpack.c.l.b16 %v290
      %v521 = vunpack.c.h.b16 %v290
      %v522 = vpack.c.b16 %v396, %v394
      %v523 = vpack.c.b16 %v397, %v395
      %v524 = vpack.c.b16 %v400, %v398
      %v525 = vpack.c.b16 %v401, %v399
      %v526 = vpack.c.b16 %v404, %v402
      %v527 = vpack.c.b16 %v405, %v403
      %v528 = vpack.c.b16 %v408, %v406
      %v529 = vpack.c.b16 %v409, %v407
      %v530 = vpack.c.b16 %v412, %v410
      %v531 = vpack.c.b16 %v413, %v411
      %v532 = vpack.c.b16 %v416, %v414
      %v533 = vpack.c.b16 %v417, %v415
      %v534 = vpack.c.b16 %v420, %v418
      %v535 = vpack.c.b16 %v421, %v419
      %v536 = vpack.c.b16 %v424, %v422
      %v537 = vpack.c.b16 %v425, %v423
      %v538 = vpack.c.b16 %v428, %v426
      %v539 = vpack.c.b16 %v429, %v427
      %v540 = vpack.c.b16 %v432, %v430
      %v541 = vpack.c.b16 %v433, %v431
      %v542 = vpack.c.b16 %v436, %v434
      %v543 = vpack.c.b16 %v437, %v435
      %v544 = vpack.c.b16 %v440, %v438
      %v545 = vpack.c.b16 %v441, %v439
      %v546 = vpack.c.b16 %v444, %v442
      %v547 = vpack.c.b16 %v445, %v443
      %v548 = vpack.c.b16 %v448, %v446
      %v549 = vpack.c.b16 %v449, %v447
      %v550 = vpack.c.b16 %v452, %v450
      %v551 = vpack.c.b16 %v453, %v451
      %v552 = vpack.c.b16 %v456, %v454
      %v553 = vpack.c.b16 %v457, %v455
      %v554 = vpack.c.b16 %v460, %v458
      %v555 = vpack.c.b16 %v461, %v459
      %v556 = vpack.c.b16 %v464, %v462
      %v557 = vpack.c.b16 %v465, %v463
      %v558 = vpack.c.b16 %v468, %v466
      %v559 = vpack.c.b16 %v469, %v467
      %v560 = vpack.c.b16 %v472, %v470
      %v561 = vpack.c.b16 %v473, %v471
      %v562 = vpack.c.b16 %v476, %v474
      %v563 = vpack.c.b16 %v477, %v475
      %v564 = vpack.c.b16 %v480, %v478
      %v565 = vpack.c.b16 %v481, %v479
      %v566 = vpack.c.b16 %v484, %v482
      %v567 = vpack.c.b16 %v485, %v483
      %v568 = vpack.c.b16 %v488, %v486
      %v569 = vpack.c.b16 %v489, %v487
      %v570 = vpack.c.b16 %v492, %v490
      %v571 = vpack.c.b16 %v493, %v491
      %v572 = vpack.c.b16 %v496, %v494
      %v573 = vpack.c.b16 %v497, %v495
      %v574 = vpack.c.b16 %v500, %v498
      %v575 = vpack.c.b16 %v501, %v499
      %v576 = vpack.c.b16 %v504, %v502
      %v577 = vpack.c.b16 %v505, %v503
      %v578 = vpack.c.b16 %v508, %v506
      %v579 = vpack.c.b16 %v509, %v507
      %v580 = vpack.c.b16 %v512, %v510
      %v581 = vpack.c.b16 %v513, %v511
      %v582 = vpack.c.b16 %v516, %v514
      %v583 = vpack.c.b16 %v517, %v515
      %v584 = vpack.c.b16 %v520, %v518
      %v585 = vpack.c.b16 %v521, %v519
      %v682 = vunpack.c.l.b16 %v291
      %v683 = vunpack.c.l.b16 %v292
      %v684 = vunpack.c.l.b16 %v293
      %v685 = vunpack.c.l.b16 %v294
      %v686 = vunpack.c.l.b16 %v295
      %v687 = vunpack.c.l.b16 %v296
      %v688 = vunpack.c.l.b16 %v297
      %v689 = vunpack.c.l.b16 %v298
      %v690 = vunpack.c.l.b16 %v299
      %v691 = vunpack.c.l.b16 %v300
      %v692 = vunpack.c.l.b16 %v301
      %v693 = vunpack.c.l.b16 %v302
      %v694 = vunpack.c.l.b16 %v303
      %v695 = vunpack.c.l.b16 %v304
      %v696 = vunpack.c.l.b16 %v305
      %v697 = vunpack.c.l.b16 %v306
      %v698 = vunpack.c.l.b16 %v307
      %v699 = vunpack.c.l.b16 %v308
      %v700 = vunpack.c.l.b16 %v309
      %v701 = vunpack.c.l.b16 %v310
      %v702 = vunpack.c.l.b16 %v311
      %v703 = vunpack.c.l.b16 %v312
      %v704 = vunpack.c.l.b16 %v313
      %v705 = vunpack.c.l.b16 %v314
      %v706 = vunpack.c.l.b16 %v315
      %v707 = vunpack.c.l.b16 %v316
      %v708 = vunpack.c.l.b16 %v317
      %v709 = vunpack.c.l.b16 %v318
      %v710 = vunpack.c.l.b16 %v319
      %v711 = vunpack.c.l.b16 %v320
      %v712 = vunpack.c.l.b16 %v321
      %v713 = vunpack.c.l.b16 %v322
      %v714 = vpack.c.b16 %v683, %v682
      %v715 = vpack.c.b16 %v685, %v684
      %v716 = vpack.c.b16 %v687, %v686
      %v717 = vpack.c.b16 %v689, %v688
      %v718 = vpack.c.b16 %v691, %v690
      %v719 = vpack.c.b16 %v693, %v692
      %v720 = vpack.c.b16 %v695, %v694
      %v721 = vpack.c.b16 %v697, %v696
      %v722 = vpack.c.b16 %v699, %v698
      %v723 = vpack.c.b16 %v701, %v700
      %v724 = vpack.c.b16 %v703, %v702
      %v725 = vpack.c.b16 %v705, %v704
      %v726 = vpack.c.b16 %v707, %v706
      %v727 = vpack.c.b16 %v709, %v708
      %v728 = vpack.c.b16 %v711, %v710
      %v729 = vpack.c.b16 %v713, %v712
      %746 = vmatprep.subr.bf16.mxu0 0
      %747 = vmatpush1.bf16.msra.mxu0 %v714
      %748 = vmatprep.subr.bf16.mxu0 0
      %749 = vmatpush1.bf16.msra.mxu0 %v715
      %750 = vmatprep.subr.bf16.mxu0 0
      %751 = vmatpush1.bf16.msra.mxu0 %v716
      %752 = vmatprep.subr.bf16.mxu0 0
      %753 = vmatpush1.bf16.msra.mxu0 %v717
      %754 = vmatprep.subr.bf16.mxu0 0
      %755 = vmatpush1.bf16.msra.mxu0 %v718
      %756 = vmatprep.subr.bf16.mxu0 0
      %757 = vmatpush1.bf16.msra.mxu0 %v719
      %758 = vmatprep.subr.bf16.mxu0 0
      %759 = vmatpush1.bf16.msra.mxu0 %v720
      %760 = vmatprep.subr.bf16.mxu0 0
      %761 = vmatpush1.bf16.msra.mxu0 %v721
      %762 = vmatprep.subr.bf16.mxu0 0
      %763 = vmatpush1.bf16.msra.mxu0 %v722
      %764 = vmatprep.subr.bf16.mxu0 0
      %765 = vmatpush1.bf16.msra.mxu0 %v723
      %766 = vmatprep.subr.bf16.mxu0 0
      %767 = vmatpush1.bf16.msra.mxu0 %v724
      %768 = vmatprep.subr.bf16.mxu0 0
      %769 = vmatpush1.bf16.msra.mxu0 %v725
      %770 = vmatprep.subr.bf16.mxu0 0
      %771 = vmatpush1.bf16.msra.mxu0 %v726
      %772 = vmatprep.subr.bf16.mxu0 0
      %773 = vmatpush1.bf16.msra.mxu0 %v727
      %774 = vmatprep.subr.bf16.mxu0 0
      %775 = vmatpush1.bf16.msra.mxu0 %v728
      %776 = vmatprep.subr.bf16.mxu0 0
      %777 = vmatpush1.bf16.msra.mxu0 %v729
      %778 = vmatprep.mubr.bf16.mxu0 %v523
      %779 = vmatmul.mubr.bf16.gmra.mrb[0].mxu0 %v522
      %v780 = vpop.f32.mrb[0].mxu0
      %v781 = vadd.f32 %v328, %v780
      %v782 = vpop.f32.mrb[0].mxu0
      %v783 = vpop.f32.mrb[0].mxu0
      %v784 = vadd.f32 %v328, %v783
      %v785 = vpop.f32.mrb[0].mxu0
      %786 = vmatprep.mubr.bf16.mxu0 %v525
      %787 = vmatmul.mubr.bf16.gmra.mrb[0].mxu0 %v524
      %v788 = vpop.f32.mrb[0].mxu0
      %v789 = vadd.f32 %v328, %v788
      %v790 = vpop.f32.mrb[0].mxu0
      %v791 = vpop.f32.mrb[0].mxu0
      %v792 = vadd.f32 %v328, %v791
      %v793 = vpop.f32.mrb[0].mxu0
      %794 = vmatprep.mubr.bf16.mxu0 %v527
      %795 = vmatmul.mubr.bf16.gmra.mrb[0].mxu0 %v526
      %v796 = vpop.f32.mrb[0].mxu0
      %v797 = vadd.f32 %v328, %v796
      %v798 = vpop.f32.mrb[0].mxu0
      %v799 = vpop.f32.mrb[0].mxu0
      %v800 = vadd.f32 %v328, %v799
      %v801 = vpop.f32.mrb[0].mxu0
      %802 = vmatprep.mubr.bf16.mxu0 %v529
      %803 = vmatmul.mubr.bf16.gmra.mrb[0].mxu0 %v528
      %v804 = vpop.f32.mrb[0].mxu0
      %v805 = vadd.f32 %v328, %v804
      %v806 = vpop.f32.mrb[0].mxu0
      %v807 = vpop.f32.mrb[0].mxu0
      %v808 = vadd.f32 %v328, %v807
      %v809 = vpop.f32.mrb[0].mxu0
      %810 = vmatprep.mubr.bf16.mxu0 %v531
      %811 = vmatmul.mubr.bf16.gmra.mrb[0].mxu0 %v530
      %v812 = vpop.f32.mrb[0].mxu0
      %v813 = vadd.f32 %v328, %v812
      %v814 = vpop.f32.mrb[0].mxu0
      %v815 = vpop.f32.mrb[0].mxu0
      %v816 = vadd.f32 %v328, %v815
      %v817 = vpop.f32.mrb[0].mxu0
      %818 = vmatprep.mubr.bf16.mxu0 %v533
      %819 = vmatmul.mubr.bf16.gmra.mrb[0].mxu0 %v532
      %v820 = vpop.f32.mrb[0].mxu0
      %v821 = vadd.f32 %v328, %v820
      %v822 = vpop.f32.mrb[0].mxu0
      %v823 = vpop.f32.mrb[0].mxu0
      %v824 = vadd.f32 %v328, %v823
      %v825 = vpop.f32.mrb[0].mxu0
      %826 = vmatprep.mubr.bf16.mxu0 %v535
      %827 = vmatmul.mubr.bf16.gmra.mrb[0].mxu0 %v534
      %v828 = vpop.f32.mrb[0].mxu0
      %v829 = vadd.f32 %v328, %v828
      %v830 = vpop.f32.mrb[0].mxu0
      %v831 = vpop.f32.mrb[0].mxu0
      %v832 = vadd.f32 %v328, %v831
      %v833 = vpop.f32.mrb[0].mxu0
      %834 = vmatprep.mubr.bf16.mxu0 %v537
      %835 = vmatmul.mubr.bf16.gmra.mrb[0].mxu0 %v536
      %v836 = vpop.f32.mrb[0].mxu0
      %v837 = vadd.f32 %v328, %v836
      %v838 = vpop.f32.mrb[0].mxu0
      %v839 = vpop.f32.mrb[0].mxu0
      %v840 = vadd.f32 %v328, %v839
      %v841 = vpop.f32.mrb[0].mxu0
      %842 = vmatprep.mubr.bf16.mxu0 %v539
      %843 = vmatmul.mubr.bf16.gmra.mrb[0].mxu0 %v538
      %v844 = vpop.f32.mrb[0].mxu0
      %v845 = vadd.f32 %v328, %v844
      %v846 = vpop.f32.mrb[0].mxu0
      %v847 = vpop.f32.mrb[0].mxu0
      %v848 = vadd.f32 %v328, %v847
      %v849 = vpop.f32.mrb[0].mxu0
      %850 = vmatprep.mubr.bf16.mxu0 %v541
      %851 = vmatmul.mubr.bf16.gmra.mrb[0].mxu0 %v540
      %v852 = vpop.f32.mrb[0].mxu0
      %v853 = vadd.f32 %v328, %v852
      %v854 = vpop.f32.mrb[0].mxu0
      %v855 = vpop.f32.mrb[0].mxu0
      %v856 = vadd.f32 %v328, %v855
      %v857 = vpop.f32.mrb[0].mxu0
      %858 = vmatprep.mubr.bf16.mxu0 %v543
      %859 = vmatmul.mubr.bf16.gmra.mrb[0].mxu0 %v542
      %v860 = vpop.f32.mrb[0].mxu0
      %v861 = vadd.f32 %v328, %v860
      %v862 = vpop.f32.mrb[0].mxu0
      %v863 = vpop.f32.mrb[0].mxu0
      %v864 = vadd.f32 %v328, %v863
      %v865 = vpop.f32.mrb[0].mxu0
      %866 = vmatprep.mubr.bf16.mxu0 %v545
      %867 = vmatmul.mubr.bf16.gmra.mrb[0].mxu0 %v544
      %v868 = vpop.f32.mrb[0].mxu0
      %v869 = vadd.f32 %v328, %v868
      %v870 = vpop.f32.mrb[0].mxu0
      %v871 = vpop.f32.mrb[0].mxu0
      %v872 = vadd.f32 %v328, %v871
      %v873 = vpop.f32.mrb[0].mxu0
      %874 = vmatprep.mubr.bf16.mxu0 %v547
      %875 = vmatmul.mubr.bf16.gmra.mrb[0].mxu0 %v546
      %v876 = vpop.f32.mrb[0].mxu0
      %v877 = vadd.f32 %v328, %v876
      %v878 = vpop.f32.mrb[0].mxu0
      %v879 = vpop.f32.mrb[0].mxu0
      %v880 = vadd.f32 %v328, %v879
      %v881 = vpop.f32.mrb[0].mxu0
      %882 = vmatprep.mubr.bf16.mxu0 %v549
      %883 = vmatmul.mubr.bf16.gmra.mrb[0].mxu0 %v548
      %v884 = vpop.f32.mrb[0].mxu0
      %v885 = vadd.f32 %v328, %v884
      %v886 = vpop.f32.mrb[0].mxu0
      %v887 = vpop.f32.mrb[0].mxu0
      %v888 = vadd.f32 %v328, %v887
      %v889 = vpop.f32.mrb[0].mxu0
      %890 = vmatprep.mubr.bf16.mxu0 %v551
      %891 = vmatmul.mubr.bf16.gmra.mrb[0].mxu0 %v550
      %v892 = vpop.f32.mrb[0].mxu0
      %v893 = vadd.f32 %v328, %v892
      %v894 = vpop.f32.mrb[0].mxu0
      %v895 = vpop.f32.mrb[0].mxu0
      %v896 = vadd.f32 %v328, %v895
      %v897 = vpop.f32.mrb[0].mxu0
      %898 = vmatprep.mubr.bf16.mxu0 %v553
      %899 = vmatmul.mubr.bf16.gmra.mrb[0].mxu0 %v552
      %v900 = vpop.f32.mrb[0].mxu0
      %v901 = vadd.f32 %v328, %v900
      %v902 = vpop.f32.mrb[0].mxu0
      %v903 = vpop.f32.mrb[0].mxu0
      %v904 = vadd.f32 %v328, %v903
      %v905 = vpop.f32.mrb[0].mxu0
      %906 = vmatprep.mubr.bf16.mxu0 %v555
      %907 = vmatmul.mubr.bf16.gmra.mrb[0].mxu0 %v554
      %v908 = vpop.f32.mrb[0].mxu0
      %v909 = vadd.f32 %v328, %v908
      %v910 = vpop.f32.mrb[0].mxu0
      %v911 = vpop.f32.mrb[0].mxu0
      %v912 = vadd.f32 %v328, %v911
      %v913 = vpop.f32.mrb[0].mxu0
      %914 = vmatprep.mubr.bf16.mxu0 %v557
      %915 = vmatmul.mubr.bf16.gmra.mrb[0].mxu0 %v556
      %v916 = vpop.f32.mrb[0].mxu0
      %v917 = vadd.f32 %v328, %v916
      %v918 = vpop.f32.mrb[0].mxu0
      %v919 = vpop.f32.mrb[0].mxu0
      %v920 = vadd.f32 %v328, %v919
      %v921 = vpop.f32.mrb[0].mxu0
      %922 = vmatprep.mubr.bf16.mxu0 %v559
      %923 = vmatmul.mubr.bf16.gmra.mrb[0].mxu0 %v558
      %v924 = vpop.f32.mrb[0].mxu0
      %v925 = vadd.f32 %v328, %v924
      %v926 = vpop.f32.mrb[0].mxu0
      %v927 = vpop.f32.mrb[0].mxu0
      %v928 = vadd.f32 %v328, %v927
      %v929 = vpop.f32.mrb[0].mxu0
      %930 = vmatprep.mubr.bf16.mxu0 %v561
      %931 = vmatmul.mubr.bf16.gmra.mrb[0].mxu0 %v560
      %v932 = vpop.f32.mrb[0].mxu0
      %v933 = vadd.f32 %v328, %v932
      %v934 = vpop.f32.mrb[0].mxu0
      %v935 = vpop.f32.mrb[0].mxu0
      %v936 = vadd.f32 %v328, %v935
      %v937 = vpop.f32.mrb[0].mxu0
      %938 = vmatprep.mubr.bf16.mxu0 %v563
      %939 = vmatmul.mubr.bf16.gmra.mrb[0].mxu0 %v562
      %v940 = vpop.f32.mrb[0].mxu0
      %v941 = vadd.f32 %v328, %v940
      %v942 = vpop.f32.mrb[0].mxu0
      %v943 = vpop.f32.mrb[0].mxu0
      %v944 = vadd.f32 %v328, %v943
      %v945 = vpop.f32.mrb[0].mxu0
      %946 = vmatprep.mubr.bf16.mxu0 %v565
      %947 = vmatmul.mubr.bf16.gmra.mrb[0].mxu0 %v564
      %v948 = vpop.f32.mrb[0].mxu0
      %v949 = vadd.f32 %v328, %v948
      %v950 = vpop.f32.mrb[0].mxu0
      %v951 = vpop.f32.mrb[0].mxu0
      %v952 = vadd.f32 %v328, %v951
      %v953 = vpop.f32.mrb[0].mxu0
      %954 = vmatprep.mubr.bf16.mxu0 %v567
      %955 = vmatmul.mubr.bf16.gmra.mrb[0].mxu0 %v566
      %v956 = vpop.f32.mrb[0].mxu0
      %v957 = vadd.f32 %v328, %v956
      %v958 = vpop.f32.mrb[0].mxu0
      %v959 = vpop.f32.mrb[0].mxu0
      %v960 = vadd.f32 %v328, %v959
      %v961 = vpop.f32.mrb[0].mxu0
      %962 = vmatprep.mubr.bf16.mxu0 %v569
      %963 = vmatmul.mubr.bf16.gmra.mrb[0].mxu0 %v568
      %v964 = vpop.f32.mrb[0].mxu0
      %v965 = vadd.f32 %v328, %v964
      %v966 = vpop.f32.mrb[0].mxu0
      %v967 = vpop.f32.mrb[0].mxu0
      %v968 = vadd.f32 %v328, %v967
      %v969 = vpop.f32.mrb[0].mxu0
      %970 = vmatprep.mubr.bf16.mxu0 %v571
      %971 = vmatmul.mubr.bf16.gmra.mrb[0].mxu0 %v570
      %v972 = vpop.f32.mrb[0].mxu0
      %v973 = vadd.f32 %v328, %v972
      %v974 = vpop.f32.mrb[0].mxu0
      %v975 = vpop.f32.mrb[0].mxu0
      %v976 = vadd.f32 %v328, %v975
      %v977 = vpop.f32.mrb[0].mxu0
      %978 = vmatprep.mubr.bf16.mxu0 %v573
      %979 = vmatmul.mubr.bf16.gmra.mrb[0].mxu0 %v572
      %v980 = vpop.f32.mrb[0].mxu0
      %v981 = vadd.f32 %v328, %v980
      %v982 = vpop.f32.mrb[0].mxu0
      %v983 = vpop.f32.mrb[0].mxu0
      %v984 = vadd.f32 %v328, %v983
      %v985 = vpop.f32.mrb[0].mxu0
      %986 = vmatprep.mubr.bf16.mxu0 %v575
      %987 = vmatmul.mubr.bf16.gmra.mrb[0].mxu0 %v574
      %v988 = vpop.f32.mrb[0].mxu0
      %v989 = vadd.f32 %v328, %v988
      %v990 = vpop.f32.mrb[0].mxu0
      %v991 = vpop.f32.mrb[0].mxu0
      %v992 = vadd.f32 %v328, %v991
      %v993 = vpop.f32.mrb[0].mxu0
      %994 = vmatprep.mubr.bf16.mxu0 %v577
      %995 = vmatmul.mubr.bf16.gmra.mrb[0].mxu0 %v576
      %v996 = vpop.f32.mrb[0].mxu0
      %v997 = vadd.f32 %v328, %v996
      %v998 = vpop.f32.mrb[0].mxu0
      %v999 = vpop.f32.mrb[0].mxu0
      %v1000 = vadd.f32 %v328, %v999
      %v1001 = vpop.f32.mrb[0].mxu0
      %1002 = vmatprep.mubr.bf16.mxu0 %v579
      %1003 = vmatmul.mubr.bf16.gmra.mrb[0].mxu0 %v578
      %v1004 = vpop.f32.mrb[0].mxu0
      %v1005 = vadd.f32 %v328, %v1004
      %v1006 = vpop.f32.mrb[0].mxu0
      %v1007 = vpop.f32.mrb[0].mxu0
      %v1008 = vadd.f32 %v328, %v1007
      %v1009 = vpop.f32.mrb[0].mxu0
      %1010 = vmatprep.mubr.bf16.mxu0 %v581
      %1011 = vmatmul.mubr.bf16.gmra.mrb[0].mxu0 %v580
      %v1012 = vpop.f32.mrb[0].mxu0
      %v1013 = vadd.f32 %v328, %v1012
      %v1014 = vpop.f32.mrb[0].mxu0
      %v1015 = vpop.f32.mrb[0].mxu0
      %v1016 = vadd.f32 %v328, %v1015
      %v1017 = vpop.f32.mrb[0].mxu0
      %1018 = vmatprep.mubr.bf16.mxu0 %v583
      %1019 = vmatmul.mubr.bf16.gmra.mrb[0].mxu0 %v582
      %v1020 = vpop.f32.mrb[0].mxu0
      %v1021 = vadd.f32 %v328, %v1020
      %v1022 = vpop.f32.mrb[0].mxu0
      %v1023 = vpop.f32.mrb[0].mxu0
      %v1024 = vadd.f32 %v328, %v1023
      %v1025 = vpop.f32.mrb[0].mxu0
      %1026 = vmatprep.mubr.bf16.mxu0 %v585
      %1027 = vmatmul.mubr.bf16.gmra.mrb[0].mxu0 %v584
      %v1028 = vpop.f32.mrb[0].mxu0
      %v1029 = vadd.f32 %v328, %v1028
      %v1030 = vpop.f32.mrb[0].mxu0
      %v1031 = vpop.f32.mrb[0].mxu0
      %v1032 = vadd.f32 %v328, %v1031
      %v1033 = vpop.f32.mrb[0].mxu0
      %1034 = vdwg.mxu0
      %v1035 = vld [vmem:[%s218] sm:$0xff]
      %v1036 = vld [vmem:[%s218 + $0x8] sm:$0xff]
      %v1037 = vld [vmem:[%s218 + $0x10] sm:$0xff]
      %v1038 = vld [vmem:[%s218 + $0x18] sm:$0xff]
      %v1039 = vld [vmem:[%s218 + $0x20] sm:$0xff]
      %v1040 = vld [vmem:[%s218 + $0x28] sm:$0xff]
      %v1041 = vld [vmem:[%s218 + $0x30] sm:$0xff]
      %v1042 = vld [vmem:[%s218 + $0x38] sm:$0xff]
      %v1043 = vld [vmem:[%s218 + $0x40] sm:$0xff]
      %v1044 = vld [vmem:[%s218 + $0x48] sm:$0xff]
      %v1045 = vld [vmem:[%s218 + $0x50] sm:$0xff]
      %v1046 = vld [vmem:[%s218 + $0x58] sm:$0xff]
      %v1047 = vld [vmem:[%s218 + $0x60] sm:$0xff]
      %v1048 = vld [vmem:[%s218 + $0x68] sm:$0xff]
      %v1049 = vld [vmem:[%s218 + $0x70] sm:$0xff]
      %v1050 = vld [vmem:[%s218 + $0x78] sm:$0xff]
      %v1051 = vld [vmem:[%s218 + $0x80] sm:$0xff]
      %v1052 = vld [vmem:[%s218 + $0x88] sm:$0xff]
      %v1053 = vld [vmem:[%s218 + $0x90] sm:$0xff]
      %v1054 = vld [vmem:[%s218 + $0x98] sm:$0xff]
      %v1055 = vld [vmem:[%s218 + $0xa0] sm:$0xff]
      %v1056 = vld [vmem:[%s218 + $0xa8] sm:$0xff]
      %v1057 = vld [vmem:[%s218 + $0xb0] sm:$0xff]
      %v1058 = vld [vmem:[%s218 + $0xb8] sm:$0xff]
      %v1059 = vld [vmem:[%s218 + $0xc0] sm:$0xff]
      %v1060 = vld [vmem:[%s218 + $0xc8] sm:$0xff]
      %v1061 = vld [vmem:[%s218 + $0xd0] sm:$0xff]
      %v1062 = vld [vmem:[%s218 + $0xd8] sm:$0xff]
      %v1063 = vld [vmem:[%s218 + $0xe0] sm:$0xff]
      %v1064 = vld [vmem:[%s218 + $0xe8] sm:$0xff]
      %v1065 = vld [vmem:[%s218 + $0xf0] sm:$0xff]
      %v1066 = vld [vmem:[%s218 + $0xf8] sm:$0xff]
      %v1067 = vld [vmem:[%s218 + $0x100] sm:$0xff]
      %v1068 = vld [vmem:[%s218 + $0x108] sm:$0xff]
      %v1069 = vld [vmem:[%s218 + $0x110] sm:$0xff]
      %v1070 = vld [vmem:[%s218 + $0x118] sm:$0xff]
      %v1071 = vld [vmem:[%s218 + $0x120] sm:$0xff]
      %v1072 = vld [vmem:[%s218 + $0x128] sm:$0xff]
      %v1073 = vld [vmem:[%s218 + $0x130] sm:$0xff]
      %v1074 = vld [vmem:[%s218 + $0x138] sm:$0xff]
      %v1075 = vld [vmem:[%s218 + $0x140] sm:$0xff]
      %v1076 = vld [vmem:[%s218 + $0x148] sm:$0xff]
      %v1077 = vld [vmem:[%s218 + $0x150] sm:$0xff]
      %v1078 = vld [vmem:[%s218 + $0x158] sm:$0xff]
      %v1079 = vld [vmem:[%s218 + $0x160] sm:$0xff]
      %v1080 = vld [vmem:[%s218 + $0x168] sm:$0xff]
      %v1081 = vld [vmem:[%s218 + $0x170] sm:$0xff]
      %v1082 = vld [vmem:[%s218 + $0x178] sm:$0xff]
      %v1083 = vld [vmem:[%s218 + $0x180] sm:$0xff]
      %v1084 = vld [vmem:[%s218 + $0x188] sm:$0xff]
      %v1085 = vld [vmem:[%s218 + $0x190] sm:$0xff]
      %v1086 = vld [vmem:[%s218 + $0x198] sm:$0xff]
      %v1087 = vld [vmem:[%s218 + $0x1a0] sm:$0xff]
      %v1088 = vld [vmem:[%s218 + $0x1a8] sm:$0xff]
      %v1089 = vld [vmem:[%s218 + $0x1b0] sm:$0xff]
      %v1090 = vld [vmem:[%s218 + $0x1b8] sm:$0xff]
      %v1091 = vld [vmem:[%s218 + $0x1c0] sm:$0xff]
      %v1092 = vld [vmem:[%s218 + $0x1c8] sm:$0xff]
      %v1093 = vld [vmem:[%s218 + $0x1d0] sm:$0xff]
      %v1094 = vld [vmem:[%s218 + $0x1d8] sm:$0xff]
      %v1095 = vld [vmem:[%s218 + $0x1e0] sm:$0xff]
      %v1096 = vld [vmem:[%s218 + $0x1e8] sm:$0xff]
      %v1097 = vld [vmem:[%s218 + $0x1f0] sm:$0xff]
      %v1098 = vld [vmem:[%s218 + $0x1f8] sm:$0xff]
      %v1099 = vadd.f32 %v781, %v1035
      %v1100 = vadd.f32 %v784, %v1036
      %v1101 = vadd.f32 %v789, %v1037
      %v1102 = vadd.f32 %v792, %v1038
      %v1103 = vadd.f32 %v797, %v1039
      %v1104 = vadd.f32 %v800, %v1040
      %v1105 = vadd.f32 %v805, %v1041
      %v1106 = vadd.f32 %v808, %v1042
      %v1107 = vadd.f32 %v813, %v1043
      %v1108 = vadd.f32 %v816, %v1044
      %v1109 = vadd.f32 %v821, %v1045
      %v1110 = vadd.f32 %v824, %v1046
      %v1111 = vadd.f32 %v829, %v1047
      %v1112 = vadd.f32 %v832, %v1048
      %v1113 = vadd.f32 %v837, %v1049
      %v1114 = vadd.f32 %v840, %v1050
      %v1115 = vadd.f32 %v845, %v1051
      %v1116 = vadd.f32 %v848, %v1052
      %v1117 = vadd.f32 %v853, %v1053
      %v1118 = vadd.f32 %v856, %v1054
      %v1119 = vadd.f32 %v861, %v1055
      %v1120 = vadd.f32 %v864, %v1056
      %v1121 = vadd.f32 %v869, %v1057
      %v1122 = vadd.f32 %v872, %v1058
      %v1123 = vadd.f32 %v877, %v1059
      %v1124 = vadd.f32 %v880, %v1060
      %v1125 = vadd.f32 %v885, %v1061
      %v1126 = vadd.f32 %v888, %v1062
      %v1127 = vadd.f32 %v893, %v1063
      %v1128 = vadd.f32 %v896, %v1064
      %v1129 = vadd.f32 %v901, %v1065
      %v1130 = vadd.f32 %v904, %v1066
      %v1131 = vadd.f32 %v909, %v1067
      %v1132 = vadd.f32 %v912, %v1068
      %v1133 = vadd.f32 %v917, %v1069
      %v1134 = vadd.f32 %v920, %v1070
      %v1135 = vadd.f32 %v925, %v1071
      %v1136 = vadd.f32 %v928, %v1072
      %v1137 = vadd.f32 %v933, %v1073
      %v1138 = vadd.f32 %v936, %v1074
      %v1139 = vadd.f32 %v941, %v1075
      %v1140 = vadd.f32 %v944, %v1076
      %v1141 = vadd.f32 %v949, %v1077
      %v1142 = vadd.f32 %v952, %v1078
      %v1143 = vadd.f32 %v957, %v1079
      %v1144 = vadd.f32 %v960, %v1080
      %v1145 = vadd.f32 %v965, %v1081
      %v1146 = vadd.f32 %v968, %v1082
      %v1147 = vadd.f32 %v973, %v1083
      %v1148 = vadd.f32 %v976, %v1084
      %v1149 = vadd.f32 %v981, %v1085
      %v1150 = vadd.f32 %v984, %v1086
      %v1151 = vadd.f32 %v989, %v1087
      %v1152 = vadd.f32 %v992, %v1088
      %v1153 = vadd.f32 %v997, %v1089
      %v1154 = vadd.f32 %v1000, %v1090
      %v1155 = vadd.f32 %v1005, %v1091
      %v1156 = vadd.f32 %v1008, %v1092
      %v1157 = vadd.f32 %v1013, %v1093
      %v1158 = vadd.f32 %v1016, %v1094
      %v1159 = vadd.f32 %v1021, %v1095
      %v1160 = vadd.f32 %v1024, %v1096
      %v1161 = vadd.f32 %v1029, %v1097
      %v1162 = vadd.f32 %v1032, %v1098
      %v1163 = vmax.f32 %v1099, 0.0
      %v1164 = vmax.f32 %v1100, 0.0
      %v1165 = vmax.f32 %v1101, 0.0
      %v1166 = vmax.f32 %v1102, 0.0
      %v1167 = vmax.f32 %v1103, 0.0
      %v1168 = vmax.f32 %v1104, 0.0
      %v1169 = vmax.f32 %v1105, 0.0
      %v1170 = vmax.f32 %v1106, 0.0
      %v1171 = vmax.f32 %v1107, 0.0
      %v1172 = vmax.f32 %v1108, 0.0
      %v1173 = vmax.f32 %v1109, 0.0
      %v1174 = vmax.f32 %v1110, 0.0
      %v1175 = vmax.f32 %v1111, 0.0
      %v1176 = vmax.f32 %v1112, 0.0
      %v1177 = vmax.f32 %v1113, 0.0
      %v1178 = vmax.f32 %v1114, 0.0
      %v1179 = vmax.f32 %v1115, 0.0
      %v1180 = vmax.f32 %v1116, 0.0
      %v1181 = vmax.f32 %v1117, 0.0
      %v1182 = vmax.f32 %v1118, 0.0
      %v1183 = vmax.f32 %v1119, 0.0
      %v1184 = vmax.f32 %v1120, 0.0
      %v1185 = vmax.f32 %v1121, 0.0
      %v1186 = vmax.f32 %v1122, 0.0
      %v1187 = vmax.f32 %v1123, 0.0
      %v1188 = vmax.f32 %v1124, 0.0
      %v1189 = vmax.f32 %v1125, 0.0
      %v1190 = vmax.f32 %v1126, 0.0
      %v1191 = vmax.f32 %v1127, 0.0
      %v1192 = vmax.f32 %v1128, 0.0
      %v1193 = vmax.f32 %v1129, 0.0
      %v1194 = vmax.f32 %v1130, 0.0
      %v1195 = vmax.f32 %v1131, 0.0
      %v1196 = vmax.f32 %v1132, 0.0
      %v1197 = vmax.f32 %v1133, 0.0
      %v1198 = vmax.f32 %v1134, 0.0
      %v1199 = vmax.f32 %v1135, 0.0
      %v1200 = vmax.f32 %v1136, 0.0
      %v1201 = vmax.f32 %v1137, 0.0
      %v1202 = vmax.f32 %v1138, 0.0
      %v1203 = vmax.f32 %v1139, 0.0
      %v1204 = vmax.f32 %v1140, 0.0
      %v1205 = vmax.f32 %v1141, 0.0
      %v1206 = vmax.f32 %v1142, 0.0
      %v1207 = vmax.f32 %v1143, 0.0
      %v1208 = vmax.f32 %v1144, 0.0
      %v1209 = vmax.f32 %v1145, 0.0
      %v1210 = vmax.f32 %v1146, 0.0
      %v1211 = vmax.f32 %v1147, 0.0
      %v1212 = vmax.f32 %v1148, 0.0
      %v1213 = vmax.f32 %v1149, 0.0
      %v1214 = vmax.f32 %v1150, 0.0
      %v1215 = vmax.f32 %v1151, 0.0
      %v1216 = vmax.f32 %v1152, 0.0
      %v1217 = vmax.f32 %v1153, 0.0
      %v1218 = vmax.f32 %v1154, 0.0
      %v1219 = vmax.f32 %v1155, 0.0
      %v1220 = vmax.f32 %v1156, 0.0
      %v1221 = vmax.f32 %v1157, 0.0
      %v1222 = vmax.f32 %v1158, 0.0
      %v1223 = vmax.f32 %v1159, 0.0
      %v1224 = vmax.f32 %v1160, 0.0
      %v1225 = vmax.f32 %v1161, 0.0
      %v1226 = vmax.f32 %v1162, 0.0
      %1227 = vst [vmem:[%s224] sm:$0xff] %v1163
      %1228 = vst [vmem:[%s224 + $0x8] sm:$0xff] %v1164
      %1229 = vst [vmem:[%s224 + $0x10] sm:$0xff] %v1165
      %1230 = vst [vmem:[%s224 + $0x18] sm:$0xff] %v1166
      %1231 = vst [vmem:[%s224 + $0x20] sm:$0xff] %v1167
      %1232 = vst [vmem:[%s224 + $0x28] sm:$0xff] %v1168
      %1233 = vst [vmem:[%s224 + $0x30] sm:$0xff] %v1169
      %1234 = vst [vmem:[%s224 + $0x38] sm:$0xff] %v1170
      %1235 = vst [vmem:[%s224 + $0x40] sm:$0xff] %v1171
      %1236 = vst [vmem:[%s224 + $0x48] sm:$0xff] %v1172
      %1237 = vst [vmem:[%s224 + $0x50] sm:$0xff] %v1173
      %1238 = vst [vmem:[%s224 + $0x58] sm:$0xff] %v1174
      %1239 = vst [vmem:[%s224 + $0x60] sm:$0xff] %v1175
      %1240 = vst [vmem:[%s224 + $0x68] sm:$0xff] %v1176
      %1241 = vst [vmem:[%s224 + $0x70] sm:$0xff] %v1177
      %1242 = vst [vmem:[%s224 + $0x78] sm:$0xff] %v1178
      %1243 = vst [vmem:[%s224 + $0x80] sm:$0xff] %v1179
      %1244 = vst [vmem:[%s224 + $0x88] sm:$0xff] %v1180
      %1245 = vst [vmem:[%s224 + $0x90] sm:$0xff] %v1181
      %1246 = vst [vmem:[%s224 + $0x98] sm:$0xff] %v1182
      %1247 = vst [vmem:[%s224 + $0xa0] sm:$0xff] %v1183
      %1248 = vst [vmem:[%s224 + $0xa8] sm:$0xff] %v1184
      %1249 = vst [vmem:[%s224 + $0xb0] sm:$0xff] %v1185
      %1250 = vst [vmem:[%s224 + $0xb8] sm:$0xff] %v1186
      %1251 = vst [vmem:[%s224 + $0xc0] sm:$0xff] %v1187
      %1252 = vst [vmem:[%s224 + $0xc8] sm:$0xff] %v1188
      %1253 = vst [vmem:[%s224 + $0xd0] sm:$0xff] %v1189
      %1254 = vst [vmem:[%s224 + $0xd8] sm:$0xff] %v1190
      %1255 = vst [vmem:[%s224 + $0xe0] sm:$0xff] %v1191
      %1256 = vst [vmem:[%s224 + $0xe8] sm:$0xff] %v1192
      %1257 = vst [vmem:[%s224 + $0xf0] sm:$0xff] %v1193
      %1258 = vst [vmem:[%s224 + $0xf8] sm:$0xff] %v1194
      %1259 = vst [vmem:[%s224 + $0x100] sm:$0xff] %v1195
      %1260 = vst [vmem:[%s224 + $0x108] sm:$0xff] %v1196
      %1261 = vst [vmem:[%s224 + $0x110] sm:$0xff] %v1197
      %1262 = vst [vmem:[%s224 + $0x118] sm:$0xff] %v1198
      %1263 = vst [vmem:[%s224 + $0x120] sm:$0xff] %v1199
      %1264 = vst [vmem:[%s224 + $0x128] sm:$0xff] %v1200
      %1265 = vst [vmem:[%s224 + $0x130] sm:$0xff] %v1201
      %1266 = vst [vmem:[%s224 + $0x138] sm:$0xff] %v1202
      %1267 = vst [vmem:[%s224 + $0x140] sm:$0xff] %v1203
      %1268 = vst [vmem:[%s224 + $0x148] sm:$0xff] %v1204
      %1269 = vst [vmem:[%s224 + $0x150] sm:$0xff] %v1205
      %1270 = vst [vmem:[%s224 + $0x158] sm:$0xff] %v1206
      %1271 = vst [vmem:[%s224 + $0x160] sm:$0xff] %v1207
      %1272 = vst [vmem:[%s224 + $0x168] sm:$0xff] %v1208
      %1273 = vst [vmem:[%s224 + $0x170] sm:$0xff] %v1209
      %1274 = vst [vmem:[%s224 + $0x178] sm:$0xff] %v1210
      %1275 = vst [vmem:[%s224 + $0x180] sm:$0xff] %v1211
      %1276 = vst [vmem:[%s224 + $0x188] sm:$0xff] %v1212
      %1277 = vst [vmem:[%s224 + $0x190] sm:$0xff] %v1213
      %1278 = vst [vmem:[%s224 + $0x198] sm:$0xff] %v1214
      %1279 = vst [vmem:[%s224 + $0x1a0] sm:$0xff] %v1215
      %1280 = vst [vmem:[%s224 + $0x1a8] sm:$0xff] %v1216
      %1281 = vst [vmem:[%s224 + $0x1b0] sm:$0xff] %v1217
      %1282 = vst [vmem:[%s224 + $0x1b8] sm:$0xff] %v1218
      %1283 = vst [vmem:[%s224 + $0x1c0] sm:$0xff] %v1219
      %1284 = vst [vmem:[%s224 + $0x1c8] sm:$0xff] %v1220
      %1285 = vst [vmem:[%s224 + $0x1d0] sm:$0xff] %v1221
      %1286 = vst [vmem:[%s224 + $0x1d8] sm:$0xff] %v1222
      %1287 = vst [vmem:[%s224 + $0x1e0] sm:$0xff] %v1223
      %1288 = vst [vmem:[%s224 + $0x1e8] sm:$0xff] %v1224
      %1289 = vst [vmem:[%s224 + $0x1f0] sm:$0xff] %v1225
      %1290 = vst [vmem:[%s224 + $0x1f8] sm:$0xff] %v1226
      %s1291 = smul.u32 64, %s15
      %p1292 = scmp.lt.s32.totalorder %s1291, 127
      %s1293 = scalar_select %p1292, %s1291, 127
      %s1294 = smul.addr %s1293, 8
      %s1295 = scalar_lea.vmem %s4, %s1294
      // Predicated region
      $region37: #{resnet_forward.14} parent=35 // pred_check
        %p1296 = pneg %p127
      $region38: #{resnet_forward.14} parent=35 // pred_check_branch
        %1298 = sbr.rel (%p1296) target = $region40
      $region39: #{resnet_forward.14} parent=35 // pred_region
        %s1299 = smul.u32 64, %s15
      $region40: #{resnet_forward.14} parent=35 // pred_fallthru
        _
    $region36: #{resnet_forward.14} parent=5 // pred_fallthru
      _
    %p1300 = scmp.le.s32.totalorder 2, %s10
    // Predicated region
    $region41: #{resnet_forward.14} parent=5 // pred_check
      %p1301 = pneg %p1300
    $region42: #{resnet_forward.14} parent=5 // pred_check_branch
      %1303 = sbr.rel (%p1301) target = $region44
    $region43: #{resnet_forward.14} parent=5 // pred_region
      %s1304 = ssub.s32 %s10, 2
      // Predicated region
      $region45: #{resnet_forward.14} parent=43 // pred_check
        %p1305 = pneg %p133
      $region46: #{resnet_forward.14} parent=43 // pred_check_branch
        %1307 = sbr.rel (%p1305) target = $region48
      $region47: #{resnet_forward.14} parent=43 // pred_region
        %s1308 = smul.u32 64, %s16
        %p1309 = scmp.lt.s32.totalorder %s1308, 127
        %s1310 = scalar_select %p1309, %s1308, 127
        %s1311 = smul.addr %s1310, 8
        %s1312 = scalar_lea.vmem %s4, %s1311
      $region48: #{resnet_forward.14} parent=43 // pred_fallthru
        _
    $region44: #{resnet_forward.14} parent=5 // pred_fallthru
      _
  $region6: #{resnet_forward.14} parent=0 // loop_footer
    %s14 = sadd.s32 1, %s10
  $region7: #{resnet_forward.14} parent=0 // loop_footer_branch
    %9 = sbr.rel target = $region3
  $region8: #{resnet_forward.14} parent=0 // loop_exit
    _

// kernel: resnet_forward.15
$region0: #{resnet_forward.15}
  #allocation0 [shape = 'u32[]', space=smem, size = 0x4, offset = 0x4, fixed_abs, tag = 'smem constant byte address 0x4 - core index']
  #allocation1 [shape = 'u32[144,128]{1,0:T(1,128)}', space=vmem, size = 0x12000, scoped, tag = 'internal scratch']
  %s0 = inlined_call_operand.vmem [shape: bf16[128,256], index: 0, kind: input, shape index: {}]
  %s1 = inlined_call_operand.vmem [shape: bf16[256,128], index: 1, kind: input, shape index: {}]
  %s2 = inlined_call_operand.vmem [shape: f32[1,128], index: 2, kind: input, shape index: {}]
  %s3 = inlined_call_operand.vmem [shape: f32[128,128], index: 3, kind: output, shape index: {}]
  %s4 = sld [smem:[#allocation0]]
  $region22: #{resnet_forward.15} parent=0
    _
  %s6 = ssub.s32 1, %s4
  %s7 = scalar_select 0, %s6, %s4
  // Predicated region
  $region2: #{resnet_forward.15} parent=0 // pred_check
    _
  $region3: #{resnet_forward.15} parent=0 // pred_check_branch
    %9 = sbr.rel (0) target = $region5
  $region4: #{resnet_forward.15} parent=0 // pred_region
    _
  $region5: #{resnet_forward.15} parent=0 // pred_fallthru
    _
  // Predicated region
  $region6: #{resnet_forward.15} parent=0 // pred_check
    _
  $region7: #{resnet_forward.15} parent=0 // pred_check_branch
    %11 = sbr.rel (0) target = $region9
  $region8: #{resnet_forward.15} parent=0 // pred_region
    _
  $region9: #{resnet_forward.15} parent=0 // pred_fallthru
    _
  // Predicated region
  $region10: #{resnet_forward.15} parent=0 // pred_check
    _
  $region11: #{resnet_forward.15} parent=0 // pred_check_branch
    %13 = sbr.rel (0) target = $region13
  $region12: #{resnet_forward.15} parent=0 // pred_region
    _
  $region13: #{resnet_forward.15} parent=0 // pred_fallthru
    _
  %v15 = vld [vmem:[%s0] sm:$0xff]
  %v16 = vld [vmem:[%s0 + $0x8] sm:$0xff]
  %v17 = vld [vmem:[%s0 + $0x10] sm:$0xff]
  %v18 = vld [vmem:[%s0 + $0x18] sm:$0xff]
  %v19 = vld [vmem:[%s0 + $0x20] sm:$0xff]
  %v20 = vld [vmem:[%s0 + $0x28] sm:$0xff]
  %v21 = vld [vmem:[%s0 + $0x30] sm:$0xff]
  %v22 = vld [vmem:[%s0 + $0x38] sm:$0xff]
  %v23 = vld [vmem:[%s0 + $0x40] sm:$0xff]
  %v24 = vld [vmem:[%s0 + $0x48] sm:$0xff]
  %v25 = vld [vmem:[%s0 + $0x50] sm:$0xff]
  %v26 = vld [vmem:[%s0 + $0x58] sm:$0xff]
  %v27 = vld [vmem:[%s0 + $0x60] sm:$0xff]
  %v28 = vld [vmem:[%s0 + $0x68] sm:$0xff]
  %v29 = vld [vmem:[%s0 + $0x70] sm:$0xff]
  %v30 = vld [vmem:[%s0 + $0x78] sm:$0xff]
  %v31 = vld [vmem:[%s1] sm:$0xf]
  %v32 = vld [vmem:[%s1 + $0x4] sm:$0xf]
  %v33 = vld [vmem:[%s1 + $0x8] sm:$0xf]
  %v34 = vld [vmem:[%s1 + $0xc] sm:$0xf]
  %v35 = vld [vmem:[%s1 + $0x10] sm:$0xf]
  %v36 = vld [vmem:[%s1 + $0x14] sm:$0xf]
  %v37 = vld [vmem:[%s1 + $0x18] sm:$0xf]
  %v38 = vld [vmem:[%s1 + $0x1c] sm:$0xf]
  %v39 = vld [vmem:[%s1 + $0x20] sm:$0xf]
  %v40 = vld [vmem:[%s1 + $0x24] sm:$0xf]
  %v41 = vld [vmem:[%s1 + $0x28] sm:$0xf]
  %v42 = vld [vmem:[%s1 + $0x2c] sm:$0xf]
  %v43 = vld [vmem:[%s1 + $0x30] sm:$0xf]
  %v44 = vld [vmem:[%s1 + $0x34] sm:$0xf]
  %v45 = vld [vmem:[%s1 + $0x38] sm:$0xf]
  %v46 = vld [vmem:[%s1 + $0x3c] sm:$0xf]
  %v47 = vld [vmem:[%s1 + $0x40] sm:$0xf]
  %v48 = vld [vmem:[%s1 + $0x44] sm:$0xf]
  %v49 = vld [vmem:[%s1 + $0x48] sm:$0xf]
  %v50 = vld [vmem:[%s1 + $0x4c] sm:$0xf]
  %v51 = vld [vmem:[%s1 + $0x50] sm:$0xf]
  %v52 = vld [vmem:[%s1 + $0x54] sm:$0xf]
  %v53 = vld [vmem:[%s1 + $0x58] sm:$0xf]
  %v54 = vld [vmem:[%s1 + $0x5c] sm:$0xf]
  %v55 = vld [vmem:[%s1 + $0x60] sm:$0xf]
  %v56 = vld [vmem:[%s1 + $0x64] sm:$0xf]
  %v57 = vld [vmem:[%s1 + $0x68] sm:$0xf]
  %v58 = vld [vmem:[%s1 + $0x6c] sm:$0xf]
  %v59 = vld [vmem:[%s1 + $0x70] sm:$0xf]
  %v60 = vld [vmem:[%s1 + $0x74] sm:$0xf]
  %v61 = vld [vmem:[%s1 + $0x78] sm:$0xf]
  %v62 = vld [vmem:[%s1 + $0x7c] sm:$0xf]
  %v63 = vld [vmem:[%s2] sm:$0x1]
  %v65 = vlaneseq
  %v66 = vshrl.u32 %v65, 7
  %v67 = vsub.s32 0, %v66
  %v68 = vrot.slane %v63, %v67
  %v86 = vunpack.c.l.b16 %v15
  %v87 = vunpack.c.h.b16 %v15
  %v88 = vunpack.c.l.b16 %v16
  %v89 = vunpack.c.h.b16 %v16
  %v90 = vunpack.c.l.b16 %v17
  %v91 = vunpack.c.h.b16 %v17
  %v92 = vunpack.c.l.b16 %v18
  %v93 = vunpack.c.h.b16 %v18
  %v94 = vunpack.c.l.b16 %v19
  %v95 = vunpack.c.h.b16 %v19
  %v96 = vunpack.c.l.b16 %v20
  %v97 = vunpack.c.h.b16 %v20
  %v98 = vunpack.c.l.b16 %v21
  %v99 = vunpack.c.h.b16 %v21
  %v100 = vunpack.c.l.b16 %v22
  %v101 = vunpack.c.h.b16 %v22
  %v102 = vunpack.c.l.b16 %v23
  %v103 = vunpack.c.h.b16 %v23
  %v104 = vunpack.c.l.b16 %v24
  %v105 = vunpack.c.h.b16 %v24
  %v106 = vunpack.c.l.b16 %v25
  %v107 = vunpack.c.h.b16 %v25
  %v108 = vunpack.c.l.b16 %v26
  %v109 = vunpack.c.h.b16 %v26
  %v110 = vunpack.c.l.b16 %v27
  %v111 = vunpack.c.h.b16 %v27
  %v112 = vunpack.c.l.b16 %v28
  %v113 = vunpack.c.h.b16 %v28
  %v114 = vunpack.c.l.b16 %v29
  %v115 = vunpack.c.h.b16 %v29
  %v116 = vunpack.c.l.b16 %v30
  %v117 = vunpack.c.h.b16 %v30
  %v118 = vpack.c.b16 %v88, %v86
  %v119 = vpack.c.b16 %v89, %v87
  %v120 = vpack.c.b16 %v92, %v90
  %v121 = vpack.c.b16 %v93, %v91
  %v122 = vpack.c.b16 %v96, %v94
  %v123 = vpack.c.b16 %v97, %v95
  %v124 = vpack.c.b16 %v100, %v98
  %v125 = vpack.c.b16 %v101, %v99
  %v126 = vpack.c.b16 %v104, %v102
  %v127 = vpack.c.b16 %v105, %v103
  %v128 = vpack.c.b16 %v108, %v106
  %v129 = vpack.c.b16 %v109, %v107
  %v130 = vpack.c.b16 %v112, %v110
  %v131 = vpack.c.b16 %v113, %v111
  %v132 = vpack.c.b16 %v116, %v114
  %v133 = vpack.c.b16 %v117, %v115
  %v182 = vunpack.c.l.b16 %v31
  %v183 = vunpack.c.l.b16 %v32
  %v184 = vunpack.c.l.b16 %v33
  %v185 = vunpack.c.l.b16 %v34
  %v186 = vunpack.c.l.b16 %v35
  %v187 = vunpack.c.l.b16 %v36
  %v188 = vunpack.c.l.b16 %v37
  %v189 = vunpack.c.l.b16 %v38
  %v190 = vunpack.c.l.b16 %v39
  %v191 = vunpack.c.l.b16 %v40
  %v192 = vunpack.c.l.b16 %v41
  %v193 = vunpack.c.l.b16 %v42
  %v194 = vunpack.c.l.b16 %v43
  %v195 = vunpack.c.l.b16 %v44
  %v196 = vunpack.c.l.b16 %v45
  %v197 = vunpack.c.l.b16 %v46
  %v198 = vunpack.c.l.b16 %v47
  %v199 = vunpack.c.l.b16 %v48
  %v200 = vunpack.c.l.b16 %v49
  %v201 = vunpack.c.l.b16 %v50
  %v202 = vunpack.c.l.b16 %v51
  %v203 = vunpack.c.l.b16 %v52
  %v204 = vunpack.c.l.b16 %v53
  %v205 = vunpack.c.l.b16 %v54
  %v206 = vunpack.c.l.b16 %v55
  %v207 = vunpack.c.l.b16 %v56
  %v208 = vunpack.c.l.b16 %v57
  %v209 = vunpack.c.l.b16 %v58
  %v210 = vunpack.c.l.b16 %v59
  %v211 = vunpack.c.l.b16 %v60
  %v212 = vunpack.c.l.b16 %v61
  %v213 = vunpack.c.l.b16 %v62
  %v214 = vpack.c.b16 %v183, %v182
  %v215 = vpack.c.b16 %v185, %v184
  %v216 = vpack.c.b16 %v187, %v186
  %v217 = vpack.c.b16 %v189, %v188
  %v218 = vpack.c.b16 %v191, %v190
  %v219 = vpack.c.b16 %v193, %v192
  %v220 = vpack.c.b16 %v195, %v194
  %v221 = vpack.c.b16 %v197, %v196
  %v222 = vpack.c.b16 %v199, %v198
  %v223 = vpack.c.b16 %v201, %v200
  %v224 = vpack.c.b16 %v203, %v202
  %v225 = vpack.c.b16 %v205, %v204
  %v226 = vpack.c.b16 %v207, %v206
  %v227 = vpack.c.b16 %v209, %v208
  %v228 = vpack.c.b16 %v211, %v210
  %v229 = vpack.c.b16 %v213, %v212
  %246 = vmatprep.subr.bf16.mxu0 0
  %247 = vmatpush1.bf16.msra.mxu0 %v214
  %248 = vmatprep.subr.bf16.mxu0 0
  %249 = vmatpush1.bf16.msra.mxu0 %v215
  %250 = vmatprep.subr.bf16.mxu0 0
  %251 = vmatpush1.bf16.msra.mxu0 %v216
  %252 = vmatprep.subr.bf16.mxu0 0
  %253 = vmatpush1.bf16.msra.mxu0 %v217
  %254 = vmatprep.subr.bf16.mxu0 0
  %255 = vmatpush1.bf16.msra.mxu0 %v218
  %256 = vmatprep.subr.bf16.mxu0 0
  %257 = vmatpush1.bf16.msra.mxu0 %v219
  %258 = vmatprep.subr.bf16.mxu0 0
  %259 = vmatpush1.bf16.msra.mxu0 %v220
  %260 = vmatprep.subr.bf16.mxu0 0
  %261 = vmatpush1.bf16.msra.mxu0 %v221
  %262 = vmatprep.subr.bf16.mxu0 0
  %263 = vmatpush1.bf16.msra.mxu0 %v222
  %264 = vmatprep.subr.bf16.mxu0 0
  %265 = vmatpush1.bf16.msra.mxu0 %v223
  %266 = vmatprep.subr.bf16.mxu0 0
  %267 = vmatpush1.bf16.msra.mxu0 %v224
  %268 = vmatprep.subr.bf16.mxu0 0
  %269 = vmatpush1.bf16.msra.mxu0 %v225
  %270 = vmatprep.subr.bf16.mxu0 0
  %271 = vmatpush1.bf16.msra.mxu0 %v226
  %272 = vmatprep.subr.bf16.mxu0 0
  %273 = vmatpush1.bf16.msra.mxu0 %v227
  %274 = vmatprep.subr.bf16.mxu0 0
  %275 = vmatpush1.bf16.msra.mxu0 %v228
  %276 = vmatprep.subr.bf16.mxu0 0
  %277 = vmatpush1.bf16.msra.mxu0 %v229
  %278 = vmatprep.mubr.bf16.mxu0 %v119
  %279 = vmatmul.mubr.bf16.gmra.mrb[0].mxu0 %v118
  %v280 = vpop.f32.mrb[0].mxu0
  %v281 = vadd.f32 %v68, %v280
  %v282 = vpop.f32.mrb[0].mxu0
  %v283 = vpop.f32.mrb[0].mxu0
  %v284 = vadd.f32 %v68, %v283
  %v285 = vpop.f32.mrb[0].mxu0
  %286 = vmatprep.mubr.bf16.mxu0 %v121
  %287 = vmatmul.mubr.bf16.gmra.mrb[0].mxu0 %v120
  %v288 = vpop.f32.mrb[0].mxu0
  %v289 = vadd.f32 %v68, %v288
  %v290 = vpop.f32.mrb[0].mxu0
  %v291 = vpop.f32.mrb[0].mxu0
  %v292 = vadd.f32 %v68, %v291
  %v293 = vpop.f32.mrb[0].mxu0
  %294 = vmatprep.mubr.bf16.mxu0 %v123
  %295 = vmatmul.mubr.bf16.gmra.mrb[0].mxu0 %v122
  %v296 = vpop.f32.mrb[0].mxu0
  %v297 = vadd.f32 %v68, %v296
  %v298 = vpop.f32.mrb[0].mxu0
  %v299 = vpop.f32.mrb[0].mxu0
  %v300 = vadd.f32 %v68, %v299
  %v301 = vpop.f32.mrb[0].mxu0
  %302 = vmatprep.mubr.bf16.mxu0 %v125
  %303 = vmatmul.mubr.bf16.gmra.mrb[0].mxu0 %v124
  %v304 = vpop.f32.mrb[0].mxu0
  %v305 = vadd.f32 %v68, %v304
  %v306 = vpop.f32.mrb[0].mxu0
  %v307 = vpop.f32.mrb[0].mxu0
  %v308 = vadd.f32 %v68, %v307
  %v309 = vpop.f32.mrb[0].mxu0
  %310 = vmatprep.mubr.bf16.mxu0 %v127
  %311 = vmatmul.mubr.bf16.gmra.mrb[0].mxu0 %v126
  %v312 = vpop.f32.mrb[0].mxu0
  %v313 = vadd.f32 %v68, %v312
  %v314 = vpop.f32.mrb[0].mxu0
  %v315 = vpop.f32.mrb[0].mxu0
  %v316 = vadd.f32 %v68, %v315
  %v317 = vpop.f32.mrb[0].mxu0
  %318 = vmatprep.mubr.bf16.mxu0 %v129
  %319 = vmatmul.mubr.bf16.gmra.mrb[0].mxu0 %v128
  %v320 = vpop.f32.mrb[0].mxu0
  %v321 = vadd.f32 %v68, %v320
  %v322 = vpop.f32.mrb[0].mxu0
  %v323 = vpop.f32.mrb[0].mxu0
  %v324 = vadd.f32 %v68, %v323
  %v325 = vpop.f32.mrb[0].mxu0
  %326 = vmatprep.mubr.bf16.mxu0 %v131
  %327 = vmatmul.mubr.bf16.gmra.mrb[0].mxu0 %v130
  %v328 = vpop.f32.mrb[0].mxu0
  %v329 = vadd.f32 %v68, %v328
  %v330 = vpop.f32.mrb[0].mxu0
  %v331 = vpop.f32.mrb[0].mxu0
  %v332 = vadd.f32 %v68, %v331
  %v333 = vpop.f32.mrb[0].mxu0
  %334 = vmatprep.mubr.bf16.mxu0 %v133
  %335 = vmatmul.mubr.bf16.gmra.mrb[0].mxu0 %v132
  %v336 = vpop.f32.mrb[0].mxu0
  %v337 = vadd.f32 %v68, %v336
  %v338 = vpop.f32.mrb[0].mxu0
  %v339 = vpop.f32.mrb[0].mxu0
  %v340 = vadd.f32 %v68, %v339
  %v341 = vpop.f32.mrb[0].mxu0
  %342 = vdwg.mxu0
  %v343 = vmax.f32 %v281, 0.0
  %v344 = vmax.f32 %v284, 0.0
  %v345 = vmax.f32 %v289, 0.0
  %v346 = vmax.f32 %v292, 0.0
  %v347 = vmax.f32 %v297, 0.0
  %v348 = vmax.f32 %v300, 0.0
  %v349 = vmax.f32 %v305, 0.0
  %v350 = vmax.f32 %v308, 0.0
  %v351 = vmax.f32 %v313, 0.0
  %v352 = vmax.f32 %v316, 0.0
  %v353 = vmax.f32 %v321, 0.0
  %v354 = vmax.f32 %v324, 0.0
  %v355 = vmax.f32 %v329, 0.0
  %v356 = vmax.f32 %v332, 0.0
  %v357 = vmax.f32 %v337, 0.0
  %v358 = vmax.f32 %v340, 0.0
  %359 = vst [vmem:[%s3] sm:$0xff] %v343
  %360 = vst [vmem:[%s3 + $0x8] sm:$0xff] %v344
  %361 = vst [vmem:[%s3 + $0x10] sm:$0xff] %v345
  %362 = vst [vmem:[%s3 + $0x18] sm:$0xff] %v346
  %363 = vst [vmem:[%s3 + $0x20] sm:$0xff] %v347
  %364 = vst [vmem:[%s3 + $0x28] sm:$0xff] %v348
  %365 = vst [vmem:[%s3 + $0x30] sm:$0xff] %v349
  %366 = vst [vmem:[%s3 + $0x38] sm:$0xff] %v350
  %367 = vst [vmem:[%s3 + $0x40] sm:$0xff] %v351
  %368 = vst [vmem:[%s3 + $0x48] sm:$0xff] %v352
  %369 = vst [vmem:[%s3 + $0x50] sm:$0xff] %v353
  %370 = vst [vmem:[%s3 + $0x58] sm:$0xff] %v354
  %371 = vst [vmem:[%s3 + $0x60] sm:$0xff] %v355
  %372 = vst [vmem:[%s3 + $0x68] sm:$0xff] %v356
  %373 = vst [vmem:[%s3 + $0x70] sm:$0xff] %v357
  %374 = vst [vmem:[%s3 + $0x78] sm:$0xff] %v358
  // Predicated region
  $region14: #{resnet_forward.15} parent=0 // pred_check
    _
  $region15: #{resnet_forward.15} parent=0 // pred_check_branch
    %376 = sbr.rel (0) target = $region17
  $region16: #{resnet_forward.15} parent=0 // pred_region
    _
  $region17: #{resnet_forward.15} parent=0 // pred_fallthru
    _
  // Predicated region
  $region18: #{resnet_forward.15} parent=0 // pred_check
    _
  $region19: #{resnet_forward.15} parent=0 // pred_check_branch
    %378 = sbr.rel (0) target = $region21
  $region20: #{resnet_forward.15} parent=0 // pred_region
    _
  $region21: #{resnet_forward.15} parent=0 // pred_fallthru
    _

// kernel: resnet_forward.16
$region0: #{resnet_forward.16}
  #allocation0 [shape = 'u32[]', space=smem, size = 0x4, offset = 0x4, fixed_abs, tag = 'smem constant byte address 0x4 - core index']
  #allocation1 [shape = 'u32[144,128]{1,0:T(1,128)}', space=vmem, size = 0x12000, scoped, tag = 'internal scratch']
  %s0 = inlined_call_operand.vmem [shape: bf16[128,128], index: 0, kind: input, shape index: {}]
  %s1 = inlined_call_operand.vmem [shape: bf16[128,128], index: 1, kind: input, shape index: {}]
  %s2 = inlined_call_operand.vmem [shape: f32[1,128], index: 2, kind: input, shape index: {}]
  %s3 = inlined_call_operand.vmem [shape: f32[128,128], index: 3, kind: output, shape index: {}]
  %s4 = sld [smem:[#allocation0]]
  $region22: #{resnet_forward.16} parent=0
    _
  %s6 = ssub.s32 1, %s4
  %s7 = scalar_select 0, %s6, %s4
  // Predicated region
  $region2: #{resnet_forward.16} parent=0 // pred_check
    _
  $region3: #{resnet_forward.16} parent=0 // pred_check_branch
    %9 = sbr.rel (0) target = $region5
  $region4: #{resnet_forward.16} parent=0 // pred_region
    _
  $region5: #{resnet_forward.16} parent=0 // pred_fallthru
    _
  // Predicated region
  $region6: #{resnet_forward.16} parent=0 // pred_check
    _
  $region7: #{resnet_forward.16} parent=0 // pred_check_branch
    %11 = sbr.rel (0) target = $region9
  $region8: #{resnet_forward.16} parent=0 // pred_region
    _
  $region9: #{resnet_forward.16} parent=0 // pred_fallthru
    _
  // Predicated region
  $region10: #{resnet_forward.16} parent=0 // pred_check
    _
  $region11: #{resnet_forward.16} parent=0 // pred_check_branch
    %13 = sbr.rel (0) target = $region13
  $region12: #{resnet_forward.16} parent=0 // pred_region
    _
  $region13: #{resnet_forward.16} parent=0 // pred_fallthru
    _
  %v15 = vld [vmem:[%s0] sm:$0xf]
  %v16 = vld [vmem:[%s0 + $0x4] sm:$0xf]
  %v17 = vld [vmem:[%s0 + $0x8] sm:$0xf]
  %v18 = vld [vmem:[%s0 + $0xc] sm:$0xf]
  %v19 = vld [vmem:[%s0 + $0x10] sm:$0xf]
  %v20 = vld [vmem:[%s0 + $0x14] sm:$0xf]
  %v21 = vld [vmem:[%s0 + $0x18] sm:$0xf]
  %v22 = vld [vmem:[%s0 + $0x1c] sm:$0xf]
  %v23 = vld [vmem:[%s0 + $0x20] sm:$0xf]
  %v24 = vld [vmem:[%s0 + $0x24] sm:$0xf]
  %v25 = vld [vmem:[%s0 + $0x28] sm:$0xf]
  %v26 = vld [vmem:[%s0 + $0x2c] sm:$0xf]
  %v27 = vld [vmem:[%s0 + $0x30] sm:$0xf]
  %v28 = vld [vmem:[%s0 + $0x34] sm:$0xf]
  %v29 = vld [vmem:[%s0 + $0x38] sm:$0xf]
  %v30 = vld [vmem:[%s0 + $0x3c] sm:$0xf]
  %v31 = vld [vmem:[%s1] sm:$0xf]
  %v32 = vld [vmem:[%s1 + $0x4] sm:$0xf]
  %v33 = vld [vmem:[%s1 + $0x8] sm:$0xf]
  %v34 = vld [vmem:[%s1 + $0xc] sm:$0xf]
  %v35 = vld [vmem:[%s1 + $0x10] sm:$0xf]
  %v36 = vld [vmem:[%s1 + $0x14] sm:$0xf]
  %v37 = vld [vmem:[%s1 + $0x18] sm:$0xf]
  %v38 = vld [vmem:[%s1 + $0x1c] sm:$0xf]
  %v39 = vld [vmem:[%s1 + $0x20] sm:$0xf]
  %v40 = vld [vmem:[%s1 + $0x24] sm:$0xf]
  %v41 = vld [vmem:[%s1 + $0x28] sm:$0xf]
  %v42 = vld [vmem:[%s1 + $0x2c] sm:$0xf]
  %v43 = vld [vmem:[%s1 + $0x30] sm:$0xf]
  %v44 = vld [vmem:[%s1 + $0x34] sm:$0xf]
  %v45 = vld [vmem:[%s1 + $0x38] sm:$0xf]
  %v46 = vld [vmem:[%s1 + $0x3c] sm:$0xf]
  %v47 = vld [vmem:[%s2] sm:$0x1]
  %v49 = vlaneseq
  %v50 = vshrl.u32 %v49, 7
  %v51 = vsub.s32 0, %v50
  %v52 = vrot.slane %v47, %v51
  %v70 = vunpack.c.l.b16 %v15
  %v71 = vunpack.c.l.b16 %v16
  %v72 = vunpack.c.l.b16 %v17
  %v73 = vunpack.c.l.b16 %v18
  %v74 = vunpack.c.l.b16 %v19
  %v75 = vunpack.c.l.b16 %v20
  %v76 = vunpack.c.l.b16 %v21
  %v77 = vunpack.c.l.b16 %v22
  %v78 = vunpack.c.l.b16 %v23
  %v79 = vunpack.c.l.b16 %v24
  %v80 = vunpack.c.l.b16 %v25
  %v81 = vunpack.c.l.b16 %v26
  %v82 = vunpack.c.l.b16 %v27
  %v83 = vunpack.c.l.b16 %v28
  %v84 = vunpack.c.l.b16 %v29
  %v85 = vunpack.c.l.b16 %v30
  %v86 = vpack.c.b16 %v71, %v70
  %v87 = vpack.c.b16 %v73, %v72
  %v88 = vpack.c.b16 %v75, %v74
  %v89 = vpack.c.b16 %v77, %v76
  %v90 = vpack.c.b16 %v79, %v78
  %v91 = vpack.c.b16 %v81, %v80
  %v92 = vpack.c.b16 %v83, %v82
  %v93 = vpack.c.b16 %v85, %v84
  %v118 = vunpack.c.l.b16 %v31
  %v119 = vunpack.c.l.b16 %v32
  %v120 = vunpack.c.l.b16 %v33
  %v121 = vunpack.c.l.b16 %v34
  %v122 = vunpack.c.l.b16 %v35
  %v123 = vunpack.c.l.b16 %v36
  %v124 = vunpack.c.l.b16 %v37
  %v125 = vunpack.c.l.b16 %v38
  %v126 = vunpack.c.l.b16 %v39
  %v127 = vunpack.c.l.b16 %v40
  %v128 = vunpack.c.l.b16 %v41
  %v129 = vunpack.c.l.b16 %v42
  %v130 = vunpack.c.l.b16 %v43
  %v131 = vunpack.c.l.b16 %v44
  %v132 = vunpack.c.l.b16 %v45
  %v133 = vunpack.c.l.b16 %v46
  %v134 = vpack.c.b16 %v119, %v118
  %v135 = vpack.c.b16 %v121, %v120
  %v136 = vpack.c.b16 %v123, %v122
  %v137 = vpack.c.b16 %v125, %v124
  %v138 = vpack.c.b16 %v127, %v126
  %v139 = vpack.c.b16 %v129, %v128
  %v140 = vpack.c.b16 %v131, %v130
  %v141 = vpack.c.b16 %v133, %v132
  %150 = vmatprep.subr.bf16.mxu0 0
  %151 = vmatpush1.bf16.msra.mxu0 %v134
  %152 = vmatprep.subr.bf16.mxu0 0
  %153 = vmatpush1.bf16.msra.mxu0 %v135
  %154 = vmatprep.subr.bf16.mxu0 0
  %155 = vmatpush1.bf16.msra.mxu0 %v136
  %156 = vmatprep.subr.bf16.mxu0 0
  %157 = vmatpush1.bf16.msra.mxu0 %v137
  %158 = vmatprep.subr.bf16.mxu0 0
  %159 = vmatpush1.bf16.msra.mxu0 %v138
  %160 = vmatprep.subr.bf16.mxu0 0
  %161 = vmatpush1.bf16.msra.mxu0 %v139
  %162 = vmatprep.subr.bf16.mxu0 0
  %163 = vmatpush1.bf16.msra.mxu0 %v140
  %164 = vmatprep.subr.bf16.mxu0 0
  %165 = vmatpush1.bf16.msra.mxu0 %v141
  %166 = vmatprep.subr.bf16.mxu0 0
  %167 = vmatpush1.bf16.msra.mxu0 0
  %168 = vmatprep.subr.bf16.mxu0 0
  %169 = vmatpush1.bf16.msra.mxu0 0
  %170 = vmatprep.subr.bf16.mxu0 0
  %171 = vmatpush1.bf16.msra.mxu0 0
  %172 = vmatprep.subr.bf16.mxu0 0
  %173 = vmatpush1.bf16.msra.mxu0 0
  %174 = vmatprep.subr.bf16.mxu0 0
  %175 = vmatpush1.bf16.msra.mxu0 0
  %176 = vmatprep.subr.bf16.mxu0 0
  %177 = vmatpush1.bf16.msra.mxu0 0
  %178 = vmatprep.subr.bf16.mxu0 0
  %179 = vmatpush1.bf16.msra.mxu0 0
  %180 = vmatprep.subr.bf16.mxu0 0
  %181 = vmatpush1.bf16.msra.mxu0 0
  %182 = vmatprep.mubr.bf16.mxu0 0
  %183 = vmatmul.mubr.bf16.gmra.mrb[0].mxu0 %v86
  %v184 = vpop.f32.mrb[0].mxu0
  %v185 = vadd.f32 %v52, %v184
  %v186 = vpop.f32.mrb[0].mxu0
  %v187 = vpop.f32.mrb[0].mxu0
  %v188 = vadd.f32 %v52, %v187
  %v189 = vpop.f32.mrb[0].mxu0
  %190 = vmatprep.mubr.bf16.mxu0 0
  %191 = vmatmul.mubr.bf16.gmra.mrb[0].mxu0 %v87
  %v192 = vpop.f32.mrb[0].mxu0
  %v193 = vadd.f32 %v52, %v192
  %v194 = vpop.f32.mrb[0].mxu0
  %v195 = vpop.f32.mrb[0].mxu0
  %v196 = vadd.f32 %v52, %v195
  %v197 = vpop.f32.mrb[0].mxu0
  %198 = vmatprep.mubr.bf16.mxu0 0
  %199 = vmatmul.mubr.bf16.gmra.mrb[0].mxu0 %v88
  %v200 = vpop.f32.mrb[0].mxu0
  %v201 = vadd.f32 %v52, %v200
  %v202 = vpop.f32.mrb[0].mxu0
  %v203 = vpop.f32.mrb[0].mxu0
  %v204 = vadd.f32 %v52, %v203
  %v205 = vpop.f32.mrb[0].mxu0
  %206 = vmatprep.mubr.bf16.mxu0 0
  %207 = vmatmul.mubr.bf16.gmra.mrb[0].mxu0 %v89
  %v208 = vpop.f32.mrb[0].mxu0
  %v209 = vadd.f32 %v52, %v208
  %v210 = vpop.f32.mrb[0].mxu0
  %v211 = vpop.f32.mrb[0].mxu0
  %v212 = vadd.f32 %v52, %v211
  %v213 = vpop.f32.mrb[0].mxu0
  %214 = vmatprep.mubr.bf16.mxu0 0
  %215 = vmatmul.mubr.bf16.gmra.mrb[0].mxu0 %v90
  %v216 = vpop.f32.mrb[0].mxu0
  %v217 = vadd.f32 %v52, %v216
  %v218 = vpop.f32.mrb[0].mxu0
  %v219 = vpop.f32.mrb[0].mxu0
  %v220 = vadd.f32 %v52, %v219
  %v221 = vpop.f32.mrb[0].mxu0
  %222 = vmatprep.mubr.bf16.mxu0 0
  %223 = vmatmul.mubr.bf16.gmra.mrb[0].mxu0 %v91
  %v224 = vpop.f32.mrb[0].mxu0
  %v225 = vadd.f32 %v52, %v224
  %v226 = vpop.f32.mrb[0].mxu0
  %v227 = vpop.f32.mrb[0].mxu0
  %v228 = vadd.f32 %v52, %v227
  %v229 = vpop.f32.mrb[0].mxu0
  %230 = vmatprep.mubr.bf16.mxu0 0
  %231 = vmatmul.mubr.bf16.gmra.mrb[0].mxu0 %v92
  %v232 = vpop.f32.mrb[0].mxu0
  %v233 = vadd.f32 %v52, %v232
  %v234 = vpop.f32.mrb[0].mxu0
  %v235 = vpop.f32.mrb[0].mxu0
  %v236 = vadd.f32 %v52, %v235
  %v237 = vpop.f32.mrb[0].mxu0
  %238 = vmatprep.mubr.bf16.mxu0 0
  %239 = vmatmul.mubr.bf16.gmra.mrb[0].mxu0 %v93
  %v240 = vpop.f32.mrb[0].mxu0
  %v241 = vadd.f32 %v52, %v240
  %v242 = vpop.f32.mrb[0].mxu0
  %v243 = vpop.f32.mrb[0].mxu0
  %v244 = vadd.f32 %v52, %v243
  %v245 = vpop.f32.mrb[0].mxu0
  %246 = vdwg.mxu0
  %247 = vst [vmem:[%s3] sm:$0xff] %v185
  %248 = vst [vmem:[%s3 + $0x8] sm:$0xff] %v188
  %249 = vst [vmem:[%s3 + $0x10] sm:$0xff] %v193
  %250 = vst [vmem:[%s3 + $0x18] sm:$0xff] %v196
  %251 = vst [vmem:[%s3 + $0x20] sm:$0xff] %v201
  %252 = vst [vmem:[%s3 + $0x28] sm:$0xff] %v204
  %253 = vst [vmem:[%s3 + $0x30] sm:$0xff] %v209
  %254 = vst [vmem:[%s3 + $0x38] sm:$0xff] %v212
  %255 = vst [vmem:[%s3 + $0x40] sm:$0xff] %v217
  %256 = vst [vmem:[%s3 + $0x48] sm:$0xff] %v220
  %257 = vst [vmem:[%s3 + $0x50] sm:$0xff] %v225
  %258 = vst [vmem:[%s3 + $0x58] sm:$0xff] %v228
  %259 = vst [vmem:[%s3 + $0x60] sm:$0xff] %v233
  %260 = vst [vmem:[%s3 + $0x68] sm:$0xff] %v236
  %261 = vst [vmem:[%s3 + $0x70] sm:$0xff] %v241
  %262 = vst [vmem:[%s3 + $0x78] sm:$0xff] %v244
  // Predicated region
  $region14: #{resnet_forward.16} parent=0 // pred_check
    _
  $region15: #{resnet_forward.16} parent=0 // pred_check_branch
    %264 = sbr.rel (0) target = $region17
  $region16: #{resnet_forward.16} parent=0 // pred_region
    _
  $region17: #{resnet_forward.16} parent=0 // pred_fallthru
    _
  // Predicated region
  $region18: #{resnet_forward.16} parent=0 // pred_check
    _
  $region19: #{resnet_forward.16} parent=0 // pred_check_branch
    %266 = sbr.rel (0) target = $region21
  $region20: #{resnet_forward.16} parent=0 // pred_region
    _
  $region21: #{resnet_forward.16} parent=0 // pred_fallthru
    _

// kernel: resnet_forward.17
$region0: #{resnet_forward.17}
  #allocation0 [shape = 'u32[]', space=smem, size = 0x4, offset = 0x4, fixed_abs, tag = 'smem constant byte address 0x4 - core index']
  #allocation1 [shape = 'u32[144,128]{1,0:T(1,128)}', space=vmem, size = 0x12000, scoped, tag = 'internal scratch']
  %s0 = inlined_call_operand.vmem [shape: bf16[128,512], index: 0, kind: input, shape index: {}]
  %s1 = inlined_call_operand.vmem [shape: bf16[512,128], index: 1, kind: input, shape index: {}]
  %s2 = inlined_call_operand.vmem [shape: f32[1,128], index: 2, kind: input, shape index: {}]
  %s3 = inlined_call_operand.vmem [shape: f32[128,128], index: 3, kind: input, shape index: {}]
  %s4 = inlined_call_operand.vmem [shape: f32[128,128], index: 4, kind: output, shape index: {}]
  %s5 = sld [smem:[#allocation0]]
  $region26: #{resnet_forward.17} parent=0
    _
  %s7 = ssub.s32 1, %s5
  %s8 = scalar_select 0, %s7, %s5
  // Predicated region
  $region2: #{resnet_forward.17} parent=0 // pred_check
    _
  $region3: #{resnet_forward.17} parent=0 // pred_check_branch
    %10 = sbr.rel (0) target = $region5
  $region4: #{resnet_forward.17} parent=0 // pred_region
    _
  $region5: #{resnet_forward.17} parent=0 // pred_fallthru
    _
  // Predicated region
  $region6: #{resnet_forward.17} parent=0 // pred_check
    _
  $region7: #{resnet_forward.17} parent=0 // pred_check_branch
    %12 = sbr.rel (0) target = $region9
  $region8: #{resnet_forward.17} parent=0 // pred_region
    _
  $region9: #{resnet_forward.17} parent=0 // pred_fallthru
    _
  // Predicated region
  $region10: #{resnet_forward.17} parent=0 // pred_check
    _
  $region11: #{resnet_forward.17} parent=0 // pred_check_branch
    %14 = sbr.rel (0) target = $region13
  $region12: #{resnet_forward.17} parent=0 // pred_region
    _
  $region13: #{resnet_forward.17} parent=0 // pred_fallthru
    _
  // Predicated region
  $region14: #{resnet_forward.17} parent=0 // pred_check
    _
  $region15: #{resnet_forward.17} parent=0 // pred_check_branch
    %16 = sbr.rel (0) target = $region17
  $region16: #{resnet_forward.17} parent=0 // pred_region
    _
  $region17: #{resnet_forward.17} parent=0 // pred_fallthru
    _
  %v18 = vld [vmem:[%s0] sm:$0xff]
  %v19 = vld [vmem:[%s0 + $0x8] sm:$0xff]
  %v20 = vld [vmem:[%s0 + $0x10] sm:$0xff]
  %v21 = vld [vmem:[%s0 + $0x18] sm:$0xff]
  %v22 = vld [vmem:[%s0 + $0x20] sm:$0xff]
  %v23 = vld [vmem:[%s0 + $0x28] sm:$0xff]
  %v24 = vld [vmem:[%s0 + $0x30] sm:$0xff]
  %v25 = vld [vmem:[%s0 + $0x38] sm:$0xff]
  %v26 = vld [vmem:[%s0 + $0x40] sm:$0xff]
  %v27 = vld [vmem:[%s0 + $0x48] sm:$0xff]
  %v28 = vld [vmem:[%s0 + $0x50] sm:$0xff]
  %v29 = vld [vmem:[%s0 + $0x58] sm:$0xff]
  %v30 = vld [vmem:[%s0 + $0x60] sm:$0xff]
  %v31 = vld [vmem:[%s0 + $0x68] sm:$0xff]
  %v32 = vld [vmem:[%s0 + $0x70] sm:$0xff]
  %v33 = vld [vmem:[%s0 + $0x78] sm:$0xff]
  %v34 = vld [vmem:[%s0 + $0x80] sm:$0xff]
  %v35 = vld [vmem:[%s0 + $0x88] sm:$0xff]
  %v36 = vld [vmem:[%s0 + $0x90] sm:$0xff]
  %v37 = vld [vmem:[%s0 + $0x98] sm:$0xff]
  %v38 = vld [vmem:[%s0 + $0xa0] sm:$0xff]
  %v39 = vld [vmem:[%s0 + $0xa8] sm:$0xff]
  %v40 = vld [vmem:[%s0 + $0xb0] sm:$0xff]
  %v41 = vld [vmem:[%s0 + $0xb8] sm:$0xff]
  %v42 = vld [vmem:[%s0 + $0xc0] sm:$0xff]
  %v43 = vld [vmem:[%s0 + $0xc8] sm:$0xff]
  %v44 = vld [vmem:[%s0 + $0xd0] sm:$0xff]
  %v45 = vld [vmem:[%s0 + $0xd8] sm:$0xff]
  %v46 = vld [vmem:[%s0 + $0xe0] sm:$0xff]
  %v47 = vld [vmem:[%s0 + $0xe8] sm:$0xff]
  %v48 = vld [vmem:[%s0 + $0xf0] sm:$0xff]
  %v49 = vld [vmem:[%s0 + $0xf8] sm:$0xff]
  %v50 = vld [vmem:[%s1] sm:$0xf]
  %v51 = vld [vmem:[%s1 + $0x4] sm:$0xf]
  %v52 = vld [vmem:[%s1 + $0x8] sm:$0xf]
  %v53 = vld [vmem:[%s1 + $0xc] sm:$0xf]
  %v54 = vld [vmem:[%s1 + $0x10] sm:$0xf]
  %v55 = vld [vmem:[%s1 + $0x14] sm:$0xf]
  %v56 = vld [vmem:[%s1 + $0x18] sm:$0xf]
  %v57 = vld [vmem:[%s1 + $0x1c] sm:$0xf]
  %v58 = vld [vmem:[%s1 + $0x20] sm:$0xf]
  %v59 = vld [vmem:[%s1 + $0x24] sm:$0xf]
  %v60 = vld [vmem:[%s1 + $0x28] sm:$0xf]
  %v61 = vld [vmem:[%s1 + $0x2c] sm:$0xf]
  %v62 = vld [vmem:[%s1 + $0x30] sm:$0xf]
  %v63 = vld [vmem:[%s1 + $0x34] sm:$0xf]
  %v64 = vld [vmem:[%s1 + $0x38] sm:$0xf]
  %v65 = vld [vmem:[%s1 + $0x3c] sm:$0xf]
  %v66 = vld [vmem:[%s1 + $0x40] sm:$0xf]
  %v67 = vld [vmem:[%s1 + $0x44] sm:$0xf]
  %v68 = vld [vmem:[%s1 + $0x48] sm:$0xf]
  %v69 = vld [vmem:[%s1 + $0x4c] sm:$0xf]
  %v70 = vld [vmem:[%s1 + $0x50] sm:$0xf]
  %v71 = vld [vmem:[%s1 + $0x54] sm:$0xf]
  %v72 = vld [vmem:[%s1 + $0x58] sm:$0xf]
  %v73 = vld [vmem:[%s1 + $0x5c] sm:$0xf]
  %v74 = vld [vmem:[%s1 + $0x60] sm:$0xf]
  %v75 = vld [vmem:[%s1 + $0x64] sm:$0xf]
  %v76 = vld [vmem:[%s1 + $0x68] sm:$0xf]
  %v77 = vld [vmem:[%s1 + $0x6c] sm:$0xf]
  %v78 = vld [vmem:[%s1 + $0x70] sm:$0xf]
  %v79 = vld [vmem:[%s1 + $0x74] sm:$0xf]
  %v80 = vld [vmem:[%s1 + $0x78] sm:$0xf]
  %v81 = vld [vmem:[%s1 + $0x7c] sm:$0xf]
  %v82 = vld [vmem:[%s1 + $0x80] sm:$0xf]
  %v83 = vld [vmem:[%s1 + $0x84] sm:$0xf]
  %v84 = vld [vmem:[%s1 + $0x88] sm:$0xf]
  %v85 = vld [vmem:[%s1 + $0x8c] sm:$0xf]
  %v86 = vld [vmem:[%s1 + $0x90] sm:$0xf]
  %v87 = vld [vmem:[%s1 + $0x94] sm:$0xf]
  %v88 = vld [vmem:[%s1 + $0x98] sm:$0xf]
  %v89 = vld [vmem:[%s1 + $0x9c] sm:$0xf]
  %v90 = vld [vmem:[%s1 + $0xa0] sm:$0xf]
  %v91 = vld [vmem:[%s1 + $0xa4] sm:$0xf]
  %v92 = vld [vmem:[%s1 + $0xa8] sm:$0xf]
  %v93 = vld [vmem:[%s1 + $0xac] sm:$0xf]
  %v94 = vld [vmem:[%s1 + $0xb0] sm:$0xf]
  %v95 = vld [vmem:[%s1 + $0xb4] sm:$0xf]
  %v96 = vld [vmem:[%s1 + $0xb8] sm:$0xf]
  %v97 = vld [vmem:[%s1 + $0xbc] sm:$0xf]
  %v98 = vld [vmem:[%s1 + $0xc0] sm:$0xf]
  %v99 = vld [vmem:[%s1 + $0xc4] sm:$0xf]
  %v100 = vld [vmem:[%s1 + $0xc8] sm:$0xf]
  %v101 = vld [vmem:[%s1 + $0xcc] sm:$0xf]
  %v102 = vld [vmem:[%s1 + $0xd0] sm:$0xf]
  %v103 = vld [vmem:[%s1 + $0xd4] sm:$0xf]
  %v104 = vld [vmem:[%s1 + $0xd8] sm:$0xf]
  %v105 = vld [vmem:[%s1 + $0xdc] sm:$0xf]
  %v106 = vld [vmem:[%s1 + $0xe0] sm:$0xf]
  %v107 = vld [vmem:[%s1 + $0xe4] sm:$0xf]
  %v108 = vld [vmem:[%s1 + $0xe8] sm:$0xf]
  %v109 = vld [vmem:[%s1 + $0xec] sm:$0xf]
  %v110 = vld [vmem:[%s1 + $0xf0] sm:$0xf]
  %v111 = vld [vmem:[%s1 + $0xf4] sm:$0xf]
  %v112 = vld [vmem:[%s1 + $0xf8] sm:$0xf]
  %v113 = vld [vmem:[%s1 + $0xfc] sm:$0xf]
  %v114 = vld [vmem:[%s2] sm:$0x1]
  %v116 = vlaneseq
  %v117 = vshrl.u32 %v116, 7
  %v118 = vsub.s32 0, %v117
  %v119 = vrot.slane %v114, %v118
  %v153 = vunpack.c.l.b16 %v18
  %v154 = vunpack.c.h.b16 %v18
  %v155 = vunpack.c.l.b16 %v19
  %v156 = vunpack.c.h.b16 %v19
  %v157 = vunpack.c.l.b16 %v20
  %v158 = vunpack.c.h.b16 %v20
  %v159 = vunpack.c.l.b16 %v21
  %v160 = vunpack.c.h.b16 %v21
  %v161 = vunpack.c.l.b16 %v22
  %v162 = vunpack.c.h.b16 %v22
  %v163 = vunpack.c.l.b16 %v23
  %v164 = vunpack.c.h.b16 %v23
  %v165 = vunpack.c.l.b16 %v24
  %v166 = vunpack.c.h.b16 %v24
  %v167 = vunpack.c.l.b16 %v25
  %v168 = vunpack.c.h.b16 %v25
  %v169 = vunpack.c.l.b16 %v26
  %v170 = vunpack.c.h.b16 %v26
  %v171 = vunpack.c.l.b16 %v27
  %v172 = vunpack.c.h.b16 %v27
  %v173 = vunpack.c.l.b16 %v28
  %v174 = vunpack.c.h.b16 %v28
  %v175 = vunpack.c.l.b16 %v29
  %v176 = vunpack.c.h.b16 %v29
  %v177 = vunpack.c.l.b16 %v30
  %v178 = vunpack.c.h.b16 %v30
  %v179 = vunpack.c.l.b16 %v31
  %v180 = vunpack.c.h.b16 %v31
  %v181 = vunpack.c.l.b16 %v32
  %v182 = vunpack.c.h.b16 %v32
  %v183 = vunpack.c.l.b16 %v33
  %v184 = vunpack.c.h.b16 %v33
  %v185 = vunpack.c.l.b16 %v34
  %v186 = vunpack.c.h.b16 %v34
  %v187 = vunpack.c.l.b16 %v35
  %v188 = vunpack.c.h.b16 %v35
  %v189 = vunpack.c.l.b16 %v36
  %v190 = vunpack.c.h.b16 %v36
  %v191 = vunpack.c.l.b16 %v37
  %v192 = vunpack.c.h.b16 %v37
  %v193 = vunpack.c.l.b16 %v38
  %v194 = vunpack.c.h.b16 %v38
  %v195 = vunpack.c.l.b16 %v39
  %v196 = vunpack.c.h.b16 %v39
  %v197 = vunpack.c.l.b16 %v40
  %v198 = vunpack.c.h.b16 %v40
  %v199 = vunpack.c.l.b16 %v41
  %v200 = vunpack.c.h.b16 %v41
  %v201 = vunpack.c.l.b16 %v42
  %v202 = vunpack.c.h.b16 %v42
  %v203 = vunpack.c.l.b16 %v43
  %v204 = vunpack.c.h.b16 %v43
  %v205 = vunpack.c.l.b16 %v44
  %v206 = vunpack.c.h.b16 %v44
  %v207 = vunpack.c.l.b16 %v45
  %v208 = vunpack.c.h.b16 %v45
  %v209 = vunpack.c.l.b16 %v46
  %v210 = vunpack.c.h.b16 %v46
  %v211 = vunpack.c.l.b16 %v47
  %v212 = vunpack.c.h.b16 %v47
  %v213 = vunpack.c.l.b16 %v48
  %v214 = vunpack.c.h.b16 %v48
  %v215 = vunpack.c.l.b16 %v49
  %v216 = vunpack.c.h.b16 %v49
  %v217 = vpack.c.b16 %v157, %v153
  %v218 = vpack.c.b16 %v158, %v154
  %v219 = vpack.c.b16 %v159, %v155
  %v220 = vpack.c.b16 %v160, %v156
  %v221 = vpack.c.b16 %v165, %v161
  %v222 = vpack.c.b16 %v166, %v162
  %v223 = vpack.c.b16 %v167, %v163
  %v224 = vpack.c.b16 %v168, %v164
  %v225 = vpack.c.b16 %v173, %v169
  %v226 = vpack.c.b16 %v174, %v170
  %v227 = vpack.c.b16 %v175, %v171
  %v228 = vpack.c.b16 %v176, %v172
  %v229 = vpack.c.b16 %v181, %v177
  %v230 = vpack.c.b16 %v182, %v178
  %v231 = vpack.c.b16 %v183, %v179
  %v232 = vpack.c.b16 %v184, %v180
  %v233 = vpack.c.b16 %v189, %v185
  %v234 = vpack.c.b16 %v190, %v186
  %v235 = vpack.c.b16 %v191, %v187
  %v236 = vpack.c.b16 %v192, %v188
  %v237 = vpack.c.b16 %v197, %v193
  %v238 = vpack.c.b16 %v198, %v194
  %v239 = vpack.c.b16 %v199, %v195
  %v240 = vpack.c.b16 %v200, %v196
  %v241 = vpack.c.b16 %v205, %v201
  %v242 = vpack.c.b16 %v206, %v202
  %v243 = vpack.c.b16 %v207, %v203
  %v244 = vpack.c.b16 %v208, %v204
  %v245 = vpack.c.b16 %v213, %v209
  %v246 = vpack.c.b16 %v214, %v210
  %v247 = vpack.c.b16 %v215, %v211
  %v248 = vpack.c.b16 %v216, %v212
  %v345 = vunpack.c.l.b16 %v50
  %v346 = vunpack.c.l.b16 %v51
  %v347 = vunpack.c.l.b16 %v52
  %v348 = vunpack.c.l.b16 %v53
  %v349 = vunpack.c.l.b16 %v54
  %v350 = vunpack.c.l.b16 %v55
  %v351 = vunpack.c.l.b16 %v56
  %v352 = vunpack.c.l.b16 %v57
  %v353 = vunpack.c.l.b16 %v58
  %v354 = vunpack.c.l.b16 %v59
  %v355 = vunpack.c.l.b16 %v60
  %v356 = vunpack.c.l.b16 %v61
  %v357 = vunpack.c.l.b16 %v62
  %v358 = vunpack.c.l.b16 %v63
  %v359 = vunpack.c.l.b16 %v64
  %v360 = vunpack.c.l.b16 %v65
  %v361 = vunpack.c.l.b16 %v66
  %v362 = vunpack.c.l.b16 %v67
  %v363 = vunpack.c.l.b16 %v68
  %v364 = vunpack.c.l.b16 %v69
  %v365 = vunpack.c.l.b16 %v70
  %v366 = vunpack.c.l.b16 %v71
  %v367 = vunpack.c.l.b16 %v72
  %v368 = vunpack.c.l.b16 %v73
  %v369 = vunpack.c.l.b16 %v74
  %v370 = vunpack.c.l.b16 %v75
  %v371 = vunpack.c.l.b16 %v76
  %v372 = vunpack.c.l.b16 %v77
  %v373 = vunpack.c.l.b16 %v78
  %v374 = vunpack.c.l.b16 %v79
  %v375 = vunpack.c.l.b16 %v80
  %v376 = vunpack.c.l.b16 %v81
  %v377 = vunpack.c.l.b16 %v82
  %v378 = vunpack.c.l.b16 %v83
  %v379 = vunpack.c.l.b16 %v84
  %v380 = vunpack.c.l.b16 %v85
  %v381 = vunpack.c.l.b16 %v86
  %v382 = vunpack.c.l.b16 %v87
  %v383 = vunpack.c.l.b16 %v88
  %v384 = vunpack.c.l.b16 %v89
  %v385 = vunpack.c.l.b16 %v90
  %v386 = vunpack.c.l.b16 %v91
  %v387 = vunpack.c.l.b16 %v92
  %v388 = vunpack.c.l.b16 %v93
  %v389 = vunpack.c.l.b16 %v94
  %v390 = vunpack.c.l.b16 %v95
  %v391 = vunpack.c.l.b16 %v96
  %v392 = vunpack.c.l.b16 %v97
  %v393 = vunpack.c.l.b16 %v98
  %v394 = vunpack.c.l.b16 %v99
  %v395 = vunpack.c.l.b16 %v100
  %v396 = vunpack.c.l.b16 %v101
  %v397 = vunpack.c.l.b16 %v102
  %v398 = vunpack.c.l.b16 %v103
  %v399 = vunpack.c.l.b16 %v104
  %v400 = vunpack.c.l.b16 %v105
  %v401 = vunpack.c.l.b16 %v106
  %v402 = vunpack.c.l.b16 %v107
  %v403 = vunpack.c.l.b16 %v108
  %v404 = vunpack.c.l.b16 %v109
  %v405 = vunpack.c.l.b16 %v110
  %v406 = vunpack.c.l.b16 %v111
  %v407 = vunpack.c.l.b16 %v112
  %v408 = vunpack.c.l.b16 %v113
  %v409 = vpack.c.b16 %v346, %v345
  %v410 = vpack.c.b16 %v348, %v347
  %v411 = vpack.c.b16 %v350, %v349
  %v412 = vpack.c.b16 %v352, %v351
  %v413 = vpack.c.b16 %v354, %v353
  %v414 = vpack.c.b16 %v356, %v355
  %v415 = vpack.c.b16 %v358, %v357
  %v416 = vpack.c.b16 %v360, %v359
  %v417 = vpack.c.b16 %v362, %v361
  %v418 = vpack.c.b16 %v364, %v363
  %v419 = vpack.c.b16 %v366, %v365
  %v420 = vpack.c.b16 %v368, %v367
  %v421 = vpack.c.b16 %v370, %v369
  %v422 = vpack.c.b16 %v372, %v371
  %v423 = vpack.c.b16 %v374, %v373
  %v424 = vpack.c.b16 %v376, %v375
  %v425 = vpack.c.b16 %v378, %v377
  %v426 = vpack.c.b16 %v380, %v379
  %v427 = vpack.c.b16 %v382, %v381
  %v428 = vpack.c.b16 %v384, %v383
  %v429 = vpack.c.b16 %v386, %v385
  %v430 = vpack.c.b16 %v388, %v387
  %v431 = vpack.c.b16 %v390, %v389
  %v432 = vpack.c.b16 %v392, %v391
  %v433 = vpack.c.b16 %v394, %v393
  %v434 = vpack.c.b16 %v396, %v395
  %v435 = vpack.c.b16 %v398, %v397
  %v436 = vpack.c.b16 %v400, %v399
  %v437 = vpack.c.b16 %v402, %v401
  %v438 = vpack.c.b16 %v404, %v403
  %v439 = vpack.c.b16 %v406, %v405
  %v440 = vpack.c.b16 %v408, %v407
  %473 = vmatprep.subr.bf16.mxu0 0
  %474 = vmatpush1.bf16.msra.mxu0 %v409
  %475 = vmatprep.subr.bf16.mxu0 0
  %476 = vmatpush1.bf16.msra.mxu0 %v410
  %477 = vmatprep.subr.bf16.mxu0 0
  %478 = vmatpush1.bf16.msra.mxu0 %v411
  %479 = vmatprep.subr.bf16.mxu0 0
  %480 = vmatpush1.bf16.msra.mxu0 %v412
  %481 = vmatprep.subr.bf16.mxu0 0
  %482 = vmatpush1.bf16.msra.mxu0 %v413
  %483 = vmatprep.subr.bf16.mxu0 0
  %484 = vmatpush1.bf16.msra.mxu0 %v414
  %485 = vmatprep.subr.bf16.mxu0 0
  %486 = vmatpush1.bf16.msra.mxu0 %v415
  %487 = vmatprep.subr.bf16.mxu0 0
  %488 = vmatpush1.bf16.msra.mxu0 %v416
  %489 = vmatprep.subr.bf16.mxu0 0
  %490 = vmatpush1.bf16.msra.mxu0 %v417
  %491 = vmatprep.subr.bf16.mxu0 0
  %492 = vmatpush1.bf16.msra.mxu0 %v418
  %493 = vmatprep.subr.bf16.mxu0 0
  %494 = vmatpush1.bf16.msra.mxu0 %v419
  %495 = vmatprep.subr.bf16.mxu0 0
  %496 = vmatpush1.bf16.msra.mxu0 %v420
  %497 = vmatprep.subr.bf16.mxu0 0
  %498 = vmatpush1.bf16.msra.mxu0 %v421
  %499 = vmatprep.subr.bf16.mxu0 0
  %500 = vmatpush1.bf16.msra.mxu0 %v422
  %501 = vmatprep.subr.bf16.mxu0 0
  %502 = vmatpush1.bf16.msra.mxu0 %v423
  %503 = vmatprep.subr.bf16.mxu0 0
  %504 = vmatpush1.bf16.msra.mxu0 %v424
  %505 = vmatprep.mubr.bf16.mxu0 %v218
  %506 = vmatmul.mubr.bf16.gmra.mrb[0].mxu0 %v217
  %v507 = vpop.f32.mrb[0].mxu0
  %v508 = vadd.f32 %v119, %v507
  %v509 = vpop.f32.mrb[0].mxu0
  %v510 = vpop.f32.mrb[0].mxu0
  %v511 = vadd.f32 %v119, %v510
  %v512 = vpop.f32.mrb[0].mxu0
  %513 = vmatprep.mubr.bf16.mxu0 %v222
  %514 = vmatmul.mubr.bf16.gmra.mrb[0].mxu0 %v221
  %v515 = vpop.f32.mrb[0].mxu0
  %v516 = vadd.f32 %v119, %v515
  %v517 = vpop.f32.mrb[0].mxu0
  %v518 = vpop.f32.mrb[0].mxu0
  %v519 = vadd.f32 %v119, %v518
  %v520 = vpop.f32.mrb[0].mxu0
  %521 = vmatprep.mubr.bf16.mxu0 %v226
  %522 = vmatmul.mubr.bf16.gmra.mrb[0].mxu0 %v225
  %v523 = vpop.f32.mrb[0].mxu0
  %v524 = vadd.f32 %v119, %v523
  %v525 = vpop.f32.mrb[0].mxu0
  %v526 = vpop.f32.mrb[0].mxu0
  %v527 = vadd.f32 %v119, %v526
  %v528 = vpop.f32.mrb[0].mxu0
  %529 = vmatprep.mubr.bf16.mxu0 %v230
  %530 = vmatmul.mubr.bf16.gmra.mrb[0].mxu0 %v229
  %v531 = vpop.f32.mrb[0].mxu0
  %v532 = vadd.f32 %v119, %v531
  %v533 = vpop.f32.mrb[0].mxu0
  %v534 = vpop.f32.mrb[0].mxu0
  %v535 = vadd.f32 %v119, %v534
  %v536 = vpop.f32.mrb[0].mxu0
  %537 = vmatprep.mubr.bf16.mxu0 %v234
  %538 = vmatmul.mubr.bf16.gmra.mrb[0].mxu0 %v233
  %v539 = vpop.f32.mrb[0].mxu0
  %v540 = vadd.f32 %v119, %v539
  %v541 = vpop.f32.mrb[0].mxu0
  %v542 = vpop.f32.mrb[0].mxu0
  %v543 = vadd.f32 %v119, %v542
  %v544 = vpop.f32.mrb[0].mxu0
  %545 = vmatprep.mubr.bf16.mxu0 %v238
  %546 = vmatmul.mubr.bf16.gmra.mrb[0].mxu0 %v237
  %v547 = vpop.f32.mrb[0].mxu0
  %v548 = vadd.f32 %v119, %v547
  %v549 = vpop.f32.mrb[0].mxu0
  %v550 = vpop.f32.mrb[0].mxu0
  %v551 = vadd.f32 %v119, %v550
  %v552 = vpop.f32.mrb[0].mxu0
  %553 = vmatprep.mubr.bf16.mxu0 %v242
  %554 = vmatmul.mubr.bf16.gmra.mrb[0].mxu0 %v241
  %v555 = vpop.f32.mrb[0].mxu0
  %v556 = vadd.f32 %v119, %v555
  %v557 = vpop.f32.mrb[0].mxu0
  %v558 = vpop.f32.mrb[0].mxu0
  %v559 = vadd.f32 %v119, %v558
  %v560 = vpop.f32.mrb[0].mxu0
  %561 = vmatprep.mubr.bf16.mxu0 %v246
  %562 = vmatmul.mubr.bf16.gmra.mrb[0].mxu0 %v245
  %v563 = vpop.f32.mrb[0].mxu0
  %v564 = vadd.f32 %v119, %v563
  %v565 = vpop.f32.mrb[0].mxu0
  %v566 = vpop.f32.mrb[0].mxu0
  %v567 = vadd.f32 %v119, %v566
  %v568 = vpop.f32.mrb[0].mxu0
  %569 = vdwg.mxu0
  %570 = vmatprep.subr.bf16.mxu0 0
  %571 = vmatpush1.bf16.msra.mxu0 %v425
  %572 = vmatprep.subr.bf16.mxu0 0
  %573 = vmatpush1.bf16.msra.mxu0 %v426
  %574 = vmatprep.subr.bf16.mxu0 0
  %575 = vmatpush1.bf16.msra.mxu0 %v427
  %576 = vmatprep.subr.bf16.mxu0 0
  %577 = vmatpush1.bf16.msra.mxu0 %v428
  %578 = vmatprep.subr.bf16.mxu0 0
  %579 = vmatpush1.bf16.msra.mxu0 %v429
  %580 = vmatprep.subr.bf16.mxu0 0
  %581 = vmatpush1.bf16.msra.mxu0 %v430
  %582 = vmatprep.subr.bf16.mxu0 0
  %583 = vmatpush1.bf16.msra.mxu0 %v431
  %584 = vmatprep.subr.bf16.mxu0 0
  %585 = vmatpush1.bf16.msra.mxu0 %v432
  %586 = vmatprep.subr.bf16.mxu0 0
  %587 = vmatpush1.bf16.msra.mxu0 %v433
  %588 = vmatprep.subr.bf16.mxu0 0
  %589 = vmatpush1.bf16.msra.mxu0 %v434
  %590 = vmatprep.subr.bf16.mxu0 0
  %591 = vmatpush1.bf16.msra.mxu0 %v435
  %592 = vmatprep.subr.bf16.mxu0 0
  %593 = vmatpush1.bf16.msra.mxu0 %v436
  %594 = vmatprep.subr.bf16.mxu0 0
  %595 = vmatpush1.bf16.msra.mxu0 %v437
  %596 = vmatprep.subr.bf16.mxu0 0
  %597 = vmatpush1.bf16.msra.mxu0 %v438
  %598 = vmatprep.subr.bf16.mxu0 0
  %599 = vmatpush1.bf16.msra.mxu0 %v439
  %600 = vmatprep.subr.bf16.mxu0 0
  %601 = vmatpush1.bf16.msra.mxu0 %v440
  %602 = vmatprep.mubr.bf16.mxu0 %v220
  %603 = vmatmul.mubr.bf16.gmra.mrb[0].mxu0 %v219
  %v604 = vpop.f32.mrb[0].mxu0
  %v605 = vadd.f32 %v508, %v604
  %v606 = vpop.f32.mrb[0].mxu0
  %v607 = vpop.f32.mrb[0].mxu0
  %v608 = vadd.f32 %v511, %v607
  %v609 = vpop.f32.mrb[0].mxu0
  %610 = vmatprep.mubr.bf16.mxu0 %v224
  %611 = vmatmul.mubr.bf16.gmra.mrb[0].mxu0 %v223
  %v612 = vpop.f32.mrb[0].mxu0
  %v613 = vadd.f32 %v516, %v612
  %v614 = vpop.f32.mrb[0].mxu0
  %v615 = vpop.f32.mrb[0].mxu0
  %v616 = vadd.f32 %v519, %v615
  %v617 = vpop.f32.mrb[0].mxu0
  %618 = vmatprep.mubr.bf16.mxu0 %v228
  %619 = vmatmul.mubr.bf16.gmra.mrb[0].mxu0 %v227
  %v620 = vpop.f32.mrb[0].mxu0
  %v621 = vadd.f32 %v524, %v620
  %v622 = vpop.f32.mrb[0].mxu0
  %v623 = vpop.f32.mrb[0].mxu0
  %v624 = vadd.f32 %v527, %v623
  %v625 = vpop.f32.mrb[0].mxu0
  %626 = vmatprep.mubr.bf16.mxu0 %v232
  %627 = vmatmul.mubr.bf16.gmra.mrb[0].mxu0 %v231
  %v628 = vpop.f32.mrb[0].mxu0
  %v629 = vadd.f32 %v532, %v628
  %v630 = vpop.f32.mrb[0].mxu0
  %v631 = vpop.f32.mrb[0].mxu0
  %v632 = vadd.f32 %v535, %v631
  %v633 = vpop.f32.mrb[0].mxu0
  %634 = vmatprep.mubr.bf16.mxu0 %v236
  %635 = vmatmul.mubr.bf16.gmra.mrb[0].mxu0 %v235
  %v636 = vpop.f32.mrb[0].mxu0
  %v637 = vadd.f32 %v540, %v636
  %v638 = vpop.f32.mrb[0].mxu0
  %v639 = vpop.f32.mrb[0].mxu0
  %v640 = vadd.f32 %v543, %v639
  %v641 = vpop.f32.mrb[0].mxu0
  %642 = vmatprep.mubr.bf16.mxu0 %v240
  %643 = vmatmul.mubr.bf16.gmra.mrb[0].mxu0 %v239
  %v644 = vpop.f32.mrb[0].mxu0
  %v645 = vadd.f32 %v548, %v644
  %v646 = vpop.f32.mrb[0].mxu0
  %v647 = vpop.f32.mrb[0].mxu0
  %v648 = vadd.f32 %v551, %v647
  %v649 = vpop.f32.mrb[0].mxu0
  %650 = vmatprep.mubr.bf16.mxu0 %v244
  %651 = vmatmul.mubr.bf16.gmra.mrb[0].mxu0 %v243
  %v652 = vpop.f32.mrb[0].mxu0
  %v653 = vadd.f32 %v556, %v652
  %v654 = vpop.f32.mrb[0].mxu0
  %v655 = vpop.f32.mrb[0].mxu0
  %v656 = vadd.f32 %v559, %v655
  %v657 = vpop.f32.mrb[0].mxu0
  %658 = vmatprep.mubr.bf16.mxu0 %v248
  %659 = vmatmul.mubr.bf16.gmra.mrb[0].mxu0 %v247
  %v660 = vpop.f32.mrb[0].mxu0
  %v661 = vadd.f32 %v564, %v660
  %v662 = vpop.f32.mrb[0].mxu0
  %v663 = vpop.f32.mrb[0].mxu0
  %v664 = vadd.f32 %v567, %v663
  %v665 = vpop.f32.mrb[0].mxu0
  %666 = vdwg.mxu0
  %v667 = vld [vmem:[%s3] sm:$0xff]
  %v668 = vld [vmem:[%s3 + $0x8] sm:$0xff]
  %v669 = vld [vmem:[%s3 + $0x10] sm:$0xff]
  %v670 = vld [vmem:[%s3 + $0x18] sm:$0xff]
  %v671 = vld [vmem:[%s3 + $0x20] sm:$0xff]
  %v672 = vld [vmem:[%s3 + $0x28] sm:$0xff]
  %v673 = vld [vmem:[%s3 + $0x30] sm:$0xff]
  %v674 = vld [vmem:[%s3 + $0x38] sm:$0xff]
  %v675 = vld [vmem:[%s3 + $0x40] sm:$0xff]
  %v676 = vld [vmem:[%s3 + $0x48] sm:$0xff]
  %v677 = vld [vmem:[%s3 + $0x50] sm:$0xff]
  %v678 = vld [vmem:[%s3 + $0x58] sm:$0xff]
  %v679 = vld [vmem:[%s3 + $0x60] sm:$0xff]
  %v680 = vld [vmem:[%s3 + $0x68] sm:$0xff]
  %v681 = vld [vmem:[%s3 + $0x70] sm:$0xff]
  %v682 = vld [vmem:[%s3 + $0x78] sm:$0xff]
  %v683 = vadd.f32 %v605, %v667
  %v684 = vadd.f32 %v608, %v668
  %v685 = vadd.f32 %v613, %v669
  %v686 = vadd.f32 %v616, %v670
  %v687 = vadd.f32 %v621, %v671
  %v688 = vadd.f32 %v624, %v672
  %v689 = vadd.f32 %v629, %v673
  %v690 = vadd.f32 %v632, %v674
  %v691 = vadd.f32 %v637, %v675
  %v692 = vadd.f32 %v640, %v676
  %v693 = vadd.f32 %v645, %v677
  %v694 = vadd.f32 %v648, %v678
  %v695 = vadd.f32 %v653, %v679
  %v696 = vadd.f32 %v656, %v680
  %v697 = vadd.f32 %v661, %v681
  %v698 = vadd.f32 %v664, %v682
  %v699 = vmax.f32 %v683, 0.0
  %v700 = vmax.f32 %v684, 0.0
  %v701 = vmax.f32 %v685, 0.0
  %v702 = vmax.f32 %v686, 0.0
  %v703 = vmax.f32 %v687, 0.0
  %v704 = vmax.f32 %v688, 0.0
  %v705 = vmax.f32 %v689, 0.0
  %v706 = vmax.f32 %v690, 0.0
  %v707 = vmax.f32 %v691, 0.0
  %v708 = vmax.f32 %v692, 0.0
  %v709 = vmax.f32 %v693, 0.0
  %v710 = vmax.f32 %v694, 0.0
  %v711 = vmax.f32 %v695, 0.0
  %v712 = vmax.f32 %v696, 0.0
  %v713 = vmax.f32 %v697, 0.0
  %v714 = vmax.f32 %v698, 0.0
  %715 = vst [vmem:[%s4] sm:$0xff] %v699
  %716 = vst [vmem:[%s4 + $0x8] sm:$0xff] %v700
  %717 = vst [vmem:[%s4 + $0x10] sm:$0xff] %v701
  %718 = vst [vmem:[%s4 + $0x18] sm:$0xff] %v702
  %719 = vst [vmem:[%s4 + $0x20] sm:$0xff] %v703
  %720 = vst [vmem:[%s4 + $0x28] sm:$0xff] %v704
  %721 = vst [vmem:[%s4 + $0x30] sm:$0xff] %v705
  %722 = vst [vmem:[%s4 + $0x38] sm:$0xff] %v706
  %723 = vst [vmem:[%s4 + $0x40] sm:$0xff] %v707
  %724 = vst [vmem:[%s4 + $0x48] sm:$0xff] %v708
  %725 = vst [vmem:[%s4 + $0x50] sm:$0xff] %v709
  %726 = vst [vmem:[%s4 + $0x58] sm:$0xff] %v710
  %727 = vst [vmem:[%s4 + $0x60] sm:$0xff] %v711
  %728 = vst [vmem:[%s4 + $0x68] sm:$0xff] %v712
  %729 = vst [vmem:[%s4 + $0x70] sm:$0xff] %v713
  %730 = vst [vmem:[%s4 + $0x78] sm:$0xff] %v714
  // Predicated region
  $region18: #{resnet_forward.17} parent=0 // pred_check
    _
  $region19: #{resnet_forward.17} parent=0 // pred_check_branch
    %732 = sbr.rel (0) target = $region21
  $region20: #{resnet_forward.17} parent=0 // pred_region
    _
  $region21: #{resnet_forward.17} parent=0 // pred_fallthru
    _
  // Predicated region
  $region22: #{resnet_forward.17} parent=0 // pred_check
    _
  $region23: #{resnet_forward.17} parent=0 // pred_check_branch
    %734 = sbr.rel (0) target = $region25
  $region24: #{resnet_forward.17} parent=0 // pred_region
    _
  $region25: #{resnet_forward.17} parent=0 // pred_fallthru
    _

// kernel: resnet_forward.18
$region0: #{resnet_forward.18}
  #allocation0 [shape = 'u32[]', space=smem, size = 0x4, offset = 0x4, fixed_abs, tag = 'smem constant byte address 0x4 - core index']
  #allocation1 [shape = 'u32[144,128]{1,0:T(1,128)}', space=vmem, size = 0x12000, scoped, tag = 'internal scratch']
  %s0 = inlined_call_operand.vmem [shape: bf16[16,512], index: 0, kind: input, shape index: {}]
  %s1 = inlined_call_operand.vmem [shape: bf16[512,128], index: 1, kind: input, shape index: {}]
  %s2 = inlined_call_operand.vmem [shape: f32[1,128], index: 2, kind: input, shape index: {}]
  %s3 = inlined_call_operand.vmem [shape: f32[16,128], index: 3, kind: output, shape index: {}]
  %s4 = sld [smem:[#allocation0]]
  $region22: #{resnet_forward.18} parent=0
    _
  %s6 = ssub.s32 1, %s4
  %s7 = scalar_select 0, %s6, %s4
  // Predicated region
  $region2: #{resnet_forward.18} parent=0 // pred_check
    _
  $region3: #{resnet_forward.18} parent=0 // pred_check_branch
    %9 = sbr.rel (0) target = $region5
  $region4: #{resnet_forward.18} parent=0 // pred_region
    _
  $region5: #{resnet_forward.18} parent=0 // pred_fallthru
    _
  // Predicated region
  $region6: #{resnet_forward.18} parent=0 // pred_check
    _
  $region7: #{resnet_forward.18} parent=0 // pred_check_branch
    %11 = sbr.rel (0) target = $region9
  $region8: #{resnet_forward.18} parent=0 // pred_region
    _
  $region9: #{resnet_forward.18} parent=0 // pred_fallthru
    _
  // Predicated region
  $region10: #{resnet_forward.18} parent=0 // pred_check
    _
  $region11: #{resnet_forward.18} parent=0 // pred_check_branch
    %13 = sbr.rel (0) target = $region13
  $region12: #{resnet_forward.18} parent=0 // pred_region
    _
  $region13: #{resnet_forward.18} parent=0 // pred_fallthru
    _
  %v15 = vld [vmem:[%s0] sm:$0xff]
  %v16 = vld [vmem:[%s0 + $0x8] sm:$0xff]
  %v17 = vld [vmem:[%s0 + $0x10] sm:$0xff]
  %v18 = vld [vmem:[%s0 + $0x18] sm:$0xff]
  %v19 = vld [vmem:[%s1] sm:$0xf]
  %v20 = vld [vmem:[%s1 + $0x4] sm:$0xf]
  %v21 = vld [vmem:[%s1 + $0x8] sm:$0xf]
  %v22 = vld [vmem:[%s1 + $0xc] sm:$0xf]
  %v23 = vld [vmem:[%s1 + $0x10] sm:$0xf]
  %v24 = vld [vmem:[%s1 + $0x14] sm:$0xf]
  %v25 = vld [vmem:[%s1 + $0x18] sm:$0xf]
  %v26 = vld [vmem:[%s1 + $0x1c] sm:$0xf]
  %v27 = vld [vmem:[%s1 + $0x20] sm:$0xf]
  %v28 = vld [vmem:[%s1 + $0x24] sm:$0xf]
  %v29 = vld [vmem:[%s1 + $0x28] sm:$0xf]
  %v30 = vld [vmem:[%s1 + $0x2c] sm:$0xf]
  %v31 = vld [vmem:[%s1 + $0x30] sm:$0xf]
  %v32 = vld [vmem:[%s1 + $0x34] sm:$0xf]
  %v33 = vld [vmem:[%s1 + $0x38] sm:$0xf]
  %v34 = vld [vmem:[%s1 + $0x3c] sm:$0xf]
  %v35 = vld [vmem:[%s1 + $0x40] sm:$0xf]
  %v36 = vld [vmem:[%s1 + $0x44] sm:$0xf]
  %v37 = vld [vmem:[%s1 + $0x48] sm:$0xf]
  %v38 = vld [vmem:[%s1 + $0x4c] sm:$0xf]
  %v39 = vld [vmem:[%s1 + $0x50] sm:$0xf]
  %v40 = vld [vmem:[%s1 + $0x54] sm:$0xf]
  %v41 = vld [vmem:[%s1 + $0x58] sm:$0xf]
  %v42 = vld [vmem:[%s1 + $0x5c] sm:$0xf]
  %v43 = vld [vmem:[%s1 + $0x60] sm:$0xf]
  %v44 = vld [vmem:[%s1 + $0x64] sm:$0xf]
  %v45 = vld [vmem:[%s1 + $0x68] sm:$0xf]
  %v46 = vld [vmem:[%s1 + $0x6c] sm:$0xf]
  %v47 = vld [vmem:[%s1 + $0x70] sm:$0xf]
  %v48 = vld [vmem:[%s1 + $0x74] sm:$0xf]
  %v49 = vld [vmem:[%s1 + $0x78] sm:$0xf]
  %v50 = vld [vmem:[%s1 + $0x7c] sm:$0xf]
  %v51 = vld [vmem:[%s1 + $0x80] sm:$0xf]
  %v52 = vld [vmem:[%s1 + $0x84] sm:$0xf]
  %v53 = vld [vmem:[%s1 + $0x88] sm:$0xf]
  %v54 = vld [vmem:[%s1 + $0x8c] sm:$0xf]
  %v55 = vld [vmem:[%s1 + $0x90] sm:$0xf]
  %v56 = vld [vmem:[%s1 + $0x94] sm:$0xf]
  %v57 = vld [vmem:[%s1 + $0x98] sm:$0xf]
  %v58 = vld [vmem:[%s1 + $0x9c] sm:$0xf]
  %v59 = vld [vmem:[%s1 + $0xa0] sm:$0xf]
  %v60 = vld [vmem:[%s1 + $0xa4] sm:$0xf]
  %v61 = vld [vmem:[%s1 + $0xa8] sm:$0xf]
  %v62 = vld [vmem:[%s1 + $0xac] sm:$0xf]
  %v63 = vld [vmem:[%s1 + $0xb0] sm:$0xf]
  %v64 = vld [vmem:[%s1 + $0xb4] sm:$0xf]
  %v65 = vld [vmem:[%s1 + $0xb8] sm:$0xf]
  %v66 = vld [vmem:[%s1 + $0xbc] sm:$0xf]
  %v67 = vld [vmem:[%s1 + $0xc0] sm:$0xf]
  %v68 = vld [vmem:[%s1 + $0xc4] sm:$0xf]
  %v69 = vld [vmem:[%s1 + $0xc8] sm:$0xf]
  %v70 = vld [vmem:[%s1 + $0xcc] sm:$0xf]
  %v71 = vld [vmem:[%s1 + $0xd0] sm:$0xf]
  %v72 = vld [vmem:[%s1 + $0xd4] sm:$0xf]
  %v73 = vld [vmem:[%s1 + $0xd8] sm:$0xf]
  %v74 = vld [vmem:[%s1 + $0xdc] sm:$0xf]
  %v75 = vld [vmem:[%s1 + $0xe0] sm:$0xf]
  %v76 = vld [vmem:[%s1 + $0xe4] sm:$0xf]
  %v77 = vld [vmem:[%s1 + $0xe8] sm:$0xf]
  %v78 = vld [vmem:[%s1 + $0xec] sm:$0xf]
  %v79 = vld [vmem:[%s1 + $0xf0] sm:$0xf]
  %v80 = vld [vmem:[%s1 + $0xf4] sm:$0xf]
  %v81 = vld [vmem:[%s1 + $0xf8] sm:$0xf]
  %v82 = vld [vmem:[%s1 + $0xfc] sm:$0xf]
  %v83 = vld [vmem:[%s2] sm:$0x1]
  %v85 = vlaneseq
  %v86 = vshrl.u32 %v85, 7
  %v87 = vsub.s32 0, %v86
  %v88 = vrot.slane %v83, %v87
  %v94 = vunpack.c.l.b16 %v15
  %v95 = vunpack.c.h.b16 %v15
  %v96 = vunpack.c.l.b16 %v16
  %v97 = vunpack.c.h.b16 %v16
  %v98 = vunpack.c.l.b16 %v17
  %v99 = vunpack.c.h.b16 %v17
  %v100 = vunpack.c.l.b16 %v18
  %v101 = vunpack.c.h.b16 %v18
  %v102 = vpack.c.b16 %v98, %v94
  %v103 = vpack.c.b16 %v99, %v95
  %v104 = vpack.c.b16 %v100, %v96
  %v105 = vpack.c.b16 %v101, %v97
  %v174 = vunpack.c.l.b16 %v19
  %v175 = vunpack.c.l.b16 %v20
  %v176 = vunpack.c.l.b16 %v21
  %v177 = vunpack.c.l.b16 %v22
  %v178 = vunpack.c.l.b16 %v23
  %v179 = vunpack.c.l.b16 %v24
  %v180 = vunpack.c.l.b16 %v25
  %v181 = vunpack.c.l.b16 %v26
  %v182 = vunpack.c.l.b16 %v27
  %v183 = vunpack.c.l.b16 %v28
  %v184 = vunpack.c.l.b16 %v29
  %v185 = vunpack.c.l.b16 %v30
  %v186 = vunpack.c.l.b16 %v31
  %v187 = vunpack.c.l.b16 %v32
  %v188 = vunpack.c.l.b16 %v33
  %v189 = vunpack.c.l.b16 %v34
  %v190 = vunpack.c.l.b16 %v35
  %v191 = vunpack.c.l.b16 %v36
  %v192 = vunpack.c.l.b16 %v37
  %v193 = vunpack.c.l.b16 %v38
  %v194 = vunpack.c.l.b16 %v39
  %v195 = vunpack.c.l.b16 %v40
  %v196 = vunpack.c.l.b16 %v41
  %v197 = vunpack.c.l.b16 %v42
  %v198 = vunpack.c.l.b16 %v43
  %v199 = vunpack.c.l.b16 %v44
  %v200 = vunpack.c.l.b16 %v45
  %v201 = vunpack.c.l.b16 %v46
  %v202 = vunpack.c.l.b16 %v47
  %v203 = vunpack.c.l.b16 %v48
  %v204 = vunpack.c.l.b16 %v49
  %v205 = vunpack.c.l.b16 %v50
  %v206 = vunpack.c.l.b16 %v51
  %v207 = vunpack.c.l.b16 %v52
  %v208 = vunpack.c.l.b16 %v53
  %v209 = vunpack.c.l.b16 %v54
  %v210 = vunpack.c.l.b16 %v55
  %v211 = vunpack.c.l.b16 %v56
  %v212 = vunpack.c.l.b16 %v57
  %v213 = vunpack.c.l.b16 %v58
  %v214 = vunpack.c.l.b16 %v59
  %v215 = vunpack.c.l.b16 %v60
  %v216 = vunpack.c.l.b16 %v61
  %v217 = vunpack.c.l.b16 %v62
  %v218 = vunpack.c.l.b16 %v63
  %v219 = vunpack.c.l.b16 %v64
  %v220 = vunpack.c.l.b16 %v65
  %v221 = vunpack.c.l.b16 %v66
  %v222 = vunpack.c.l.b16 %v67
  %v223 = vunpack.c.l.b16 %v68
  %v224 = vunpack.c.l.b16 %v69
  %v225 = vunpack.c.l.b16 %v70
  %v226 = vunpack.c.l.b16 %v71
  %v227 = vunpack.c.l.b16 %v72
  %v228 = vunpack.c.l.b16 %v73
  %v229 = vunpack.c.l.b16 %v74
  %v230 = vunpack.c.l.b16 %v75
  %v231 = vunpack.c.l.b16 %v76
  %v232 = vunpack.c.l.b16 %v77
  %v233 = vunpack.c.l.b16 %v78
  %v234 = vunpack.c.l.b16 %v79
  %v235 = vunpack.c.l.b16 %v80
  %v236 = vunpack.c.l.b16 %v81
  %v237 = vunpack.c.l.b16 %v82
  %v238 = vpack.c.b16 %v175, %v174
  %v239 = vpack.c.b16 %v177, %v176
  %v240 = vpack.c.b16 %v179, %v178
  %v241 = vpack.c.b16 %v181, %v180
  %v242 = vpack.c.b16 %v183, %v182
  %v243 = vpack.c.b16 %v185, %v184
  %v244 = vpack.c.b16 %v187, %v186
  %v245 = vpack.c.b16 %v189, %v188
  %v246 = vpack.c.b16 %v191, %v190
  %v247 = vpack.c.b16 %v193, %v192
  %v248 = vpack.c.b16 %v195, %v194
  %v249 = vpack.c.b16 %v197, %v196
  %v250 = vpack.c.b16 %v199, %v198
  %v251 = vpack.c.b16 %v201, %v200
  %v252 = vpack.c.b16 %v203, %v202
  %v253 = vpack.c.b16 %v205, %v204
  %v254 = vpack.c.b16 %v207, %v206
  %v255 = vpack.c.b16 %v209, %v208
  %v256 = vpack.c.b16 %v211, %v210
  %v257 = vpack.c.b16 %v213, %v212
  %v258 = vpack.c.b16 %v215, %v214
  %v259 = vpack.c.b16 %v217, %v216
  %v260 = vpack.c.b16 %v219, %v218
  %v261 = vpack.c.b16 %v221, %v220
  %v262 = vpack.c.b16 %v223, %v222
  %v263 = vpack.c.b16 %v225, %v224
  %v264 = vpack.c.b16 %v227, %v226
  %v265 = vpack.c.b16 %v229, %v228
  %v266 = vpack.c.b16 %v231, %v230
  %v267 = vpack.c.b16 %v233, %v232
  %v268 = vpack.c.b16 %v235, %v234
  %v269 = vpack.c.b16 %v237, %v236
  %302 = vmatprep.subr.bf16.mxu0 0
  %303 = vmatpush1.bf16.msra.mxu0 %v238
  %304 = vmatprep.subr.bf16.mxu0 0
  %305 = vmatpush1.bf16.msra.mxu0 %v239
  %306 = vmatprep.subr.bf16.mxu0 0
  %307 = vmatpush1.bf16.msra.mxu0 %v240
  %308 = vmatprep.subr.bf16.mxu0 0
  %309 = vmatpush1.bf16.msra.mxu0 %v241
  %310 = vmatprep.subr.bf16.mxu0 0
  %311 = vmatpush1.bf16.msra.mxu0 %v242
  %312 = vmatprep.subr.bf16.mxu0 0
  %313 = vmatpush1.bf16.msra.mxu0 %v243
  %314 = vmatprep.subr.bf16.mxu0 0
  %315 = vmatpush1.bf16.msra.mxu0 %v244
  %316 = vmatprep.subr.bf16.mxu0 0
  %317 = vmatpush1.bf16.msra.mxu0 %v245
  %318 = vmatprep.subr.bf16.mxu0 0
  %319 = vmatpush1.bf16.msra.mxu0 %v246
  %320 = vmatprep.subr.bf16.mxu0 0
  %321 = vmatpush1.bf16.msra.mxu0 %v247
  %322 = vmatprep.subr.bf16.mxu0 0
  %323 = vmatpush1.bf16.msra.mxu0 %v248
  %324 = vmatprep.subr.bf16.mxu0 0
  %325 = vmatpush1.bf16.msra.mxu0 %v249
  %326 = vmatprep.subr.bf16.mxu0 0
  %327 = vmatpush1.bf16.msra.mxu0 %v250
  %328 = vmatprep.subr.bf16.mxu0 0
  %329 = vmatpush1.bf16.msra.mxu0 %v251
  %330 = vmatprep.subr.bf16.mxu0 0
  %331 = vmatpush1.bf16.msra.mxu0 %v252
  %332 = vmatprep.subr.bf16.mxu0 0
  %333 = vmatpush1.bf16.msra.mxu0 %v253
  %334 = vmatprep.mubr.bf16.mxu0 %v103
  %335 = vmatmul.mubr.bf16.gmra.mrb[0].mxu0 %v102
  %v336 = vpop.f32.mrb[0].mxu0
  %v337 = vadd.f32 %v88, %v336
  %v338 = vpop.f32.mrb[0].mxu0
  %v339 = vpop.f32.mrb[0].mxu0
  %v340 = vadd.f32 %v88, %v339
  %v341 = vpop.f32.mrb[0].mxu0
  %342 = vdwg.mxu0
  %343 = vmatprep.subr.bf16.mxu0 0
  %344 = vmatpush1.bf16.msra.mxu0 %v254
  %345 = vmatprep.subr.bf16.mxu0 0
  %346 = vmatpush1.bf16.msra.mxu0 %v255
  %347 = vmatprep.subr.bf16.mxu0 0
  %348 = vmatpush1.bf16.msra.mxu0 %v256
  %349 = vmatprep.subr.bf16.mxu0 0
  %350 = vmatpush1.bf16.msra.mxu0 %v257
  %351 = vmatprep.subr.bf16.mxu0 0
  %352 = vmatpush1.bf16.msra.mxu0 %v258
  %353 = vmatprep.subr.bf16.mxu0 0
  %354 = vmatpush1.bf16.msra.mxu0 %v259
  %355 = vmatprep.subr.bf16.mxu0 0
  %356 = vmatpush1.bf16.msra.mxu0 %v260
  %357 = vmatprep.subr.bf16.mxu0 0
  %358 = vmatpush1.bf16.msra.mxu0 %v261
  %359 = vmatprep.subr.bf16.mxu0 0
  %360 = vmatpush1.bf16.msra.mxu0 %v262
  %361 = vmatprep.subr.bf16.mxu0 0
  %362 = vmatpush1.bf16.msra.mxu0 %v263
  %363 = vmatprep.subr.bf16.mxu0 0
  %364 = vmatpush1.bf16.msra.mxu0 %v264
  %365 = vmatprep.subr.bf16.mxu0 0
  %366 = vmatpush1.bf16.msra.mxu0 %v265
  %367 = vmatprep.subr.bf16.mxu0 0
  %368 = vmatpush1.bf16.msra.mxu0 %v266
  %369 = vmatprep.subr.bf16.mxu0 0
  %370 = vmatpush1.bf16.msra.mxu0 %v267
  %371 = vmatprep.subr.bf16.mxu0 0
  %372 = vmatpush1.bf16.msra.mxu0 %v268
  %373 = vmatprep.subr.bf16.mxu0 0
  %374 = vmatpush1.bf16.msra.mxu0 %v269
  %375 = vmatprep.mubr.bf16.mxu0 %v105
  %376 = vmatmul.mubr.bf16.gmra.mrb[0].mxu0 %v104
  %v377 = vpop.f32.mrb[0].mxu0
  %v378 = vadd.f32 %v337, %v377
  %v379 = vpop.f32.mrb[0].mxu0
  %v380 = vpop.f32.mrb[0].mxu0
  %v381 = vadd.f32 %v340, %v380
  %v382 = vpop.f32.mrb[0].mxu0
  %383 = vdwg.mxu0
  %v384 = vmax.f32 %v378, 0.0
  %v385 = vmax.f32 %v381, 0.0
  %386 = vst [vmem:[%s3] sm:$0xff] %v384
  %387 = vst [vmem:[%s3 + $0x8] sm:$0xff] %v385
  // Predicated region
  $region14: #{resnet_forward.18} parent=0 // pred_check
    _
  $region15: #{resnet_forward.18} parent=0 // pred_check_branch
    %389 = sbr.rel (0) target = $region17
  $region16: #{resnet_forward.18} parent=0 // pred_region
    _
  $region17: #{resnet_forward.18} parent=0 // pred_fallthru
    _
  // Predicated region
  $region18: #{resnet_forward.18} parent=0 // pred_check
    _
  $region19: #{resnet_forward.18} parent=0 // pred_check_branch
    %391 = sbr.rel (0) target = $region21
  $region20: #{resnet_forward.18} parent=0 // pred_region
    _
  $region21: #{resnet_forward.18} parent=0 // pred_fallthru
    _

// kernel: resnet_forward.19
$region0: #{resnet_forward.19}
  #allocation0 [shape = 'u32[]', space=smem, size = 0x4, offset = 0x4, fixed_abs, tag = 'smem constant byte address 0x4 - core index']
  #allocation1 [shape = 'u32[144,128]{1,0:T(1,128)}', space=vmem, size = 0x12000, scoped, tag = 'internal scratch']
  %s0 = inlined_call_operand.vmem [shape: bf16[16,128], index: 0, kind: input, shape index: {}]
  %s1 = inlined_call_operand.vmem [shape: bf16[128,128], index: 1, kind: input, shape index: {}]
  %s2 = inlined_call_operand.vmem [shape: f32[1,128], index: 2, kind: input, shape index: {}]
  %s3 = inlined_call_operand.vmem [shape: f32[16,128], index: 3, kind: output, shape index: {}]
  %s4 = sld [smem:[#allocation0]]
  $region22: #{resnet_forward.19} parent=0
    _
  %s6 = ssub.s32 1, %s4
  %s7 = scalar_select 0, %s6, %s4
  // Predicated region
  $region2: #{resnet_forward.19} parent=0 // pred_check
    _
  $region3: #{resnet_forward.19} parent=0 // pred_check_branch
    %9 = sbr.rel (0) target = $region5
  $region4: #{resnet_forward.19} parent=0 // pred_region
    _
  $region5: #{resnet_forward.19} parent=0 // pred_fallthru
    _
  // Predicated region
  $region6: #{resnet_forward.19} parent=0 // pred_check
    _
  $region7: #{resnet_forward.19} parent=0 // pred_check_branch
    %11 = sbr.rel (0) target = $region9
  $region8: #{resnet_forward.19} parent=0 // pred_region
    _
  $region9: #{resnet_forward.19} parent=0 // pred_fallthru
    _
  // Predicated region
  $region10: #{resnet_forward.19} parent=0 // pred_check
    _
  $region11: #{resnet_forward.19} parent=0 // pred_check_branch
    %13 = sbr.rel (0) target = $region13
  $region12: #{resnet_forward.19} parent=0 // pred_region
    _
  $region13: #{resnet_forward.19} parent=0 // pred_fallthru
    _
  %v15 = vld [vmem:[%s0] sm:$0xf]
  %v16 = vld [vmem:[%s0 + $0x4] sm:$0xf]
  %v17 = vld [vmem:[%s1] sm:$0xf]
  %v18 = vld [vmem:[%s1 + $0x4] sm:$0xf]
  %v19 = vld [vmem:[%s1 + $0x8] sm:$0xf]
  %v20 = vld [vmem:[%s1 + $0xc] sm:$0xf]
  %v21 = vld [vmem:[%s1 + $0x10] sm:$0xf]
  %v22 = vld [vmem:[%s1 + $0x14] sm:$0xf]
  %v23 = vld [vmem:[%s1 + $0x18] sm:$0xf]
  %v24 = vld [vmem:[%s1 + $0x1c] sm:$0xf]
  %v25 = vld [vmem:[%s1 + $0x20] sm:$0xf]
  %v26 = vld [vmem:[%s1 + $0x24] sm:$0xf]
  %v27 = vld [vmem:[%s1 + $0x28] sm:$0xf]
  %v28 = vld [vmem:[%s1 + $0x2c] sm:$0xf]
  %v29 = vld [vmem:[%s1 + $0x30] sm:$0xf]
  %v30 = vld [vmem:[%s1 + $0x34] sm:$0xf]
  %v31 = vld [vmem:[%s1 + $0x38] sm:$0xf]
  %v32 = vld [vmem:[%s1 + $0x3c] sm:$0xf]
  %v33 = vld [vmem:[%s2] sm:$0x1]
  %v35 = vlaneseq
  %v36 = vshrl.u32 %v35, 7
  %v37 = vsub.s32 0, %v36
  %v38 = vrot.slane %v33, %v37
  %v42 = vunpack.c.l.b16 %v15
  %v43 = vunpack.c.l.b16 %v16
  %v44 = vpack.c.b16 %v43, %v42
  %v62 = vunpack.c.l.b16 %v17
  %v63 = vunpack.c.l.b16 %v18
  %v64 = vunpack.c.l.b16 %v19
  %v65 = vunpack.c.l.b16 %v20
  %v66 = vunpack.c.l.b16 %v21
  %v67 = vunpack.c.l.b16 %v22
  %v68 = vunpack.c.l.b16 %v23
  %v69 = vunpack.c.l.b16 %v24
  %v70 = vunpack.c.l.b16 %v25
  %v71 = vunpack.c.l.b16 %v26
  %v72 = vunpack.c.l.b16 %v27
  %v73 = vunpack.c.l.b16 %v28
  %v74 = vunpack.c.l.b16 %v29
  %v75 = vunpack.c.l.b16 %v30
  %v76 = vunpack.c.l.b16 %v31
  %v77 = vunpack.c.l.b16 %v32
  %v78 = vpack.c.b16 %v63, %v62
  %v79 = vpack.c.b16 %v65, %v64
  %v80 = vpack.c.b16 %v67, %v66
  %v81 = vpack.c.b16 %v69, %v68
  %v82 = vpack.c.b16 %v71, %v70
  %v83 = vpack.c.b16 %v73, %v72
  %v84 = vpack.c.b16 %v75, %v74
  %v85 = vpack.c.b16 %v77, %v76
  %94 = vmatprep.subr.bf16.mxu0 0
  %95 = vmatpush1.bf16.msra.mxu0 %v78
  %96 = vmatprep.subr.bf16.mxu0 0
  %97 = vmatpush1.bf16.msra.mxu0 %v79
  %98 = vmatprep.subr.bf16.mxu0 0
  %99 = vmatpush1.bf16.msra.mxu0 %v80
  %100 = vmatprep.subr.bf16.mxu0 0
  %101 = vmatpush1.bf16.msra.mxu0 %v81
  %102 = vmatprep.subr.bf16.mxu0 0
  %103 = vmatpush1.bf16.msra.mxu0 %v82
  %104 = vmatprep.subr.bf16.mxu0 0
  %105 = vmatpush1.bf16.msra.mxu0 %v83
  %106 = vmatprep.subr.bf16.mxu0 0
  %107 = vmatpush1.bf16.msra.mxu0 %v84
  %108 = vmatprep.subr.bf16.mxu0 0
  %109 = vmatpush1.bf16.msra.mxu0 %v85
  %110 = vmatprep.subr.bf16.mxu0 0
  %111 = vmatpush1.bf16.msra.mxu0 0
  %112 = vmatprep.subr.bf16.mxu0 0
  %113 = vmatpush1.bf16.msra.mxu0 0
  %114 = vmatprep.subr.bf16.mxu0 0
  %115 = vmatpush1.bf16.msra.mxu0 0
  %116 = vmatprep.subr.bf16.mxu0 0
  %117 = vmatpush1.bf16.msra.mxu0 0
  %118 = vmatprep.subr.bf16.mxu0 0
  %119 = vmatpush1.bf16.msra.mxu0 0
  %120 = vmatprep.subr.bf16.mxu0 0
  %121 = vmatpush1.bf16.msra.mxu0 0
  %122 = vmatprep.subr.bf16.mxu0 0
  %123 = vmatpush1.bf16.msra.mxu0 0
  %124 = vmatprep.subr.bf16.mxu0 0
  %125 = vmatpush1.bf16.msra.mxu0 0
  %126 = vmatprep.mubr.bf16.mxu0 0
  %127 = vmatmul.mubr.bf16.gmra.mrb[0].mxu0 %v44
  %v128 = vpop.f32.mrb[0].mxu0
  %v129 = vadd.f32 %v38, %v128
  %v130 = vpop.f32.mrb[0].mxu0
  %v131 = vpop.f32.mrb[0].mxu0
  %v132 = vadd.f32 %v38, %v131
  %v133 = vpop.f32.mrb[0].mxu0
  %134 = vdwg.mxu0
  %135 = vst [vmem:[%s3] sm:$0xff] %v129
  %136 = vst [vmem:[%s3 + $0x8] sm:$0xff] %v132
  // Predicated region
  $region14: #{resnet_forward.19} parent=0 // pred_check
    _
  $region15: #{resnet_forward.19} parent=0 // pred_check_branch
    %138 = sbr.rel (0) target = $region17
  $region16: #{resnet_forward.19} parent=0 // pred_region
    _
  $region17: #{resnet_forward.19} parent=0 // pred_fallthru
    _
  // Predicated region
  $region18: #{resnet_forward.19} parent=0 // pred_check
    _
  $region19: #{resnet_forward.19} parent=0 // pred_check_branch
    %140 = sbr.rel (0) target = $region21
  $region20: #{resnet_forward.19} parent=0 // pred_region
    _
  $region21: #{resnet_forward.19} parent=0 // pred_fallthru
    _

// kernel: resnet_forward.20
$region0: #{resnet_forward.20}
  #allocation0 [shape = 'u32[]', space=smem, size = 0x4, offset = 0x4, fixed_abs, tag = 'smem constant byte address 0x4 - core index']
  #allocation1 [shape = 'u32[144,128]{1,0:T(1,128)}', space=vmem, size = 0x12000, scoped, tag = 'internal scratch']
  %s0 = inlined_call_operand.vmem [shape: bf16[16,896], index: 0, kind: input, shape index: {}]
  %s1 = inlined_call_operand.vmem [shape: bf16[896,128], index: 1, kind: input, shape index: {}]
  %s2 = inlined_call_operand.vmem [shape: f32[1,128], index: 2, kind: input, shape index: {}]
  %s3 = inlined_call_operand.vmem [shape: f32[16,128], index: 3, kind: input, shape index: {}]
  %s4 = inlined_call_operand.vmem [shape: f32[16,128], index: 4, kind: output, shape index: {}]
  %s5 = sld [smem:[#allocation0]]
  $region26: #{resnet_forward.20} parent=0
    _
  %s7 = ssub.s32 1, %s5
  %s8 = scalar_select 0, %s7, %s5
  // Predicated region
  $region2: #{resnet_forward.20} parent=0 // pred_check
    _
  $region3: #{resnet_forward.20} parent=0 // pred_check_branch
    %10 = sbr.rel (0) target = $region5
  $region4: #{resnet_forward.20} parent=0 // pred_region
    _
  $region5: #{resnet_forward.20} parent=0 // pred_fallthru
    _
  // Predicated region
  $region6: #{resnet_forward.20} parent=0 // pred_check
    _
  $region7: #{resnet_forward.20} parent=0 // pred_check_branch
    %12 = sbr.rel (0) target = $region9
  $region8: #{resnet_forward.20} parent=0 // pred_region
    _
  $region9: #{resnet_forward.20} parent=0 // pred_fallthru
    _
  // Predicated region
  $region10: #{resnet_forward.20} parent=0 // pred_check
    _
  $region11: #{resnet_forward.20} parent=0 // pred_check_branch
    %14 = sbr.rel (0) target = $region13
  $region12: #{resnet_forward.20} parent=0 // pred_region
    _
  $region13: #{resnet_forward.20} parent=0 // pred_fallthru
    _
  // Predicated region
  $region14: #{resnet_forward.20} parent=0 // pred_check
    _
  $region15: #{resnet_forward.20} parent=0 // pred_check_branch
    %16 = sbr.rel (0) target = $region17
  $region16: #{resnet_forward.20} parent=0 // pred_region
    _
  $region17: #{resnet_forward.20} parent=0 // pred_fallthru
    _
  %v18 = vld [vmem:[%s0] sm:$0xff]
  %v19 = vld [vmem:[%s0 + $0x8] sm:$0xff]
  %v20 = vld [vmem:[%s0 + $0x10] sm:$0xff]
  %v21 = vld [vmem:[%s0 + $0x18] sm:$0xf]
  %v22 = vld [vmem:[%s0 + $0x1c] sm:$0xff]
  %v23 = vld [vmem:[%s0 + $0x24] sm:$0xff]
  %v24 = vld [vmem:[%s0 + $0x2c] sm:$0xff]
  %v25 = vld [vmem:[%s0 + $0x34] sm:$0xf]
  %v26 = vld [vmem:[%s1] sm:$0xf]
  %v27 = vld [vmem:[%s1 + $0x4] sm:$0xf]
  %v28 = vld [vmem:[%s1 + $0x8] sm:$0xf]
  %v29 = vld [vmem:[%s1 + $0xc] sm:$0xf]
  %v30 = vld [vmem:[%s1 + $0x10] sm:$0xf]
  %v31 = vld [vmem:[%s1 + $0x14] sm:$0xf]
  %v32 = vld [vmem:[%s1 + $0x18] sm:$0xf]
  %v33 = vld [vmem:[%s1 + $0x1c] sm:$0xf]
  %v34 = vld [vmem:[%s1 + $0x20] sm:$0xf]
  %v35 = vld [vmem:[%s1 + $0x24] sm:$0xf]
  %v36 = vld [vmem:[%s1 + $0x28] sm:$0xf]
  %v37 = vld [vmem:[%s1 + $0x2c] sm:$0xf]
  %v38 = vld [vmem:[%s1 + $0x30] sm:$0xf]
  %v39 = vld [vmem:[%s1 + $0x34] sm:$0xf]
  %v40 = vld [vmem:[%s1 + $0x38] sm:$0xf]
  %v41 = vld [vmem:[%s1 + $0x3c] sm:$0xf]
  %v42 = vld [vmem:[%s1 + $0x40] sm:$0xf]
  %v43 = vld [vmem:[%s1 + $0x44] sm:$0xf]
  %v44 = vld [vmem:[%s1 + $0x48] sm:$0xf]
  %v45 = vld [vmem:[%s1 + $0x4c] sm:$0xf]
  %v46 = vld [vmem:[%s1 + $0x50] sm:$0xf]
  %v47 = vld [vmem:[%s1 + $0x54] sm:$0xf]
  %v48 = vld [vmem:[%s1 + $0x58] sm:$0xf]
  %v49 = vld [vmem:[%s1 + $0x5c] sm:$0xf]
  %v50 = vld [vmem:[%s1 + $0x60] sm:$0xf]
  %v51 = vld [vmem:[%s1 + $0x64] sm:$0xf]
  %v52 = vld [vmem:[%s1 + $0x68] sm:$0xf]
  %v53 = vld [vmem:[%s1 + $0x6c] sm:$0xf]
  %v54 = vld [vmem:[%s1 + $0x70] sm:$0xf]
  %v55 = vld [vmem:[%s1 + $0x74] sm:$0xf]
  %v56 = vld [vmem:[%s1 + $0x78] sm:$0xf]
  %v57 = vld [vmem:[%s1 + $0x7c] sm:$0xf]
  %v58 = vld [vmem:[%s1 + $0x80] sm:$0xf]
  %v59 = vld [vmem:[%s1 + $0x84] sm:$0xf]
  %v60 = vld [vmem:[%s1 + $0x88] sm:$0xf]
  %v61 = vld [vmem:[%s1 + $0x8c] sm:$0xf]
  %v62 = vld [vmem:[%s1 + $0x90] sm:$0xf]
  %v63 = vld [vmem:[%s1 + $0x94] sm:$0xf]
  %v64 = vld [vmem:[%s1 + $0x98] sm:$0xf]
  %v65 = vld [vmem:[%s1 + $0x9c] sm:$0xf]
  %v66 = vld [vmem:[%s1 + $0xa0] sm:$0xf]
  %v67 = vld [vmem:[%s1 + $0xa4] sm:$0xf]
  %v68 = vld [vmem:[%s1 + $0xa8] sm:$0xf]
  %v69 = vld [vmem:[%s1 + $0xac] sm:$0xf]
  %v70 = vld [vmem:[%s1 + $0xb0] sm:$0xf]
  %v71 = vld [vmem:[%s1 + $0xb4] sm:$0xf]
  %v72 = vld [vmem:[%s1 + $0xb8] sm:$0xf]
  %v73 = vld [vmem:[%s1 + $0xbc] sm:$0xf]
  %v74 = vld [vmem:[%s1 + $0xc0] sm:$0xf]
  %v75 = vld [vmem:[%s1 + $0xc4] sm:$0xf]
  %v76 = vld [vmem:[%s1 + $0xc8] sm:$0xf]
  %v77 = vld [vmem:[%s1 + $0xcc] sm:$0xf]
  %v78 = vld [vmem:[%s1 + $0xd0] sm:$0xf]
  %v79 = vld [vmem:[%s1 + $0xd4] sm:$0xf]
  %v80 = vld [vmem:[%s1 + $0xd8] sm:$0xf]
  %v81 = vld [vmem:[%s1 + $0xdc] sm:$0xf]
  %v82 = vld [vmem:[%s1 + $0xe0] sm:$0xf]
  %v83 = vld [vmem:[%s1 + $0xe4] sm:$0xf]
  %v84 = vld [vmem:[%s1 + $0xe8] sm:$0xf]
  %v85 = vld [vmem:[%s1 + $0xec] sm:$0xf]
  %v86 = vld [vmem:[%s1 + $0xf0] sm:$0xf]
  %v87 = vld [vmem:[%s1 + $0xf4] sm:$0xf]
  %v88 = vld [vmem:[%s1 + $0xf8] sm:$0xf]
  %v89 = vld [vmem:[%s1 + $0xfc] sm:$0xf]
  %v90 = vld [vmem:[%s1 + $0x100] sm:$0xf]
  %v91 = vld [vmem:[%s1 + $0x104] sm:$0xf]
  %v92 = vld [vmem:[%s1 + $0x108] sm:$0xf]
  %v93 = vld [vmem:[%s1 + $0x10c] sm:$0xf]
  %v94 = vld [vmem:[%s1 + $0x110] sm:$0xf]
  %v95 = vld [vmem:[%s1 + $0x114] sm:$0xf]
  %v96 = vld [vmem:[%s1 + $0x118] sm:$0xf]
  %v97 = vld [vmem:[%s1 + $0x11c] sm:$0xf]
  %v98 = vld [vmem:[%s1 + $0x120] sm:$0xf]
  %v99 = vld [vmem:[%s1 + $0x124] sm:$0xf]
  %v100 = vld [vmem:[%s1 + $0x128] sm:$0xf]
  %v101 = vld [vmem:[%s1 + $0x12c] sm:$0xf]
  %v102 = vld [vmem:[%s1 + $0x130] sm:$0xf]
  %v103 = vld [vmem:[%s1 + $0x134] sm:$0xf]
  %v104 = vld [vmem:[%s1 + $0x138] sm:$0xf]
  %v105 = vld [vmem:[%s1 + $0x13c] sm:$0xf]
  %v106 = vld [vmem:[%s1 + $0x140] sm:$0xf]
  %v107 = vld [vmem:[%s1 + $0x144] sm:$0xf]
  %v108 = vld [vmem:[%s1 + $0x148] sm:$0xf]
  %v109 = vld [vmem:[%s1 + $0x14c] sm:$0xf]
  %v110 = vld [vmem:[%s1 + $0x150] sm:$0xf]
  %v111 = vld [vmem:[%s1 + $0x154] sm:$0xf]
  %v112 = vld [vmem:[%s1 + $0x158] sm:$0xf]
  %v113 = vld [vmem:[%s1 + $0x15c] sm:$0xf]
  %v114 = vld [vmem:[%s1 + $0x160] sm:$0xf]
  %v115 = vld [vmem:[%s1 + $0x164] sm:$0xf]
  %v116 = vld [vmem:[%s1 + $0x168] sm:$0xf]
  %v117 = vld [vmem:[%s1 + $0x16c] sm:$0xf]
  %v118 = vld [vmem:[%s1 + $0x170] sm:$0xf]
  %v119 = vld [vmem:[%s1 + $0x174] sm:$0xf]
  %v120 = vld [vmem:[%s1 + $0x178] sm:$0xf]
  %v121 = vld [vmem:[%s1 + $0x17c] sm:$0xf]
  %v122 = vld [vmem:[%s1 + $0x180] sm:$0xf]
  %v123 = vld [vmem:[%s1 + $0x184] sm:$0xf]
  %v124 = vld [vmem:[%s1 + $0x188] sm:$0xf]
  %v125 = vld [vmem:[%s1 + $0x18c] sm:$0xf]
  %v126 = vld [vmem:[%s1 + $0x190] sm:$0xf]
  %v127 = vld [vmem:[%s1 + $0x194] sm:$0xf]
  %v128 = vld [vmem:[%s1 + $0x198] sm:$0xf]
  %v129 = vld [vmem:[%s1 + $0x19c] sm:$0xf]
  %v130 = vld [vmem:[%s1 + $0x1a0] sm:$0xf]
  %v131 = vld [vmem:[%s1 + $0x1a4] sm:$0xf]
  %v132 = vld [vmem:[%s1 + $0x1a8] sm:$0xf]
  %v133 = vld [vmem:[%s1 + $0x1ac] sm:$0xf]
  %v134 = vld [vmem:[%s1 + $0x1b0] sm:$0xf]
  %v135 = vld [vmem:[%s1 + $0x1b4] sm:$0xf]
  %v136 = vld [vmem:[%s1 + $0x1b8] sm:$0xf]
  %v137 = vld [vmem:[%s1 + $0x1bc] sm:$0xf]
  %v138 = vld [vmem:[%s2] sm:$0x1]
  %v140 = vlaneseq
  %v141 = vshrl.u32 %v140, 7
  %v142 = vsub.s32 0, %v141
  %v143 = vrot.slane %v138, %v142
  %v153 = vunpack.c.l.b16 %v18
  %v154 = vunpack.c.h.b16 %v18
  %v155 = vunpack.c.l.b16 %v19
  %v156 = vunpack.c.h.b16 %v19
  %v157 = vunpack.c.l.b16 %v20
  %v158 = vunpack.c.h.b16 %v20
  %v159 = vunpack.c.l.b16 %v21
  %v160 = vunpack.c.l.b16 %v22
  %v161 = vunpack.c.h.b16 %v22
  %v162 = vunpack.c.l.b16 %v23
  %v163 = vunpack.c.h.b16 %v23
  %v164 = vunpack.c.l.b16 %v24
  %v165 = vunpack.c.h.b16 %v24
  %v166 = vunpack.c.l.b16 %v25
  %v167 = vpack.c.b16 %v160, %v153
  %v168 = vpack.c.b16 %v161, %v154
  %v169 = vpack.c.b16 %v162, %v155
  %v170 = vpack.c.b16 %v163, %v156
  %v171 = vpack.c.b16 %v164, %v157
  %v172 = vpack.c.b16 %v165, %v158
  %v173 = vpack.c.b16 %v166, %v159
  %v293 = vunpack.c.l.b16 %v26
  %v294 = vunpack.c.l.b16 %v27
  %v295 = vunpack.c.l.b16 %v28
  %v296 = vunpack.c.l.b16 %v29
  %v297 = vunpack.c.l.b16 %v30
  %v298 = vunpack.c.l.b16 %v31
  %v299 = vunpack.c.l.b16 %v32
  %v300 = vunpack.c.l.b16 %v33
  %v301 = vunpack.c.l.b16 %v34
  %v302 = vunpack.c.l.b16 %v35
  %v303 = vunpack.c.l.b16 %v36
  %v304 = vunpack.c.l.b16 %v37
  %v305 = vunpack.c.l.b16 %v38
  %v306 = vunpack.c.l.b16 %v39
  %v307 = vunpack.c.l.b16 %v40
  %v308 = vunpack.c.l.b16 %v41
  %v309 = vunpack.c.l.b16 %v42
  %v310 = vunpack.c.l.b16 %v43
  %v311 = vunpack.c.l.b16 %v44
  %v312 = vunpack.c.l.b16 %v45
  %v313 = vunpack.c.l.b16 %v46
  %v314 = vunpack.c.l.b16 %v47
  %v315 = vunpack.c.l.b16 %v48
  %v316 = vunpack.c.l.b16 %v49
  %v317 = vunpack.c.l.b16 %v50
  %v318 = vunpack.c.l.b16 %v51
  %v319 = vunpack.c.l.b16 %v52
  %v320 = vunpack.c.l.b16 %v53
  %v321 = vunpack.c.l.b16 %v54
  %v322 = vunpack.c.l.b16 %v55
  %v323 = vunpack.c.l.b16 %v56
  %v324 = vunpack.c.l.b16 %v57
  %v325 = vunpack.c.l.b16 %v58
  %v326 = vunpack.c.l.b16 %v59
  %v327 = vunpack.c.l.b16 %v60
  %v328 = vunpack.c.l.b16 %v61
  %v329 = vunpack.c.l.b16 %v62
  %v330 = vunpack.c.l.b16 %v63
  %v331 = vunpack.c.l.b16 %v64
  %v332 = vunpack.c.l.b16 %v65
  %v333 = vunpack.c.l.b16 %v66
  %v334 = vunpack.c.l.b16 %v67
  %v335 = vunpack.c.l.b16 %v68
  %v336 = vunpack.c.l.b16 %v69
  %v337 = vunpack.c.l.b16 %v70
  %v338 = vunpack.c.l.b16 %v71
  %v339 = vunpack.c.l.b16 %v72
  %v340 = vunpack.c.l.b16 %v73
  %v341 = vunpack.c.l.b16 %v74
  %v342 = vunpack.c.l.b16 %v75
  %v343 = vunpack.c.l.b16 %v76
  %v344 = vunpack.c.l.b16 %v77
  %v345 = vunpack.c.l.b16 %v78
  %v346 = vunpack.c.l.b16 %v79
  %v347 = vunpack.c.l.b16 %v80
  %v348 = vunpack.c.l.b16 %v81
  %v349 = vunpack.c.l.b16 %v82
  %v350 = vunpack.c.l.b16 %v83
  %v351 = vunpack.c.l.b16 %v84
  %v352 = vunpack.c.l.b16 %v85
  %v353 = vunpack.c.l.b16 %v86
  %v354 = vunpack.c.l.b16 %v87
  %v355 = vunpack.c.l.b16 %v88
  %v356 = vunpack.c.l.b16 %v89
  %v357 = vunpack.c.l.b16 %v90
  %v358 = vunpack.c.l.b16 %v91
  %v359 = vunpack.c.l.b16 %v92
  %v360 = vunpack.c.l.b16 %v93
  %v361 = vunpack.c.l.b16 %v94
  %v362 = vunpack.c.l.b16 %v95
  %v363 = vunpack.c.l.b16 %v96
  %v364 = vunpack.c.l.b16 %v97
  %v365 = vunpack.c.l.b16 %v98
  %v366 = vunpack.c.l.b16 %v99
  %v367 = vunpack.c.l.b16 %v100
  %v368 = vunpack.c.l.b16 %v101
  %v369 = vunpack.c.l.b16 %v102
  %v370 = vunpack.c.l.b16 %v103
  %v371 = vunpack.c.l.b16 %v104
  %v372 = vunpack.c.l.b16 %v105
  %v373 = vunpack.c.l.b16 %v106
  %v374 = vunpack.c.l.b16 %v107
  %v375 = vunpack.c.l.b16 %v108
  %v376 = vunpack.c.l.b16 %v109
  %v377 = vunpack.c.l.b16 %v110
  %v378 = vunpack.c.l.b16 %v111
  %v379 = vunpack.c.l.b16 %v112
  %v380 = vunpack.c.l.b16 %v113
  %v381 = vunpack.c.l.b16 %v114
  %v382 = vunpack.c.l.b16 %v115
  %v383 = vunpack.c.l.b16 %v116
  %v384 = vunpack.c.l.b16 %v117
  %v385 = vunpack.c.l.b16 %v118
  %v386 = vunpack.c.l.b16 %v119
  %v387 = vunpack.c.l.b16 %v120
  %v388 = vunpack.c.l.b16 %v121
  %v389 = vunpack.c.l.b16 %v122
  %v390 = vunpack.c.l.b16 %v123
  %v391 = vunpack.c.l.b16 %v124
  %v392 = vunpack.c.l.b16 %v125
  %v393 = vunpack.c.l.b16 %v126
  %v394 = vunpack.c.l.b16 %v127
  %v395 = vunpack.c.l.b16 %v128
  %v396 = vunpack.c.l.b16 %v129
  %v397 = vunpack.c.l.b16 %v130
  %v398 = vunpack.c.l.b16 %v131
  %v399 = vunpack.c.l.b16 %v132
  %v400 = vunpack.c.l.b16 %v133
  %v401 = vunpack.c.l.b16 %v134
  %v402 = vunpack.c.l.b16 %v135
  %v403 = vunpack.c.l.b16 %v136
  %v404 = vunpack.c.l.b16 %v137
  %v405 = vpack.c.b16 %v294, %v293
  %v406 = vpack.c.b16 %v296, %v295
  %v407 = vpack.c.b16 %v298, %v297
  %v408 = vpack.c.b16 %v300, %v299
  %v409 = vpack.c.b16 %v302, %v301
  %v410 = vpack.c.b16 %v304, %v303
  %v411 = vpack.c.b16 %v306, %v305
  %v412 = vpack.c.b16 %v308, %v307
  %v413 = vpack.c.b16 %v310, %v309
  %v414 = vpack.c.b16 %v312, %v311
  %v415 = vpack.c.b16 %v314, %v313
  %v416 = vpack.c.b16 %v316, %v315
  %v417 = vpack.c.b16 %v318, %v317
  %v418 = vpack.c.b16 %v320, %v319
  %v419 = vpack.c.b16 %v322, %v321
  %v420 = vpack.c.b16 %v324, %v323
  %v421 = vpack.c.b16 %v326, %v325
  %v422 = vpack.c.b16 %v328, %v327
  %v423 = vpack.c.b16 %v330, %v329
  %v424 = vpack.c.b16 %v332, %v331
  %v425 = vpack.c.b16 %v334, %v333
  %v426 = vpack.c.b16 %v336, %v335
  %v427 = vpack.c.b16 %v338, %v337
  %v428 = vpack.c.b16 %v340, %v339
  %v429 = vpack.c.b16 %v342, %v341
  %v430 = vpack.c.b16 %v344, %v343
  %v431 = vpack.c.b16 %v346, %v345
  %v432 = vpack.c.b16 %v348, %v347
  %v433 = vpack.c.b16 %v350, %v349
  %v434 = vpack.c.b16 %v352, %v351
  %v435 = vpack.c.b16 %v354, %v353
  %v436 = vpack.c.b16 %v356, %v355
  %v437 = vpack.c.b16 %v358, %v357
  %v438 = vpack.c.b16 %v360, %v359
  %v439 = vpack.c.b16 %v362, %v361
  %v440 = vpack.c.b16 %v364, %v363
  %v441 = vpack.c.b16 %v366, %v365
  %v442 = vpack.c.b16 %v368, %v367
  %v443 = vpack.c.b16 %v370, %v369
  %v444 = vpack.c.b16 %v372, %v371
  %v445 = vpack.c.b16 %v374, %v373
  %v446 = vpack.c.b16 %v376, %v375
  %v447 = vpack.c.b16 %v378, %v377
  %v448 = vpack.c.b16 %v380, %v379
  %v449 = vpack.c.b16 %v382, %v381
  %v450 = vpack.c.b16 %v384, %v383
  %v451 = vpack.c.b16 %v386, %v385
  %v452 = vpack.c.b16 %v388, %v387
  %v453 = vpack.c.b16 %v390, %v389
  %v454 = vpack.c.b16 %v392, %v391
  %v455 = vpack.c.b16 %v394, %v393
  %v456 = vpack.c.b16 %v396, %v395
  %v457 = vpack.c.b16 %v398, %v397
  %v458 = vpack.c.b16 %v400, %v399
  %v459 = vpack.c.b16 %v402, %v401
  %v460 = vpack.c.b16 %v404, %v403
  %517 = vmatprep.subr.bf16.mxu0 0
  %518 = vmatpush1.bf16.msra.mxu0 %v405
  %519 = vmatprep.subr.bf16.mxu0 0
  %520 = vmatpush1.bf16.msra.mxu0 %v406
  %521 = vmatprep.subr.bf16.mxu0 0
  %522 = vmatpush1.bf16.msra.mxu0 %v407
  %523 = vmatprep.subr.bf16.mxu0 0
  %524 = vmatpush1.bf16.msra.mxu0 %v408
  %525 = vmatprep.subr.bf16.mxu0 0
  %526 = vmatpush1.bf16.msra.mxu0 %v409
  %527 = vmatprep.subr.bf16.mxu0 0
  %528 = vmatpush1.bf16.msra.mxu0 %v410
  %529 = vmatprep.subr.bf16.mxu0 0
  %530 = vmatpush1.bf16.msra.mxu0 %v411
  %531 = vmatprep.subr.bf16.mxu0 0
  %532 = vmatpush1.bf16.msra.mxu0 %v412
  %533 = vmatprep.subr.bf16.mxu0 0
  %534 = vmatpush1.bf16.msra.mxu0 %v413
  %535 = vmatprep.subr.bf16.mxu0 0
  %536 = vmatpush1.bf16.msra.mxu0 %v414
  %537 = vmatprep.subr.bf16.mxu0 0
  %538 = vmatpush1.bf16.msra.mxu0 %v415
  %539 = vmatprep.subr.bf16.mxu0 0
  %540 = vmatpush1.bf16.msra.mxu0 %v416
  %541 = vmatprep.subr.bf16.mxu0 0
  %542 = vmatpush1.bf16.msra.mxu0 %v417
  %543 = vmatprep.subr.bf16.mxu0 0
  %544 = vmatpush1.bf16.msra.mxu0 %v418
  %545 = vmatprep.subr.bf16.mxu0 0
  %546 = vmatpush1.bf16.msra.mxu0 %v419
  %547 = vmatprep.subr.bf16.mxu0 0
  %548 = vmatpush1.bf16.msra.mxu0 %v420
  %549 = vmatprep.mubr.bf16.mxu0 %v168
  %550 = vmatmul.mubr.bf16.gmra.mrb[0].mxu0 %v167
  %v551 = vpop.f32.mrb[0].mxu0
  %v552 = vadd.f32 %v143, %v551
  %v553 = vpop.f32.mrb[0].mxu0
  %v554 = vpop.f32.mrb[0].mxu0
  %v555 = vadd.f32 %v143, %v554
  %v556 = vpop.f32.mrb[0].mxu0
  %557 = vdwg.mxu0
  %558 = vmatprep.subr.bf16.mxu0 0
  %559 = vmatpush1.bf16.msra.mxu0 %v421
  %560 = vmatprep.subr.bf16.mxu0 0
  %561 = vmatpush1.bf16.msra.mxu0 %v422
  %562 = vmatprep.subr.bf16.mxu0 0
  %563 = vmatpush1.bf16.msra.mxu0 %v423
  %564 = vmatprep.subr.bf16.mxu0 0
  %565 = vmatpush1.bf16.msra.mxu0 %v424
  %566 = vmatprep.subr.bf16.mxu0 0
  %567 = vmatpush1.bf16.msra.mxu0 %v425
  %568 = vmatprep.subr.bf16.mxu0 0
  %569 = vmatpush1.bf16.msra.mxu0 %v426
  %570 = vmatprep.subr.bf16.mxu0 0
  %571 = vmatpush1.bf16.msra.mxu0 %v427
  %572 = vmatprep.subr.bf16.mxu0 0
  %573 = vmatpush1.bf16.msra.mxu0 %v428
  %574 = vmatprep.subr.bf16.mxu0 0
  %575 = vmatpush1.bf16.msra.mxu0 %v429
  %576 = vmatprep.subr.bf16.mxu0 0
  %577 = vmatpush1.bf16.msra.mxu0 %v430
  %578 = vmatprep.subr.bf16.mxu0 0
  %579 = vmatpush1.bf16.msra.mxu0 %v431
  %580 = vmatprep.subr.bf16.mxu0 0
  %581 = vmatpush1.bf16.msra.mxu0 %v432
  %582 = vmatprep.subr.bf16.mxu0 0
  %583 = vmatpush1.bf16.msra.mxu0 %v433
  %584 = vmatprep.subr.bf16.mxu0 0
  %585 = vmatpush1.bf16.msra.mxu0 %v434
  %586 = vmatprep.subr.bf16.mxu0 0
  %587 = vmatpush1.bf16.msra.mxu0 %v435
  %588 = vmatprep.subr.bf16.mxu0 0
  %589 = vmatpush1.bf16.msra.mxu0 %v436
  %590 = vmatprep.mubr.bf16.mxu0 %v170
  %591 = vmatmul.mubr.bf16.gmra.mrb[0].mxu0 %v169
  %v592 = vpop.f32.mrb[0].mxu0
  %v593 = vadd.f32 %v552, %v592
  %v594 = vpop.f32.mrb[0].mxu0
  %v595 = vpop.f32.mrb[0].mxu0
  %v596 = vadd.f32 %v555, %v595
  %v597 = vpop.f32.mrb[0].mxu0
  %598 = vdwg.mxu0
  %599 = vmatprep.subr.bf16.mxu0 0
  %600 = vmatpush1.bf16.msra.mxu0 %v437
  %601 = vmatprep.subr.bf16.mxu0 0
  %602 = vmatpush1.bf16.msra.mxu0 %v438
  %603 = vmatprep.subr.bf16.mxu0 0
  %604 = vmatpush1.bf16.msra.mxu0 %v439
  %605 = vmatprep.subr.bf16.mxu0 0
  %606 = vmatpush1.bf16.msra.mxu0 %v440
  %607 = vmatprep.subr.bf16.mxu0 0
  %608 = vmatpush1.bf16.msra.mxu0 %v441
  %609 = vmatprep.subr.bf16.mxu0 0
  %610 = vmatpush1.bf16.msra.mxu0 %v442
  %611 = vmatprep.subr.bf16.mxu0 0
  %612 = vmatpush1.bf16.msra.mxu0 %v443
  %613 = vmatprep.subr.bf16.mxu0 0
  %614 = vmatpush1.bf16.msra.mxu0 %v444
  %615 = vmatprep.subr.bf16.mxu0 0
  %616 = vmatpush1.bf16.msra.mxu0 %v445
  %617 = vmatprep.subr.bf16.mxu0 0
  %618 = vmatpush1.bf16.msra.mxu0 %v446
  %619 = vmatprep.subr.bf16.mxu0 0
  %620 = vmatpush1.bf16.msra.mxu0 %v447
  %621 = vmatprep.subr.bf16.mxu0 0
  %622 = vmatpush1.bf16.msra.mxu0 %v448
  %623 = vmatprep.subr.bf16.mxu0 0
  %624 = vmatpush1.bf16.msra.mxu0 %v449
  %625 = vmatprep.subr.bf16.mxu0 0
  %626 = vmatpush1.bf16.msra.mxu0 %v450
  %627 = vmatprep.subr.bf16.mxu0 0
  %628 = vmatpush1.bf16.msra.mxu0 %v451
  %629 = vmatprep.subr.bf16.mxu0 0
  %630 = vmatpush1.bf16.msra.mxu0 %v452
  %631 = vmatprep.mubr.bf16.mxu0 %v172
  %632 = vmatmul.mubr.bf16.gmra.mrb[0].mxu0 %v171
  %v633 = vpop.f32.mrb[0].mxu0
  %v634 = vadd.f32 %v593, %v633
  %v635 = vpop.f32.mrb[0].mxu0
  %v636 = vpop.f32.mrb[0].mxu0
  %v637 = vadd.f32 %v596, %v636
  %v638 = vpop.f32.mrb[0].mxu0
  %639 = vdwg.mxu0
  %640 = vmatprep.subr.bf16.mxu0 0
  %641 = vmatpush1.bf16.msra.mxu0 %v453
  %642 = vmatprep.subr.bf16.mxu0 0
  %643 = vmatpush1.bf16.msra.mxu0 %v454
  %644 = vmatprep.subr.bf16.mxu0 0
  %645 = vmatpush1.bf16.msra.mxu0 %v455
  %646 = vmatprep.subr.bf16.mxu0 0
  %647 = vmatpush1.bf16.msra.mxu0 %v456
  %648 = vmatprep.subr.bf16.mxu0 0
  %649 = vmatpush1.bf16.msra.mxu0 %v457
  %650 = vmatprep.subr.bf16.mxu0 0
  %651 = vmatpush1.bf16.msra.mxu0 %v458
  %652 = vmatprep.subr.bf16.mxu0 0
  %653 = vmatpush1.bf16.msra.mxu0 %v459
  %654 = vmatprep.subr.bf16.mxu0 0
  %655 = vmatpush1.bf16.msra.mxu0 %v460
  %656 = vmatprep.subr.bf16.mxu0 0
  %657 = vmatpush1.bf16.msra.mxu0 0
  %658 = vmatprep.subr.bf16.mxu0 0
  %659 = vmatpush1.bf16.msra.mxu0 0
  %660 = vmatprep.subr.bf16.mxu0 0
  %661 = vmatpush1.bf16.msra.mxu0 0
  %662 = vmatprep.subr.bf16.mxu0 0
  %663 = vmatpush1.bf16.msra.mxu0 0
  %664 = vmatprep.subr.bf16.mxu0 0
  %665 = vmatpush1.bf16.msra.mxu0 0
  %666 = vmatprep.subr.bf16.mxu0 0
  %667 = vmatpush1.bf16.msra.mxu0 0
  %668 = vmatprep.subr.bf16.mxu0 0
  %669 = vmatpush1.bf16.msra.mxu0 0
  %670 = vmatprep.subr.bf16.mxu0 0
  %671 = vmatpush1.bf16.msra.mxu0 0
  %672 = vmatprep.mubr.bf16.mxu0 0
  %673 = vmatmul.mubr.bf16.gmra.mrb[0].mxu0 %v173
  %v674 = vpop.f32.mrb[0].mxu0
  %v675 = vadd.f32 %v634, %v674
  %v676 = vpop.f32.mrb[0].mxu0
  %v677 = vpop.f32.mrb[0].mxu0
  %v678 = vadd.f32 %v637, %v677
  %v679 = vpop.f32.mrb[0].mxu0
  %680 = vdwg.mxu0
  %v681 = vld [vmem:[%s3] sm:$0xff]
  %v682 = vld [vmem:[%s3 + $0x8] sm:$0xff]
  %v683 = vadd.f32 %v675, %v681
  %v684 = vadd.f32 %v678, %v682
  %v685 = vmax.f32 %v683, 0.0
  %v686 = vmax.f32 %v684, 0.0
  %687 = vst [vmem:[%s4] sm:$0xff] %v685
  %688 = vst [vmem:[%s4 + $0x8] sm:$0xff] %v686
  // Predicated region
  $region18: #{resnet_forward.20} parent=0 // pred_check
    _
  $region19: #{resnet_forward.20} parent=0 // pred_check_branch
    %690 = sbr.rel (0) target = $region21
  $region20: #{resnet_forward.20} parent=0 // pred_region
    _
  $region21: #{resnet_forward.20} parent=0 // pred_fallthru
    _
  // Predicated region
  $region22: #{resnet_forward.20} parent=0 // pred_check
    _
  $region23: #{resnet_forward.20} parent=0 // pred_check_branch
    %692 = sbr.rel (0) target = $region25
  $region24: #{resnet_forward.20} parent=0 // pred_region
    _
  $region25: #{resnet_forward.20} parent=0 // pred_fallthru
    _

// kernel: resnet_forward.22
$region0: #{resnet_forward.22}
  #allocation0 [shape = 'u32[]', space=smem, size = 0x4, offset = 0x4, fixed_abs, tag = 'smem constant byte address 0x4 - core index']
  #allocation1 [shape = 'u32[144,128]{1,0:T(1,128)}', space=vmem, size = 0x12000, scoped, tag = 'internal scratch']
  %s0 = inlined_call_operand.vmem [shape: bf16[2,128], index: 0, kind: input, shape index: {}]
  %s1 = inlined_call_operand.vmem [shape: bf16[128,128], index: 1, kind: input, shape index: {}]
  %s2 = inlined_call_operand.vmem [shape: f32[1,128], index: 2, kind: input, shape index: {}]
  %s3 = inlined_call_operand.vmem [shape: f32[2,128], index: 3, kind: output, shape index: {}]
  %s4 = sld [smem:[#allocation0]]
  $region22: #{resnet_forward.22} parent=0
    _
  %s6 = ssub.s32 1, %s4
  %s7 = scalar_select 0, %s6, %s4
  // Predicated region
  $region2: #{resnet_forward.22} parent=0 // pred_check
    _
  $region3: #{resnet_forward.22} parent=0 // pred_check_branch
    %9 = sbr.rel (0) target = $region5
  $region4: #{resnet_forward.22} parent=0 // pred_region
    _
  $region5: #{resnet_forward.22} parent=0 // pred_fallthru
    _
  // Predicated region
  $region6: #{resnet_forward.22} parent=0 // pred_check
    _
  $region7: #{resnet_forward.22} parent=0 // pred_check_branch
    %11 = sbr.rel (0) target = $region9
  $region8: #{resnet_forward.22} parent=0 // pred_region
    _
  $region9: #{resnet_forward.22} parent=0 // pred_fallthru
    _
  // Predicated region
  $region10: #{resnet_forward.22} parent=0 // pred_check
    _
  $region11: #{resnet_forward.22} parent=0 // pred_check_branch
    %13 = sbr.rel (0) target = $region13
  $region12: #{resnet_forward.22} parent=0 // pred_region
    _
  $region13: #{resnet_forward.22} parent=0 // pred_fallthru
    _
  %v15 = vld [vmem:[%s0] sm:$0x1]
  %v16 = vld [vmem:[%s1] sm:$0xf]
  %v17 = vld [vmem:[%s1 + $0x4] sm:$0xf]
  %v18 = vld [vmem:[%s1 + $0x8] sm:$0xf]
  %v19 = vld [vmem:[%s1 + $0xc] sm:$0xf]
  %v20 = vld [vmem:[%s1 + $0x10] sm:$0xf]
  %v21 = vld [vmem:[%s1 + $0x14] sm:$0xf]
  %v22 = vld [vmem:[%s1 + $0x18] sm:$0xf]
  %v23 = vld [vmem:[%s1 + $0x1c] sm:$0xf]
  %v24 = vld [vmem:[%s1 + $0x20] sm:$0xf]
  %v25 = vld [vmem:[%s1 + $0x24] sm:$0xf]
  %v26 = vld [vmem:[%s1 + $0x28] sm:$0xf]
  %v27 = vld [vmem:[%s1 + $0x2c] sm:$0xf]
  %v28 = vld [vmem:[%s1 + $0x30] sm:$0xf]
  %v29 = vld [vmem:[%s1 + $0x34] sm:$0xf]
  %v30 = vld [vmem:[%s1 + $0x38] sm:$0xf]
  %v31 = vld [vmem:[%s1 + $0x3c] sm:$0xf]
  %v32 = vld [vmem:[%s2] sm:$0x1]
  %v34 = vlaneseq
  %v35 = vshrl.u32 %v34, 7
  %v36 = vsub.s32 0, %v35
  %v37 = vrot.slane %v32, %v36
  %v55 = vunpack.c.l.b16 %v16
  %v56 = vunpack.c.l.b16 %v17
  %v57 = vunpack.c.l.b16 %v18
  %v58 = vunpack.c.l.b16 %v19
  %v59 = vunpack.c.l.b16 %v20
  %v60 = vunpack.c.l.b16 %v21
  %v61 = vunpack.c.l.b16 %v22
  %v62 = vunpack.c.l.b16 %v23
  %v63 = vunpack.c.l.b16 %v24
  %v64 = vunpack.c.l.b16 %v25
  %v65 = vunpack.c.l.b16 %v26
  %v66 = vunpack.c.l.b16 %v27
  %v67 = vunpack.c.l.b16 %v28
  %v68 = vunpack.c.l.b16 %v29
  %v69 = vunpack.c.l.b16 %v30
  %v70 = vunpack.c.l.b16 %v31
  %v71 = vpack.c.b16 %v56, %v55
  %v72 = vpack.c.b16 %v58, %v57
  %v73 = vpack.c.b16 %v60, %v59
  %v74 = vpack.c.b16 %v62, %v61
  %v75 = vpack.c.b16 %v64, %v63
  %v76 = vpack.c.b16 %v66, %v65
  %v77 = vpack.c.b16 %v68, %v67
  %v78 = vpack.c.b16 %v70, %v69
  %87 = vmatprep.subr.bf16.mxu0 0
  %88 = vmatpush1.bf16.msra.mxu0 %v71
  %89 = vmatprep.subr.bf16.mxu0 0
  %90 = vmatpush1.bf16.msra.mxu0 %v72
  %91 = vmatprep.subr.bf16.mxu0 0
  %92 = vmatpush1.bf16.msra.mxu0 %v73
  %93 = vmatprep.subr.bf16.mxu0 0
  %94 = vmatpush1.bf16.msra.mxu0 %v74
  %95 = vmatprep.subr.bf16.mxu0 0
  %96 = vmatpush1.bf16.msra.mxu0 %v75
  %97 = vmatprep.subr.bf16.mxu0 0
  %98 = vmatpush1.bf16.msra.mxu0 %v76
  %99 = vmatprep.subr.bf16.mxu0 0
  %100 = vmatpush1.bf16.msra.mxu0 %v77
  %101 = vmatprep.subr.bf16.mxu0 0
  %102 = vmatpush1.bf16.msra.mxu0 %v78
  %103 = vmatprep.subr.bf16.mxu0 0
  %104 = vmatpush1.bf16.msra.mxu0 0
  %105 = vmatprep.subr.bf16.mxu0 0
  %106 = vmatpush1.bf16.msra.mxu0 0
  %107 = vmatprep.subr.bf16.mxu0 0
  %108 = vmatpush1.bf16.msra.mxu0 0
  %109 = vmatprep.subr.bf16.mxu0 0
  %110 = vmatpush1.bf16.msra.mxu0 0
  %111 = vmatprep.subr.bf16.mxu0 0
  %112 = vmatpush1.bf16.msra.mxu0 0
  %113 = vmatprep.subr.bf16.mxu0 0
  %114 = vmatpush1.bf16.msra.mxu0 0
  %115 = vmatprep.subr.bf16.mxu0 0
  %116 = vmatpush1.bf16.msra.mxu0 0
  %117 = vmatprep.subr.bf16.mxu0 0
  %118 = vmatpush1.bf16.msra.mxu0 0
  %119 = vmatprep.mubr.bf16.mxu0 0
  %120 = vmatmul.mubr.bf16.gmra.mrb[0].mxu0 %v15
  %v121 = vpop.f32.mrb[0].mxu0
  %v122 = vadd.f32 %v37, %v121
  %v123 = vpop.f32.mrb[0].mxu0
  %v124 = vpop.f32.mrb[0].mxu0
  %v125 = vpop.f32.mrb[0].mxu0
  %126 = vdwg.mxu0
  %127 = vst [vmem:[%s3] sm:$0x3] %v122
  // Predicated region
  $region14: #{resnet_forward.22} parent=0 // pred_check
    _
  $region15: #{resnet_forward.22} parent=0 // pred_check_branch
    %129 = sbr.rel (0) target = $region17
  $region16: #{resnet_forward.22} parent=0 // pred_region
    _
  $region17: #{resnet_forward.22} parent=0 // pred_fallthru
    _
  // Predicated region
  $region18: #{resnet_forward.22} parent=0 // pred_check
    _
  $region19: #{resnet_forward.22} parent=0 // pred_check_branch
    %131 = sbr.rel (0) target = $region21
  $region20: #{resnet_forward.22} parent=0 // pred_region
    _
  $region21: #{resnet_forward.22} parent=0 // pred_fallthru
    _

// kernel: resnet_forward.21
$region0: #{resnet_forward.21}
  #allocation0 [shape = 'u32[]', space=smem, size = 0x4, offset = 0x4, fixed_abs, tag = 'smem constant byte address 0x4 - core index']
  #allocation1 [shape = 'u32[144,128]{1,0:T(1,128)}', space=vmem, size = 0x12000, scoped, tag = 'internal scratch']
  %s0 = inlined_call_operand.vmem [shape: bf16[2,896], index: 0, kind: input, shape index: {}]
  %s1 = inlined_call_operand.vmem [shape: bf16[896,128], index: 1, kind: input, shape index: {}]
  %s2 = inlined_call_operand.vmem [shape: f32[1,128], index: 2, kind: input, shape index: {}]
  %s3 = inlined_call_operand.vmem [shape: f32[2,128], index: 3, kind: output, shape index: {}]
  %s4 = sld [smem:[#allocation0]]
  $region22: #{resnet_forward.21} parent=0
    _
  %s6 = ssub.s32 1, %s4
  %s7 = scalar_select 0, %s6, %s4
  // Predicated region
  $region2: #{resnet_forward.21} parent=0 // pred_check
    _
  $region3: #{resnet_forward.21} parent=0 // pred_check_branch
    %9 = sbr.rel (0) target = $region5
  $region4: #{resnet_forward.21} parent=0 // pred_region
    _
  $region5: #{resnet_forward.21} parent=0 // pred_fallthru
    _
  // Predicated region
  $region6: #{resnet_forward.21} parent=0 // pred_check
    _
  $region7: #{resnet_forward.21} parent=0 // pred_check_branch
    %11 = sbr.rel (0) target = $region9
  $region8: #{resnet_forward.21} parent=0 // pred_region
    _
  $region9: #{resnet_forward.21} parent=0 // pred_fallthru
    _
  // Predicated region
  $region10: #{resnet_forward.21} parent=0 // pred_check
    _
  $region11: #{resnet_forward.21} parent=0 // pred_check_branch
    %13 = sbr.rel (0) target = $region13
  $region12: #{resnet_forward.21} parent=0 // pred_region
    _
  $region13: #{resnet_forward.21} parent=0 // pred_fallthru
    _
  %v15 = vld [vmem:[%s0] sm:$0x7f]
  %v16 = vld [vmem:[%s1] sm:$0xf]
  %v17 = vld [vmem:[%s1 + $0x4] sm:$0xf]
  %v18 = vld [vmem:[%s1 + $0x8] sm:$0xf]
  %v19 = vld [vmem:[%s1 + $0xc] sm:$0xf]
  %v20 = vld [vmem:[%s1 + $0x10] sm:$0xf]
  %v21 = vld [vmem:[%s1 + $0x14] sm:$0xf]
  %v22 = vld [vmem:[%s1 + $0x18] sm:$0xf]
  %v23 = vld [vmem:[%s1 + $0x1c] sm:$0xf]
  %v24 = vld [vmem:[%s1 + $0x20] sm:$0xf]
  %v25 = vld [vmem:[%s1 + $0x24] sm:$0xf]
  %v26 = vld [vmem:[%s1 + $0x28] sm:$0xf]
  %v27 = vld [vmem:[%s1 + $0x2c] sm:$0xf]
  %v28 = vld [vmem:[%s1 + $0x30] sm:$0xf]
  %v29 = vld [vmem:[%s1 + $0x34] sm:$0xf]
  %v30 = vld [vmem:[%s1 + $0x38] sm:$0xf]
  %v31 = vld [vmem:[%s1 + $0x3c] sm:$0xf]
  %v32 = vld [vmem:[%s1 + $0x40] sm:$0xf]
  %v33 = vld [vmem:[%s1 + $0x44] sm:$0xf]
  %v34 = vld [vmem:[%s1 + $0x48] sm:$0xf]
  %v35 = vld [vmem:[%s1 + $0x4c] sm:$0xf]
  %v36 = vld [vmem:[%s1 + $0x50] sm:$0xf]
  %v37 = vld [vmem:[%s1 + $0x54] sm:$0xf]
  %v38 = vld [vmem:[%s1 + $0x58] sm:$0xf]
  %v39 = vld [vmem:[%s1 + $0x5c] sm:$0xf]
  %v40 = vld [vmem:[%s1 + $0x60] sm:$0xf]
  %v41 = vld [vmem:[%s1 + $0x64] sm:$0xf]
  %v42 = vld [vmem:[%s1 + $0x68] sm:$0xf]
  %v43 = vld [vmem:[%s1 + $0x6c] sm:$0xf]
  %v44 = vld [vmem:[%s1 + $0x70] sm:$0xf]
  %v45 = vld [vmem:[%s1 + $0x74] sm:$0xf]
  %v46 = vld [vmem:[%s1 + $0x78] sm:$0xf]
  %v47 = vld [vmem:[%s1 + $0x7c] sm:$0xf]
  %v48 = vld [vmem:[%s1 + $0x80] sm:$0xf]
  %v49 = vld [vmem:[%s1 + $0x84] sm:$0xf]
  %v50 = vld [vmem:[%s1 + $0x88] sm:$0xf]
  %v51 = vld [vmem:[%s1 + $0x8c] sm:$0xf]
  %v52 = vld [vmem:[%s1 + $0x90] sm:$0xf]
  %v53 = vld [vmem:[%s1 + $0x94] sm:$0xf]
  %v54 = vld [vmem:[%s1 + $0x98] sm:$0xf]
  %v55 = vld [vmem:[%s1 + $0x9c] sm:$0xf]
  %v56 = vld [vmem:[%s1 + $0xa0] sm:$0xf]
  %v57 = vld [vmem:[%s1 + $0xa4] sm:$0xf]
  %v58 = vld [vmem:[%s1 + $0xa8] sm:$0xf]
  %v59 = vld [vmem:[%s1 + $0xac] sm:$0xf]
  %v60 = vld [vmem:[%s1 + $0xb0] sm:$0xf]
  %v61 = vld [vmem:[%s1 + $0xb4] sm:$0xf]
  %v62 = vld [vmem:[%s1 + $0xb8] sm:$0xf]
  %v63 = vld [vmem:[%s1 + $0xbc] sm:$0xf]
  %v64 = vld [vmem:[%s1 + $0xc0] sm:$0xf]
  %v65 = vld [vmem:[%s1 + $0xc4] sm:$0xf]
  %v66 = vld [vmem:[%s1 + $0xc8] sm:$0xf]
  %v67 = vld [vmem:[%s1 + $0xcc] sm:$0xf]
  %v68 = vld [vmem:[%s1 + $0xd0] sm:$0xf]
  %v69 = vld [vmem:[%s1 + $0xd4] sm:$0xf]
  %v70 = vld [vmem:[%s1 + $0xd8] sm:$0xf]
  %v71 = vld [vmem:[%s1 + $0xdc] sm:$0xf]
  %v72 = vld [vmem:[%s1 + $0xe0] sm:$0xf]
  %v73 = vld [vmem:[%s1 + $0xe4] sm:$0xf]
  %v74 = vld [vmem:[%s1 + $0xe8] sm:$0xf]
  %v75 = vld [vmem:[%s1 + $0xec] sm:$0xf]
  %v76 = vld [vmem:[%s1 + $0xf0] sm:$0xf]
  %v77 = vld [vmem:[%s1 + $0xf4] sm:$0xf]
  %v78 = vld [vmem:[%s1 + $0xf8] sm:$0xf]
  %v79 = vld [vmem:[%s1 + $0xfc] sm:$0xf]
  %v80 = vld [vmem:[%s1 + $0x100] sm:$0xf]
  %v81 = vld [vmem:[%s1 + $0x104] sm:$0xf]
  %v82 = vld [vmem:[%s1 + $0x108] sm:$0xf]
  %v83 = vld [vmem:[%s1 + $0x10c] sm:$0xf]
  %v84 = vld [vmem:[%s1 + $0x110] sm:$0xf]
  %v85 = vld [vmem:[%s1 + $0x114] sm:$0xf]
  %v86 = vld [vmem:[%s1 + $0x118] sm:$0xf]
  %v87 = vld [vmem:[%s1 + $0x11c] sm:$0xf]
  %v88 = vld [vmem:[%s1 + $0x120] sm:$0xf]
  %v89 = vld [vmem:[%s1 + $0x124] sm:$0xf]
  %v90 = vld [vmem:[%s1 + $0x128] sm:$0xf]
  %v91 = vld [vmem:[%s1 + $0x12c] sm:$0xf]
  %v92 = vld [vmem:[%s1 + $0x130] sm:$0xf]
  %v93 = vld [vmem:[%s1 + $0x134] sm:$0xf]
  %v94 = vld [vmem:[%s1 + $0x138] sm:$0xf]
  %v95 = vld [vmem:[%s1 + $0x13c] sm:$0xf]
  %v96 = vld [vmem:[%s1 + $0x140] sm:$0xf]
  %v97 = vld [vmem:[%s1 + $0x144] sm:$0xf]
  %v98 = vld [vmem:[%s1 + $0x148] sm:$0xf]
  %v99 = vld [vmem:[%s1 + $0x14c] sm:$0xf]
  %v100 = vld [vmem:[%s1 + $0x150] sm:$0xf]
  %v101 = vld [vmem:[%s1 + $0x154] sm:$0xf]
  %v102 = vld [vmem:[%s1 + $0x158] sm:$0xf]
  %v103 = vld [vmem:[%s1 + $0x15c] sm:$0xf]
  %v104 = vld [vmem:[%s1 + $0x160] sm:$0xf]
  %v105 = vld [vmem:[%s1 + $0x164] sm:$0xf]
  %v106 = vld [vmem:[%s1 + $0x168] sm:$0xf]
  %v107 = vld [vmem:[%s1 + $0x16c] sm:$0xf]
  %v108 = vld [vmem:[%s1 + $0x170] sm:$0xf]
  %v109 = vld [vmem:[%s1 + $0x174] sm:$0xf]
  %v110 = vld [vmem:[%s1 + $0x178] sm:$0xf]
  %v111 = vld [vmem:[%s1 + $0x17c] sm:$0xf]
  %v112 = vld [vmem:[%s1 + $0x180] sm:$0xf]
  %v113 = vld [vmem:[%s1 + $0x184] sm:$0xf]
  %v114 = vld [vmem:[%s1 + $0x188] sm:$0xf]
  %v115 = vld [vmem:[%s1 + $0x18c] sm:$0xf]
  %v116 = vld [vmem:[%s1 + $0x190] sm:$0xf]
  %v117 = vld [vmem:[%s1 + $0x194] sm:$0xf]
  %v118 = vld [vmem:[%s1 + $0x198] sm:$0xf]
  %v119 = vld [vmem:[%s1 + $0x19c] sm:$0xf]
  %v120 = vld [vmem:[%s1 + $0x1a0] sm:$0xf]
  %v121 = vld [vmem:[%s1 + $0x1a4] sm:$0xf]
  %v122 = vld [vmem:[%s1 + $0x1a8] sm:$0xf]
  %v123 = vld [vmem:[%s1 + $0x1ac] sm:$0xf]
  %v124 = vld [vmem:[%s1 + $0x1b0] sm:$0xf]
  %v125 = vld [vmem:[%s1 + $0x1b4] sm:$0xf]
  %v126 = vld [vmem:[%s1 + $0x1b8] sm:$0xf]
  %v127 = vld [vmem:[%s1 + $0x1bc] sm:$0xf]
  %v128 = vld [vmem:[%s2] sm:$0x1]
  %v130 = vlaneseq
  %v131 = vshrl.u32 %v130, 7
  %v132 = vsub.s32 0, %v131
  %v133 = vrot.slane %v128, %v132
  %v136 = vcombine.high %v15, %v15
  %v138 = vunpack.c.l.s4 1966171168
  %v139 = vunpack.c.0.s8 %v138
  %v140 = vlaneseq
  %v141 = vshrl.u32 %v140, 7
  %v142 = vsub.s32 %v139, %v141
  %v143 = vrot.slane %v15, %v142
  %v145 = vunpack.c.l.s4 1966171168
  %v146 = vunpack.c.0.s8 %v145
  %v147 = vlaneseq
  %v148 = vshrl.u32 %v147, 7
  %v149 = vsub.s32 %v146, %v148
  %v150 = vrot.slane %v136, %v149
  %v151 = vcombine.high %v143, %v143
  %v152 = vcombine.high %v150, %v150
  %v154 = vunpack.c.l.s4 1966171168
  %v155 = vunpack.c.0.s8 %v154
  %v156 = vlaneseq
  %v157 = vshrl.u32 %v156, 7
  %v158 = vsub.s32 %v155, %v157
  %v159 = vrot.slane %v143, %v158
  %v161 = vunpack.c.l.s4 1966171168
  %v162 = vunpack.c.0.s8 %v161
  %v163 = vlaneseq
  %v164 = vshrl.u32 %v163, 7
  %v165 = vsub.s32 %v162, %v164
  %v166 = vrot.slane %v150, %v165
  %v168 = vunpack.c.l.s4 1966171168
  %v169 = vunpack.c.0.s8 %v168
  %v170 = vlaneseq
  %v171 = vshrl.u32 %v170, 7
  %v172 = vsub.s32 %v169, %v171
  %v173 = vrot.slane %v151, %v172
  %v175 = vunpack.c.l.s4 1966171168
  %v176 = vunpack.c.0.s8 %v175
  %v177 = vlaneseq
  %v178 = vshrl.u32 %v177, 7
  %v179 = vsub.s32 %v176, %v178
  %v180 = vrot.slane %v152, %v179
  %v181 = vcombine.high %v159, %v159
  %v182 = vcombine.high %v166, %v166
  %v183 = vcombine.high %v173, %v173
  %v303 = vunpack.c.l.b16 %v16
  %v304 = vunpack.c.l.b16 %v17
  %v305 = vunpack.c.l.b16 %v18
  %v306 = vunpack.c.l.b16 %v19
  %v307 = vunpack.c.l.b16 %v20
  %v308 = vunpack.c.l.b16 %v21
  %v309 = vunpack.c.l.b16 %v22
  %v310 = vunpack.c.l.b16 %v23
  %v311 = vunpack.c.l.b16 %v24
  %v312 = vunpack.c.l.b16 %v25
  %v313 = vunpack.c.l.b16 %v26
  %v314 = vunpack.c.l.b16 %v27
  %v315 = vunpack.c.l.b16 %v28
  %v316 = vunpack.c.l.b16 %v29
  %v317 = vunpack.c.l.b16 %v30
  %v318 = vunpack.c.l.b16 %v31
  %v319 = vunpack.c.l.b16 %v32
  %v320 = vunpack.c.l.b16 %v33
  %v321 = vunpack.c.l.b16 %v34
  %v322 = vunpack.c.l.b16 %v35
  %v323 = vunpack.c.l.b16 %v36
  %v324 = vunpack.c.l.b16 %v37
  %v325 = vunpack.c.l.b16 %v38
  %v326 = vunpack.c.l.b16 %v39
  %v327 = vunpack.c.l.b16 %v40
  %v328 = vunpack.c.l.b16 %v41
  %v329 = vunpack.c.l.b16 %v42
  %v330 = vunpack.c.l.b16 %v43
  %v331 = vunpack.c.l.b16 %v44
  %v332 = vunpack.c.l.b16 %v45
  %v333 = vunpack.c.l.b16 %v46
  %v334 = vunpack.c.l.b16 %v47
  %v335 = vunpack.c.l.b16 %v48
  %v336 = vunpack.c.l.b16 %v49
  %v337 = vunpack.c.l.b16 %v50
  %v338 = vunpack.c.l.b16 %v51
  %v339 = vunpack.c.l.b16 %v52
  %v340 = vunpack.c.l.b16 %v53
  %v341 = vunpack.c.l.b16 %v54
  %v342 = vunpack.c.l.b16 %v55
  %v343 = vunpack.c.l.b16 %v56
  %v344 = vunpack.c.l.b16 %v57
  %v345 = vunpack.c.l.b16 %v58
  %v346 = vunpack.c.l.b16 %v59
  %v347 = vunpack.c.l.b16 %v60
  %v348 = vunpack.c.l.b16 %v61
  %v349 = vunpack.c.l.b16 %v62
  %v350 = vunpack.c.l.b16 %v63
  %v351 = vunpack.c.l.b16 %v64
  %v352 = vunpack.c.l.b16 %v65
  %v353 = vunpack.c.l.b16 %v66
  %v354 = vunpack.c.l.b16 %v67
  %v355 = vunpack.c.l.b16 %v68
  %v356 = vunpack.c.l.b16 %v69
  %v357 = vunpack.c.l.b16 %v70
  %v358 = vunpack.c.l.b16 %v71
  %v359 = vunpack.c.l.b16 %v72
  %v360 = vunpack.c.l.b16 %v73
  %v361 = vunpack.c.l.b16 %v74
  %v362 = vunpack.c.l.b16 %v75
  %v363 = vunpack.c.l.b16 %v76
  %v364 = vunpack.c.l.b16 %v77
  %v365 = vunpack.c.l.b16 %v78
  %v366 = vunpack.c.l.b16 %v79
  %v367 = vunpack.c.l.b16 %v80
  %v368 = vunpack.c.l.b16 %v81
  %v369 = vunpack.c.l.b16 %v82
  %v370 = vunpack.c.l.b16 %v83
  %v371 = vunpack.c.l.b16 %v84
  %v372 = vunpack.c.l.b16 %v85
  %v373 = vunpack.c.l.b16 %v86
  %v374 = vunpack.c.l.b16 %v87
  %v375 = vunpack.c.l.b16 %v88
  %v376 = vunpack.c.l.b16 %v89
  %v377 = vunpack.c.l.b16 %v90
  %v378 = vunpack.c.l.b16 %v91
  %v379 = vunpack.c.l.b16 %v92
  %v380 = vunpack.c.l.b16 %v93
  %v381 = vunpack.c.l.b16 %v94
  %v382 = vunpack.c.l.b16 %v95
  %v383 = vunpack.c.l.b16 %v96
  %v384 = vunpack.c.l.b16 %v97
  %v385 = vunpack.c.l.b16 %v98
  %v386 = vunpack.c.l.b16 %v99
  %v387 = vunpack.c.l.b16 %v100
  %v388 = vunpack.c.l.b16 %v101
  %v389 = vunpack.c.l.b16 %v102
  %v390 = vunpack.c.l.b16 %v103
  %v391 = vunpack.c.l.b16 %v104
  %v392 = vunpack.c.l.b16 %v105
  %v393 = vunpack.c.l.b16 %v106
  %v394 = vunpack.c.l.b16 %v107
  %v395 = vunpack.c.l.b16 %v108
  %v396 = vunpack.c.l.b16 %v109
  %v397 = vunpack.c.l.b16 %v110
  %v398 = vunpack.c.l.b16 %v111
  %v399 = vunpack.c.l.b16 %v112
  %v400 = vunpack.c.l.b16 %v113
  %v401 = vunpack.c.l.b16 %v114
  %v402 = vunpack.c.l.b16 %v115
  %v403 = vunpack.c.l.b16 %v116
  %v404 = vunpack.c.l.b16 %v117
  %v405 = vunpack.c.l.b16 %v118
  %v406 = vunpack.c.l.b16 %v119
  %v407 = vunpack.c.l.b16 %v120
  %v408 = vunpack.c.l.b16 %v121
  %v409 = vunpack.c.l.b16 %v122
  %v410 = vunpack.c.l.b16 %v123
  %v411 = vunpack.c.l.b16 %v124
  %v412 = vunpack.c.l.b16 %v125
  %v413 = vunpack.c.l.b16 %v126
  %v414 = vunpack.c.l.b16 %v127
  %v415 = vpack.c.b16 %v304, %v303
  %v416 = vpack.c.b16 %v306, %v305
  %v417 = vpack.c.b16 %v308, %v307
  %v418 = vpack.c.b16 %v310, %v309
  %v419 = vpack.c.b16 %v312, %v311
  %v420 = vpack.c.b16 %v314, %v313
  %v421 = vpack.c.b16 %v316, %v315
  %v422 = vpack.c.b16 %v318, %v317
  %v423 = vpack.c.b16 %v320, %v319
  %v424 = vpack.c.b16 %v322, %v321
  %v425 = vpack.c.b16 %v324, %v323
  %v426 = vpack.c.b16 %v326, %v325
  %v427 = vpack.c.b16 %v328, %v327
  %v428 = vpack.c.b16 %v330, %v329
  %v429 = vpack.c.b16 %v332, %v331
  %v430 = vpack.c.b16 %v334, %v333
  %v431 = vpack.c.b16 %v336, %v335
  %v432 = vpack.c.b16 %v338, %v337
  %v433 = vpack.c.b16 %v340, %v339
  %v434 = vpack.c.b16 %v342, %v341
  %v435 = vpack.c.b16 %v344, %v343
  %v436 = vpack.c.b16 %v346, %v345
  %v437 = vpack.c.b16 %v348, %v347
  %v438 = vpack.c.b16 %v350, %v349
  %v439 = vpack.c.b16 %v352, %v351
  %v440 = vpack.c.b16 %v354, %v353
  %v441 = vpack.c.b16 %v356, %v355
  %v442 = vpack.c.b16 %v358, %v357
  %v443 = vpack.c.b16 %v360, %v359
  %v444 = vpack.c.b16 %v362, %v361
  %v445 = vpack.c.b16 %v364, %v363
  %v446 = vpack.c.b16 %v366, %v365
  %v447 = vpack.c.b16 %v368, %v367
  %v448 = vpack.c.b16 %v370, %v369
  %v449 = vpack.c.b16 %v372, %v371
  %v450 = vpack.c.b16 %v374, %v373
  %v451 = vpack.c.b16 %v376, %v375
  %v452 = vpack.c.b16 %v378, %v377
  %v453 = vpack.c.b16 %v380, %v379
  %v454 = vpack.c.b16 %v382, %v381
  %v455 = vpack.c.b16 %v384, %v383
  %v456 = vpack.c.b16 %v386, %v385
  %v457 = vpack.c.b16 %v388, %v387
  %v458 = vpack.c.b16 %v390, %v389
  %v459 = vpack.c.b16 %v392, %v391
  %v460 = vpack.c.b16 %v394, %v393
  %v461 = vpack.c.b16 %v396, %v395
  %v462 = vpack.c.b16 %v398, %v397
  %v463 = vpack.c.b16 %v400, %v399
  %v464 = vpack.c.b16 %v402, %v401
  %v465 = vpack.c.b16 %v404, %v403
  %v466 = vpack.c.b16 %v406, %v405
  %v467 = vpack.c.b16 %v408, %v407
  %v468 = vpack.c.b16 %v410, %v409
  %v469 = vpack.c.b16 %v412, %v411
  %v470 = vpack.c.b16 %v414, %v413
  %527 = vmatprep.subr.bf16.mxu0 0
  %528 = vmatpush1.bf16.msra.mxu0 %v415
  %529 = vmatprep.subr.bf16.mxu0 0
  %530 = vmatpush1.bf16.msra.mxu0 %v416
  %531 = vmatprep.subr.bf16.mxu0 0
  %532 = vmatpush1.bf16.msra.mxu0 %v417
  %533 = vmatprep.subr.bf16.mxu0 0
  %534 = vmatpush1.bf16.msra.mxu0 %v418
  %535 = vmatprep.subr.bf16.mxu0 0
  %536 = vmatpush1.bf16.msra.mxu0 %v419
  %537 = vmatprep.subr.bf16.mxu0 0
  %538 = vmatpush1.bf16.msra.mxu0 %v420
  %539 = vmatprep.subr.bf16.mxu0 0
  %540 = vmatpush1.bf16.msra.mxu0 %v421
  %541 = vmatprep.subr.bf16.mxu0 0
  %542 = vmatpush1.bf16.msra.mxu0 %v422
  %543 = vmatprep.subr.bf16.mxu0 0
  %544 = vmatpush1.bf16.msra.mxu0 %v423
  %545 = vmatprep.subr.bf16.mxu0 0
  %546 = vmatpush1.bf16.msra.mxu0 %v424
  %547 = vmatprep.subr.bf16.mxu0 0
  %548 = vmatpush1.bf16.msra.mxu0 %v425
  %549 = vmatprep.subr.bf16.mxu0 0
  %550 = vmatpush1.bf16.msra.mxu0 %v426
  %551 = vmatprep.subr.bf16.mxu0 0
  %552 = vmatpush1.bf16.msra.mxu0 %v427
  %553 = vmatprep.subr.bf16.mxu0 0
  %554 = vmatpush1.bf16.msra.mxu0 %v428
  %555 = vmatprep.subr.bf16.mxu0 0
  %556 = vmatpush1.bf16.msra.mxu0 %v429
  %557 = vmatprep.subr.bf16.mxu0 0
  %558 = vmatpush1.bf16.msra.mxu0 %v430
  %559 = vmatprep.mubr.bf16.mxu0 %v173
  %560 = vmatmul.mubr.bf16.gmra.mrb[0].mxu0 %v159
  %v561 = vpop.f32.mrb[0].mxu0
  %v562 = vadd.f32 %v133, %v561
  %v563 = vpop.f32.mrb[0].mxu0
  %v564 = vpop.f32.mrb[0].mxu0
  %v565 = vpop.f32.mrb[0].mxu0
  %566 = vdwg.mxu0
  %567 = vmatprep.subr.bf16.mxu0 0
  %568 = vmatpush1.bf16.msra.mxu0 %v431
  %569 = vmatprep.subr.bf16.mxu0 0
  %570 = vmatpush1.bf16.msra.mxu0 %v432
  %571 = vmatprep.subr.bf16.mxu0 0
  %572 = vmatpush1.bf16.msra.mxu0 %v433
  %573 = vmatprep.subr.bf16.mxu0 0
  %574 = vmatpush1.bf16.msra.mxu0 %v434
  %575 = vmatprep.subr.bf16.mxu0 0
  %576 = vmatpush1.bf16.msra.mxu0 %v435
  %577 = vmatprep.subr.bf16.mxu0 0
  %578 = vmatpush1.bf16.msra.mxu0 %v436
  %579 = vmatprep.subr.bf16.mxu0 0
  %580 = vmatpush1.bf16.msra.mxu0 %v437
  %581 = vmatprep.subr.bf16.mxu0 0
  %582 = vmatpush1.bf16.msra.mxu0 %v438
  %583 = vmatprep.subr.bf16.mxu0 0
  %584 = vmatpush1.bf16.msra.mxu0 %v439
  %585 = vmatprep.subr.bf16.mxu0 0
  %586 = vmatpush1.bf16.msra.mxu0 %v440
  %587 = vmatprep.subr.bf16.mxu0 0
  %588 = vmatpush1.bf16.msra.mxu0 %v441
  %589 = vmatprep.subr.bf16.mxu0 0
  %590 = vmatpush1.bf16.msra.mxu0 %v442
  %591 = vmatprep.subr.bf16.mxu0 0
  %592 = vmatpush1.bf16.msra.mxu0 %v443
  %593 = vmatprep.subr.bf16.mxu0 0
  %594 = vmatpush1.bf16.msra.mxu0 %v444
  %595 = vmatprep.subr.bf16.mxu0 0
  %596 = vmatpush1.bf16.msra.mxu0 %v445
  %597 = vmatprep.subr.bf16.mxu0 0
  %598 = vmatpush1.bf16.msra.mxu0 %v446
  %599 = vmatprep.mubr.bf16.mxu0 %v183
  %600 = vmatmul.mubr.bf16.gmra.mrb[0].mxu0 %v181
  %v601 = vpop.f32.mrb[0].mxu0
  %v602 = vadd.f32 %v562, %v601
  %v603 = vpop.f32.mrb[0].mxu0
  %v604 = vpop.f32.mrb[0].mxu0
  %v605 = vpop.f32.mrb[0].mxu0
  %606 = vdwg.mxu0
  %607 = vmatprep.subr.bf16.mxu0 0
  %608 = vmatpush1.bf16.msra.mxu0 %v447
  %609 = vmatprep.subr.bf16.mxu0 0
  %610 = vmatpush1.bf16.msra.mxu0 %v448
  %611 = vmatprep.subr.bf16.mxu0 0
  %612 = vmatpush1.bf16.msra.mxu0 %v449
  %613 = vmatprep.subr.bf16.mxu0 0
  %614 = vmatpush1.bf16.msra.mxu0 %v450
  %615 = vmatprep.subr.bf16.mxu0 0
  %616 = vmatpush1.bf16.msra.mxu0 %v451
  %617 = vmatprep.subr.bf16.mxu0 0
  %618 = vmatpush1.bf16.msra.mxu0 %v452
  %619 = vmatprep.subr.bf16.mxu0 0
  %620 = vmatpush1.bf16.msra.mxu0 %v453
  %621 = vmatprep.subr.bf16.mxu0 0
  %622 = vmatpush1.bf16.msra.mxu0 %v454
  %623 = vmatprep.subr.bf16.mxu0 0
  %624 = vmatpush1.bf16.msra.mxu0 %v455
  %625 = vmatprep.subr.bf16.mxu0 0
  %626 = vmatpush1.bf16.msra.mxu0 %v456
  %627 = vmatprep.subr.bf16.mxu0 0
  %628 = vmatpush1.bf16.msra.mxu0 %v457
  %629 = vmatprep.subr.bf16.mxu0 0
  %630 = vmatpush1.bf16.msra.mxu0 %v458
  %631 = vmatprep.subr.bf16.mxu0 0
  %632 = vmatpush1.bf16.msra.mxu0 %v459
  %633 = vmatprep.subr.bf16.mxu0 0
  %634 = vmatpush1.bf16.msra.mxu0 %v460
  %635 = vmatprep.subr.bf16.mxu0 0
  %636 = vmatpush1.bf16.msra.mxu0 %v461
  %637 = vmatprep.subr.bf16.mxu0 0
  %638 = vmatpush1.bf16.msra.mxu0 %v462
  %639 = vmatprep.mubr.bf16.mxu0 %v180
  %640 = vmatmul.mubr.bf16.gmra.mrb[0].mxu0 %v166
  %v641 = vpop.f32.mrb[0].mxu0
  %v642 = vadd.f32 %v602, %v641
  %v643 = vpop.f32.mrb[0].mxu0
  %v644 = vpop.f32.mrb[0].mxu0
  %v645 = vpop.f32.mrb[0].mxu0
  %646 = vdwg.mxu0
  %647 = vmatprep.subr.bf16.mxu0 0
  %648 = vmatpush1.bf16.msra.mxu0 %v463
  %649 = vmatprep.subr.bf16.mxu0 0
  %650 = vmatpush1.bf16.msra.mxu0 %v464
  %651 = vmatprep.subr.bf16.mxu0 0
  %652 = vmatpush1.bf16.msra.mxu0 %v465
  %653 = vmatprep.subr.bf16.mxu0 0
  %654 = vmatpush1.bf16.msra.mxu0 %v466
  %655 = vmatprep.subr.bf16.mxu0 0
  %656 = vmatpush1.bf16.msra.mxu0 %v467
  %657 = vmatprep.subr.bf16.mxu0 0
  %658 = vmatpush1.bf16.msra.mxu0 %v468
  %659 = vmatprep.subr.bf16.mxu0 0
  %660 = vmatpush1.bf16.msra.mxu0 %v469
  %661 = vmatprep.subr.bf16.mxu0 0
  %662 = vmatpush1.bf16.msra.mxu0 %v470
  %663 = vmatprep.subr.bf16.mxu0 0
  %664 = vmatpush1.bf16.msra.mxu0 0
  %665 = vmatprep.subr.bf16.mxu0 0
  %666 = vmatpush1.bf16.msra.mxu0 0
  %667 = vmatprep.subr.bf16.mxu0 0
  %668 = vmatpush1.bf16.msra.mxu0 0
  %669 = vmatprep.subr.bf16.mxu0 0
  %670 = vmatpush1.bf16.msra.mxu0 0
  %671 = vmatprep.subr.bf16.mxu0 0
  %672 = vmatpush1.bf16.msra.mxu0 0
  %673 = vmatprep.subr.bf16.mxu0 0
  %674 = vmatpush1.bf16.msra.mxu0 0
  %675 = vmatprep.subr.bf16.mxu0 0
  %676 = vmatpush1.bf16.msra.mxu0 0
  %677 = vmatprep.subr.bf16.mxu0 0
  %678 = vmatpush1.bf16.msra.mxu0 0
  %679 = vmatprep.mubr.bf16.mxu0 0
  %680 = vmatmul.mubr.bf16.gmra.mrb[0].mxu0 %v182
  %v681 = vpop.f32.mrb[0].mxu0
  %v682 = vadd.f32 %v642, %v681
  %v683 = vpop.f32.mrb[0].mxu0
  %v684 = vpop.f32.mrb[0].mxu0
  %v685 = vpop.f32.mrb[0].mxu0
  %686 = vdwg.mxu0
  %v687 = vmax.f32 %v682, 0.0
  %688 = vst [vmem:[%s3] sm:$0x3] %v687
  // Predicated region
  $region14: #{resnet_forward.21} parent=0 // pred_check
    _
  $region15: #{resnet_forward.21} parent=0 // pred_check_branch
    %690 = sbr.rel (0) target = $region17
  $region16: #{resnet_forward.21} parent=0 // pred_region
    _
  $region17: #{resnet_forward.21} parent=0 // pred_fallthru
    _
  // Predicated region
  $region18: #{resnet_forward.21} parent=0 // pred_check
    _
  $region19: #{resnet_forward.21} parent=0 // pred_check_branch
    %692 = sbr.rel (0) target = $region21
  $region20: #{resnet_forward.21} parent=0 // pred_region
    _
  $region21: #{resnet_forward.21} parent=0 // pred_fallthru
    _

// kernel: resnet_forward.23
$region0: #{resnet_forward.23}
  #allocation0 [shape = 'u32[]', space=smem, size = 0x4, offset = 0x4, fixed_abs, tag = 'smem constant byte address 0x4 - core index']
  #allocation1 [shape = 'u32[144,128]{1,0:T(1,128)}', space=vmem, size = 0x12000, scoped, tag = 'internal scratch']
  %s0 = inlined_call_operand.vmem [shape: bf16[2,1792], index: 0, kind: input, shape index: {}]
  %s1 = inlined_call_operand.vmem [shape: bf16[1792,128], index: 1, kind: input, shape index: {}]
  %s2 = inlined_call_operand.vmem [shape: f32[1,128], index: 2, kind: input, shape index: {}]
  %s3 = inlined_call_operand.vmem [shape: f32[2,128], index: 3, kind: input, shape index: {}]
  %s4 = inlined_call_operand.vmem [shape: f32[2,128], index: 4, kind: output, shape index: {}]
  %s5 = sld [smem:[#allocation0]]
  $region26: #{resnet_forward.23} parent=0
    _
  %s7 = ssub.s32 1, %s5
  %s8 = scalar_select 0, %s7, %s5
  // Predicated region
  $region2: #{resnet_forward.23} parent=0 // pred_check
    _
  $region3: #{resnet_forward.23} parent=0 // pred_check_branch
    %10 = sbr.rel (0) target = $region5
  $region4: #{resnet_forward.23} parent=0 // pred_region
    _
  $region5: #{resnet_forward.23} parent=0 // pred_fallthru
    _
  // Predicated region
  $region6: #{resnet_forward.23} parent=0 // pred_check
    _
  $region7: #{resnet_forward.23} parent=0 // pred_check_branch
    %12 = sbr.rel (0) target = $region9
  $region8: #{resnet_forward.23} parent=0 // pred_region
    _
  $region9: #{resnet_forward.23} parent=0 // pred_fallthru
    _
  // Predicated region
  $region10: #{resnet_forward.23} parent=0 // pred_check
    _
  $region11: #{resnet_forward.23} parent=0 // pred_check_branch
    %14 = sbr.rel (0) target = $region13
  $region12: #{resnet_forward.23} parent=0 // pred_region
    _
  $region13: #{resnet_forward.23} parent=0 // pred_fallthru
    _
  // Predicated region
  $region14: #{resnet_forward.23} parent=0 // pred_check
    _
  $region15: #{resnet_forward.23} parent=0 // pred_check_branch
    %16 = sbr.rel (0) target = $region17
  $region16: #{resnet_forward.23} parent=0 // pred_region
    _
  $region17: #{resnet_forward.23} parent=0 // pred_fallthru
    _
  %v18 = vld [vmem:[%s0] sm:$0xff]
  %v19 = vld [vmem:[%s0 + $0x8] sm:$0x3f]
  %v20 = vld [vmem:[%s1] sm:$0xf]
  %v21 = vld [vmem:[%s1 + $0x4] sm:$0xf]
  %v22 = vld [vmem:[%s1 + $0x8] sm:$0xf]
  %v23 = vld [vmem:[%s1 + $0xc] sm:$0xf]
  %v24 = vld [vmem:[%s1 + $0x10] sm:$0xf]
  %v25 = vld [vmem:[%s1 + $0x14] sm:$0xf]
  %v26 = vld [vmem:[%s1 + $0x18] sm:$0xf]
  %v27 = vld [vmem:[%s1 + $0x1c] sm:$0xf]
  %v28 = vld [vmem:[%s1 + $0x20] sm:$0xf]
  %v29 = vld [vmem:[%s1 + $0x24] sm:$0xf]
  %v30 = vld [vmem:[%s1 + $0x28] sm:$0xf]
  %v31 = vld [vmem:[%s1 + $0x2c] sm:$0xf]
  %v32 = vld [vmem:[%s1 + $0x30] sm:$0xf]
  %v33 = vld [vmem:[%s1 + $0x34] sm:$0xf]
  %v34 = vld [vmem:[%s1 + $0x38] sm:$0xf]
  %v35 = vld [vmem:[%s1 + $0x3c] sm:$0xf]
  %v36 = vld [vmem:[%s1 + $0x40] sm:$0xf]
  %v37 = vld [vmem:[%s1 + $0x44] sm:$0xf]
  %v38 = vld [vmem:[%s1 + $0x48] sm:$0xf]
  %v39 = vld [vmem:[%s1 + $0x4c] sm:$0xf]
  %v40 = vld [vmem:[%s1 + $0x50] sm:$0xf]
  %v41 = vld [vmem:[%s1 + $0x54] sm:$0xf]
  %v42 = vld [vmem:[%s1 + $0x58] sm:$0xf]
  %v43 = vld [vmem:[%s1 + $0x5c] sm:$0xf]
  %v44 = vld [vmem:[%s1 + $0x60] sm:$0xf]
  %v45 = vld [vmem:[%s1 + $0x64] sm:$0xf]
  %v46 = vld [vmem:[%s1 + $0x68] sm:$0xf]
  %v47 = vld [vmem:[%s1 + $0x6c] sm:$0xf]
  %v48 = vld [vmem:[%s1 + $0x70] sm:$0xf]
  %v49 = vld [vmem:[%s1 + $0x74] sm:$0xf]
  %v50 = vld [vmem:[%s1 + $0x78] sm:$0xf]
  %v51 = vld [vmem:[%s1 + $0x7c] sm:$0xf]
  %v52 = vld [vmem:[%s1 + $0x80] sm:$0xf]
  %v53 = vld [vmem:[%s1 + $0x84] sm:$0xf]
  %v54 = vld [vmem:[%s1 + $0x88] sm:$0xf]
  %v55 = vld [vmem:[%s1 + $0x8c] sm:$0xf]
  %v56 = vld [vmem:[%s1 + $0x90] sm:$0xf]
  %v57 = vld [vmem:[%s1 + $0x94] sm:$0xf]
  %v58 = vld [vmem:[%s1 + $0x98] sm:$0xf]
  %v59 = vld [vmem:[%s1 + $0x9c] sm:$0xf]
  %v60 = vld [vmem:[%s1 + $0xa0] sm:$0xf]
  %v61 = vld [vmem:[%s1 + $0xa4] sm:$0xf]
  %v62 = vld [vmem:[%s1 + $0xa8] sm:$0xf]
  %v63 = vld [vmem:[%s1 + $0xac] sm:$0xf]
  %v64 = vld [vmem:[%s1 + $0xb0] sm:$0xf]
  %v65 = vld [vmem:[%s1 + $0xb4] sm:$0xf]
  %v66 = vld [vmem:[%s1 + $0xb8] sm:$0xf]
  %v67 = vld [vmem:[%s1 + $0xbc] sm:$0xf]
  %v68 = vld [vmem:[%s1 + $0xc0] sm:$0xf]
  %v69 = vld [vmem:[%s1 + $0xc4] sm:$0xf]
  %v70 = vld [vmem:[%s1 + $0xc8] sm:$0xf]
  %v71 = vld [vmem:[%s1 + $0xcc] sm:$0xf]
  %v72 = vld [vmem:[%s1 + $0xd0] sm:$0xf]
  %v73 = vld [vmem:[%s1 + $0xd4] sm:$0xf]
  %v74 = vld [vmem:[%s1 + $0xd8] sm:$0xf]
  %v75 = vld [vmem:[%s1 + $0xdc] sm:$0xf]
  %v76 = vld [vmem:[%s1 + $0xe0] sm:$0xf]
  %v77 = vld [vmem:[%s1 + $0xe4] sm:$0xf]
  %v78 = vld [vmem:[%s1 + $0xe8] sm:$0xf]
  %v79 = vld [vmem:[%s1 + $0xec] sm:$0xf]
  %v80 = vld [vmem:[%s1 + $0xf0] sm:$0xf]
  %v81 = vld [vmem:[%s1 + $0xf4] sm:$0xf]
  %v82 = vld [vmem:[%s1 + $0xf8] sm:$0xf]
  %v83 = vld [vmem:[%s1 + $0xfc] sm:$0xf]
  %v84 = vld [vmem:[%s1 + $0x100] sm:$0xf]
  %v85 = vld [vmem:[%s1 + $0x104] sm:$0xf]
  %v86 = vld [vmem:[%s1 + $0x108] sm:$0xf]
  %v87 = vld [vmem:[%s1 + $0x10c] sm:$0xf]
  %v88 = vld [vmem:[%s1 + $0x110] sm:$0xf]
  %v89 = vld [vmem:[%s1 + $0x114] sm:$0xf]
  %v90 = vld [vmem:[%s1 + $0x118] sm:$0xf]
  %v91 = vld [vmem:[%s1 + $0x11c] sm:$0xf]
  %v92 = vld [vmem:[%s1 + $0x120] sm:$0xf]
  %v93 = vld [vmem:[%s1 + $0x124] sm:$0xf]
  %v94 = vld [vmem:[%s1 + $0x128] sm:$0xf]
  %v95 = vld [vmem:[%s1 + $0x12c] sm:$0xf]
  %v96 = vld [vmem:[%s1 + $0x130] sm:$0xf]
  %v97 = vld [vmem:[%s1 + $0x134] sm:$0xf]
  %v98 = vld [vmem:[%s1 + $0x138] sm:$0xf]
  %v99 = vld [vmem:[%s1 + $0x13c] sm:$0xf]
  %v100 = vld [vmem:[%s1 + $0x140] sm:$0xf]
  %v101 = vld [vmem:[%s1 + $0x144] sm:$0xf]
  %v102 = vld [vmem:[%s1 + $0x148] sm:$0xf]
  %v103 = vld [vmem:[%s1 + $0x14c] sm:$0xf]
  %v104 = vld [vmem:[%s1 + $0x150] sm:$0xf]
  %v105 = vld [vmem:[%s1 + $0x154] sm:$0xf]
  %v106 = vld [vmem:[%s1 + $0x158] sm:$0xf]
  %v107 = vld [vmem:[%s1 + $0x15c] sm:$0xf]
  %v108 = vld [vmem:[%s1 + $0x160] sm:$0xf]
  %v109 = vld [vmem:[%s1 + $0x164] sm:$0xf]
  %v110 = vld [vmem:[%s1 + $0x168] sm:$0xf]
  %v111 = vld [vmem:[%s1 + $0x16c] sm:$0xf]
  %v112 = vld [vmem:[%s1 + $0x170] sm:$0xf]
  %v113 = vld [vmem:[%s1 + $0x174] sm:$0xf]
  %v114 = vld [vmem:[%s1 + $0x178] sm:$0xf]
  %v115 = vld [vmem:[%s1 + $0x17c] sm:$0xf]
  %v116 = vld [vmem:[%s1 + $0x180] sm:$0xf]
  %v117 = vld [vmem:[%s1 + $0x184] sm:$0xf]
  %v118 = vld [vmem:[%s1 + $0x188] sm:$0xf]
  %v119 = vld [vmem:[%s1 + $0x18c] sm:$0xf]
  %v120 = vld [vmem:[%s1 + $0x190] sm:$0xf]
  %v121 = vld [vmem:[%s1 + $0x194] sm:$0xf]
  %v122 = vld [vmem:[%s1 + $0x198] sm:$0xf]
  %v123 = vld [vmem:[%s1 + $0x19c] sm:$0xf]
  %v124 = vld [vmem:[%s1 + $0x1a0] sm:$0xf]
  %v125 = vld [vmem:[%s1 + $0x1a4] sm:$0xf]
  %v126 = vld [vmem:[%s1 + $0x1a8] sm:$0xf]
  %v127 = vld [vmem:[%s1 + $0x1ac] sm:$0xf]
  %v128 = vld [vmem:[%s1 + $0x1b0] sm:$0xf]
  %v129 = vld [vmem:[%s1 + $0x1b4] sm:$0xf]
  %v130 = vld [vmem:[%s1 + $0x1b8] sm:$0xf]
  %v131 = vld [vmem:[%s1 + $0x1bc] sm:$0xf]
  %v132 = vld [vmem:[%s1 + $0x1c0] sm:$0xf]
  %v133 = vld [vmem:[%s1 + $0x1c4] sm:$0xf]
  %v134 = vld [vmem:[%s1 + $0x1c8] sm:$0xf]
  %v135 = vld [vmem:[%s1 + $0x1cc] sm:$0xf]
  %v136 = vld [vmem:[%s1 + $0x1d0] sm:$0xf]
  %v137 = vld [vmem:[%s1 + $0x1d4] sm:$0xf]
  %v138 = vld [vmem:[%s1 + $0x1d8] sm:$0xf]
  %v139 = vld [vmem:[%s1 + $0x1dc] sm:$0xf]
  %v140 = vld [vmem:[%s1 + $0x1e0] sm:$0xf]
  %v141 = vld [vmem:[%s1 + $0x1e4] sm:$0xf]
  %v142 = vld [vmem:[%s1 + $0x1e8] sm:$0xf]
  %v143 = vld [vmem:[%s1 + $0x1ec] sm:$0xf]
  %v144 = vld [vmem:[%s1 + $0x1f0] sm:$0xf]
  %v145 = vld [vmem:[%s1 + $0x1f4] sm:$0xf]
  %v146 = vld [vmem:[%s1 + $0x1f8] sm:$0xf]
  %v147 = vld [vmem:[%s1 + $0x1fc] sm:$0xf]
  %v148 = vld [vmem:[%s1 + $0x200] sm:$0xf]
  %v149 = vld [vmem:[%s1 + $0x204] sm:$0xf]
  %v150 = vld [vmem:[%s1 + $0x208] sm:$0xf]
  %v151 = vld [vmem:[%s1 + $0x20c] sm:$0xf]
  %v152 = vld [vmem:[%s1 + $0x210] sm:$0xf]
  %v153 = vld [vmem:[%s1 + $0x214] sm:$0xf]
  %v154 = vld [vmem:[%s1 + $0x218] sm:$0xf]
  %v155 = vld [vmem:[%s1 + $0x21c] sm:$0xf]
  %v156 = vld [vmem:[%s1 + $0x220] sm:$0xf]
  %v157 = vld [vmem:[%s1 + $0x224] sm:$0xf]
  %v158 = vld [vmem:[%s1 + $0x228] sm:$0xf]
  %v159 = vld [vmem:[%s1 + $0x22c] sm:$0xf]
  %v160 = vld [vmem:[%s1 + $0x230] sm:$0xf]
  %v161 = vld [vmem:[%s1 + $0x234] sm:$0xf]
  %v162 = vld [vmem:[%s1 + $0x238] sm:$0xf]
  %v163 = vld [vmem:[%s1 + $0x23c] sm:$0xf]
  %v164 = vld [vmem:[%s1 + $0x240] sm:$0xf]
  %v165 = vld [vmem:[%s1 + $0x244] sm:$0xf]
  %v166 = vld [vmem:[%s1 + $0x248] sm:$0xf]
  %v167 = vld [vmem:[%s1 + $0x24c] sm:$0xf]
  %v168 = vld [vmem:[%s1 + $0x250] sm:$0xf]
  %v169 = vld [vmem:[%s1 + $0x254] sm:$0xf]
  %v170 = vld [vmem:[%s1 + $0x258] sm:$0xf]
  %v171 = vld [vmem:[%s1 + $0x25c] sm:$0xf]
  %v172 = vld [vmem:[%s1 + $0x260] sm:$0xf]
  %v173 = vld [vmem:[%s1 + $0x264] sm:$0xf]
  %v174 = vld [vmem:[%s1 + $0x268] sm:$0xf]
  %v175 = vld [vmem:[%s1 + $0x26c] sm:$0xf]
  %v176 = vld [vmem:[%s1 + $0x270] sm:$0xf]
  %v177 = vld [vmem:[%s1 + $0x274] sm:$0xf]
  %v178 = vld [vmem:[%s1 + $0x278] sm:$0xf]
  %v179 = vld [vmem:[%s1 + $0x27c] sm:$0xf]
  %v180 = vld [vmem:[%s1 + $0x280] sm:$0xf]
  %v181 = vld [vmem:[%s1 + $0x284] sm:$0xf]
  %v182 = vld [vmem:[%s1 + $0x288] sm:$0xf]
  %v183 = vld [vmem:[%s1 + $0x28c] sm:$0xf]
  %v184 = vld [vmem:[%s1 + $0x290] sm:$0xf]
  %v185 = vld [vmem:[%s1 + $0x294] sm:$0xf]
  %v186 = vld [vmem:[%s1 + $0x298] sm:$0xf]
  %v187 = vld [vmem:[%s1 + $0x29c] sm:$0xf]
  %v188 = vld [vmem:[%s1 + $0x2a0] sm:$0xf]
  %v189 = vld [vmem:[%s1 + $0x2a4] sm:$0xf]
  %v190 = vld [vmem:[%s1 + $0x2a8] sm:$0xf]
  %v191 = vld [vmem:[%s1 + $0x2ac] sm:$0xf]
  %v192 = vld [vmem:[%s1 + $0x2b0] sm:$0xf]
  %v193 = vld [vmem:[%s1 + $0x2b4] sm:$0xf]
  %v194 = vld [vmem:[%s1 + $0x2b8] sm:$0xf]
  %v195 = vld [vmem:[%s1 + $0x2bc] sm:$0xf]
  %v196 = vld [vmem:[%s1 + $0x2c0] sm:$0xf]
  %v197 = vld [vmem:[%s1 + $0x2c4] sm:$0xf]
  %v198 = vld [vmem:[%s1 + $0x2c8] sm:$0xf]
  %v199 = vld [vmem:[%s1 + $0x2cc] sm:$0xf]
  %v200 = vld [vmem:[%s1 + $0x2d0] sm:$0xf]
  %v201 = vld [vmem:[%s1 + $0x2d4] sm:$0xf]
  %v202 = vld [vmem:[%s1 + $0x2d8] sm:$0xf]
  %v203 = vld [vmem:[%s1 + $0x2dc] sm:$0xf]
  %v204 = vld [vmem:[%s1 + $0x2e0] sm:$0xf]
  %v205 = vld [vmem:[%s1 + $0x2e4] sm:$0xf]
  %v206 = vld [vmem:[%s1 + $0x2e8] sm:$0xf]
  %v207 = vld [vmem:[%s1 + $0x2ec] sm:$0xf]
  %v208 = vld [vmem:[%s1 + $0x2f0] sm:$0xf]
  %v209 = vld [vmem:[%s1 + $0x2f4] sm:$0xf]
  %v210 = vld [vmem:[%s1 + $0x2f8] sm:$0xf]
  %v211 = vld [vmem:[%s1 + $0x2fc] sm:$0xf]
  %v212 = vld [vmem:[%s1 + $0x300] sm:$0xf]
  %v213 = vld [vmem:[%s1 + $0x304] sm:$0xf]
  %v214 = vld [vmem:[%s1 + $0x308] sm:$0xf]
  %v215 = vld [vmem:[%s1 + $0x30c] sm:$0xf]
  %v216 = vld [vmem:[%s1 + $0x310] sm:$0xf]
  %v217 = vld [vmem:[%s1 + $0x314] sm:$0xf]
  %v218 = vld [vmem:[%s1 + $0x318] sm:$0xf]
  %v219 = vld [vmem:[%s1 + $0x31c] sm:$0xf]
  %v220 = vld [vmem:[%s1 + $0x320] sm:$0xf]
  %v221 = vld [vmem:[%s1 + $0x324] sm:$0xf]
  %v222 = vld [vmem:[%s1 + $0x328] sm:$0xf]
  %v223 = vld [vmem:[%s1 + $0x32c] sm:$0xf]
  %v224 = vld [vmem:[%s1 + $0x330] sm:$0xf]
  %v225 = vld [vmem:[%s1 + $0x334] sm:$0xf]
  %v226 = vld [vmem:[%s1 + $0x338] sm:$0xf]
  %v227 = vld [vmem:[%s1 + $0x33c] sm:$0xf]
  %v228 = vld [vmem:[%s1 + $0x340] sm:$0xf]
  %v229 = vld [vmem:[%s1 + $0x344] sm:$0xf]
  %v230 = vld [vmem:[%s1 + $0x348] sm:$0xf]
  %v231 = vld [vmem:[%s1 + $0x34c] sm:$0xf]
  %v232 = vld [vmem:[%s1 + $0x350] sm:$0xf]
  %v233 = vld [vmem:[%s1 + $0x354] sm:$0xf]
  %v234 = vld [vmem:[%s1 + $0x358] sm:$0xf]
  %v235 = vld [vmem:[%s1 + $0x35c] sm:$0xf]
  %v236 = vld [vmem:[%s1 + $0x360] sm:$0xf]
  %v237 = vld [vmem:[%s1 + $0x364] sm:$0xf]
  %v238 = vld [vmem:[%s1 + $0x368] sm:$0xf]
  %v239 = vld [vmem:[%s1 + $0x36c] sm:$0xf]
  %v240 = vld [vmem:[%s1 + $0x370] sm:$0xf]
  %v241 = vld [vmem:[%s1 + $0x374] sm:$0xf]
  %v242 = vld [vmem:[%s1 + $0x378] sm:$0xf]
  %v243 = vld [vmem:[%s1 + $0x37c] sm:$0xf]
  %v244 = vld [vmem:[%s2] sm:$0x1]
  %v246 = vlaneseq
  %v247 = vshrl.u32 %v246, 7
  %v248 = vsub.s32 0, %v247
  %v249 = vrot.slane %v244, %v248
  %v253 = vcombine.high %v18, %v18
  %v255 = vunpack.c.l.s4 1966171168
  %v256 = vunpack.c.0.s8 %v255
  %v257 = vlaneseq
  %v258 = vshrl.u32 %v257, 7
  %v259 = vsub.s32 %v256, %v258
  %v260 = vrot.slane %v18, %v259
  %v262 = vunpack.c.l.s4 1966171168
  %v263 = vunpack.c.0.s8 %v262
  %v264 = vlaneseq
  %v265 = vshrl.u32 %v264, 7
  %v266 = vsub.s32 %v263, %v265
  %v267 = vrot.slane %v253, %v266
  %v268 = vcombine.high %v260, %v260
  %v269 = vcombine.high %v267, %v267
  %v271 = vunpack.c.l.s4 1966171168
  %v272 = vunpack.c.0.s8 %v271
  %v273 = vlaneseq
  %v274 = vshrl.u32 %v273, 7
  %v275 = vsub.s32 %v272, %v274
  %v276 = vrot.slane %v260, %v275
  %v278 = vunpack.c.l.s4 1966171168
  %v279 = vunpack.c.0.s8 %v278
  %v280 = vlaneseq
  %v281 = vshrl.u32 %v280, 7
  %v282 = vsub.s32 %v279, %v281
  %v283 = vrot.slane %v267, %v282
  %v285 = vunpack.c.l.s4 1966171168
  %v286 = vunpack.c.0.s8 %v285
  %v287 = vlaneseq
  %v288 = vshrl.u32 %v287, 7
  %v289 = vsub.s32 %v286, %v288
  %v290 = vrot.slane %v268, %v289
  %v292 = vunpack.c.l.s4 1966171168
  %v293 = vunpack.c.0.s8 %v292
  %v294 = vlaneseq
  %v295 = vshrl.u32 %v294, 7
  %v296 = vsub.s32 %v293, %v295
  %v297 = vrot.slane %v269, %v296
  %v298 = vcombine.high %v276, %v276
  %v299 = vcombine.high %v283, %v283
  %v300 = vcombine.high %v290, %v290
  %v301 = vcombine.high %v297, %v297
  %v302 = vcombine.high %v19, %v19
  %v304 = vunpack.c.l.s4 1966171168
  %v305 = vunpack.c.0.s8 %v304
  %v306 = vlaneseq
  %v307 = vshrl.u32 %v306, 7
  %v308 = vsub.s32 %v305, %v307
  %v309 = vrot.slane %v19, %v308
  %v311 = vunpack.c.l.s4 1966171168
  %v312 = vunpack.c.0.s8 %v311
  %v313 = vlaneseq
  %v314 = vshrl.u32 %v313, 7
  %v315 = vsub.s32 %v312, %v314
  %v316 = vrot.slane %v302, %v315
  %v317 = vcombine.high %v309, %v309
  %v318 = vcombine.high %v316, %v316
  %v320 = vunpack.c.l.s4 1966171168
  %v321 = vunpack.c.0.s8 %v320
  %v322 = vlaneseq
  %v323 = vshrl.u32 %v322, 7
  %v324 = vsub.s32 %v321, %v323
  %v325 = vrot.slane %v309, %v324
  %v327 = vunpack.c.l.s4 1966171168
  %v328 = vunpack.c.0.s8 %v327
  %v329 = vlaneseq
  %v330 = vshrl.u32 %v329, 7
  %v331 = vsub.s32 %v328, %v330
  %v332 = vrot.slane %v316, %v331
  %v334 = vunpack.c.l.s4 1966171168
  %v335 = vunpack.c.0.s8 %v334
  %v336 = vlaneseq
  %v337 = vshrl.u32 %v336, 7
  %v338 = vsub.s32 %v335, %v337
  %v339 = vrot.slane %v317, %v338
  %v341 = vunpack.c.l.s4 1966171168
  %v342 = vunpack.c.0.s8 %v341
  %v343 = vlaneseq
  %v344 = vshrl.u32 %v343, 7
  %v345 = vsub.s32 %v342, %v344
  %v346 = vrot.slane %v318, %v345
  %v347 = vcombine.high %v325, %v325
  %v348 = vcombine.high %v339, %v339
  %v587 = vunpack.c.l.b16 %v20
  %v588 = vunpack.c.l.b16 %v21
  %v589 = vunpack.c.l.b16 %v22
  %v590 = vunpack.c.l.b16 %v23
  %v591 = vunpack.c.l.b16 %v24
  %v592 = vunpack.c.l.b16 %v25
  %v593 = vunpack.c.l.b16 %v26
  %v594 = vunpack.c.l.b16 %v27
  %v595 = vunpack.c.l.b16 %v28
  %v596 = vunpack.c.l.b16 %v29
  %v597 = vunpack.c.l.b16 %v30
  %v598 = vunpack.c.l.b16 %v31
  %v599 = vunpack.c.l.b16 %v32
  %v600 = vunpack.c.l.b16 %v33
  %v601 = vunpack.c.l.b16 %v34
  %v602 = vunpack.c.l.b16 %v35
  %v603 = vunpack.c.l.b16 %v36
  %v604 = vunpack.c.l.b16 %v37
  %v605 = vunpack.c.l.b16 %v38
  %v606 = vunpack.c.l.b16 %v39
  %v607 = vunpack.c.l.b16 %v40
  %v608 = vunpack.c.l.b16 %v41
  %v609 = vunpack.c.l.b16 %v42
  %v610 = vunpack.c.l.b16 %v43
  %v611 = vunpack.c.l.b16 %v44
  %v612 = vunpack.c.l.b16 %v45
  %v613 = vunpack.c.l.b16 %v46
  %v614 = vunpack.c.l.b16 %v47
  %v615 = vunpack.c.l.b16 %v48
  %v616 = vunpack.c.l.b16 %v49
  %v617 = vunpack.c.l.b16 %v50
  %v618 = vunpack.c.l.b16 %v51
  %v619 = vunpack.c.l.b16 %v52
  %v620 = vunpack.c.l.b16 %v53
  %v621 = vunpack.c.l.b16 %v54
  %v622 = vunpack.c.l.b16 %v55
  %v623 = vunpack.c.l.b16 %v56
  %v624 = vunpack.c.l.b16 %v57
  %v625 = vunpack.c.l.b16 %v58
  %v626 = vunpack.c.l.b16 %v59
  %v627 = vunpack.c.l.b16 %v60
  %v628 = vunpack.c.l.b16 %v61
  %v629 = vunpack.c.l.b16 %v62
  %v630 = vunpack.c.l.b16 %v63
  %v631 = vunpack.c.l.b16 %v64
  %v632 = vunpack.c.l.b16 %v65
  %v633 = vunpack.c.l.b16 %v66
  %v634 = vunpack.c.l.b16 %v67
  %v635 = vunpack.c.l.b16 %v68
  %v636 = vunpack.c.l.b16 %v69
  %v637 = vunpack.c.l.b16 %v70
  %v638 = vunpack.c.l.b16 %v71
  %v639 = vunpack.c.l.b16 %v72
  %v640 = vunpack.c.l.b16 %v73
  %v641 = vunpack.c.l.b16 %v74
  %v642 = vunpack.c.l.b16 %v75
  %v643 = vunpack.c.l.b16 %v76
  %v644 = vunpack.c.l.b16 %v77
  %v645 = vunpack.c.l.b16 %v78
  %v646 = vunpack.c.l.b16 %v79
  %v647 = vunpack.c.l.b16 %v80
  %v648 = vunpack.c.l.b16 %v81
  %v649 = vunpack.c.l.b16 %v82
  %v650 = vunpack.c.l.b16 %v83
  %v651 = vunpack.c.l.b16 %v84
  %v652 = vunpack.c.l.b16 %v85
  %v653 = vunpack.c.l.b16 %v86
  %v654 = vunpack.c.l.b16 %v87
  %v655 = vunpack.c.l.b16 %v88
  %v656 = vunpack.c.l.b16 %v89
  %v657 = vunpack.c.l.b16 %v90
  %v658 = vunpack.c.l.b16 %v91
  %v659 = vunpack.c.l.b16 %v92
  %v660 = vunpack.c.l.b16 %v93
  %v661 = vunpack.c.l.b16 %v94
  %v662 = vunpack.c.l.b16 %v95
  %v663 = vunpack.c.l.b16 %v96
  %v664 = vunpack.c.l.b16 %v97
  %v665 = vunpack.c.l.b16 %v98
  %v666 = vunpack.c.l.b16 %v99
  %v667 = vunpack.c.l.b16 %v100
  %v668 = vunpack.c.l.b16 %v101
  %v669 = vunpack.c.l.b16 %v102
  %v670 = vunpack.c.l.b16 %v103
  %v671 = vunpack.c.l.b16 %v104
  %v672 = vunpack.c.l.b16 %v105
  %v673 = vunpack.c.l.b16 %v106
  %v674 = vunpack.c.l.b16 %v107
  %v675 = vunpack.c.l.b16 %v108
  %v676 = vunpack.c.l.b16 %v109
  %v677 = vunpack.c.l.b16 %v110
  %v678 = vunpack.c.l.b16 %v111
  %v679 = vunpack.c.l.b16 %v112
  %v680 = vunpack.c.l.b16 %v113
  %v681 = vunpack.c.l.b16 %v114
  %v682 = vunpack.c.l.b16 %v115
  %v683 = vunpack.c.l.b16 %v116
  %v684 = vunpack.c.l.b16 %v117
  %v685 = vunpack.c.l.b16 %v118
  %v686 = vunpack.c.l.b16 %v119
  %v687 = vunpack.c.l.b16 %v120
  %v688 = vunpack.c.l.b16 %v121
  %v689 = vunpack.c.l.b16 %v122
  %v690 = vunpack.c.l.b16 %v123
  %v691 = vunpack.c.l.b16 %v124
  %v692 = vunpack.c.l.b16 %v125
  %v693 = vunpack.c.l.b16 %v126
  %v694 = vunpack.c.l.b16 %v127
  %v695 = vunpack.c.l.b16 %v128
  %v696 = vunpack.c.l.b16 %v129
  %v697 = vunpack.c.l.b16 %v130
  %v698 = vunpack.c.l.b16 %v131
  %v699 = vunpack.c.l.b16 %v132
  %v700 = vunpack.c.l.b16 %v133
  %v701 = vunpack.c.l.b16 %v134
  %v702 = vunpack.c.l.b16 %v135
  %v703 = vunpack.c.l.b16 %v136
  %v704 = vunpack.c.l.b16 %v137
  %v705 = vunpack.c.l.b16 %v138
  %v706 = vunpack.c.l.b16 %v139
  %v707 = vunpack.c.l.b16 %v140
  %v708 = vunpack.c.l.b16 %v141
  %v709 = vunpack.c.l.b16 %v142
  %v710 = vunpack.c.l.b16 %v143
  %v711 = vunpack.c.l.b16 %v144
  %v712 = vunpack.c.l.b16 %v145
  %v713 = vunpack.c.l.b16 %v146
  %v714 = vunpack.c.l.b16 %v147
  %v715 = vunpack.c.l.b16 %v148
  %v716 = vunpack.c.l.b16 %v149
  %v717 = vunpack.c.l.b16 %v150
  %v718 = vunpack.c.l.b16 %v151
  %v719 = vunpack.c.l.b16 %v152
  %v720 = vunpack.c.l.b16 %v153
  %v721 = vunpack.c.l.b16 %v154
  %v722 = vunpack.c.l.b16 %v155
  %v723 = vunpack.c.l.b16 %v156
  %v724 = vunpack.c.l.b16 %v157
  %v725 = vunpack.c.l.b16 %v158
  %v726 = vunpack.c.l.b16 %v159
  %v727 = vunpack.c.l.b16 %v160
  %v728 = vunpack.c.l.b16 %v161
  %v729 = vunpack.c.l.b16 %v162
  %v730 = vunpack.c.l.b16 %v163
  %v731 = vunpack.c.l.b16 %v164
  %v732 = vunpack.c.l.b16 %v165
  %v733 = vunpack.c.l.b16 %v166
  %v734 = vunpack.c.l.b16 %v167
  %v735 = vunpack.c.l.b16 %v168
  %v736 = vunpack.c.l.b16 %v169
  %v737 = vunpack.c.l.b16 %v170
  %v738 = vunpack.c.l.b16 %v171
  %v739 = vunpack.c.l.b16 %v172
  %v740 = vunpack.c.l.b16 %v173
  %v741 = vunpack.c.l.b16 %v174
  %v742 = vunpack.c.l.b16 %v175
  %v743 = vunpack.c.l.b16 %v176
  %v744 = vunpack.c.l.b16 %v177
  %v745 = vunpack.c.l.b16 %v178
  %v746 = vunpack.c.l.b16 %v179
  %v747 = vunpack.c.l.b16 %v180
  %v748 = vunpack.c.l.b16 %v181
  %v749 = vunpack.c.l.b16 %v182
  %v750 = vunpack.c.l.b16 %v183
  %v751 = vunpack.c.l.b16 %v184
  %v752 = vunpack.c.l.b16 %v185
  %v753 = vunpack.c.l.b16 %v186
  %v754 = vunpack.c.l.b16 %v187
  %v755 = vunpack.c.l.b16 %v188
  %v756 = vunpack.c.l.b16 %v189
  %v757 = vunpack.c.l.b16 %v190
  %v758 = vunpack.c.l.b16 %v191
  %v759 = vunpack.c.l.b16 %v192
  %v760 = vunpack.c.l.b16 %v193
  %v761 = vunpack.c.l.b16 %v194
  %v762 = vunpack.c.l.b16 %v195
  %v763 = vunpack.c.l.b16 %v196
  %v764 = vunpack.c.l.b16 %v197
  %v765 = vunpack.c.l.b16 %v198
  %v766 = vunpack.c.l.b16 %v199
  %v767 = vunpack.c.l.b16 %v200
  %v768 = vunpack.c.l.b16 %v201
  %v769 = vunpack.c.l.b16 %v202
  %v770 = vunpack.c.l.b16 %v203
  %v771 = vunpack.c.l.b16 %v204
  %v772 = vunpack.c.l.b16 %v205
  %v773 = vunpack.c.l.b16 %v206
  %v774 = vunpack.c.l.b16 %v207
  %v775 = vunpack.c.l.b16 %v208
  %v776 = vunpack.c.l.b16 %v209
  %v777 = vunpack.c.l.b16 %v210
  %v778 = vunpack.c.l.b16 %v211
  %v779 = vunpack.c.l.b16 %v212
  %v780 = vunpack.c.l.b16 %v213
  %v781 = vunpack.c.l.b16 %v214
  %v782 = vunpack.c.l.b16 %v215
  %v783 = vunpack.c.l.b16 %v216
  %v784 = vunpack.c.l.b16 %v217
  %v785 = vunpack.c.l.b16 %v218
  %v786 = vunpack.c.l.b16 %v219
  %v787 = vunpack.c.l.b16 %v220
  %v788 = vunpack.c.l.b16 %v221
  %v789 = vunpack.c.l.b16 %v222
  %v790 = vunpack.c.l.b16 %v223
  %v791 = vunpack.c.l.b16 %v224
  %v792 = vunpack.c.l.b16 %v225
  %v793 = vunpack.c.l.b16 %v226
  %v794 = vunpack.c.l.b16 %v227
  %v795 = vunpack.c.l.b16 %v228
  %v796 = vunpack.c.l.b16 %v229
  %v797 = vunpack.c.l.b16 %v230
  %v798 = vunpack.c.l.b16 %v231
  %v799 = vunpack.c.l.b16 %v232
  %v800 = vunpack.c.l.b16 %v233
  %v801 = vunpack.c.l.b16 %v234
  %v802 = vunpack.c.l.b16 %v235
  %v803 = vunpack.c.l.b16 %v236
  %v804 = vunpack.c.l.b16 %v237
  %v805 = vunpack.c.l.b16 %v238
  %v806 = vunpack.c.l.b16 %v239
  %v807 = vunpack.c.l.b16 %v240
  %v808 = vunpack.c.l.b16 %v241
  %v809 = vunpack.c.l.b16 %v242
  %v810 = vunpack.c.l.b16 %v243
  %v811 = vpack.c.b16 %v588, %v587
  %v812 = vpack.c.b16 %v590, %v589
  %v813 = vpack.c.b16 %v592, %v591
  %v814 = vpack.c.b16 %v594, %v593
  %v815 = vpack.c.b16 %v596, %v595
  %v816 = vpack.c.b16 %v598, %v597
  %v817 = vpack.c.b16 %v600, %v599
  %v818 = vpack.c.b16 %v602, %v601
  %v819 = vpack.c.b16 %v604, %v603
  %v820 = vpack.c.b16 %v606, %v605
  %v821 = vpack.c.b16 %v608, %v607
  %v822 = vpack.c.b16 %v610, %v609
  %v823 = vpack.c.b16 %v612, %v611
  %v824 = vpack.c.b16 %v614, %v613
  %v825 = vpack.c.b16 %v616, %v615
  %v826 = vpack.c.b16 %v618, %v617
  %v827 = vpack.c.b16 %v620, %v619
  %v828 = vpack.c.b16 %v622, %v621
  %v829 = vpack.c.b16 %v624, %v623
  %v830 = vpack.c.b16 %v626, %v625
  %v831 = vpack.c.b16 %v628, %v627
  %v832 = vpack.c.b16 %v630, %v629
  %v833 = vpack.c.b16 %v632, %v631
  %v834 = vpack.c.b16 %v634, %v633
  %v835 = vpack.c.b16 %v636, %v635
  %v836 = vpack.c.b16 %v638, %v637
  %v837 = vpack.c.b16 %v640, %v639
  %v838 = vpack.c.b16 %v642, %v641
  %v839 = vpack.c.b16 %v644, %v643
  %v840 = vpack.c.b16 %v646, %v645
  %v841 = vpack.c.b16 %v648, %v647
  %v842 = vpack.c.b16 %v650, %v649
  %v843 = vpack.c.b16 %v652, %v651
  %v844 = vpack.c.b16 %v654, %v653
  %v845 = vpack.c.b16 %v656, %v655
  %v846 = vpack.c.b16 %v658, %v657
  %v847 = vpack.c.b16 %v660, %v659
  %v848 = vpack.c.b16 %v662, %v661
  %v849 = vpack.c.b16 %v664, %v663
  %v850 = vpack.c.b16 %v666, %v665
  %v851 = vpack.c.b16 %v668, %v667
  %v852 = vpack.c.b16 %v670, %v669
  %v853 = vpack.c.b16 %v672, %v671
  %v854 = vpack.c.b16 %v674, %v673
  %v855 = vpack.c.b16 %v676, %v675
  %v856 = vpack.c.b16 %v678, %v677
  %v857 = vpack.c.b16 %v680, %v679
  %v858 = vpack.c.b16 %v682, %v681
  %v859 = vpack.c.b16 %v684, %v683
  %v860 = vpack.c.b16 %v686, %v685
  %v861 = vpack.c.b16 %v688, %v687
  %v862 = vpack.c.b16 %v690, %v689
  %v863 = vpack.c.b16 %v692, %v691
  %v864 = vpack.c.b16 %v694, %v693
  %v865 = vpack.c.b16 %v696, %v695
  %v866 = vpack.c.b16 %v698, %v697
  %v867 = vpack.c.b16 %v700, %v699
  %v868 = vpack.c.b16 %v702, %v701
  %v869 = vpack.c.b16 %v704, %v703
  %v870 = vpack.c.b16 %v706, %v705
  %v871 = vpack.c.b16 %v708, %v707
  %v872 = vpack.c.b16 %v710, %v709
  %v873 = vpack.c.b16 %v712, %v711
  %v874 = vpack.c.b16 %v714, %v713
  %v875 = vpack.c.b16 %v716, %v715
  %v876 = vpack.c.b16 %v718, %v717
  %v877 = vpack.c.b16 %v720, %v719
  %v878 = vpack.c.b16 %v722, %v721
  %v879 = vpack.c.b16 %v724, %v723
  %v880 = vpack.c.b16 %v726, %v725
  %v881 = vpack.c.b16 %v728, %v727
  %v882 = vpack.c.b16 %v730, %v729
  %v883 = vpack.c.b16 %v732, %v731
  %v884 = vpack.c.b16 %v734, %v733
  %v885 = vpack.c.b16 %v736, %v735
  %v886 = vpack.c.b16 %v738, %v737
  %v887 = vpack.c.b16 %v740, %v739
  %v888 = vpack.c.b16 %v742, %v741
  %v889 = vpack.c.b16 %v744, %v743
  %v890 = vpack.c.b16 %v746, %v745
  %v891 = vpack.c.b16 %v748, %v747
  %v892 = vpack.c.b16 %v750, %v749
  %v893 = vpack.c.b16 %v752, %v751
  %v894 = vpack.c.b16 %v754, %v753
  %v895 = vpack.c.b16 %v756, %v755
  %v896 = vpack.c.b16 %v758, %v757
  %v897 = vpack.c.b16 %v760, %v759
  %v898 = vpack.c.b16 %v762, %v761
  %v899 = vpack.c.b16 %v764, %v763
  %v900 = vpack.c.b16 %v766, %v765
  %v901 = vpack.c.b16 %v768, %v767
  %v902 = vpack.c.b16 %v770, %v769
  %v903 = vpack.c.b16 %v772, %v771
  %v904 = vpack.c.b16 %v774, %v773
  %v905 = vpack.c.b16 %v776, %v775
  %v906 = vpack.c.b16 %v778, %v777
  %v907 = vpack.c.b16 %v780, %v779
  %v908 = vpack.c.b16 %v782, %v781
  %v909 = vpack.c.b16 %v784, %v783
  %v910 = vpack.c.b16 %v786, %v785
  %v911 = vpack.c.b16 %v788, %v787
  %v912 = vpack.c.b16 %v790, %v789
  %v913 = vpack.c.b16 %v792, %v791
  %v914 = vpack.c.b16 %v794, %v793
  %v915 = vpack.c.b16 %v796, %v795
  %v916 = vpack.c.b16 %v798, %v797
  %v917 = vpack.c.b16 %v800, %v799
  %v918 = vpack.c.b16 %v802, %v801
  %v919 = vpack.c.b16 %v804, %v803
  %v920 = vpack.c.b16 %v806, %v805
  %v921 = vpack.c.b16 %v808, %v807
  %v922 = vpack.c.b16 %v810, %v809
  %1035 = vmatprep.subr.bf16.mxu0 0
  %1036 = vmatpush1.bf16.msra.mxu0 %v811
  %1037 = vmatprep.subr.bf16.mxu0 0
  %1038 = vmatpush1.bf16.msra.mxu0 %v812
  %1039 = vmatprep.subr.bf16.mxu0 0
  %1040 = vmatpush1.bf16.msra.mxu0 %v813
  %1041 = vmatprep.subr.bf16.mxu0 0
  %1042 = vmatpush1.bf16.msra.mxu0 %v814
  %1043 = vmatprep.subr.bf16.mxu0 0
  %1044 = vmatpush1.bf16.msra.mxu0 %v815
  %1045 = vmatprep.subr.bf16.mxu0 0
  %1046 = vmatpush1.bf16.msra.mxu0 %v816
  %1047 = vmatprep.subr.bf16.mxu0 0
  %1048 = vmatpush1.bf16.msra.mxu0 %v817
  %1049 = vmatprep.subr.bf16.mxu0 0
  %1050 = vmatpush1.bf16.msra.mxu0 %v818
  %1051 = vmatprep.subr.bf16.mxu0 0
  %1052 = vmatpush1.bf16.msra.mxu0 %v819
  %1053 = vmatprep.subr.bf16.mxu0 0
  %1054 = vmatpush1.bf16.msra.mxu0 %v820
  %1055 = vmatprep.subr.bf16.mxu0 0
  %1056 = vmatpush1.bf16.msra.mxu0 %v821
  %1057 = vmatprep.subr.bf16.mxu0 0
  %1058 = vmatpush1.bf16.msra.mxu0 %v822
  %1059 = vmatprep.subr.bf16.mxu0 0
  %1060 = vmatpush1.bf16.msra.mxu0 %v823
  %1061 = vmatprep.subr.bf16.mxu0 0
  %1062 = vmatpush1.bf16.msra.mxu0 %v824
  %1063 = vmatprep.subr.bf16.mxu0 0
  %1064 = vmatpush1.bf16.msra.mxu0 %v825
  %1065 = vmatprep.subr.bf16.mxu0 0
  %1066 = vmatpush1.bf16.msra.mxu0 %v826
  %1067 = vmatprep.mubr.bf16.mxu0 %v290
  %1068 = vmatmul.mubr.bf16.gmra.mrb[0].mxu0 %v276
  %v1069 = vpop.f32.mrb[0].mxu0
  %v1070 = vadd.f32 %v249, %v1069
  %v1071 = vpop.f32.mrb[0].mxu0
  %v1072 = vpop.f32.mrb[0].mxu0
  %v1073 = vpop.f32.mrb[0].mxu0
  %1074 = vdwg.mxu0
  %1075 = vmatprep.subr.bf16.mxu0 0
  %1076 = vmatpush1.bf16.msra.mxu0 %v827
  %1077 = vmatprep.subr.bf16.mxu0 0
  %1078 = vmatpush1.bf16.msra.mxu0 %v828
  %1079 = vmatprep.subr.bf16.mxu0 0
  %1080 = vmatpush1.bf16.msra.mxu0 %v829
  %1081 = vmatprep.subr.bf16.mxu0 0
  %1082 = vmatpush1.bf16.msra.mxu0 %v830
  %1083 = vmatprep.subr.bf16.mxu0 0
  %1084 = vmatpush1.bf16.msra.mxu0 %v831
  %1085 = vmatprep.subr.bf16.mxu0 0
  %1086 = vmatpush1.bf16.msra.mxu0 %v832
  %1087 = vmatprep.subr.bf16.mxu0 0
  %1088 = vmatpush1.bf16.msra.mxu0 %v833
  %1089 = vmatprep.subr.bf16.mxu0 0
  %1090 = vmatpush1.bf16.msra.mxu0 %v834
  %1091 = vmatprep.subr.bf16.mxu0 0
  %1092 = vmatpush1.bf16.msra.mxu0 %v835
  %1093 = vmatprep.subr.bf16.mxu0 0
  %1094 = vmatpush1.bf16.msra.mxu0 %v836
  %1095 = vmatprep.subr.bf16.mxu0 0
  %1096 = vmatpush1.bf16.msra.mxu0 %v837
  %1097 = vmatprep.subr.bf16.mxu0 0
  %1098 = vmatpush1.bf16.msra.mxu0 %v838
  %1099 = vmatprep.subr.bf16.mxu0 0
  %1100 = vmatpush1.bf16.msra.mxu0 %v839
  %1101 = vmatprep.subr.bf16.mxu0 0
  %1102 = vmatpush1.bf16.msra.mxu0 %v840
  %1103 = vmatprep.subr.bf16.mxu0 0
  %1104 = vmatpush1.bf16.msra.mxu0 %v841
  %1105 = vmatprep.subr.bf16.mxu0 0
  %1106 = vmatpush1.bf16.msra.mxu0 %v842
  %1107 = vmatprep.mubr.bf16.mxu0 %v300
  %1108 = vmatmul.mubr.bf16.gmra.mrb[0].mxu0 %v298
  %v1109 = vpop.f32.mrb[0].mxu0
  %v1110 = vadd.f32 %v1070, %v1109
  %v1111 = vpop.f32.mrb[0].mxu0
  %v1112 = vpop.f32.mrb[0].mxu0
  %v1113 = vpop.f32.mrb[0].mxu0
  %1114 = vdwg.mxu0
  %1115 = vmatprep.subr.bf16.mxu0 0
  %1116 = vmatpush1.bf16.msra.mxu0 %v843
  %1117 = vmatprep.subr.bf16.mxu0 0
  %1118 = vmatpush1.bf16.msra.mxu0 %v844
  %1119 = vmatprep.subr.bf16.mxu0 0
  %1120 = vmatpush1.bf16.msra.mxu0 %v845
  %1121 = vmatprep.subr.bf16.mxu0 0
  %1122 = vmatpush1.bf16.msra.mxu0 %v846
  %1123 = vmatprep.subr.bf16.mxu0 0
  %1124 = vmatpush1.bf16.msra.mxu0 %v847
  %1125 = vmatprep.subr.bf16.mxu0 0
  %1126 = vmatpush1.bf16.msra.mxu0 %v848
  %1127 = vmatprep.subr.bf16.mxu0 0
  %1128 = vmatpush1.bf16.msra.mxu0 %v849
  %1129 = vmatprep.subr.bf16.mxu0 0
  %1130 = vmatpush1.bf16.msra.mxu0 %v850
  %1131 = vmatprep.subr.bf16.mxu0 0
  %1132 = vmatpush1.bf16.msra.mxu0 %v851
  %1133 = vmatprep.subr.bf16.mxu0 0
  %1134 = vmatpush1.bf16.msra.mxu0 %v852
  %1135 = vmatprep.subr.bf16.mxu0 0
  %1136 = vmatpush1.bf16.msra.mxu0 %v853
  %1137 = vmatprep.subr.bf16.mxu0 0
  %1138 = vmatpush1.bf16.msra.mxu0 %v854
  %1139 = vmatprep.subr.bf16.mxu0 0
  %1140 = vmatpush1.bf16.msra.mxu0 %v855
  %1141 = vmatprep.subr.bf16.mxu0 0
  %1142 = vmatpush1.bf16.msra.mxu0 %v856
  %1143 = vmatprep.subr.bf16.mxu0 0
  %1144 = vmatpush1.bf16.msra.mxu0 %v857
  %1145 = vmatprep.subr.bf16.mxu0 0
  %1146 = vmatpush1.bf16.msra.mxu0 %v858
  %1147 = vmatprep.mubr.bf16.mxu0 %v297
  %1148 = vmatmul.mubr.bf16.gmra.mrb[0].mxu0 %v283
  %v1149 = vpop.f32.mrb[0].mxu0
  %v1150 = vadd.f32 %v1110, %v1149
  %v1151 = vpop.f32.mrb[0].mxu0
  %v1152 = vpop.f32.mrb[0].mxu0
  %v1153 = vpop.f32.mrb[0].mxu0
  %1154 = vdwg.mxu0
  %1155 = vmatprep.subr.bf16.mxu0 0
  %1156 = vmatpush1.bf16.msra.mxu0 %v859
  %1157 = vmatprep.subr.bf16.mxu0 0
  %1158 = vmatpush1.bf16.msra.mxu0 %v860
  %1159 = vmatprep.subr.bf16.mxu0 0
  %1160 = vmatpush1.bf16.msra.mxu0 %v861
  %1161 = vmatprep.subr.bf16.mxu0 0
  %1162 = vmatpush1.bf16.msra.mxu0 %v862
  %1163 = vmatprep.subr.bf16.mxu0 0
  %1164 = vmatpush1.bf16.msra.mxu0 %v863
  %1165 = vmatprep.subr.bf16.mxu0 0
  %1166 = vmatpush1.bf16.msra.mxu0 %v864
  %1167 = vmatprep.subr.bf16.mxu0 0
  %1168 = vmatpush1.bf16.msra.mxu0 %v865
  %1169 = vmatprep.subr.bf16.mxu0 0
  %1170 = vmatpush1.bf16.msra.mxu0 %v866
  %1171 = vmatprep.subr.bf16.mxu0 0
  %1172 = vmatpush1.bf16.msra.mxu0 %v867
  %1173 = vmatprep.subr.bf16.mxu0 0
  %1174 = vmatpush1.bf16.msra.mxu0 %v868
  %1175 = vmatprep.subr.bf16.mxu0 0
  %1176 = vmatpush1.bf16.msra.mxu0 %v869
  %1177 = vmatprep.subr.bf16.mxu0 0
  %1178 = vmatpush1.bf16.msra.mxu0 %v870
  %1179 = vmatprep.subr.bf16.mxu0 0
  %1180 = vmatpush1.bf16.msra.mxu0 %v871
  %1181 = vmatprep.subr.bf16.mxu0 0
  %1182 = vmatpush1.bf16.msra.mxu0 %v872
  %1183 = vmatprep.subr.bf16.mxu0 0
  %1184 = vmatpush1.bf16.msra.mxu0 %v873
  %1185 = vmatprep.subr.bf16.mxu0 0
  %1186 = vmatpush1.bf16.msra.mxu0 %v874
  %1187 = vmatprep.mubr.bf16.mxu0 %v301
  %1188 = vmatmul.mubr.bf16.gmra.mrb[0].mxu0 %v299
  %v1189 = vpop.f32.mrb[0].mxu0
  %v1190 = vadd.f32 %v1150, %v1189
  %v1191 = vpop.f32.mrb[0].mxu0
  %v1192 = vpop.f32.mrb[0].mxu0
  %v1193 = vpop.f32.mrb[0].mxu0
  %1194 = vdwg.mxu0
  %1195 = vmatprep.subr.bf16.mxu0 0
  %1196 = vmatpush1.bf16.msra.mxu0 %v875
  %1197 = vmatprep.subr.bf16.mxu0 0
  %1198 = vmatpush1.bf16.msra.mxu0 %v876
  %1199 = vmatprep.subr.bf16.mxu0 0
  %1200 = vmatpush1.bf16.msra.mxu0 %v877
  %1201 = vmatprep.subr.bf16.mxu0 0
  %1202 = vmatpush1.bf16.msra.mxu0 %v878
  %1203 = vmatprep.subr.bf16.mxu0 0
  %1204 = vmatpush1.bf16.msra.mxu0 %v879
  %1205 = vmatprep.subr.bf16.mxu0 0
  %1206 = vmatpush1.bf16.msra.mxu0 %v880
  %1207 = vmatprep.subr.bf16.mxu0 0
  %1208 = vmatpush1.bf16.msra.mxu0 %v881
  %1209 = vmatprep.subr.bf16.mxu0 0
  %1210 = vmatpush1.bf16.msra.mxu0 %v882
  %1211 = vmatprep.subr.bf16.mxu0 0
  %1212 = vmatpush1.bf16.msra.mxu0 %v883
  %1213 = vmatprep.subr.bf16.mxu0 0
  %1214 = vmatpush1.bf16.msra.mxu0 %v884
  %1215 = vmatprep.subr.bf16.mxu0 0
  %1216 = vmatpush1.bf16.msra.mxu0 %v885
  %1217 = vmatprep.subr.bf16.mxu0 0
  %1218 = vmatpush1.bf16.msra.mxu0 %v886
  %1219 = vmatprep.subr.bf16.mxu0 0
  %1220 = vmatpush1.bf16.msra.mxu0 %v887
  %1221 = vmatprep.subr.bf16.mxu0 0
  %1222 = vmatpush1.bf16.msra.mxu0 %v888
  %1223 = vmatprep.subr.bf16.mxu0 0
  %1224 = vmatpush1.bf16.msra.mxu0 %v889
  %1225 = vmatprep.subr.bf16.mxu0 0
  %1226 = vmatpush1.bf16.msra.mxu0 %v890
  %1227 = vmatprep.mubr.bf16.mxu0 %v339
  %1228 = vmatmul.mubr.bf16.gmra.mrb[0].mxu0 %v325
  %v1229 = vpop.f32.mrb[0].mxu0
  %v1230 = vadd.f32 %v1190, %v1229
  %v1231 = vpop.f32.mrb[0].mxu0
  %v1232 = vpop.f32.mrb[0].mxu0
  %v1233 = vpop.f32.mrb[0].mxu0
  %1234 = vdwg.mxu0
  %1235 = vmatprep.subr.bf16.mxu0 0
  %1236 = vmatpush1.bf16.msra.mxu0 %v891
  %1237 = vmatprep.subr.bf16.mxu0 0
  %1238 = vmatpush1.bf16.msra.mxu0 %v892
  %1239 = vmatprep.subr.bf16.mxu0 0
  %1240 = vmatpush1.bf16.msra.mxu0 %v893
  %1241 = vmatprep.subr.bf16.mxu0 0
  %1242 = vmatpush1.bf16.msra.mxu0 %v894
  %1243 = vmatprep.subr.bf16.mxu0 0
  %1244 = vmatpush1.bf16.msra.mxu0 %v895
  %1245 = vmatprep.subr.bf16.mxu0 0
  %1246 = vmatpush1.bf16.msra.mxu0 %v896
  %1247 = vmatprep.subr.bf16.mxu0 0
  %1248 = vmatpush1.bf16.msra.mxu0 %v897
  %1249 = vmatprep.subr.bf16.mxu0 0
  %1250 = vmatpush1.bf16.msra.mxu0 %v898
  %1251 = vmatprep.subr.bf16.mxu0 0
  %1252 = vmatpush1.bf16.msra.mxu0 %v899
  %1253 = vmatprep.subr.bf16.mxu0 0
  %1254 = vmatpush1.bf16.msra.mxu0 %v900
  %1255 = vmatprep.subr.bf16.mxu0 0
  %1256 = vmatpush1.bf16.msra.mxu0 %v901
  %1257 = vmatprep.subr.bf16.mxu0 0
  %1258 = vmatpush1.bf16.msra.mxu0 %v902
  %1259 = vmatprep.subr.bf16.mxu0 0
  %1260 = vmatpush1.bf16.msra.mxu0 %v903
  %1261 = vmatprep.subr.bf16.mxu0 0
  %1262 = vmatpush1.bf16.msra.mxu0 %v904
  %1263 = vmatprep.subr.bf16.mxu0 0
  %1264 = vmatpush1.bf16.msra.mxu0 %v905
  %1265 = vmatprep.subr.bf16.mxu0 0
  %1266 = vmatpush1.bf16.msra.mxu0 %v906
  %1267 = vmatprep.mubr.bf16.mxu0 %v348
  %1268 = vmatmul.mubr.bf16.gmra.mrb[0].mxu0 %v347
  %v1269 = vpop.f32.mrb[0].mxu0
  %v1270 = vadd.f32 %v1230, %v1269
  %v1271 = vpop.f32.mrb[0].mxu0
  %v1272 = vpop.f32.mrb[0].mxu0
  %v1273 = vpop.f32.mrb[0].mxu0
  %1274 = vdwg.mxu0
  %1275 = vmatprep.subr.bf16.mxu0 0
  %1276 = vmatpush1.bf16.msra.mxu0 %v907
  %1277 = vmatprep.subr.bf16.mxu0 0
  %1278 = vmatpush1.bf16.msra.mxu0 %v908
  %1279 = vmatprep.subr.bf16.mxu0 0
  %1280 = vmatpush1.bf16.msra.mxu0 %v909
  %1281 = vmatprep.subr.bf16.mxu0 0
  %1282 = vmatpush1.bf16.msra.mxu0 %v910
  %1283 = vmatprep.subr.bf16.mxu0 0
  %1284 = vmatpush1.bf16.msra.mxu0 %v911
  %1285 = vmatprep.subr.bf16.mxu0 0
  %1286 = vmatpush1.bf16.msra.mxu0 %v912
  %1287 = vmatprep.subr.bf16.mxu0 0
  %1288 = vmatpush1.bf16.msra.mxu0 %v913
  %1289 = vmatprep.subr.bf16.mxu0 0
  %1290 = vmatpush1.bf16.msra.mxu0 %v914
  %1291 = vmatprep.subr.bf16.mxu0 0
  %1292 = vmatpush1.bf16.msra.mxu0 %v915
  %1293 = vmatprep.subr.bf16.mxu0 0
  %1294 = vmatpush1.bf16.msra.mxu0 %v916
  %1295 = vmatprep.subr.bf16.mxu0 0
  %1296 = vmatpush1.bf16.msra.mxu0 %v917
  %1297 = vmatprep.subr.bf16.mxu0 0
  %1298 = vmatpush1.bf16.msra.mxu0 %v918
  %1299 = vmatprep.subr.bf16.mxu0 0
  %1300 = vmatpush1.bf16.msra.mxu0 %v919
  %1301 = vmatprep.subr.bf16.mxu0 0
  %1302 = vmatpush1.bf16.msra.mxu0 %v920
  %1303 = vmatprep.subr.bf16.mxu0 0
  %1304 = vmatpush1.bf16.msra.mxu0 %v921
  %1305 = vmatprep.subr.bf16.mxu0 0
  %1306 = vmatpush1.bf16.msra.mxu0 %v922
  %1307 = vmatprep.mubr.bf16.mxu0 %v346
  %1308 = vmatmul.mubr.bf16.gmra.mrb[0].mxu0 %v332
  %v1309 = vpop.f32.mrb[0].mxu0
  %v1310 = vadd.f32 %v1270, %v1309
  %v1311 = vpop.f32.mrb[0].mxu0
  %v1312 = vpop.f32.mrb[0].mxu0
  %v1313 = vpop.f32.mrb[0].mxu0
  %1314 = vdwg.mxu0
  %v1315 = vld [vmem:[%s3] sm:$0x3]
  %v1316 = vadd.f32 %v1310, %v1315
  %v1317 = vmax.f32 %v1316, 0.0
  %1318 = vst [vmem:[%s4] sm:$0x3] %v1317
  // Predicated region
  $region18: #{resnet_forward.23} parent=0 // pred_check
    _
  $region19: #{resnet_forward.23} parent=0 // pred_check_branch
    %1320 = sbr.rel (0) target = $region21
  $region20: #{resnet_forward.23} parent=0 // pred_region
    _
  $region21: #{resnet_forward.23} parent=0 // pred_fallthru
    _
  // Predicated region
  $region22: #{resnet_forward.23} parent=0 // pred_check
    _
  $region23: #{resnet_forward.23} parent=0 // pred_check_branch
    %1322 = sbr.rel (0) target = $region25
  $region24: #{resnet_forward.23} parent=0 // pred_region
    _
  $region25: #{resnet_forward.23} parent=0 // pred_fallthru
    _

</llo_original>
